<compile_context>
chip_gen: v7x
topology: tpu7x:2x2x1
jax: 0.10.0
libtpu: 0.0.40
codegen_flags: <defaults>
</compile_context>

<pallas_src>
import functools

import jax
import jax.numpy as jnp
from jax.experimental import pallas as pl
from jax.experimental.pallas import tpu as pltpu


def _round_up(v, m):
    return (v + m - 1) // m * m


def wide_basic_kernel(identity_sc, H, Wp,
                      mask_ref, x_ref, s1_ref, t1_ref, w1_ref,
                      s2_ref, t2_ref, w2_ref, wsc_ref, bout_ref,
                      o_ref, ypad, hpad):
    """One image per step.  Flat coordinate: row m = i*Wp + c maps to spatial
    (i, c-1), valid for c in [1, W]; padded-scratch row 1 + r*Wp + cc holds
    padded position (r, cc)."""
    M = H * Wp
    Cin = x_ref.shape[-1]
    Cmid = hpad.shape[-1]
    Cout = o_ref.shape[-1]
    RP = ypad.shape[0]
    top = Wp + 1                    # scratch rows [0, top): lead elem + top halo row
    bot = 1 + (H + 1) * Wp          # scratch rows [bot, RP): bottom halo row + tail

    # Keep the top/bottom halo strips zero.  Interior halo *columns* are zeroed
    # by `mask` at every store below, so only these ~2*Wp rows need it.  Done
    # every step (cheap) so the kernel stays correct when the batch axis is
    # megacore-split (a program_id==0-guarded init would miss per-core scratch).
    ypad[0:top, :] = jnp.zeros((top, Cin), ypad.dtype)
    ypad[bot:RP, :] = jnp.zeros((RP - bot, Cin), ypad.dtype)
    hpad[0:top, :] = jnp.zeros((top, Cmid), hpad.dtype)
    hpad[bot:RP, :] = jnp.zeros((RP - bot, Cmid), hpad.dtype)

    mask = mask_ref[...]                                        # (M, 1) f32

    # ---- bn1 + relu -> bf16 zero-halo scratch (one contiguous store) ---------
    x = x_ref[...]                                              # (M, Cin) f32
    y = jnp.maximum(x * s1_ref[...] + t1_ref[...], 0.0) * mask
    ypad[Wp + 1:Wp + 1 + M, :] = y.astype(ypad.dtype)

    # ---- 3x3 conv = 9 accumulated MXU matmuls over row-offset slices ---------
    # The zero halo columns/rows of the flat scratch make every out-of-window
    # contribution vanish, so the offset slices need no masking.
    def conv3x3(src, w_ref, cout):
        acc = jnp.zeros((M, cout), jnp.float32)
        for t in range(9):
            dy, dx = divmod(t, 3)
            off = dy * Wp + dx
            acc = acc + jnp.dot(src[off:off + M, :], w_ref[t],
                                preferred_element_type=jnp.float32)
        return acc

    # conv1 (its bias is folded into the bn2 shift wrapper-side).
    # TODO(synk): nn.Dropout is modeled in eval mode (identity); training-mode
    # Bernoulli mask / (1-p) rescale is omitted.
    h = conv3x3(ypad, w1_ref, Cmid)                             # (M, Cmid) f32

    # ---- bn2 + relu -> second bf16 zero-halo scratch --------------------------
    z = jnp.maximum(h * s2_ref[...] + t2_ref[...], 0.0) * mask
    hpad[Wp + 1:Wp + 1 + M, :] = z.astype(hpad.dtype)

    # ---- conv2 + shortcut + fused output bias ---------------------------------
    acc = conv3x3(hpad, w2_ref, Cout)
    if identity_sc:                 # in_planes == planes: skip the 1x1 matmul
        acc = acc + x
    else:
        acc = acc + jnp.dot(x.astype(wsc_ref.dtype), wsc_ref[...],
                            preferred_element_type=jnp.float32)
    o_ref[...] = (acc + bout_ref[...]).astype(o_ref.dtype)


def wide_basic_forward(x_nchw, p, *, stride=1, eps=1e-5):
    # TODO(synk): stride > 1 would require strided output sampling in the
    # kernel; this instantiation (like the module default) uses stride=1.
    assert stride == 1
    N, Cin, H, W = x_nchw.shape
    planes = p["w1"].shape[0]
    Wp = W + 2
    M = H * Wp                               # rows per image, flat W-padded layout
    RP = _round_up((H + 2) * Wp + 2, 8)      # padded-scratch rows (+2 slice overrun)

    # BN (eval mode, running stats) folded to scale/shift; conv1 bias folded
    # into shift2; conv2 bias (+ shortcut bias) folded into one output bias.
    scale1 = p["g1"] / jnp.sqrt(p["v1"] + eps)
    shift1 = p["be1"] - p["m1"] * scale1
    scale2 = p["g2"] / jnp.sqrt(p["v2"] + eps)
    shift2 = p["be2"] - p["m2"] * scale2 + scale2 * p["b1"]

    # OIHW -> (tap, Cin, Cout) bf16 weights (MXU-native operands, f32 accum).
    w1k = jnp.transpose(p["w1"], (2, 3, 1, 0)).reshape(9, Cin, planes)
    w1k = w1k.astype(jnp.bfloat16)
    w2k = jnp.transpose(p["w2"], (2, 3, 1, 0)).reshape(9, planes, planes)
    w2k = w2k.astype(jnp.bfloat16)

    identity_sc = p.get("wsc") is None
    if identity_sc:
        assert Cin == planes
        wsck = jnp.zeros((1, 1), jnp.bfloat16)                  # unused dummy
        bout = p["b2"]
    else:
        wsck = p["wsc"][:, :, 0, 0].T.astype(jnp.bfloat16)      # (Cin, planes)
        bout = p["b2"] + p["bsc"]

    # x -> flat, W-zero-padded NHWC slab (N, H*Wp, Cin).
    # TODO(synk): for HBM-bound early layers on v5e this slab could be bf16.
    x_nhwc = jnp.transpose(x_nchw, (0, 2, 3, 1)).astype(jnp.float32)
    x_flat = jnp.pad(x_nhwc, ((0, 0), (0, 0), (1, 1), (0, 0))).reshape(N, M, Cin)

    # Column-validity mask: 1.0 on columns 1..W of every Wp-row.
    col = jnp.arange(M, dtype=jnp.int32) % Wp
    mask = ((col >= 1) & (col <= W)).astype(jnp.float32)[:, None]

    # Modest VMEM request (footprint here is tiny); stay well under per-core
    # capacity so the x/out double buffers keep headroom (v7x: 64 MiB physical).
    vmem_limit = 32 * 1024 * 1024
    try:
        cap = pltpu.get_tpu_info().vmem_capacity_bytes
        vmem_limit = min(vmem_limit, max(cap // 2, cap - 16 * 1024 * 1024))
    except Exception:
        pass

    kernel = functools.partial(wide_basic_kernel, identity_sc, H, Wp)
    out_flat = pl.pallas_call(
        kernel,
        out_shape=jax.ShapeDtypeStruct((N, M, planes), jnp.float32),
        grid=(N,),
        in_specs=[
            pl.BlockSpec((M, 1), lambda n: (0, 0)),                  # column mask
            pl.BlockSpec((None, M, Cin), lambda n: (n, 0, 0)),       # x (flat)
            pl.BlockSpec((1, Cin), lambda n: (0, 0)),                # bn1 scale
            pl.BlockSpec((1, Cin), lambda n: (0, 0)),                # bn1 shift
            pl.BlockSpec((9, Cin, planes), lambda n: (0, 0, 0)),     # w1 taps
            pl.BlockSpec((1, planes), lambda n: (0, 0)),             # bn2 scale
            pl.BlockSpec((1, planes), lambda n: (0, 0)),             # bn2 shift(+b1)
            pl.BlockSpec((9, planes, planes), lambda n: (0, 0, 0)),  # w2 taps
            pl.BlockSpec(wsck.shape, lambda n: (0, 0)),              # 1x1 shortcut
            pl.BlockSpec((1, planes), lambda n: (0, 0)),             # fused bias
        ],
        out_specs=pl.BlockSpec((None, M, planes), lambda n: (n, 0, 0)),
        scratch_shapes=[
            pltpu.VMEM((RP, Cin), jnp.bfloat16),      # zero-halo relu(bn1(x))
            pltpu.VMEM((RP, planes), jnp.bfloat16),   # zero-halo relu(bn2(h))
        ],
        compiler_params=pltpu.CompilerParams(
            # TODO(synk): at production widths (C~640, 32x32) add an H-band grid
            # axis (>=2N parallel points for v7x's 2 TCs) and block several
            # images per step for the late 8x8 stages so the MXU M-dim is >=256
            # and the per-step footprint fits v7x's 64 MiB VMEM.
            dimension_semantics=("parallel",),
            vmem_limit_bytes=vmem_limit,
        ),
    )(mask, x_flat, scale1[None, :], shift1[None, :], w1k,
      scale2[None, :], shift2[None, :], w2k, wsck, bout[None, :])

    out = out_flat.reshape(N, H, Wp, planes)[:, :, 1:W + 1, :]
    return jnp.transpose(out, (0, 3, 1, 2))      # back to NCHW


def reference_forward(x, p, eps=1e-5):
    """Pure-JAX NCHW reference mirroring the PyTorch module (eval mode)."""
    def bn(z, g, b, m, v):
        return (g[None, :, None, None] * (z - m[None, :, None, None])
                / jnp.sqrt(v[None, :, None, None] + eps) + b[None, :, None, None])

    def conv(z, w, b, pad):
        y = jax.lax.conv_general_dilated(
            z, w, window_strides=(1, 1), padding=((pad, pad), (pad, pad)),
            dimension_numbers=("NCHW", "OIHW", "NCHW"),
            precision=jax.lax.Precision.HIGHEST)
        return y + b[None, :, None, None]

    out = conv(jax.nn.relu(bn(x, p["g1"], p["be1"], p["m1"], p["v1"])),
               p["w1"], p["b1"], 1)
    out = conv(jax.nn.relu(bn(out, p["g2"], p["be2"], p["m2"], p["v2"])),
               p["w2"], p["b2"], 1)
    sc = conv(x, p["wsc"], p["bsc"], 0)
    return out + sc


if __name__ == "__main__":
    N, Cin, H, W = 2, 4, 16, 16
    planes = 8
    dropout_rate = 0.3   # eval mode -> identity

    key = jax.random.PRNGKey(0)
    ks = jax.random.split(key, 16)
    x = jax.random.normal(ks[0], (N, Cin, H, W), jnp.float32)   # NCHW like PyTorch

    p = {
        # bn1 (in_planes)
        "g1": 1.0 + 0.1 * jax.random.normal(ks[1], (Cin,), jnp.float32),
        "be1": 0.1 * jax.random.normal(ks[2], (Cin,), jnp.float32),
        "m1": 0.1 * jax.random.normal(ks[3], (Cin,), jnp.float32),
        "v1": 1.0 + 0.5 * jax.random.uniform(ks[4], (Cin,), jnp.float32),
        # conv1 (planes, in_planes, 3, 3)
        "w1": 0.1 * jax.random.normal(ks[5], (planes, Cin, 3, 3), jnp.float32),
        "b1": 0.1 * jax.random.normal(ks[6], (planes,), jnp.float32),
        # bn2 (planes)
        "g2": 1.0 + 0.1 * jax.random.normal(ks[7], (planes,), jnp.float32),
        "be2": 0.1 * jax.random.normal(ks[8], (planes,), jnp.float32),
        "m2": 0.1 * jax.random.normal(ks[9], (planes,), jnp.float32),
        "v2": 1.0 + 0.5 * jax.random.uniform(ks[10], (planes,), jnp.float32),
        # conv2 (planes, planes, 3, 3)
        "w2": 0.1 * jax.random.normal(ks[11], (planes, planes, 3, 3), jnp.float32),
        "b2": 0.1 * jax.random.normal(ks[12], (planes,), jnp.float32),
        # shortcut 1x1 conv (needed because in_planes != planes)
        "wsc": 0.1 * jax.random.normal(ks[13], (planes, Cin, 1, 1), jnp.float32),
        "bsc": 0.1 * jax.random.normal(ks[14], (planes,), jnp.float32),
    }

    out = wide_basic_forward(x, p, stride=1)
    out = jax.block_until_ready(out)
    assert out.shape == (N, planes, H, W), out.shape

    ref = jax.block_until_ready(reference_forward(x, p))
    err = float(jnp.max(jnp.abs(out - ref)))
    assert err < 2e-2, f"max abs error too large: {err}"

    print("KERNEL_OK")
</pallas_src>

<mosaic_0001>
module attributes {stable_mosaic.version = 11 : i64} {
  func.func @wide_basic_kernel(%arg0: i32, %arg1: memref<288x1xf32, #tpu.memory_space<vmem>>, %arg2: memref<1x288x4xf32, #tpu.memory_space<vmem>>, %arg3: memref<1x4xf32, #tpu.memory_space<vmem>>, %arg4: memref<1x4xf32, #tpu.memory_space<vmem>>, %arg5: memref<9x4x8xbf16, #tpu.memory_space<vmem>>, %arg6: memref<1x8xf32, #tpu.memory_space<vmem>>, %arg7: memref<1x8xf32, #tpu.memory_space<vmem>>, %arg8: memref<9x8x8xbf16, #tpu.memory_space<vmem>>, %arg9: memref<4x8xbf16, #tpu.memory_space<vmem>>, %arg10: memref<1x8xf32, #tpu.memory_space<vmem>>, %arg11: memref<1x288x8xf32, #tpu.memory_space<vmem>>, %arg12: memref<328x4xbf16, #tpu.memory_space<vmem>>, %arg13: memref<328x8xbf16, #tpu.memory_space<vmem>>) attributes {dimension_semantics = [#tpu.dimension_semantics<parallel>], iteration_bounds = array<i64: 2>, scalar_prefetch = 0 : i64, scratch_operands = 2 : i64, tpu.core_type = #tpu.core_type<tc>, window_params = [{pipeline_mode = #tpu.pipeline_mode<synchronous>, transform_indices = @transform_0, window_bounds = array<i64: 288, 1>}, {transform_indices = @transform_1, window_bounds = array<i64: 1, 288, 4>}, {pipeline_mode = #tpu.pipeline_mode<synchronous>, transform_indices = @transform_2, window_bounds = array<i64: 1, 4>}, {pipeline_mode = #tpu.pipeline_mode<synchronous>, transform_indices = @transform_3, window_bounds = array<i64: 1, 4>}, {pipeline_mode = #tpu.pipeline_mode<synchronous>, transform_indices = @transform_4, window_bounds = array<i64: 9, 4, 8>}, {pipeline_mode = #tpu.pipeline_mode<synchronous>, transform_indices = @transform_5, window_bounds = array<i64: 1, 8>}, {pipeline_mode = #tpu.pipeline_mode<synchronous>, transform_indices = @transform_6, window_bounds = array<i64: 1, 8>}, {pipeline_mode = #tpu.pipeline_mode<synchronous>, transform_indices = @transform_7, window_bounds = array<i64: 9, 8, 8>}, {pipeline_mode = #tpu.pipeline_mode<synchronous>, transform_indices = @transform_8, window_bounds = array<i64: 4, 8>}, {pipeline_mode = #tpu.pipeline_mode<synchronous>, transform_indices = @transform_9, window_bounds = array<i64: 1, 8>}, {transform_indices = @transform_10, window_bounds = array<i64: 1, 288, 8>}]} {
    %cst = arith.constant 0.000000e+00 : bf16
    %0 = vector.broadcast %cst : bf16 to vector<19x4xbf16>
    %c0 = arith.constant 0 : index
    %c0_0 = arith.constant 0 : index
    %1 = vector.load %arg12[%c0, %c0_0] : memref<328x4xbf16, #tpu.memory_space<vmem>>, vector<19x4xbf16>
    tpu.vector_store %arg12[%c0, %c0_0], %0 {strides = array<i32>} : memref<328x4xbf16, #tpu.memory_space<vmem>>, vector<19x4xbf16>,
    %cst_1 = arith.constant 0.000000e+00 : bf16
    %2 = vector.broadcast %cst_1 : bf16 to vector<21x4xbf16>
    %c307 = arith.constant 307 : index
    %c0_2 = arith.constant 0 : index
    %3 = vector.load %arg12[%c307, %c0_2] : memref<328x4xbf16, #tpu.memory_space<vmem>>, vector<21x4xbf16>
    tpu.vector_store %arg12[%c307, %c0_2], %2 {strides = array<i32>} : memref<328x4xbf16, #tpu.memory_space<vmem>>, vector<21x4xbf16>,
    %cst_3 = arith.constant 0.000000e+00 : bf16
    %4 = vector.broadcast %cst_3 : bf16 to vector<19x8xbf16>
    %c0_4 = arith.constant 0 : index
    %c0_5 = arith.constant 0 : index
    %5 = vector.load %arg13[%c0_4, %c0_5] : memref<328x8xbf16, #tpu.memory_space<vmem>>, vector<19x8xbf16>
    tpu.vector_store %arg13[%c0_4, %c0_5], %4 {strides = array<i32>} : memref<328x8xbf16, #tpu.memory_space<vmem>>, vector<19x8xbf16>,
    %cst_6 = arith.constant 0.000000e+00 : bf16
    %6 = vector.broadcast %cst_6 : bf16 to vector<21x8xbf16>
    %c307_7 = arith.constant 307 : index
    %c0_8 = arith.constant 0 : index
    %7 = vector.load %arg13[%c307_7, %c0_8] : memref<328x8xbf16, #tpu.memory_space<vmem>>, vector<21x8xbf16>
    tpu.vector_store %arg13[%c307_7, %c0_8], %6 {strides = array<i32>} : memref<328x8xbf16, #tpu.memory_space<vmem>>, vector<21x8xbf16>,
    %c0_9 = arith.constant 0 : index
    %c0_10 = arith.constant 0 : index
    %8 = vector.load %arg1[%c0_9, %c0_10] : memref<288x1xf32, #tpu.memory_space<vmem>>, vector<288x1xf32>
    %c0_11 = arith.constant 0 : index
    %c0_12 = arith.constant 0 : index
    %c0_13 = arith.constant 0 : index
    %9 = vector.load %arg2[%c0_11, %c0_12, %c0_13] : memref<1x288x4xf32, #tpu.memory_space<vmem>>, vector<1x288x4xf32>
    %10 = vector.shape_cast %9 : vector<1x288x4xf32> to vector<288x4xf32>
    %c0_14 = arith.constant 0 : index
    %c0_15 = arith.constant 0 : index
    %11 = vector.load %arg3[%c0_14, %c0_15] : memref<1x4xf32, #tpu.memory_space<vmem>>, vector<1x4xf32>
    %12 = vector.broadcast %11 : vector<1x4xf32> to vector<288x4xf32>
    %13 = arith.mulf %10, %12 : vector<288x4xf32>
    %c0_16 = arith.constant 0 : index
    %c0_17 = arith.constant 0 : index
    %14 = vector.load %arg4[%c0_16, %c0_17] : memref<1x4xf32, #tpu.memory_space<vmem>>, vector<1x4xf32>
    %15 = vector.broadcast %14 : vector<1x4xf32> to vector<288x4xf32>
    %16 = arith.addf %13, %15 : vector<288x4xf32>
    %cst_18 = arith.constant 0.000000e+00 : f32
    %17 = vector.broadcast %cst_18 : f32 to vector<288x4xf32>
    %18 = arith.maximumf %16, %17 : vector<288x4xf32>
    %19 = vector.broadcast %8 : vector<288x1xf32> to vector<288x4xf32>
    %20 = arith.mulf %18, %19 : vector<288x4xf32>
    %21 = arith.truncf %20 : vector<288x4xf32> to vector<288x4xbf16>
    %c19 = arith.constant 19 : index
    %c0_19 = arith.constant 0 : index
    %22 = vector.load %arg12[%c19, %c0_19] : memref<328x4xbf16, #tpu.memory_space<vmem>>, vector<288x4xbf16>
    tpu.vector_store %arg12[%c19, %c0_19], %21 {strides = array<i32>} : memref<328x4xbf16, #tpu.memory_space<vmem>>, vector<288x4xbf16>,
    %cst_20 = arith.constant 0.000000e+00 : f32
    %23 = vector.broadcast %cst_20 : f32 to vector<288x8xf32>
    %c0_21 = arith.constant 0 : index
    %c0_22 = arith.constant 0 : index
    %24 = vector.load %arg12[%c0_21, %c0_22] : memref<328x4xbf16, #tpu.memory_space<vmem>>, vector<288x4xbf16>
    %c0_23 = arith.constant 0 : index
    %c0_24 = arith.constant 0 : index
    %c0_25 = arith.constant 0 : index
    %25 = vector.load %arg5[%c0_23, %c0_24, %c0_25] : memref<9x4x8xbf16, #tpu.memory_space<vmem>>, vector<1x4x8xbf16>
    %26 = vector.shape_cast %25 : vector<1x4x8xbf16> to vector<4x8xbf16>
    %cst_26 = arith.constant dense<0.000000e+00> : vector<288x8xf32>
    %27 = tpu.matmul %24, %26, %cst_26 {dimension_numbers = #tpu.dot_dimension_numbers<[1], [0], [0], [1], [0, 0, 1, 1], [], []>} : vector<288x4xbf16>, vector<4x8xbf16>, vector<288x8xf32> -> vector<288x8xf32>
    %28 = arith.addf %23, %27 : vector<288x8xf32>
    %c1 = arith.constant 1 : index
    %c0_27 = arith.constant 0 : index
    %29 = vector.load %arg12[%c1, %c0_27] : memref<328x4xbf16, #tpu.memory_space<vmem>>, vector<288x4xbf16>
    %c1_28 = arith.constant 1 : index
    %c0_29 = arith.constant 0 : index
    %c0_30 = arith.constant 0 : index
    %30 = vector.load %arg5[%c1_28, %c0_29, %c0_30] : memref<9x4x8xbf16, #tpu.memory_space<vmem>>, vector<1x4x8xbf16>
    %31 = vector.shape_cast %30 : vector<1x4x8xbf16> to vector<4x8xbf16>
    %cst_31 = arith.constant dense<0.000000e+00> : vector<288x8xf32>
    %32 = tpu.matmul %29, %31, %cst_31 {dimension_numbers = #tpu.dot_dimension_numbers<[1], [0], [0], [1], [0, 0, 1, 1], [], []>} : vector<288x4xbf16>, vector<4x8xbf16>, vector<288x8xf32> -> vector<288x8xf32>
    %33 = arith.addf %28, %32 : vector<288x8xf32>
    %c2 = arith.constant 2 : index
    %c0_32 = arith.constant 0 : index
    %34 = vector.load %arg12[%c2, %c0_32] : memref<328x4xbf16, #tpu.memory_space<vmem>>, vector<288x4xbf16>
    %c2_33 = arith.constant 2 : index
    %c0_34 = arith.constant 0 : index
    %c0_35 = arith.constant 0 : index
    %35 = vector.load %arg5[%c2_33, %c0_34, %c0_35] : memref<9x4x8xbf16, #tpu.memory_space<vmem>>, vector<1x4x8xbf16>
    %36 = vector.shape_cast %35 : vector<1x4x8xbf16> to vector<4x8xbf16>
    %cst_36 = arith.constant dense<0.000000e+00> : vector<288x8xf32>
    %37 = tpu.matmul %34, %36, %cst_36 {dimension_numbers = #tpu.dot_dimension_numbers<[1], [0], [0], [1], [0, 0, 1, 1], [], []>} : vector<288x4xbf16>, vector<4x8xbf16>, vector<288x8xf32> -> vector<288x8xf32>
    %38 = arith.addf %33, %37 : vector<288x8xf32>
    %c18 = arith.constant 18 : index
    %c0_37 = arith.constant 0 : index
    %39 = vector.load %arg12[%c18, %c0_37] : memref<328x4xbf16, #tpu.memory_space<vmem>>, vector<288x4xbf16>
    %c3 = arith.constant 3 : index
    %c0_38 = arith.constant 0 : index
    %c0_39 = arith.constant 0 : index
    %40 = vector.load %arg5[%c3, %c0_38, %c0_39] : memref<9x4x8xbf16, #tpu.memory_space<vmem>>, vector<1x4x8xbf16>
    %41 = vector.shape_cast %40 : vector<1x4x8xbf16> to vector<4x8xbf16>
    %cst_40 = arith.constant dense<0.000000e+00> : vector<288x8xf32>
    %42 = tpu.matmul %39, %41, %cst_40 {dimension_numbers = #tpu.dot_dimension_numbers<[1], [0], [0], [1], [0, 0, 1, 1], [], []>} : vector<288x4xbf16>, vector<4x8xbf16>, vector<288x8xf32> -> vector<288x8xf32>
    %43 = arith.addf %38, %42 : vector<288x8xf32>
    %c19_41 = arith.constant 19 : index
    %c0_42 = arith.constant 0 : index
    %44 = vector.load %arg12[%c19_41, %c0_42] : memref<328x4xbf16, #tpu.memory_space<vmem>>, vector<288x4xbf16>
    %c4 = arith.constant 4 : index
    %c0_43 = arith.constant 0 : index
    %c0_44 = arith.constant 0 : index
    %45 = vector.load %arg5[%c4, %c0_43, %c0_44] : memref<9x4x8xbf16, #tpu.memory_space<vmem>>, vector<1x4x8xbf16>
    %46 = vector.shape_cast %45 : vector<1x4x8xbf16> to vector<4x8xbf16>
    %cst_45 = arith.constant dense<0.000000e+00> : vector<288x8xf32>
    %47 = tpu.matmul %44, %46, %cst_45 {dimension_numbers = #tpu.dot_dimension_numbers<[1], [0], [0], [1], [0, 0, 1, 1], [], []>} : vector<288x4xbf16>, vector<4x8xbf16>, vector<288x8xf32> -> vector<288x8xf32>
    %48 = arith.addf %43, %47 : vector<288x8xf32>
    %c20 = arith.constant 20 : index
    %c0_46 = arith.constant 0 : index
    %49 = vector.load %arg12[%c20, %c0_46] : memref<328x4xbf16, #tpu.memory_space<vmem>>, vector<288x4xbf16>
    %c5 = arith.constant 5 : index
    %c0_47 = arith.constant 0 : index
    %c0_48 = arith.constant 0 : index
    %50 = vector.load %arg5[%c5, %c0_47, %c0_48] : memref<9x4x8xbf16, #tpu.memory_space<vmem>>, vector<1x4x8xbf16>
    %51 = vector.shape_cast %50 : vector<1x4x8xbf16> to vector<4x8xbf16>
    %cst_49 = arith.constant dense<0.000000e+00> : vector<288x8xf32>
    %52 = tpu.matmul %49, %51, %cst_49 {dimension_numbers = #tpu.dot_dimension_numbers<[1], [0], [0], [1], [0, 0, 1, 1], [], []>} : vector<288x4xbf16>, vector<4x8xbf16>, vector<288x8xf32> -> vector<288x8xf32>
    %53 = arith.addf %48, %52 : vector<288x8xf32>
    %c36 = arith.constant 36 : index
    %c0_50 = arith.constant 0 : index
    %54 = vector.load %arg12[%c36, %c0_50] : memref<328x4xbf16, #tpu.memory_space<vmem>>, vector<288x4xbf16>
    %c6 = arith.constant 6 : index
    %c0_51 = arith.constant 0 : index
    %c0_52 = arith.constant 0 : index
    %55 = vector.load %arg5[%c6, %c0_51, %c0_52] : memref<9x4x8xbf16, #tpu.memory_space<vmem>>, vector<1x4x8xbf16>
    %56 = vector.shape_cast %55 : vector<1x4x8xbf16> to vector<4x8xbf16>
    %cst_53 = arith.constant dense<0.000000e+00> : vector<288x8xf32>
    %57 = tpu.matmul %54, %56, %cst_53 {dimension_numbers = #tpu.dot_dimension_numbers<[1], [0], [0], [1], [0, 0, 1, 1], [], []>} : vector<288x4xbf16>, vector<4x8xbf16>, vector<288x8xf32> -> vector<288x8xf32>
    %58 = arith.addf %53, %57 : vector<288x8xf32>
    %c37 = arith.constant 37 : index
    %c0_54 = arith.constant 0 : index
    %59 = vector.load %arg12[%c37, %c0_54] : memref<328x4xbf16, #tpu.memory_space<vmem>>, vector<288x4xbf16>
    %c7 = arith.constant 7 : index
    %c0_55 = arith.constant 0 : index
    %c0_56 = arith.constant 0 : index
    %60 = vector.load %arg5[%c7, %c0_55, %c0_56] : memref<9x4x8xbf16, #tpu.memory_space<vmem>>, vector<1x4x8xbf16>
    %61 = vector.shape_cast %60 : vector<1x4x8xbf16> to vector<4x8xbf16>
    %cst_57 = arith.constant dense<0.000000e+00> : vector<288x8xf32>
    %62 = tpu.matmul %59, %61, %cst_57 {dimension_numbers = #tpu.dot_dimension_numbers<[1], [0], [0], [1], [0, 0, 1, 1], [], []>} : vector<288x4xbf16>, vector<4x8xbf16>, vector<288x8xf32> -> vector<288x8xf32>
    %63 = arith.addf %58, %62 : vector<288x8xf32>
    %c38 = arith.constant 38 : index
    %c0_58 = arith.constant 0 : index
    %64 = vector.load %arg12[%c38, %c0_58] : memref<328x4xbf16, #tpu.memory_space<vmem>>, vector<288x4xbf16>
    %c8 = arith.constant 8 : index
    %c0_59 = arith.constant 0 : index
    %c0_60 = arith.constant 0 : index
    %65 = vector.load %arg5[%c8, %c0_59, %c0_60] : memref<9x4x8xbf16, #tpu.memory_space<vmem>>, vector<1x4x8xbf16>
    %66 = vector.shape_cast %65 : vector<1x4x8xbf16> to vector<4x8xbf16>
    %cst_61 = arith.constant dense<0.000000e+00> : vector<288x8xf32>
    %67 = tpu.matmul %64, %66, %cst_61 {dimension_numbers = #tpu.dot_dimension_numbers<[1], [0], [0], [1], [0, 0, 1, 1], [], []>} : vector<288x4xbf16>, vector<4x8xbf16>, vector<288x8xf32> -> vector<288x8xf32>
    %68 = arith.addf %63, %67 : vector<288x8xf32>
    %c0_62 = arith.constant 0 : index
    %c0_63 = arith.constant 0 : index
    %69 = vector.load %arg6[%c0_62, %c0_63] : memref<1x8xf32, #tpu.memory_space<vmem>>, vector<1x8xf32>
    %70 = vector.broadcast %69 : vector<1x8xf32> to vector<288x8xf32>
    %71 = arith.mulf %68, %70 : vector<288x8xf32>
    %c0_64 = arith.constant 0 : index
    %c0_65 = arith.constant 0 : index
    %72 = vector.load %arg7[%c0_64, %c0_65] : memref<1x8xf32, #tpu.memory_space<vmem>>, vector<1x8xf32>
    %73 = vector.broadcast %72 : vector<1x8xf32> to vector<288x8xf32>
    %74 = arith.addf %71, %73 : vector<288x8xf32>
    %cst_66 = arith.constant 0.000000e+00 : f32
    %75 = vector.broadcast %cst_66 : f32 to vector<288x8xf32>
    %76 = arith.maximumf %74, %75 : vector<288x8xf32>
    %77 = vector.broadcast %8 : vector<288x1xf32> to vector<288x8xf32>
    %78 = arith.mulf %76, %77 : vector<288x8xf32>
    %79 = arith.truncf %78 : vector<288x8xf32> to vector<288x8xbf16>
    %c19_67 = arith.constant 19 : index
    %c0_68 = arith.constant 0 : index
    %80 = vector.load %arg13[%c19_67, %c0_68] : memref<328x8xbf16, #tpu.memory_space<vmem>>, vector<288x8xbf16>
    tpu.vector_store %arg13[%c19_67, %c0_68], %79 {strides = array<i32>} : memref<328x8xbf16, #tpu.memory_space<vmem>>, vector<288x8xbf16>,
    %cst_69 = arith.constant 0.000000e+00 : f32
    %81 = vector.broadcast %cst_69 : f32 to vector<288x8xf32>
    %c0_70 = arith.constant 0 : index
    %c0_71 = arith.constant 0 : index
    %82 = vector.load %arg13[%c0_70, %c0_71] : memref<328x8xbf16, #tpu.memory_space<vmem>>, vector<288x8xbf16>
    %c0_72 = arith.constant 0 : index
    %c0_73 = arith.constant 0 : index
    %c0_74 = arith.constant 0 : index
    %83 = vector.load %arg8[%c0_72, %c0_73, %c0_74] : memref<9x8x8xbf16, #tpu.memory_space<vmem>>, vector<1x8x8xbf16>
    %84 = vector.shape_cast %83 : vector<1x8x8xbf16> to vector<8x8xbf16>
    %cst_75 = arith.constant dense<0.000000e+00> : vector<288x8xf32>
    %85 = tpu.matmul %82, %84, %cst_75 {dimension_numbers = #tpu.dot_dimension_numbers<[1], [0], [0], [1], [0, 0, 1, 1], [], []>} : vector<288x8xbf16>, vector<8x8xbf16>, vector<288x8xf32> -> vector<288x8xf32>
    %86 = arith.addf %81, %85 : vector<288x8xf32>
    %c1_76 = arith.constant 1 : index
    %c0_77 = arith.constant 0 : index
    %87 = vector.load %arg13[%c1_76, %c0_77] : memref<328x8xbf16, #tpu.memory_space<vmem>>, vector<288x8xbf16>
    %c1_78 = arith.constant 1 : index
    %c0_79 = arith.constant 0 : index
    %c0_80 = arith.constant 0 : index
    %88 = vector.load %arg8[%c1_78, %c0_79, %c0_80] : memref<9x8x8xbf16, #tpu.memory_space<vmem>>, vector<1x8x8xbf16>
    %89 = vector.shape_cast %88 : vector<1x8x8xbf16> to vector<8x8xbf16>
    %cst_81 = arith.constant dense<0.000000e+00> : vector<288x8xf32>
    %90 = tpu.matmul %87, %89, %cst_81 {dimension_numbers = #tpu.dot_dimension_numbers<[1], [0], [0], [1], [0, 0, 1, 1], [], []>} : vector<288x8xbf16>, vector<8x8xbf16>, vector<288x8xf32> -> vector<288x8xf32>
    %91 = arith.addf %86, %90 : vector<288x8xf32>
    %c2_82 = arith.constant 2 : index
    %c0_83 = arith.constant 0 : index
    %92 = vector.load %arg13[%c2_82, %c0_83] : memref<328x8xbf16, #tpu.memory_space<vmem>>, vector<288x8xbf16>
    %c2_84 = arith.constant 2 : index
    %c0_85 = arith.constant 0 : index
    %c0_86 = arith.constant 0 : index
    %93 = vector.load %arg8[%c2_84, %c0_85, %c0_86] : memref<9x8x8xbf16, #tpu.memory_space<vmem>>, vector<1x8x8xbf16>
    %94 = vector.shape_cast %93 : vector<1x8x8xbf16> to vector<8x8xbf16>
    %cst_87 = arith.constant dense<0.000000e+00> : vector<288x8xf32>
    %95 = tpu.matmul %92, %94, %cst_87 {dimension_numbers = #tpu.dot_dimension_numbers<[1], [0], [0], [1], [0, 0, 1, 1], [], []>} : vector<288x8xbf16>, vector<8x8xbf16>, vector<288x8xf32> -> vector<288x8xf32>
    %96 = arith.addf %91, %95 : vector<288x8xf32>
    %c18_88 = arith.constant 18 : index
    %c0_89 = arith.constant 0 : index
    %97 = vector.load %arg13[%c18_88, %c0_89] : memref<328x8xbf16, #tpu.memory_space<vmem>>, vector<288x8xbf16>
    %c3_90 = arith.constant 3 : index
    %c0_91 = arith.constant 0 : index
    %c0_92 = arith.constant 0 : index
    %98 = vector.load %arg8[%c3_90, %c0_91, %c0_92] : memref<9x8x8xbf16, #tpu.memory_space<vmem>>, vector<1x8x8xbf16>
    %99 = vector.shape_cast %98 : vector<1x8x8xbf16> to vector<8x8xbf16>
    %cst_93 = arith.constant dense<0.000000e+00> : vector<288x8xf32>
    %100 = tpu.matmul %97, %99, %cst_93 {dimension_numbers = #tpu.dot_dimension_numbers<[1], [0], [0], [1], [0, 0, 1, 1], [], []>} : vector<288x8xbf16>, vector<8x8xbf16>, vector<288x8xf32> -> vector<288x8xf32>
    %101 = arith.addf %96, %100 : vector<288x8xf32>
    %c19_94 = arith.constant 19 : index
    %c0_95 = arith.constant 0 : index
    %102 = vector.load %arg13[%c19_94, %c0_95] : memref<328x8xbf16, #tpu.memory_space<vmem>>, vector<288x8xbf16>
    %c4_96 = arith.constant 4 : index
    %c0_97 = arith.constant 0 : index
    %c0_98 = arith.constant 0 : index
    %103 = vector.load %arg8[%c4_96, %c0_97, %c0_98] : memref<9x8x8xbf16, #tpu.memory_space<vmem>>, vector<1x8x8xbf16>
    %104 = vector.shape_cast %103 : vector<1x8x8xbf16> to vector<8x8xbf16>
    %cst_99 = arith.constant dense<0.000000e+00> : vector<288x8xf32>
    %105 = tpu.matmul %102, %104, %cst_99 {dimension_numbers = #tpu.dot_dimension_numbers<[1], [0], [0], [1], [0, 0, 1, 1], [], []>} : vector<288x8xbf16>, vector<8x8xbf16>, vector<288x8xf32> -> vector<288x8xf32>
    %106 = arith.addf %101, %105 : vector<288x8xf32>
    %c20_100 = arith.constant 20 : index
    %c0_101 = arith.constant 0 : index
    %107 = vector.load %arg13[%c20_100, %c0_101] : memref<328x8xbf16, #tpu.memory_space<vmem>>, vector<288x8xbf16>
    %c5_102 = arith.constant 5 : index
    %c0_103 = arith.constant 0 : index
    %c0_104 = arith.constant 0 : index
    %108 = vector.load %arg8[%c5_102, %c0_103, %c0_104] : memref<9x8x8xbf16, #tpu.memory_space<vmem>>, vector<1x8x8xbf16>
    %109 = vector.shape_cast %108 : vector<1x8x8xbf16> to vector<8x8xbf16>
    %cst_105 = arith.constant dense<0.000000e+00> : vector<288x8xf32>
    %110 = tpu.matmul %107, %109, %cst_105 {dimension_numbers = #tpu.dot_dimension_numbers<[1], [0], [0], [1], [0, 0, 1, 1], [], []>} : vector<288x8xbf16>, vector<8x8xbf16>, vector<288x8xf32> -> vector<288x8xf32>
    %111 = arith.addf %106, %110 : vector<288x8xf32>
    %c36_106 = arith.constant 36 : index
    %c0_107 = arith.constant 0 : index
    %112 = vector.load %arg13[%c36_106, %c0_107] : memref<328x8xbf16, #tpu.memory_space<vmem>>, vector<288x8xbf16>
    %c6_108 = arith.constant 6 : index
    %c0_109 = arith.constant 0 : index
    %c0_110 = arith.constant 0 : index
    %113 = vector.load %arg8[%c6_108, %c0_109, %c0_110] : memref<9x8x8xbf16, #tpu.memory_space<vmem>>, vector<1x8x8xbf16>
    %114 = vector.shape_cast %113 : vector<1x8x8xbf16> to vector<8x8xbf16>
    %cst_111 = arith.constant dense<0.000000e+00> : vector<288x8xf32>
    %115 = tpu.matmul %112, %114, %cst_111 {dimension_numbers = #tpu.dot_dimension_numbers<[1], [0], [0], [1], [0, 0, 1, 1], [], []>} : vector<288x8xbf16>, vector<8x8xbf16>, vector<288x8xf32> -> vector<288x8xf32>
    %116 = arith.addf %111, %115 : vector<288x8xf32>
    %c37_112 = arith.constant 37 : index
    %c0_113 = arith.constant 0 : index
    %117 = vector.load %arg13[%c37_112, %c0_113] : memref<328x8xbf16, #tpu.memory_space<vmem>>, vector<288x8xbf16>
    %c7_114 = arith.constant 7 : index
    %c0_115 = arith.constant 0 : index
    %c0_116 = arith.constant 0 : index
    %118 = vector.load %arg8[%c7_114, %c0_115, %c0_116] : memref<9x8x8xbf16, #tpu.memory_space<vmem>>, vector<1x8x8xbf16>
    %119 = vector.shape_cast %118 : vector<1x8x8xbf16> to vector<8x8xbf16>
    %cst_117 = arith.constant dense<0.000000e+00> : vector<288x8xf32>
    %120 = tpu.matmul %117, %119, %cst_117 {dimension_numbers = #tpu.dot_dimension_numbers<[1], [0], [0], [1], [0, 0, 1, 1], [], []>} : vector<288x8xbf16>, vector<8x8xbf16>, vector<288x8xf32> -> vector<288x8xf32>
    %121 = arith.addf %116, %120 : vector<288x8xf32>
    %c38_118 = arith.constant 38 : index
    %c0_119 = arith.constant 0 : index
    %122 = vector.load %arg13[%c38_118, %c0_119] : memref<328x8xbf16, #tpu.memory_space<vmem>>, vector<288x8xbf16>
    %c8_120 = arith.constant 8 : index
    %c0_121 = arith.constant 0 : index
    %c0_122 = arith.constant 0 : index
    %123 = vector.load %arg8[%c8_120, %c0_121, %c0_122] : memref<9x8x8xbf16, #tpu.memory_space<vmem>>, vector<1x8x8xbf16>
    %124 = vector.shape_cast %123 : vector<1x8x8xbf16> to vector<8x8xbf16>
    %cst_123 = arith.constant dense<0.000000e+00> : vector<288x8xf32>
    %125 = tpu.matmul %122, %124, %cst_123 {dimension_numbers = #tpu.dot_dimension_numbers<[1], [0], [0], [1], [0, 0, 1, 1], [], []>} : vector<288x8xbf16>, vector<8x8xbf16>, vector<288x8xf32> -> vector<288x8xf32>
    %126 = arith.addf %121, %125 : vector<288x8xf32>
    %127 = arith.truncf %10 : vector<288x4xf32> to vector<288x4xbf16>
    %c0_124 = arith.constant 0 : index
    %c0_125 = arith.constant 0 : index
    %128 = vector.load %arg9[%c0_124, %c0_125] : memref<4x8xbf16, #tpu.memory_space<vmem>>, vector<4x8xbf16>
    %cst_126 = arith.constant dense<0.000000e+00> : vector<288x8xf32>
    %129 = tpu.matmul %127, %128, %cst_126 {dimension_numbers = #tpu.dot_dimension_numbers<[1], [0], [0], [1], [0, 0, 1, 1], [], []>} : vector<288x4xbf16>, vector<4x8xbf16>, vector<288x8xf32> -> vector<288x8xf32>
    %130 = arith.addf %126, %129 : vector<288x8xf32>
    %c0_127 = arith.constant 0 : index
    %c0_128 = arith.constant 0 : index
    %131 = vector.load %arg10[%c0_127, %c0_128] : memref<1x8xf32, #tpu.memory_space<vmem>>, vector<1x8xf32>
    %132 = vector.broadcast %131 : vector<1x8xf32> to vector<288x8xf32>
    %133 = arith.addf %130, %132 : vector<288x8xf32>
    %c0_129 = arith.constant 0 : index
    %c0_130 = arith.constant 0 : index
    %c0_131 = arith.constant 0 : index
    %134 = vector.load %arg11[%c0_129, %c0_130, %c0_131] : memref<1x288x8xf32, #tpu.memory_space<vmem>>, vector<1x288x8xf32>
    %135 = vector.shape_cast %134 : vector<1x288x8xf32> to vector<288x8xf32>
    %136 = vector.shape_cast %133 : vector<288x8xf32> to vector<1x288x8xf32>
    tpu.vector_store %arg11[%c0_129, %c0_130, %c0_131], %136 {strides = array<i32>} : memref<1x288x8xf32, #tpu.memory_space<vmem>>, vector<1x288x8xf32>,
    return
  }
  func.func @transform_0(%arg0: i32) -> (i32, i32) {
    %c0_i32 = arith.constant 0 : i32
    %c0_i32_0 = arith.constant 0 : i32
    %c0_i32_1 = arith.constant 0 : i32
    return %c0_i32, %c0_i32_0 : i32, i32
  }
  func.func @transform_1(%arg0: i32) -> (i32, i32, i32) {
    %c0_i32 = arith.constant 0 : i32
    %c0_i32_0 = arith.constant 0 : i32
    %c0_i32_1 = arith.constant 0 : i32
    return %arg0, %c0_i32, %c0_i32_0 : i32, i32, i32
  }
  func.func @transform_2(%arg0: i32) -> (i32, i32) {
    %c0_i32 = arith.constant 0 : i32
    %c0_i32_0 = arith.constant 0 : i32
    %c0_i32_1 = arith.constant 0 : i32
    return %c0_i32, %c0_i32_0 : i32, i32
  }
  func.func @transform_3(%arg0: i32) -> (i32, i32) {
    %c0_i32 = arith.constant 0 : i32
    %c0_i32_0 = arith.constant 0 : i32
    %c0_i32_1 = arith.constant 0 : i32
    return %c0_i32, %c0_i32_0 : i32, i32
  }
  func.func @transform_4(%arg0: i32) -> (i32, i32, i32) {
    %c0_i32 = arith.constant 0 : i32
    %c0_i32_0 = arith.constant 0 : i32
    %c0_i32_1 = arith.constant 0 : i32
    %c0_i32_2 = arith.constant 0 : i32
    return %c0_i32, %c0_i32_0, %c0_i32_1 : i32, i32, i32
  }
  func.func @transform_5(%arg0: i32) -> (i32, i32) {
    %c0_i32 = arith.constant 0 : i32
    %c0_i32_0 = arith.constant 0 : i32
    %c0_i32_1 = arith.constant 0 : i32
    return %c0_i32, %c0_i32_0 : i32, i32
  }
  func.func @transform_6(%arg0: i32) -> (i32, i32) {
    %c0_i32 = arith.constant 0 : i32
    %c0_i32_0 = arith.constant 0 : i32
    %c0_i32_1 = arith.constant 0 : i32
    return %c0_i32, %c0_i32_0 : i32, i32
  }
  func.func @transform_7(%arg0: i32) -> (i32, i32, i32) {
    %c0_i32 = arith.constant 0 : i32
    %c0_i32_0 = arith.constant 0 : i32
    %c0_i32_1 = arith.constant 0 : i32
    %c0_i32_2 = arith.constant 0 : i32
    return %c0_i32, %c0_i32_0, %c0_i32_1 : i32, i32, i32
  }
  func.func @transform_8(%arg0: i32) -> (i32, i32) {
    %c0_i32 = arith.constant 0 : i32
    %c0_i32_0 = arith.constant 0 : i32
    %c0_i32_1 = arith.constant 0 : i32
    return %c0_i32, %c0_i32_0 : i32, i32
  }
  func.func @transform_9(%arg0: i32) -> (i32, i32) {
    %c0_i32 = arith.constant 0 : i32
    %c0_i32_0 = arith.constant 0 : i32
    %c0_i32_1 = arith.constant 0 : i32
    return %c0_i32, %c0_i32_0 : i32, i32
  }
  func.func @transform_10(%arg0: i32) -> (i32, i32, i32) {
    %c0_i32 = arith.constant 0 : i32
    %c0_i32_0 = arith.constant 0 : i32
    %c0_i32_1 = arith.constant 0 : i32
    return %arg0, %c0_i32, %c0_i32_0 : i32, i32, i32
  }
}

</mosaic_0001>

<llo_original>
// kernel: tpu_custom_call.1
$region0: #{tpu_custom_call.1}
  #allocation0 [shape = 'u32[]', space=smem, size = 0x4, offset = 0x4, fixed_abs, tag = 'smem constant byte address 0x4 - core index']
  #allocation1 [shape = 'u32[144,128]{1,0:T(1,128)}', space=vmem, size = 0x12000, scoped, tag = 'internal scratch']
  #allocation2 [shape = 'bf16[328,4]{1,0:T(8,128)(2,1)}', space=vmem, size = 0x14800, scoped, tag = 'scratch operand']
  #allocation3 [shape = 'bf16[328,8]{1,0:T(8,128)(2,1)}', space=vmem, size = 0x14800, scoped, tag = 'scratch operand']
  %s0 = inlined_call_operand.vmem [shape: f32[288,1], index: 0, kind: input, shape index: {}]
  %s1 = inlined_call_operand.vmem [shape: f32[2,288,4], index: 1, kind: input, shape index: {}]
  %s2 = inlined_call_operand.vmem [shape: f32[1,4], index: 2, kind: input, shape index: {}]
  %s3 = inlined_call_operand.vmem [shape: f32[1,4], index: 3, kind: input, shape index: {}]
  %s4 = inlined_call_operand.vmem [shape: bf16[9,4,8], index: 4, kind: input, shape index: {}]
  %s5 = inlined_call_operand.vmem [shape: f32[1,8], index: 5, kind: input, shape index: {}]
  %s6 = inlined_call_operand.vmem [shape: f32[1,8], index: 6, kind: input, shape index: {}]
  %s7 = inlined_call_operand.vmem [shape: bf16[9,8,8], index: 7, kind: input, shape index: {}]
  %s8 = inlined_call_operand.vmem [shape: bf16[4,8], index: 8, kind: input, shape index: {}]
  %s9 = inlined_call_operand.vmem [shape: f32[1,8], index: 9, kind: input, shape index: {}]
  %s10 = inlined_call_operand.vmem [shape: f32[2,288,8], index: 10, kind: output, shape index: {}]
  %s11 = sld [smem:[#allocation0]]
  $region73: #{tpu_custom_call.1} parent=0
    _
  %s13 = ssub.s32 1, %s11
  %s14 = scalar_select 0, %s13, %s11
  loop: start=0, step=1, limit=4
  $region2: #{tpu_custom_call.1} parent=0 // loop_pre_header
    _
  $region3: #{tpu_custom_call.1} parent=0 // loop_header
    %s16 = sphi 0, %s20
    %p17 = scmp.ge.s32.totalorder %s16, 4
    %s24 = sphi 0, %s24
    %s26 = sphi 0, %s24
    %s27 = sphi 0, %s26
    %s41 = sphi 0, %s27
    %s47 = sphi 0, %s49
    %s50 = sphi 0, %s47
    %s51 = sphi 0, %s50
    %s67 = sphi 0, %s51
    %s71 = sphi 0, %s71
    %s73 = sphi 0, %s71
    %s74 = sphi 0, %s73
    %s88 = sphi 0, %s74
    %s92 = sphi 0, %s92
    %s94 = sphi 0, %s92
    %s95 = sphi 0, %s94
    %s109 = sphi 0, %s95
    %s113 = sphi 0, %s113
    %s115 = sphi 0, %s113
    %s116 = sphi 0, %s115
    %s130 = sphi 0, %s116
    %s134 = sphi 0, %s134
    %s136 = sphi 0, %s134
    %s137 = sphi 0, %s136
    %s151 = sphi 0, %s137
    %s155 = sphi 0, %s155
    %s157 = sphi 0, %s155
    %s158 = sphi 0, %s157
    %s172 = sphi 0, %s158
    %s176 = sphi 0, %s176
    %s178 = sphi 0, %s176
    %s179 = sphi 0, %s178
    %s193 = sphi 0, %s179
    %s197 = sphi 0, %s197
    %s199 = sphi 0, %s197
    %s200 = sphi 0, %s199
    %s214 = sphi 0, %s200
    %s218 = sphi 0, %s218
    %s220 = sphi 0, %s218
    %s221 = sphi 0, %s220
    %s235 = sphi 0, %s221
    %s241 = sphi 0, %s243
    %s244 = sphi 0, %s241
    %s245 = sphi 0, %s244
    %s261 = sphi 0, %s245
  $region4: #{tpu_custom_call.1} parent=0 // loop_header_branch
    %19 = sbr.rel (%p17) target = $region8
  $region5: #{tpu_custom_call.1} parent=0 // loop_body
    %s21 = ssub.s32 %s16, 1
    %s22 = ssub.s32 %s16, 2
    %s23 = sadd.s32 %s16, 1
    %s25 = sadd.s32 %s24, 1
    %p28 = scmp.eq.s32.totalorder %s16, 1
    %p29 = scmp.ne.s32.totalorder %s24, %s26
    %p30 = scmp.eq.s32.totalorder %s16, 0
    %p31 = por %p29, %p30
    %p32 = scmp.ne.s32.totalorder %s24, %s26
    %p33 = scmp.eq.s32.totalorder %s21, 1
    %p34 = por %p32, %p33
    %p35 = scmp.ne.s32.totalorder %s26, %s27
    %p36 = scmp.eq.s32.totalorder %s21, 0
    %p37 = por %p35, %p36
    %p38 = scmp.ne.s32.totalorder %s26, %s27
    %p39 = scmp.eq.s32.totalorder %s22, 1
    %p40 = por %p38, %p39
    %p42 = scmp.ne.s32.totalorder %s27, %s41
    %p43 = scmp.eq.s32.totalorder %s22, 0
    %p44 = por %p42, %p43
    %s45 = ssub.s32 %s16, %s23
    %p46 = scmp.eq.s32.totalorder %s45, 0
    %s48 = sadd.s32 %s47, 1
    %s49 = scalar_select %p46, %s47, %s48
    %p52 = pneg %p46
    %p53 = scmp.eq.s32.totalorder %s16, 1
    %p54 = por %p52, %p53
    %p55 = scmp.ne.s32.totalorder %s47, %s50
    %p56 = scmp.eq.s32.totalorder %s16, 0
    %p57 = por %p55, %p56
    %p58 = scmp.ne.s32.totalorder %s47, %s50
    %p59 = scmp.eq.s32.totalorder %s21, 1
    %p60 = por %p58, %p59
    %p61 = scmp.ne.s32.totalorder %s50, %s51
    %p62 = scmp.eq.s32.totalorder %s21, 0
    %p63 = por %p61, %p62
    %p64 = scmp.ne.s32.totalorder %s50, %s51
    %p65 = scmp.eq.s32.totalorder %s22, 1
    %p66 = por %p64, %p65
    %p68 = scmp.ne.s32.totalorder %s51, %s67
    %p69 = scmp.eq.s32.totalorder %s22, 0
    %p70 = por %p68, %p69
    %s72 = sadd.s32 %s71, 1
    %p75 = scmp.eq.s32.totalorder %s16, 1
    %p76 = scmp.ne.s32.totalorder %s71, %s73
    %p77 = scmp.eq.s32.totalorder %s16, 0
    %p78 = por %p76, %p77
    %p79 = scmp.ne.s32.totalorder %s71, %s73
    %p80 = scmp.eq.s32.totalorder %s21, 1
    %p81 = por %p79, %p80
    %p82 = scmp.ne.s32.totalorder %s73, %s74
    %p83 = scmp.eq.s32.totalorder %s21, 0
    %p84 = por %p82, %p83
    %p85 = scmp.ne.s32.totalorder %s73, %s74
    %p86 = scmp.eq.s32.totalorder %s22, 1
    %p87 = por %p85, %p86
    %p89 = scmp.ne.s32.totalorder %s74, %s88
    %p90 = scmp.eq.s32.totalorder %s22, 0
    %p91 = por %p89, %p90
    %s93 = sadd.s32 %s92, 1
    %p96 = scmp.eq.s32.totalorder %s16, 1
    %p97 = scmp.ne.s32.totalorder %s92, %s94
    %p98 = scmp.eq.s32.totalorder %s16, 0
    %p99 = por %p97, %p98
    %p100 = scmp.ne.s32.totalorder %s92, %s94
    %p101 = scmp.eq.s32.totalorder %s21, 1
    %p102 = por %p100, %p101
    %p103 = scmp.ne.s32.totalorder %s94, %s95
    %p104 = scmp.eq.s32.totalorder %s21, 0
    %p105 = por %p103, %p104
    %p106 = scmp.ne.s32.totalorder %s94, %s95
    %p107 = scmp.eq.s32.totalorder %s22, 1
    %p108 = por %p106, %p107
    %p110 = scmp.ne.s32.totalorder %s95, %s109
    %p111 = scmp.eq.s32.totalorder %s22, 0
    %p112 = por %p110, %p111
    %s114 = sadd.s32 %s113, 1
    %p117 = scmp.eq.s32.totalorder %s16, 1
    %p118 = scmp.ne.s32.totalorder %s113, %s115
    %p119 = scmp.eq.s32.totalorder %s16, 0
    %p120 = por %p118, %p119
    %p121 = scmp.ne.s32.totalorder %s113, %s115
    %p122 = scmp.eq.s32.totalorder %s21, 1
    %p123 = por %p121, %p122
    %p124 = scmp.ne.s32.totalorder %s115, %s116
    %p125 = scmp.eq.s32.totalorder %s21, 0
    %p126 = por %p124, %p125
    %p127 = scmp.ne.s32.totalorder %s115, %s116
    %p128 = scmp.eq.s32.totalorder %s22, 1
    %p129 = por %p127, %p128
    %p131 = scmp.ne.s32.totalorder %s116, %s130
    %p132 = scmp.eq.s32.totalorder %s22, 0
    %p133 = por %p131, %p132
    %s135 = sadd.s32 %s134, 1
    %p138 = scmp.eq.s32.totalorder %s16, 1
    %p139 = scmp.ne.s32.totalorder %s134, %s136
    %p140 = scmp.eq.s32.totalorder %s16, 0
    %p141 = por %p139, %p140
    %p142 = scmp.ne.s32.totalorder %s134, %s136
    %p143 = scmp.eq.s32.totalorder %s21, 1
    %p144 = por %p142, %p143
    %p145 = scmp.ne.s32.totalorder %s136, %s137
    %p146 = scmp.eq.s32.totalorder %s21, 0
    %p147 = por %p145, %p146
    %p148 = scmp.ne.s32.totalorder %s136, %s137
    %p149 = scmp.eq.s32.totalorder %s22, 1
    %p150 = por %p148, %p149
    %p152 = scmp.ne.s32.totalorder %s137, %s151
    %p153 = scmp.eq.s32.totalorder %s22, 0
    %p154 = por %p152, %p153
    %s156 = sadd.s32 %s155, 1
    %p159 = scmp.eq.s32.totalorder %s16, 1
    %p160 = scmp.ne.s32.totalorder %s155, %s157
    %p161 = scmp.eq.s32.totalorder %s16, 0
    %p162 = por %p160, %p161
    %p163 = scmp.ne.s32.totalorder %s155, %s157
    %p164 = scmp.eq.s32.totalorder %s21, 1
    %p165 = por %p163, %p164
    %p166 = scmp.ne.s32.totalorder %s157, %s158
    %p167 = scmp.eq.s32.totalorder %s21, 0
    %p168 = por %p166, %p167
    %p169 = scmp.ne.s32.totalorder %s157, %s158
    %p170 = scmp.eq.s32.totalorder %s22, 1
    %p171 = por %p169, %p170
    %p173 = scmp.ne.s32.totalorder %s158, %s172
    %p174 = scmp.eq.s32.totalorder %s22, 0
    %p175 = por %p173, %p174
    %s177 = sadd.s32 %s176, 1
    %p180 = scmp.eq.s32.totalorder %s16, 1
    %p181 = scmp.ne.s32.totalorder %s176, %s178
    %p182 = scmp.eq.s32.totalorder %s16, 0
    %p183 = por %p181, %p182
    %p184 = scmp.ne.s32.totalorder %s176, %s178
    %p185 = scmp.eq.s32.totalorder %s21, 1
    %p186 = por %p184, %p185
    %p187 = scmp.ne.s32.totalorder %s178, %s179
    %p188 = scmp.eq.s32.totalorder %s21, 0
    %p189 = por %p187, %p188
    %p190 = scmp.ne.s32.totalorder %s178, %s179
    %p191 = scmp.eq.s32.totalorder %s22, 1
    %p192 = por %p190, %p191
    %p194 = scmp.ne.s32.totalorder %s179, %s193
    %p195 = scmp.eq.s32.totalorder %s22, 0
    %p196 = por %p194, %p195
    %s198 = sadd.s32 %s197, 1
    %p201 = scmp.eq.s32.totalorder %s16, 1
    %p202 = scmp.ne.s32.totalorder %s197, %s199
    %p203 = scmp.eq.s32.totalorder %s16, 0
    %p204 = por %p202, %p203
    %p205 = scmp.ne.s32.totalorder %s197, %s199
    %p206 = scmp.eq.s32.totalorder %s21, 1
    %p207 = por %p205, %p206
    %p208 = scmp.ne.s32.totalorder %s199, %s200
    %p209 = scmp.eq.s32.totalorder %s21, 0
    %p210 = por %p208, %p209
    %p211 = scmp.ne.s32.totalorder %s199, %s200
    %p212 = scmp.eq.s32.totalorder %s22, 1
    %p213 = por %p211, %p212
    %p215 = scmp.ne.s32.totalorder %s200, %s214
    %p216 = scmp.eq.s32.totalorder %s22, 0
    %p217 = por %p215, %p216
    %s219 = sadd.s32 %s218, 1
    %p222 = scmp.eq.s32.totalorder %s16, 1
    %p223 = scmp.ne.s32.totalorder %s218, %s220
    %p224 = scmp.eq.s32.totalorder %s16, 0
    %p225 = por %p223, %p224
    %p226 = scmp.ne.s32.totalorder %s218, %s220
    %p227 = scmp.eq.s32.totalorder %s21, 1
    %p228 = por %p226, %p227
    %p229 = scmp.ne.s32.totalorder %s220, %s221
    %p230 = scmp.eq.s32.totalorder %s21, 0
    %p231 = por %p229, %p230
    %p232 = scmp.ne.s32.totalorder %s220, %s221
    %p233 = scmp.eq.s32.totalorder %s22, 1
    %p234 = por %p232, %p233
    %p236 = scmp.ne.s32.totalorder %s221, %s235
    %p237 = scmp.eq.s32.totalorder %s22, 0
    %p238 = por %p236, %p237
    %s239 = ssub.s32 %s16, %s23
    %p240 = scmp.eq.s32.totalorder %s239, 0
    %s242 = sadd.s32 %s241, 1
    %s243 = scalar_select %p240, %s241, %s242
    %p246 = pneg %p240
    %p247 = scmp.eq.s32.totalorder %s16, 1
    %p248 = por %p246, %p247
    %p249 = scmp.ne.s32.totalorder %s241, %s244
    %p250 = scmp.eq.s32.totalorder %s16, 0
    %p251 = por %p249, %p250
    %p252 = scmp.ne.s32.totalorder %s241, %s244
    %p253 = scmp.eq.s32.totalorder %s21, 1
    %p254 = por %p252, %p253
    %p255 = scmp.ne.s32.totalorder %s244, %s245
    %p256 = scmp.eq.s32.totalorder %s21, 0
    %p257 = por %p255, %p256
    %p258 = scmp.ne.s32.totalorder %s244, %s245
    %p259 = scmp.eq.s32.totalorder %s22, 1
    %p260 = por %p258, %p259
    %p262 = scmp.ne.s32.totalorder %s245, %s261
    %p263 = scmp.eq.s32.totalorder %s22, 0
    %p264 = por %p262, %p263
    %p265 = scmp.le.s32.totalorder 1, %s16
    %p266 = scmp.lt.s32.totalorder %s16, 3
    %p267 = pnand %p265, %p266
    %p268 = pneg %p267
    // Predicated region
    $region9: #{tpu_custom_call.1} parent=5 // pred_check
      _
    $region10: #{tpu_custom_call.1} parent=5 // pred_check_branch
      %270 = sbr.rel (%p267) target = $region12
    $region11: #{tpu_custom_call.1} parent=5 // pred_region
      %s271 = ssub.s32 %s16, 1
      // Predicated region
      $region13: #{tpu_custom_call.1} parent=11 // pred_check
        %p272 = pneg %p37
      $region14: #{tpu_custom_call.1} parent=11 // pred_check_branch
        %274 = sbr.rel (%p272) target = $region16
      $region15: #{tpu_custom_call.1} parent=11 // pred_region
        _
      $region16: #{tpu_custom_call.1} parent=11 // pred_fallthru
        _
      // Predicated region
      $region17: #{tpu_custom_call.1} parent=11 // pred_check
        %p275 = pneg %p84
      $region18: #{tpu_custom_call.1} parent=11 // pred_check_branch
        %277 = sbr.rel (%p275) target = $region20
      $region19: #{tpu_custom_call.1} parent=11 // pred_region
        _
      $region20: #{tpu_custom_call.1} parent=11 // pred_fallthru
        _
      // Predicated region
      $region21: #{tpu_custom_call.1} parent=11 // pred_check
        %p278 = pneg %p105
      $region22: #{tpu_custom_call.1} parent=11 // pred_check_branch
        %280 = sbr.rel (%p278) target = $region24
      $region23: #{tpu_custom_call.1} parent=11 // pred_region
        _
      $region24: #{tpu_custom_call.1} parent=11 // pred_fallthru
        _
      // Predicated region
      $region25: #{tpu_custom_call.1} parent=11 // pred_check
        %p281 = pneg %p126
      $region26: #{tpu_custom_call.1} parent=11 // pred_check_branch
        %283 = sbr.rel (%p281) target = $region28
      $region27: #{tpu_custom_call.1} parent=11 // pred_region
        _
      $region28: #{tpu_custom_call.1} parent=11 // pred_fallthru
        _
      // Predicated region
      $region29: #{tpu_custom_call.1} parent=11 // pred_check
        %p284 = pneg %p147
      $region30: #{tpu_custom_call.1} parent=11 // pred_check_branch
        %286 = sbr.rel (%p284) target = $region32
      $region31: #{tpu_custom_call.1} parent=11 // pred_region
        _
      $region32: #{tpu_custom_call.1} parent=11 // pred_fallthru
        _
      // Predicated region
      $region33: #{tpu_custom_call.1} parent=11 // pred_check
        %p287 = pneg %p168
      $region34: #{tpu_custom_call.1} parent=11 // pred_check_branch
        %289 = sbr.rel (%p287) target = $region36
      $region35: #{tpu_custom_call.1} parent=11 // pred_region
        _
      $region36: #{tpu_custom_call.1} parent=11 // pred_fallthru
        _
      // Predicated region
      $region37: #{tpu_custom_call.1} parent=11 // pred_check
        %p290 = pneg %p189
      $region38: #{tpu_custom_call.1} parent=11 // pred_check_branch
        %292 = sbr.rel (%p290) target = $region40
      $region39: #{tpu_custom_call.1} parent=11 // pred_region
        _
      $region40: #{tpu_custom_call.1} parent=11 // pred_fallthru
        _
      // Predicated region
      $region41: #{tpu_custom_call.1} parent=11 // pred_check
        %p293 = pneg %p210
      $region42: #{tpu_custom_call.1} parent=11 // pred_check_branch
        %295 = sbr.rel (%p293) target = $region44
      $region43: #{tpu_custom_call.1} parent=11 // pred_region
        _
      $region44: #{tpu_custom_call.1} parent=11 // pred_fallthru
        _
      // Predicated region
      $region45: #{tpu_custom_call.1} parent=11 // pred_check
        %p296 = pneg %p231
      $region46: #{tpu_custom_call.1} parent=11 // pred_check_branch
        %298 = sbr.rel (%p296) target = $region48
      $region47: #{tpu_custom_call.1} parent=11 // pred_region
        _
      $region48: #{tpu_custom_call.1} parent=11 // pred_fallthru
        _
    $region12: #{tpu_custom_call.1} parent=5 // pred_fallthru
      _
    %p299 = scmp.lt.s32.totalorder %s16, 2
    // Predicated region
    $region49: #{tpu_custom_call.1} parent=5 // pred_check
      %p300 = pneg %p299
    $region50: #{tpu_custom_call.1} parent=5 // pred_check_branch
      %302 = sbr.rel (%p300) target = $region52
    $region51: #{tpu_custom_call.1} parent=5 // pred_region
      // Predicated region
      $region53: #{tpu_custom_call.1} parent=51 // pred_check
        %p303 = pneg %p57
      $region54: #{tpu_custom_call.1} parent=51 // pred_check_branch
        %305 = sbr.rel (%p303) target = $region56
      $region55: #{tpu_custom_call.1} parent=51 // pred_region
        %p306 = scmp.lt.s32.totalorder %s16, 1
        %s307 = scalar_select %p306, %s16, 1
        %s308 = smul.addr %s307, 36
        %s309 = smul.addr %s308, 8
        %s310 = scalar_lea.vmem %s1, %s309
      $region56: #{tpu_custom_call.1} parent=51 // pred_fallthru
        _
    $region52: #{tpu_custom_call.1} parent=5 // pred_fallthru
      _
    %p311 = scmp.le.s32.totalorder 1, %s16
    %p312 = scmp.lt.s32.totalorder %s16, 3
    %p313 = pnand %p311, %p312
    %p314 = pneg %p313
    // Predicated region
    $region57: #{tpu_custom_call.1} parent=5 // pred_check
      _
    $region58: #{tpu_custom_call.1} parent=5 // pred_check_branch
      %316 = sbr.rel (%p313) target = $region60
    $region59: #{tpu_custom_call.1} parent=5 // pred_region
      %s317 = ssub.s32 %s16, 1
      %p318 = pneg %p37
      %p319 = pneg %p34
      %p320 = scmp.lt.s32.totalorder %s21, 1
      %s321 = scalar_select %p320, %s21, 1
      %s322 = smul.addr %s321, 36
      %s323 = smul.addr %s322, 8
      %s324 = scalar_lea.vmem %s1, %s323
      %p325 = pneg %p63
      %p326 = pneg %p60
      %p327 = pneg %p84
      %p328 = pneg %p81
      %p329 = pneg %p105
      %p330 = pneg %p102
      %p331 = pneg %p126
      %p332 = pneg %p123
      %p333 = pneg %p147
      %p334 = pneg %p144
      %p335 = pneg %p168
      %p336 = pneg %p165
      %p337 = pneg %p189
      %p338 = pneg %p186
      %p339 = pneg %p210
      %p340 = pneg %p207
      %p341 = pneg %p231
      %p342 = pneg %p228
      %p343 = pneg %p257
      %p344 = pneg %p254
      %p345 = scmp.lt.s32.totalorder %s21, 1
      %s346 = scalar_select %p345, %s21, 1
      %s347 = smul.addr %s346, 36
      %s348 = smul.addr %s347, 8
      %s349 = scalar_lea.vmem %s10, %s348
      %p350 = scmp.lt.s32.totalorder %s21, 1
      %s351 = scalar_select %p350, %s21, 1
      %s352 = smul.addr %s351, 36
      %s353 = smul.addr %s352, 8
      %s354 = scalar_lea.vmem %s1, %s353
      %p355 = scmp.lt.s32.totalorder %s21, 1
      %s356 = scalar_select %p355, %s21, 1
      %s357 = smul.addr %s356, 36
      %s358 = smul.addr %s357, 8
      %s359 = scalar_lea.vmem %s10, %s358
      %vm361 = vcmask 27648
      %362 = vst.msk [vmem:[#allocation2] sm:$0xf] %vm361, 0
      %363 = vst.msk [vmem:[#allocation2 + $0x4] sm:$0xf] %vm361, 0
      %vm364 = vcmask 25600
      %vm365 = vsmask.f32 1280
      %vm366 = vmand %vm364, %vm365
      %v367 = vld [vmem:[#allocation2 + $0x8] sm:$0x3]
      %v368 = vsel %vm366, 0, %v367
      %369 = vst [vmem:[#allocation2 + $0x8] sm:$0x3] %v368
      %vm370 = vcmask 27649
      %vm371 = vsmask.f32 7942
      %vm372 = vmand %vm370, %vm371
      %v373 = vld [vmem:[#allocation2 + $0x98] sm:$0xe]
      %v374 = vsel %vm372, 0, %v373
      %375 = vst [vmem:[#allocation2 + $0x98] sm:$0xe] %v374
      %376 = vst.msk [vmem:[#allocation2 + $0x9c] sm:$0xf] %vm361, 0
      %377 = vst.msk [vmem:[#allocation2 + $0xa0] sm:$0xf] %vm361, 0
      %vm378 = vcmask 60416
      %379 = vst.msk [vmem:[#allocation3] sm:$0xf] %vm378, 0
      %380 = vst.msk [vmem:[#allocation3 + $0x4] sm:$0xf] %vm378, 0
      %vm381 = vcmask 58368
      %vm382 = vmand %vm381, %vm365
      %v383 = vld [vmem:[#allocation3 + $0x8] sm:$0x3]
      %v384 = vsel %vm382, 0, %v383
      %385 = vst [vmem:[#allocation3 + $0x8] sm:$0x3] %v384
      %vm386 = vcmask 60417
      %vm387 = vmand %vm386, %vm371
      %v388 = vld [vmem:[#allocation3 + $0x98] sm:$0xe]
      %v389 = vsel %vm387, 0, %v388
      %390 = vst [vmem:[#allocation3 + $0x98] sm:$0xe] %v389
      %391 = vst.msk [vmem:[#allocation3 + $0x9c] sm:$0xf] %vm378, 0
      %392 = vst.msk [vmem:[#allocation3 + $0xa0] sm:$0xf] %vm378, 0
      %v393 = vld [vmem:[%s0] sm:$0xff]
      %v394 = vld [vmem:[%s0 + $0x8] sm:$0xff]
      %v395 = vld [vmem:[%s0 + $0x10] sm:$0xff]
      %v396 = vld [vmem:[%s0 + $0x18] sm:$0xff]
      %v397 = vld [vmem:[%s0 + $0x20] sm:$0xff]
      %v398 = vld [vmem:[%s0 + $0x28] sm:$0xff]
      %v399 = vld [vmem:[%s0 + $0x30] sm:$0xff]
      %v400 = vld [vmem:[%s0 + $0x38] sm:$0xff]
      %v401 = vld [vmem:[%s0 + $0x40] sm:$0xff]
      %v402 = vld [vmem:[%s0 + $0x48] sm:$0xff]
      %v403 = vld [vmem:[%s0 + $0x50] sm:$0xff]
      %v404 = vld [vmem:[%s0 + $0x58] sm:$0xff]
      %v405 = vld [vmem:[%s0 + $0x60] sm:$0xff]
      %v406 = vld [vmem:[%s0 + $0x68] sm:$0xff]
      %v407 = vld [vmem:[%s0 + $0x70] sm:$0xff]
      %v408 = vld [vmem:[%s0 + $0x78] sm:$0xff]
      %v409 = vld [vmem:[%s0 + $0x80] sm:$0xff]
      %v410 = vld [vmem:[%s0 + $0x88] sm:$0xff]
      %v411 = vld [vmem:[%s0 + $0x90] sm:$0xff]
      %v412 = vld [vmem:[%s0 + $0x98] sm:$0xff]
      %v413 = vld [vmem:[%s0 + $0xa0] sm:$0xff]
      %v414 = vld [vmem:[%s0 + $0xa8] sm:$0xff]
      %v415 = vld [vmem:[%s0 + $0xb0] sm:$0xff]
      %v416 = vld [vmem:[%s0 + $0xb8] sm:$0xff]
      %v417 = vld [vmem:[%s0 + $0xc0] sm:$0xff]
      %v418 = vld [vmem:[%s0 + $0xc8] sm:$0xff]
      %v419 = vld [vmem:[%s0 + $0xd0] sm:$0xff]
      %v420 = vld [vmem:[%s0 + $0xd8] sm:$0xff]
      %v421 = vld [vmem:[%s0 + $0xe0] sm:$0xff]
      %v422 = vld [vmem:[%s0 + $0xe8] sm:$0xff]
      %v423 = vld [vmem:[%s0 + $0xf0] sm:$0xff]
      %v424 = vld [vmem:[%s0 + $0xf8] sm:$0xff]
      %v425 = vld [vmem:[%s0 + $0x100] sm:$0xff]
      %v426 = vld [vmem:[%s0 + $0x108] sm:$0xff]
      %v427 = vld [vmem:[%s0 + $0x110] sm:$0xff]
      %v428 = vld [vmem:[%s0 + $0x118] sm:$0xff]
      %v429 = vld [vmem:[%s354] sm:$0xff]
      %v430 = vld [vmem:[%s354 + $0x8] sm:$0xff]
      %v431 = vld [vmem:[%s354 + $0x10] sm:$0xff]
      %v432 = vld [vmem:[%s354 + $0x18] sm:$0xff]
      %v433 = vld [vmem:[%s354 + $0x20] sm:$0xff]
      %v434 = vld [vmem:[%s354 + $0x28] sm:$0xff]
      %v435 = vld [vmem:[%s354 + $0x30] sm:$0xff]
      %v436 = vld [vmem:[%s354 + $0x38] sm:$0xff]
      %v437 = vld [vmem:[%s354 + $0x40] sm:$0xff]
      %v438 = vld [vmem:[%s354 + $0x48] sm:$0xff]
      %v439 = vld [vmem:[%s354 + $0x50] sm:$0xff]
      %v440 = vld [vmem:[%s354 + $0x58] sm:$0xff]
      %v441 = vld [vmem:[%s354 + $0x60] sm:$0xff]
      %v442 = vld [vmem:[%s354 + $0x68] sm:$0xff]
      %v443 = vld [vmem:[%s354 + $0x70] sm:$0xff]
      %v444 = vld [vmem:[%s354 + $0x78] sm:$0xff]
      %v445 = vld [vmem:[%s354 + $0x80] sm:$0xff]
      %v446 = vld [vmem:[%s354 + $0x88] sm:$0xff]
      %v447 = vld [vmem:[%s354 + $0x90] sm:$0xff]
      %v448 = vld [vmem:[%s354 + $0x98] sm:$0xff]
      %v449 = vld [vmem:[%s354 + $0xa0] sm:$0xff]
      %v450 = vld [vmem:[%s354 + $0xa8] sm:$0xff]
      %v451 = vld [vmem:[%s354 + $0xb0] sm:$0xff]
      %v452 = vld [vmem:[%s354 + $0xb8] sm:$0xff]
      %v453 = vld [vmem:[%s354 + $0xc0] sm:$0xff]
      %v454 = vld [vmem:[%s354 + $0xc8] sm:$0xff]
      %v455 = vld [vmem:[%s354 + $0xd0] sm:$0xff]
      %v456 = vld [vmem:[%s354 + $0xd8] sm:$0xff]
      %v457 = vld [vmem:[%s354 + $0xe0] sm:$0xff]
      %v458 = vld [vmem:[%s354 + $0xe8] sm:$0xff]
      %v459 = vld [vmem:[%s354 + $0xf0] sm:$0xff]
      %v460 = vld [vmem:[%s354 + $0xf8] sm:$0xff]
      %v461 = vld [vmem:[%s354 + $0x100] sm:$0xff]
      %v462 = vld [vmem:[%s354 + $0x108] sm:$0xff]
      %v463 = vld [vmem:[%s354 + $0x110] sm:$0xff]
      %v464 = vld [vmem:[%s354 + $0x118] sm:$0xff]
      %v465 = vld [vmem:[%s2] sm:$0x1]
      %v467 = vlaneseq
      %v468 = vshrl.u32 %v467, 7
      %v469 = vsub.s32 0, %v468
      %v470 = vrot.slane %v465, %v469
      %v472 = vmul.f32 %v429, %v470
      %v473 = vmul.f32 %v430, %v470
      %v474 = vmul.f32 %v431, %v470
      %v475 = vmul.f32 %v432, %v470
      %v476 = vmul.f32 %v433, %v470
      %v477 = vmul.f32 %v434, %v470
      %v478 = vmul.f32 %v435, %v470
      %v479 = vmul.f32 %v436, %v470
      %v480 = vmul.f32 %v437, %v470
      %v481 = vmul.f32 %v438, %v470
      %v482 = vmul.f32 %v439, %v470
      %v483 = vmul.f32 %v440, %v470
      %v484 = vmul.f32 %v441, %v470
      %v485 = vmul.f32 %v442, %v470
      %v486 = vmul.f32 %v443, %v470
      %v487 = vmul.f32 %v444, %v470
      %v488 = vmul.f32 %v445, %v470
      %v489 = vmul.f32 %v446, %v470
      %v490 = vmul.f32 %v447, %v470
      %v491 = vmul.f32 %v448, %v470
      %v492 = vmul.f32 %v449, %v470
      %v493 = vmul.f32 %v450, %v470
      %v494 = vmul.f32 %v451, %v470
      %v495 = vmul.f32 %v452, %v470
      %v496 = vmul.f32 %v453, %v470
      %v497 = vmul.f32 %v454, %v470
      %v498 = vmul.f32 %v455, %v470
      %v499 = vmul.f32 %v456, %v470
      %v500 = vmul.f32 %v457, %v470
      %v501 = vmul.f32 %v458, %v470
      %v502 = vmul.f32 %v459, %v470
      %v503 = vmul.f32 %v460, %v470
      %v504 = vmul.f32 %v461, %v470
      %v505 = vmul.f32 %v462, %v470
      %v506 = vmul.f32 %v463, %v470
      %v507 = vmul.f32 %v464, %v470
      %v508 = vld [vmem:[%s3] sm:$0x1]
      %v510 = vlaneseq
      %v511 = vshrl.u32 %v510, 7
      %v512 = vsub.s32 0, %v511
      %v513 = vrot.slane %v508, %v512
      %v515 = vadd.f32 %v472, %v513
      %v516 = vadd.f32 %v473, %v513
      %v517 = vadd.f32 %v474, %v513
      %v518 = vadd.f32 %v475, %v513
      %v519 = vadd.f32 %v476, %v513
      %v520 = vadd.f32 %v477, %v513
      %v521 = vadd.f32 %v478, %v513
      %v522 = vadd.f32 %v479, %v513
      %v523 = vadd.f32 %v480, %v513
      %v524 = vadd.f32 %v481, %v513
      %v525 = vadd.f32 %v482, %v513
      %v526 = vadd.f32 %v483, %v513
      %v527 = vadd.f32 %v484, %v513
      %v528 = vadd.f32 %v485, %v513
      %v529 = vadd.f32 %v486, %v513
      %v530 = vadd.f32 %v487, %v513
      %v531 = vadd.f32 %v488, %v513
      %v532 = vadd.f32 %v489, %v513
      %v533 = vadd.f32 %v490, %v513
      %v534 = vadd.f32 %v491, %v513
      %v535 = vadd.f32 %v492, %v513
      %v536 = vadd.f32 %v493, %v513
      %v537 = vadd.f32 %v494, %v513
      %v538 = vadd.f32 %v495, %v513
      %v539 = vadd.f32 %v496, %v513
      %v540 = vadd.f32 %v497, %v513
      %v541 = vadd.f32 %v498, %v513
      %v542 = vadd.f32 %v499, %v513
      %v543 = vadd.f32 %v500, %v513
      %v544 = vadd.f32 %v501, %v513
      %v545 = vadd.f32 %v502, %v513
      %v546 = vadd.f32 %v503, %v513
      %v547 = vadd.f32 %v504, %v513
      %v548 = vadd.f32 %v505, %v513
      %v549 = vadd.f32 %v506, %v513
      %v550 = vadd.f32 %v507, %v513
      %v551 = vmax.f32 %v515, 0.0
      %v552 = vmax.f32 %v516, 0.0
      %v553 = vmax.f32 %v517, 0.0
      %v554 = vmax.f32 %v518, 0.0
      %v555 = vmax.f32 %v519, 0.0
      %v556 = vmax.f32 %v520, 0.0
      %v557 = vmax.f32 %v521, 0.0
      %v558 = vmax.f32 %v522, 0.0
      %v559 = vmax.f32 %v523, 0.0
      %v560 = vmax.f32 %v524, 0.0
      %v561 = vmax.f32 %v525, 0.0
      %v562 = vmax.f32 %v526, 0.0
      %v563 = vmax.f32 %v527, 0.0
      %v564 = vmax.f32 %v528, 0.0
      %v565 = vmax.f32 %v529, 0.0
      %v566 = vmax.f32 %v530, 0.0
      %v567 = vmax.f32 %v531, 0.0
      %v568 = vmax.f32 %v532, 0.0
      %v569 = vmax.f32 %v533, 0.0
      %v570 = vmax.f32 %v534, 0.0
      %v571 = vmax.f32 %v535, 0.0
      %v572 = vmax.f32 %v536, 0.0
      %v573 = vmax.f32 %v537, 0.0
      %v574 = vmax.f32 %v538, 0.0
      %v575 = vmax.f32 %v539, 0.0
      %v576 = vmax.f32 %v540, 0.0
      %v577 = vmax.f32 %v541, 0.0
      %v578 = vmax.f32 %v542, 0.0
      %v579 = vmax.f32 %v543, 0.0
      %v580 = vmax.f32 %v544, 0.0
      %v581 = vmax.f32 %v545, 0.0
      %v582 = vmax.f32 %v546, 0.0
      %v583 = vmax.f32 %v547, 0.0
      %v584 = vmax.f32 %v548, 0.0
      %v585 = vmax.f32 %v549, 0.0
      %v586 = vmax.f32 %v550, 0.0
      %588 = vset.pattern.permute.xlu0 0
      %589 = vperm.xlu0 %588, %v393
      %v590 = vpop.permute.xlu0 %589
      %593 = vset.pattern.permute.xlu0 0
      %594 = vperm.xlu0 %593, %v394
      %v595 = vpop.permute.xlu0 %594
      %598 = vset.pattern.permute.xlu0 0
      %599 = vperm.xlu0 %598, %v395
      %v600 = vpop.permute.xlu0 %599
      %603 = vset.pattern.permute.xlu0 0
      %604 = vperm.xlu0 %603, %v396
      %v605 = vpop.permute.xlu0 %604
      %608 = vset.pattern.permute.xlu0 0
      %609 = vperm.xlu0 %608, %v397
      %v610 = vpop.permute.xlu0 %609
      %613 = vset.pattern.permute.xlu0 0
      %614 = vperm.xlu0 %613, %v398
      %v615 = vpop.permute.xlu0 %614
      %618 = vset.pattern.permute.xlu0 0
      %619 = vperm.xlu0 %618, %v399
      %v620 = vpop.permute.xlu0 %619
      %623 = vset.pattern.permute.xlu0 0
      %624 = vperm.xlu0 %623, %v400
      %v625 = vpop.permute.xlu0 %624
      %628 = vset.pattern.permute.xlu0 0
      %629 = vperm.xlu0 %628, %v401
      %v630 = vpop.permute.xlu0 %629
      %633 = vset.pattern.permute.xlu0 0
      %634 = vperm.xlu0 %633, %v402
      %v635 = vpop.permute.xlu0 %634
      %638 = vset.pattern.permute.xlu0 0
      %639 = vperm.xlu0 %638, %v403
      %v640 = vpop.permute.xlu0 %639
      %643 = vset.pattern.permute.xlu0 0
      %644 = vperm.xlu0 %643, %v404
      %v645 = vpop.permute.xlu0 %644
      %648 = vset.pattern.permute.xlu0 0
      %649 = vperm.xlu0 %648, %v405
      %v650 = vpop.permute.xlu0 %649
      %653 = vset.pattern.permute.xlu0 0
      %654 = vperm.xlu0 %653, %v406
      %v655 = vpop.permute.xlu0 %654
      %658 = vset.pattern.permute.xlu0 0
      %659 = vperm.xlu0 %658, %v407
      %v660 = vpop.permute.xlu0 %659
      %663 = vset.pattern.permute.xlu0 0
      %664 = vperm.xlu0 %663, %v408
      %v665 = vpop.permute.xlu0 %664
      %668 = vset.pattern.permute.xlu0 0
      %669 = vperm.xlu0 %668, %v409
      %v670 = vpop.permute.xlu0 %669
      %673 = vset.pattern.permute.xlu0 0
      %674 = vperm.xlu0 %673, %v410
      %v675 = vpop.permute.xlu0 %674
      %678 = vset.pattern.permute.xlu0 0
      %679 = vperm.xlu0 %678, %v411
      %v680 = vpop.permute.xlu0 %679
      %683 = vset.pattern.permute.xlu0 0
      %684 = vperm.xlu0 %683, %v412
      %v685 = vpop.permute.xlu0 %684
      %688 = vset.pattern.permute.xlu0 0
      %689 = vperm.xlu0 %688, %v413
      %v690 = vpop.permute.xlu0 %689
      %693 = vset.pattern.permute.xlu0 0
      %694 = vperm.xlu0 %693, %v414
      %v695 = vpop.permute.xlu0 %694
      %698 = vset.pattern.permute.xlu0 0
      %699 = vperm.xlu0 %698, %v415
      %v700 = vpop.permute.xlu0 %699
      %703 = vset.pattern.permute.xlu0 0
      %704 = vperm.xlu0 %703, %v416
      %v705 = vpop.permute.xlu0 %704
      %708 = vset.pattern.permute.xlu0 0
      %709 = vperm.xlu0 %708, %v417
      %v710 = vpop.permute.xlu0 %709
      %713 = vset.pattern.permute.xlu0 0
      %714 = vperm.xlu0 %713, %v418
      %v715 = vpop.permute.xlu0 %714
      %718 = vset.pattern.permute.xlu0 0
      %719 = vperm.xlu0 %718, %v419
      %v720 = vpop.permute.xlu0 %719
      %723 = vset.pattern.permute.xlu0 0
      %724 = vperm.xlu0 %723, %v420
      %v725 = vpop.permute.xlu0 %724
      %728 = vset.pattern.permute.xlu0 0
      %729 = vperm.xlu0 %728, %v421
      %v730 = vpop.permute.xlu0 %729
      %733 = vset.pattern.permute.xlu0 0
      %734 = vperm.xlu0 %733, %v422
      %v735 = vpop.permute.xlu0 %734
      %738 = vset.pattern.permute.xlu0 0
      %739 = vperm.xlu0 %738, %v423
      %v740 = vpop.permute.xlu0 %739
      %743 = vset.pattern.permute.xlu0 0
      %744 = vperm.xlu0 %743, %v424
      %v745 = vpop.permute.xlu0 %744
      %748 = vset.pattern.permute.xlu0 0
      %749 = vperm.xlu0 %748, %v425
      %v750 = vpop.permute.xlu0 %749
      %753 = vset.pattern.permute.xlu0 0
      %754 = vperm.xlu0 %753, %v426
      %v755 = vpop.permute.xlu0 %754
      %758 = vset.pattern.permute.xlu0 0
      %759 = vperm.xlu0 %758, %v427
      %v760 = vpop.permute.xlu0 %759
      %763 = vset.pattern.permute.xlu0 0
      %764 = vperm.xlu0 %763, %v428
      %v765 = vpop.permute.xlu0 %764
      %v767 = vmul.f32 %v551, %v590
      %v768 = vmul.f32 %v552, %v595
      %v769 = vmul.f32 %v553, %v600
      %v770 = vmul.f32 %v554, %v605
      %v771 = vmul.f32 %v555, %v610
      %v772 = vmul.f32 %v556, %v615
      %v773 = vmul.f32 %v557, %v620
      %v774 = vmul.f32 %v558, %v625
      %v775 = vmul.f32 %v559, %v630
      %v776 = vmul.f32 %v560, %v635
      %v777 = vmul.f32 %v561, %v640
      %v778 = vmul.f32 %v562, %v645
      %v779 = vmul.f32 %v563, %v650
      %v780 = vmul.f32 %v564, %v655
      %v781 = vmul.f32 %v565, %v660
      %v782 = vmul.f32 %v566, %v665
      %v783 = vmul.f32 %v567, %v670
      %v784 = vmul.f32 %v568, %v675
      %v785 = vmul.f32 %v569, %v680
      %v786 = vmul.f32 %v570, %v685
      %v787 = vmul.f32 %v571, %v690
      %v788 = vmul.f32 %v572, %v695
      %v789 = vmul.f32 %v573, %v700
      %v790 = vmul.f32 %v574, %v705
      %v791 = vmul.f32 %v575, %v710
      %v792 = vmul.f32 %v576, %v715
      %v793 = vmul.f32 %v577, %v720
      %v794 = vmul.f32 %v578, %v725
      %v795 = vmul.f32 %v579, %v730
      %v796 = vmul.f32 %v580, %v735
      %v797 = vmul.f32 %v581, %v740
      %v798 = vmul.f32 %v582, %v745
      %v799 = vmul.f32 %v583, %v750
      %v800 = vmul.f32 %v584, %v755
      %v801 = vmul.f32 %v585, %v760
      %v802 = vmul.f32 %v586, %v765
      %v803 = vpack.c.bf16 %v768, %v767
      %v804 = vpack.c.bf16 %v770, %v769
      %v805 = vpack.c.bf16 %v772, %v771
      %v806 = vpack.c.bf16 %v774, %v773
      %v807 = vpack.c.bf16 %v776, %v775
      %v808 = vpack.c.bf16 %v778, %v777
      %v809 = vpack.c.bf16 %v780, %v779
      %v810 = vpack.c.bf16 %v782, %v781
      %v811 = vpack.c.bf16 %v784, %v783
      %v812 = vpack.c.bf16 %v786, %v785
      %v813 = vpack.c.bf16 %v788, %v787
      %v814 = vpack.c.bf16 %v790, %v789
      %v815 = vpack.c.bf16 %v792, %v791
      %v816 = vpack.c.bf16 %v794, %v793
      %v817 = vpack.c.bf16 %v796, %v795
      %v818 = vpack.c.bf16 %v798, %v797
      %v819 = vpack.c.bf16 %v800, %v799
      %v820 = vpack.c.bf16 %v802, %v801
      %v839 = vunpack.c.l.b16 %v803
      %v840 = vunpack.c.h.b16 %v803
      %v841 = vunpack.c.l.b16 %v804
      %v842 = vunpack.c.h.b16 %v804
      %v843 = vunpack.c.l.b16 %v805
      %v844 = vunpack.c.h.b16 %v805
      %v845 = vunpack.c.l.b16 %v806
      %v846 = vunpack.c.h.b16 %v806
      %v847 = vunpack.c.l.b16 %v807
      %v848 = vunpack.c.h.b16 %v807
      %v849 = vunpack.c.l.b16 %v808
      %v850 = vunpack.c.h.b16 %v808
      %v851 = vunpack.c.l.b16 %v809
      %v852 = vunpack.c.h.b16 %v809
      %v853 = vunpack.c.l.b16 %v810
      %v854 = vunpack.c.h.b16 %v810
      %v855 = vunpack.c.l.b16 %v811
      %v856 = vunpack.c.h.b16 %v811
      %v857 = vunpack.c.l.b16 %v812
      %v858 = vunpack.c.h.b16 %v812
      %v859 = vunpack.c.l.b16 %v813
      %v860 = vunpack.c.h.b16 %v813
      %v861 = vunpack.c.l.b16 %v814
      %v862 = vunpack.c.h.b16 %v814
      %v863 = vunpack.c.l.b16 %v815
      %v864 = vunpack.c.h.b16 %v815
      %v865 = vunpack.c.l.b16 %v816
      %v866 = vunpack.c.h.b16 %v816
      %v867 = vunpack.c.l.b16 %v817
      %v868 = vunpack.c.h.b16 %v817
      %v869 = vunpack.c.l.b16 %v818
      %v870 = vunpack.c.h.b16 %v818
      %v871 = vunpack.c.l.b16 %v819
      %v872 = vunpack.c.h.b16 %v819
      %v873 = vunpack.c.l.b16 %v820
      %v874 = vunpack.c.h.b16 %v820
      %v875 = vpack.c.b16 %v839, %v839
      %v876 = vpack.c.b16 %v840, %v840
      %v877 = vpack.c.b16 %v841, %v841
      %v878 = vpack.c.b16 %v842, %v842
      %v879 = vpack.c.b16 %v843, %v843
      %v880 = vpack.c.b16 %v844, %v844
      %v881 = vpack.c.b16 %v845, %v845
      %v882 = vpack.c.b16 %v846, %v846
      %v883 = vpack.c.b16 %v847, %v847
      %v884 = vpack.c.b16 %v848, %v848
      %v885 = vpack.c.b16 %v849, %v849
      %v886 = vpack.c.b16 %v850, %v850
      %v887 = vpack.c.b16 %v851, %v851
      %v888 = vpack.c.b16 %v852, %v852
      %v889 = vpack.c.b16 %v853, %v853
      %v890 = vpack.c.b16 %v854, %v854
      %v891 = vpack.c.b16 %v855, %v855
      %v892 = vpack.c.b16 %v856, %v856
      %v893 = vpack.c.b16 %v857, %v857
      %v894 = vpack.c.b16 %v858, %v858
      %v895 = vpack.c.b16 %v859, %v859
      %v896 = vpack.c.b16 %v860, %v860
      %v897 = vpack.c.b16 %v861, %v861
      %v898 = vpack.c.b16 %v862, %v862
      %v899 = vpack.c.b16 %v863, %v863
      %v900 = vpack.c.b16 %v864, %v864
      %v901 = vpack.c.b16 %v865, %v865
      %v902 = vpack.c.b16 %v866, %v866
      %v903 = vpack.c.b16 %v867, %v867
      %v904 = vpack.c.b16 %v868, %v868
      %v905 = vpack.c.b16 %v869, %v869
      %v906 = vpack.c.b16 %v870, %v870
      %v907 = vpack.c.b16 %v871, %v871
      %v908 = vpack.c.b16 %v872, %v872
      %v909 = vpack.c.b16 %v873, %v873
      %v910 = vpack.c.b16 %v874, %v874
      %vm911 = vsmask.f32 5392
      %vm912 = vmor %vm365, %vm911
      %v914 = vshrl.u32 %v875, 16
      %v916 = vrot.slane %v914, 6
      %v917 = vshll.u32 %v875, 16
      %v919 = vrot.slane %v917, 7
      %v920 = vor.u32 %v916, %v919
      %v921 = vrot.slane %v920, 4
      %v923 = vshrl.u32 %v876, 16
      %v925 = vrot.slane %v923, 6
      %v926 = vshll.u32 %v876, 16
      %v928 = vrot.slane %v926, 7
      %v929 = vor.u32 %v925, %v928
      %v930 = vsel %vm912, %v921, %v929
      %v931 = vrot.slane %v929, 4
      %v933 = vshrl.u32 %v877, 16
      %v935 = vrot.slane %v933, 6
      %v936 = vshll.u32 %v877, 16
      %v938 = vrot.slane %v936, 7
      %v939 = vor.u32 %v935, %v938
      %v940 = vsel %vm912, %v931, %v939
      %v941 = vrot.slane %v939, 4
      %v943 = vshrl.u32 %v878, 16
      %v945 = vrot.slane %v943, 6
      %v946 = vshll.u32 %v878, 16
      %v948 = vrot.slane %v946, 7
      %v949 = vor.u32 %v945, %v948
      %v950 = vsel %vm912, %v941, %v949
      %v951 = vrot.slane %v949, 4
      %v953 = vshrl.u32 %v879, 16
      %v955 = vrot.slane %v953, 6
      %v956 = vshll.u32 %v879, 16
      %v958 = vrot.slane %v956, 7
      %v959 = vor.u32 %v955, %v958
      %v960 = vsel %vm912, %v951, %v959
      %v961 = vrot.slane %v959, 4
      %v963 = vshrl.u32 %v880, 16
      %v965 = vrot.slane %v963, 6
      %v966 = vshll.u32 %v880, 16
      %v968 = vrot.slane %v966, 7
      %v969 = vor.u32 %v965, %v968
      %v970 = vsel %vm912, %v961, %v969
      %v971 = vrot.slane %v969, 4
      %v973 = vshrl.u32 %v881, 16
      %v975 = vrot.slane %v973, 6
      %v976 = vshll.u32 %v881, 16
      %v978 = vrot.slane %v976, 7
      %v979 = vor.u32 %v975, %v978
      %v980 = vsel %vm912, %v971, %v979
      %v981 = vrot.slane %v979, 4
      %v983 = vshrl.u32 %v882, 16
      %v985 = vrot.slane %v983, 6
      %v986 = vshll.u32 %v882, 16
      %v988 = vrot.slane %v986, 7
      %v989 = vor.u32 %v985, %v988
      %v990 = vsel %vm912, %v981, %v989
      %v991 = vrot.slane %v989, 4
      %v993 = vshrl.u32 %v883, 16
      %v995 = vrot.slane %v993, 6
      %v996 = vshll.u32 %v883, 16
      %v998 = vrot.slane %v996, 7
      %v999 = vor.u32 %v995, %v998
      %v1000 = vsel %vm912, %v991, %v999
      %v1001 = vrot.slane %v999, 4
      %v1003 = vshrl.u32 %v884, 16
      %v1005 = vrot.slane %v1003, 6
      %v1006 = vshll.u32 %v884, 16
      %v1008 = vrot.slane %v1006, 7
      %v1009 = vor.u32 %v1005, %v1008
      %v1010 = vsel %vm912, %v1001, %v1009
      %v1011 = vrot.slane %v1009, 4
      %v1013 = vshrl.u32 %v885, 16
      %v1015 = vrot.slane %v1013, 6
      %v1016 = vshll.u32 %v885, 16
      %v1018 = vrot.slane %v1016, 7
      %v1019 = vor.u32 %v1015, %v1018
      %v1020 = vsel %vm912, %v1011, %v1019
      %v1021 = vrot.slane %v1019, 4
      %v1023 = vshrl.u32 %v886, 16
      %v1025 = vrot.slane %v1023, 6
      %v1026 = vshll.u32 %v886, 16
      %v1028 = vrot.slane %v1026, 7
      %v1029 = vor.u32 %v1025, %v1028
      %v1030 = vsel %vm912, %v1021, %v1029
      %v1031 = vrot.slane %v1029, 4
      %v1033 = vshrl.u32 %v887, 16
      %v1035 = vrot.slane %v1033, 6
      %v1036 = vshll.u32 %v887, 16
      %v1038 = vrot.slane %v1036, 7
      %v1039 = vor.u32 %v1035, %v1038
      %v1040 = vsel %vm912, %v1031, %v1039
      %v1041 = vrot.slane %v1039, 4
      %v1043 = vshrl.u32 %v888, 16
      %v1045 = vrot.slane %v1043, 6
      %v1046 = vshll.u32 %v888, 16
      %v1048 = vrot.slane %v1046, 7
      %v1049 = vor.u32 %v1045, %v1048
      %v1050 = vsel %vm912, %v1041, %v1049
      %v1051 = vrot.slane %v1049, 4
      %v1053 = vshrl.u32 %v889, 16
      %v1055 = vrot.slane %v1053, 6
      %v1056 = vshll.u32 %v889, 16
      %v1058 = vrot.slane %v1056, 7
      %v1059 = vor.u32 %v1055, %v1058
      %v1060 = vsel %vm912, %v1051, %v1059
      %v1061 = vrot.slane %v1059, 4
      %v1063 = vshrl.u32 %v890, 16
      %v1065 = vrot.slane %v1063, 6
      %v1066 = vshll.u32 %v890, 16
      %v1068 = vrot.slane %v1066, 7
      %v1069 = vor.u32 %v1065, %v1068
      %v1070 = vsel %vm912, %v1061, %v1069
      %v1071 = vrot.slane %v1069, 4
      %v1073 = vshrl.u32 %v891, 16
      %v1075 = vrot.slane %v1073, 6
      %v1076 = vshll.u32 %v891, 16
      %v1078 = vrot.slane %v1076, 7
      %v1079 = vor.u32 %v1075, %v1078
      %v1080 = vsel %vm912, %v1071, %v1079
      %v1081 = vrot.slane %v1079, 4
      %v1083 = vshrl.u32 %v892, 16
      %v1085 = vrot.slane %v1083, 6
      %v1086 = vshll.u32 %v892, 16
      %v1088 = vrot.slane %v1086, 7
      %v1089 = vor.u32 %v1085, %v1088
      %v1090 = vsel %vm912, %v1081, %v1089
      %v1091 = vrot.slane %v1089, 4
      %v1093 = vshrl.u32 %v893, 16
      %v1095 = vrot.slane %v1093, 6
      %v1096 = vshll.u32 %v893, 16
      %v1098 = vrot.slane %v1096, 7
      %v1099 = vor.u32 %v1095, %v1098
      %v1100 = vsel %vm912, %v1091, %v1099
      %v1101 = vrot.slane %v1099, 4
      %v1103 = vshrl.u32 %v894, 16
      %v1105 = vrot.slane %v1103, 6
      %v1106 = vshll.u32 %v894, 16
      %v1108 = vrot.slane %v1106, 7
      %v1109 = vor.u32 %v1105, %v1108
      %v1110 = vsel %vm912, %v1101, %v1109
      %v1111 = vrot.slane %v1109, 4
      %v1113 = vshrl.u32 %v895, 16
      %v1115 = vrot.slane %v1113, 6
      %v1116 = vshll.u32 %v895, 16
      %v1118 = vrot.slane %v1116, 7
      %v1119 = vor.u32 %v1115, %v1118
      %v1120 = vsel %vm912, %v1111, %v1119
      %v1121 = vrot.slane %v1119, 4
      %v1123 = vshrl.u32 %v896, 16
      %v1125 = vrot.slane %v1123, 6
      %v1126 = vshll.u32 %v896, 16
      %v1128 = vrot.slane %v1126, 7
      %v1129 = vor.u32 %v1125, %v1128
      %v1130 = vsel %vm912, %v1121, %v1129
      %v1131 = vrot.slane %v1129, 4
      %v1133 = vshrl.u32 %v897, 16
      %v1135 = vrot.slane %v1133, 6
      %v1136 = vshll.u32 %v897, 16
      %v1138 = vrot.slane %v1136, 7
      %v1139 = vor.u32 %v1135, %v1138
      %v1140 = vsel %vm912, %v1131, %v1139
      %v1141 = vrot.slane %v1139, 4
      %v1143 = vshrl.u32 %v898, 16
      %v1145 = vrot.slane %v1143, 6
      %v1146 = vshll.u32 %v898, 16
      %v1148 = vrot.slane %v1146, 7
      %v1149 = vor.u32 %v1145, %v1148
      %v1150 = vsel %vm912, %v1141, %v1149
      %v1151 = vrot.slane %v1149, 4
      %v1153 = vshrl.u32 %v899, 16
      %v1155 = vrot.slane %v1153, 6
      %v1156 = vshll.u32 %v899, 16
      %v1158 = vrot.slane %v1156, 7
      %v1159 = vor.u32 %v1155, %v1158
      %v1160 = vsel %vm912, %v1151, %v1159
      %v1161 = vrot.slane %v1159, 4
      %v1163 = vshrl.u32 %v900, 16
      %v1165 = vrot.slane %v1163, 6
      %v1166 = vshll.u32 %v900, 16
      %v1168 = vrot.slane %v1166, 7
      %v1169 = vor.u32 %v1165, %v1168
      %v1170 = vsel %vm912, %v1161, %v1169
      %v1171 = vrot.slane %v1169, 4
      %v1173 = vshrl.u32 %v901, 16
      %v1175 = vrot.slane %v1173, 6
      %v1176 = vshll.u32 %v901, 16
      %v1178 = vrot.slane %v1176, 7
      %v1179 = vor.u32 %v1175, %v1178
      %v1180 = vsel %vm912, %v1171, %v1179
      %v1181 = vrot.slane %v1179, 4
      %v1183 = vshrl.u32 %v902, 16
      %v1185 = vrot.slane %v1183, 6
      %v1186 = vshll.u32 %v902, 16
      %v1188 = vrot.slane %v1186, 7
      %v1189 = vor.u32 %v1185, %v1188
      %v1190 = vsel %vm912, %v1181, %v1189
      %v1191 = vrot.slane %v1189, 4
      %v1193 = vshrl.u32 %v903, 16
      %v1195 = vrot.slane %v1193, 6
      %v1196 = vshll.u32 %v903, 16
      %v1198 = vrot.slane %v1196, 7
      %v1199 = vor.u32 %v1195, %v1198
      %v1200 = vsel %vm912, %v1191, %v1199
      %v1201 = vrot.slane %v1199, 4
      %v1203 = vshrl.u32 %v904, 16
      %v1205 = vrot.slane %v1203, 6
      %v1206 = vshll.u32 %v904, 16
      %v1208 = vrot.slane %v1206, 7
      %v1209 = vor.u32 %v1205, %v1208
      %v1210 = vsel %vm912, %v1201, %v1209
      %v1211 = vrot.slane %v1209, 4
      %v1213 = vshrl.u32 %v905, 16
      %v1215 = vrot.slane %v1213, 6
      %v1216 = vshll.u32 %v905, 16
      %v1218 = vrot.slane %v1216, 7
      %v1219 = vor.u32 %v1215, %v1218
      %v1220 = vsel %vm912, %v1211, %v1219
      %v1221 = vrot.slane %v1219, 4
      %v1223 = vshrl.u32 %v906, 16
      %v1225 = vrot.slane %v1223, 6
      %v1226 = vshll.u32 %v906, 16
      %v1228 = vrot.slane %v1226, 7
      %v1229 = vor.u32 %v1225, %v1228
      %v1230 = vsel %vm912, %v1221, %v1229
      %v1231 = vrot.slane %v1229, 4
      %v1233 = vshrl.u32 %v907, 16
      %v1235 = vrot.slane %v1233, 6
      %v1236 = vshll.u32 %v907, 16
      %v1238 = vrot.slane %v1236, 7
      %v1239 = vor.u32 %v1235, %v1238
      %v1240 = vsel %vm912, %v1231, %v1239
      %v1241 = vrot.slane %v1239, 4
      %v1243 = vshrl.u32 %v908, 16
      %v1245 = vrot.slane %v1243, 6
      %v1246 = vshll.u32 %v908, 16
      %v1248 = vrot.slane %v1246, 7
      %v1249 = vor.u32 %v1245, %v1248
      %v1250 = vsel %vm912, %v1241, %v1249
      %v1251 = vrot.slane %v1249, 4
      %v1253 = vshrl.u32 %v909, 16
      %v1255 = vrot.slane %v1253, 6
      %v1256 = vshll.u32 %v909, 16
      %v1258 = vrot.slane %v1256, 7
      %v1259 = vor.u32 %v1255, %v1258
      %v1260 = vsel %vm912, %v1251, %v1259
      %v1261 = vrot.slane %v1259, 4
      %v1263 = vshrl.u32 %v910, 16
      %v1265 = vrot.slane %v1263, 6
      %v1266 = vshll.u32 %v910, 16
      %v1268 = vrot.slane %v1266, 7
      %v1269 = vor.u32 %v1265, %v1268
      %v1270 = vsel %vm912, %v1261, %v1269
      %v1271 = vrot.slane %v1269, 4
      %v1309 = vld [vmem:[#allocation2 + $0x8] sm:$0xe]
      %v1310 = vsel %vm372, %v920, %v1309
      %1311 = vst [vmem:[#allocation2 + $0x8] sm:$0xe] %v1310
      %1312 = vst.msk [vmem:[#allocation2 + $0xc] sm:$0xf] %vm361, %v930
      %1313 = vst.msk [vmem:[#allocation2 + $0x10] sm:$0xf] %vm361, %v940
      %1314 = vst.msk [vmem:[#allocation2 + $0x14] sm:$0xf] %vm361, %v950
      %1315 = vst.msk [vmem:[#allocation2 + $0x18] sm:$0xf] %vm361, %v960
      %1316 = vst.msk [vmem:[#allocation2 + $0x1c] sm:$0xf] %vm361, %v970
      %1317 = vst.msk [vmem:[#allocation2 + $0x20] sm:$0xf] %vm361, %v980
      %1318 = vst.msk [vmem:[#allocation2 + $0x24] sm:$0xf] %vm361, %v990
      %1319 = vst.msk [vmem:[#allocation2 + $0x28] sm:$0xf] %vm361, %v1000
      %1320 = vst.msk [vmem:[#allocation2 + $0x2c] sm:$0xf] %vm361, %v1010
      %1321 = vst.msk [vmem:[#allocation2 + $0x30] sm:$0xf] %vm361, %v1020
      %1322 = vst.msk [vmem:[#allocation2 + $0x34] sm:$0xf] %vm361, %v1030
      %1323 = vst.msk [vmem:[#allocation2 + $0x38] sm:$0xf] %vm361, %v1040
      %1324 = vst.msk [vmem:[#allocation2 + $0x3c] sm:$0xf] %vm361, %v1050
      %1325 = vst.msk [vmem:[#allocation2 + $0x40] sm:$0xf] %vm361, %v1060
      %1326 = vst.msk [vmem:[#allocation2 + $0x44] sm:$0xf] %vm361, %v1070
      %1327 = vst.msk [vmem:[#allocation2 + $0x48] sm:$0xf] %vm361, %v1080
      %1328 = vst.msk [vmem:[#allocation2 + $0x4c] sm:$0xf] %vm361, %v1090
      %1329 = vst.msk [vmem:[#allocation2 + $0x50] sm:$0xf] %vm361, %v1100
      %1330 = vst.msk [vmem:[#allocation2 + $0x54] sm:$0xf] %vm361, %v1110
      %1331 = vst.msk [vmem:[#allocation2 + $0x58] sm:$0xf] %vm361, %v1120
      %1332 = vst.msk [vmem:[#allocation2 + $0x5c] sm:$0xf] %vm361, %v1130
      %1333 = vst.msk [vmem:[#allocation2 + $0x60] sm:$0xf] %vm361, %v1140
      %1334 = vst.msk [vmem:[#allocation2 + $0x64] sm:$0xf] %vm361, %v1150
      %1335 = vst.msk [vmem:[#allocation2 + $0x68] sm:$0xf] %vm361, %v1160
      %1336 = vst.msk [vmem:[#allocation2 + $0x6c] sm:$0xf] %vm361, %v1170
      %1337 = vst.msk [vmem:[#allocation2 + $0x70] sm:$0xf] %vm361, %v1180
      %1338 = vst.msk [vmem:[#allocation2 + $0x74] sm:$0xf] %vm361, %v1190
      %1339 = vst.msk [vmem:[#allocation2 + $0x78] sm:$0xf] %vm361, %v1200
      %1340 = vst.msk [vmem:[#allocation2 + $0x7c] sm:$0xf] %vm361, %v1210
      %1341 = vst.msk [vmem:[#allocation2 + $0x80] sm:$0xf] %vm361, %v1220
      %1342 = vst.msk [vmem:[#allocation2 + $0x84] sm:$0xf] %vm361, %v1230
      %1343 = vst.msk [vmem:[#allocation2 + $0x88] sm:$0xf] %vm361, %v1240
      %1344 = vst.msk [vmem:[#allocation2 + $0x8c] sm:$0xf] %vm361, %v1250
      %1345 = vst.msk [vmem:[#allocation2 + $0x90] sm:$0xf] %vm361, %v1260
      %1346 = vst.msk [vmem:[#allocation2 + $0x94] sm:$0xf] %vm361, %v1270
      %v1347 = vld [vmem:[#allocation2 + $0x98] sm:$0x3]
      %v1348 = vsel %vm366, %v1271, %v1347
      %1349 = vst [vmem:[#allocation2 + $0x98] sm:$0x3] %v1348
      %v1350 = vld [vmem:[#allocation2] sm:$0xf]
      %v1351 = vld [vmem:[#allocation2 + $0x4] sm:$0xf]
      %v1352 = vld [vmem:[#allocation2 + $0x8] sm:$0xf]
      %v1353 = vld [vmem:[#allocation2 + $0xc] sm:$0xf]
      %v1354 = vld [vmem:[#allocation2 + $0x10] sm:$0xf]
      %v1355 = vld [vmem:[#allocation2 + $0x14] sm:$0xf]
      %v1356 = vld [vmem:[#allocation2 + $0x18] sm:$0xf]
      %v1357 = vld [vmem:[#allocation2 + $0x1c] sm:$0xf]
      %v1358 = vld [vmem:[#allocation2 + $0x20] sm:$0xf]
      %v1359 = vld [vmem:[#allocation2 + $0x24] sm:$0xf]
      %v1360 = vld [vmem:[#allocation2 + $0x28] sm:$0xf]
      %v1361 = vld [vmem:[#allocation2 + $0x2c] sm:$0xf]
      %v1362 = vld [vmem:[#allocation2 + $0x30] sm:$0xf]
      %v1363 = vld [vmem:[#allocation2 + $0x34] sm:$0xf]
      %v1364 = vld [vmem:[#allocation2 + $0x38] sm:$0xf]
      %v1365 = vld [vmem:[#allocation2 + $0x3c] sm:$0xf]
      %v1366 = vld [vmem:[#allocation2 + $0x40] sm:$0xf]
      %v1367 = vld [vmem:[#allocation2 + $0x44] sm:$0xf]
      %v1368 = vld [vmem:[#allocation2 + $0x48] sm:$0xf]
      %v1369 = vld [vmem:[#allocation2 + $0x4c] sm:$0xf]
      %v1370 = vld [vmem:[#allocation2 + $0x50] sm:$0xf]
      %v1371 = vld [vmem:[#allocation2 + $0x54] sm:$0xf]
      %v1372 = vld [vmem:[#allocation2 + $0x58] sm:$0xf]
      %v1373 = vld [vmem:[#allocation2 + $0x5c] sm:$0xf]
      %v1374 = vld [vmem:[#allocation2 + $0x60] sm:$0xf]
      %v1375 = vld [vmem:[#allocation2 + $0x64] sm:$0xf]
      %v1376 = vld [vmem:[#allocation2 + $0x68] sm:$0xf]
      %v1377 = vld [vmem:[#allocation2 + $0x6c] sm:$0xf]
      %v1378 = vld [vmem:[#allocation2 + $0x70] sm:$0xf]
      %v1379 = vld [vmem:[#allocation2 + $0x74] sm:$0xf]
      %v1380 = vld [vmem:[#allocation2 + $0x78] sm:$0xf]
      %v1381 = vld [vmem:[#allocation2 + $0x7c] sm:$0xf]
      %v1382 = vld [vmem:[#allocation2 + $0x80] sm:$0xf]
      %v1383 = vld [vmem:[#allocation2 + $0x84] sm:$0xf]
      %v1384 = vld [vmem:[#allocation2 + $0x88] sm:$0xf]
      %v1385 = vld [vmem:[#allocation2 + $0x8c] sm:$0xf]
      %v1386 = vld [vmem:[%s4] sm:$0x3]
      %v1387 = vld [vmem:[#allocation2 + $0x90] sm:$0x1]
      %s1388 = scalar_lea.vmem %s4, 2
      %v1389 = vld [vmem:[%s1388] sm:$0x3]
      %v1427 = vunpack.c.l.b16 %v1350
      %v1428 = vunpack.c.l.b16 %v1351
      %v1429 = vunpack.c.l.b16 %v1352
      %v1430 = vunpack.c.l.b16 %v1353
      %v1431 = vunpack.c.l.b16 %v1354
      %v1432 = vunpack.c.l.b16 %v1355
      %v1433 = vunpack.c.l.b16 %v1356
      %v1434 = vunpack.c.l.b16 %v1357
      %v1435 = vunpack.c.l.b16 %v1358
      %v1436 = vunpack.c.l.b16 %v1359
      %v1437 = vunpack.c.l.b16 %v1360
      %v1438 = vunpack.c.l.b16 %v1361
      %v1439 = vunpack.c.l.b16 %v1362
      %v1440 = vunpack.c.l.b16 %v1363
      %v1441 = vunpack.c.l.b16 %v1364
      %v1442 = vunpack.c.l.b16 %v1365
      %v1443 = vunpack.c.l.b16 %v1366
      %v1444 = vunpack.c.l.b16 %v1367
      %v1445 = vunpack.c.l.b16 %v1368
      %v1446 = vunpack.c.l.b16 %v1369
      %v1447 = vunpack.c.l.b16 %v1370
      %v1448 = vunpack.c.l.b16 %v1371
      %v1449 = vunpack.c.l.b16 %v1372
      %v1450 = vunpack.c.l.b16 %v1373
      %v1451 = vunpack.c.l.b16 %v1374
      %v1452 = vunpack.c.l.b16 %v1375
      %v1453 = vunpack.c.l.b16 %v1376
      %v1454 = vunpack.c.l.b16 %v1377
      %v1455 = vunpack.c.l.b16 %v1378
      %v1456 = vunpack.c.l.b16 %v1379
      %v1457 = vunpack.c.l.b16 %v1380
      %v1458 = vunpack.c.l.b16 %v1381
      %v1459 = vunpack.c.l.b16 %v1382
      %v1460 = vunpack.c.l.b16 %v1383
      %v1461 = vunpack.c.l.b16 %v1384
      %v1462 = vunpack.c.l.b16 %v1385
      %v1463 = vunpack.c.l.b16 %v1387
      %v1464 = vpack.c.b16 %v1428, %v1427
      %v1465 = vpack.c.b16 %v1430, %v1429
      %v1466 = vpack.c.b16 %v1432, %v1431
      %v1467 = vpack.c.b16 %v1434, %v1433
      %v1468 = vpack.c.b16 %v1436, %v1435
      %v1469 = vpack.c.b16 %v1438, %v1437
      %v1470 = vpack.c.b16 %v1440, %v1439
      %v1471 = vpack.c.b16 %v1442, %v1441
      %v1472 = vpack.c.b16 %v1444, %v1443
      %v1473 = vpack.c.b16 %v1446, %v1445
      %v1474 = vpack.c.b16 %v1448, %v1447
      %v1475 = vpack.c.b16 %v1450, %v1449
      %v1476 = vpack.c.b16 %v1452, %v1451
      %v1477 = vpack.c.b16 %v1454, %v1453
      %v1478 = vpack.c.b16 %v1456, %v1455
      %v1479 = vpack.c.b16 %v1458, %v1457
      %v1480 = vpack.c.b16 %v1460, %v1459
      %v1481 = vpack.c.b16 %v1462, %v1461
      %v1482 = vpack.c.b16 %v1463, %v1463
      %vm1483 = vsmask.f32 7424
      %v1485 = vshrl.u32 %v1464, 16
      %v1487 = vshll.u32 %v1464, 16
      %v1489 = vrot.slane %v1487, 1
      %v1490 = vor.u32 %v1485, %v1489
      %v1492 = vshll.u32 %v1465, 16
      %v1494 = vrot.slane %v1492, 1
      %v1495 = vsel %vm1483, %v1490, %v1494
      %v1496 = vshrl.u32 %v1465, 16
      %v1498 = vor.u32 %v1496, %v1494
      %v1500 = vshll.u32 %v1466, 16
      %v1502 = vrot.slane %v1500, 1
      %v1503 = vsel %vm1483, %v1498, %v1502
      %v1504 = vshrl.u32 %v1466, 16
      %v1506 = vor.u32 %v1504, %v1502
      %v1508 = vshll.u32 %v1467, 16
      %v1510 = vrot.slane %v1508, 1
      %v1511 = vsel %vm1483, %v1506, %v1510
      %v1512 = vshrl.u32 %v1467, 16
      %v1514 = vor.u32 %v1512, %v1510
      %v1516 = vshll.u32 %v1468, 16
      %v1518 = vrot.slane %v1516, 1
      %v1519 = vsel %vm1483, %v1514, %v1518
      %v1520 = vshrl.u32 %v1468, 16
      %v1522 = vor.u32 %v1520, %v1518
      %v1524 = vshll.u32 %v1469, 16
      %v1526 = vrot.slane %v1524, 1
      %v1527 = vsel %vm1483, %v1522, %v1526
      %v1528 = vshrl.u32 %v1469, 16
      %v1530 = vor.u32 %v1528, %v1526
      %v1532 = vshll.u32 %v1470, 16
      %v1534 = vrot.slane %v1532, 1
      %v1535 = vsel %vm1483, %v1530, %v1534
      %v1536 = vshrl.u32 %v1470, 16
      %v1538 = vor.u32 %v1536, %v1534
      %v1540 = vshll.u32 %v1471, 16
      %v1542 = vrot.slane %v1540, 1
      %v1543 = vsel %vm1483, %v1538, %v1542
      %v1544 = vshrl.u32 %v1471, 16
      %v1546 = vor.u32 %v1544, %v1542
      %v1548 = vshll.u32 %v1472, 16
      %v1550 = vrot.slane %v1548, 1
      %v1551 = vsel %vm1483, %v1546, %v1550
      %v1552 = vshrl.u32 %v1472, 16
      %v1554 = vor.u32 %v1552, %v1550
      %v1556 = vshll.u32 %v1473, 16
      %v1558 = vrot.slane %v1556, 1
      %v1559 = vsel %vm1483, %v1554, %v1558
      %v1560 = vshrl.u32 %v1473, 16
      %v1562 = vor.u32 %v1560, %v1558
      %v1564 = vshll.u32 %v1474, 16
      %v1566 = vrot.slane %v1564, 1
      %v1567 = vsel %vm1483, %v1562, %v1566
      %v1568 = vshrl.u32 %v1474, 16
      %v1570 = vor.u32 %v1568, %v1566
      %v1572 = vshll.u32 %v1475, 16
      %v1574 = vrot.slane %v1572, 1
      %v1575 = vsel %vm1483, %v1570, %v1574
      %v1576 = vshrl.u32 %v1475, 16
      %v1578 = vor.u32 %v1576, %v1574
      %v1580 = vshll.u32 %v1476, 16
      %v1582 = vrot.slane %v1580, 1
      %v1583 = vsel %vm1483, %v1578, %v1582
      %v1584 = vshrl.u32 %v1476, 16
      %v1586 = vor.u32 %v1584, %v1582
      %v1588 = vshll.u32 %v1477, 16
      %v1590 = vrot.slane %v1588, 1
      %v1591 = vsel %vm1483, %v1586, %v1590
      %v1592 = vshrl.u32 %v1477, 16
      %v1594 = vor.u32 %v1592, %v1590
      %v1596 = vshll.u32 %v1478, 16
      %v1598 = vrot.slane %v1596, 1
      %v1599 = vsel %vm1483, %v1594, %v1598
      %v1600 = vshrl.u32 %v1478, 16
      %v1602 = vor.u32 %v1600, %v1598
      %v1604 = vshll.u32 %v1479, 16
      %v1606 = vrot.slane %v1604, 1
      %v1607 = vsel %vm1483, %v1602, %v1606
      %v1608 = vshrl.u32 %v1479, 16
      %v1610 = vor.u32 %v1608, %v1606
      %v1612 = vshll.u32 %v1480, 16
      %v1614 = vrot.slane %v1612, 1
      %v1615 = vsel %vm1483, %v1610, %v1614
      %v1616 = vshrl.u32 %v1480, 16
      %v1618 = vor.u32 %v1616, %v1614
      %v1620 = vshll.u32 %v1481, 16
      %v1622 = vrot.slane %v1620, 1
      %v1623 = vsel %vm1483, %v1618, %v1622
      %v1624 = vshrl.u32 %v1481, 16
      %v1626 = vor.u32 %v1624, %v1622
      %v1628 = vshll.u32 %v1482, 16
      %v1630 = vrot.slane %v1628, 1
      %v1631 = vsel %vm1483, %v1626, %v1630
      %vm1632 = vcmask 31744
      %v1634 = vsel %vm1632, %v1495, 0
      %v1637 = vsel %vm1632, %v1503, 0
      %v1640 = vsel %vm1632, %v1511, 0
      %v1643 = vsel %vm1632, %v1519, 0
      %v1646 = vsel %vm1632, %v1527, 0
      %v1649 = vsel %vm1632, %v1535, 0
      %v1652 = vsel %vm1632, %v1543, 0
      %v1655 = vsel %vm1632, %v1551, 0
      %v1658 = vsel %vm1632, %v1559, 0
      %v1661 = vsel %vm1632, %v1567, 0
      %v1664 = vsel %vm1632, %v1575, 0
      %v1667 = vsel %vm1632, %v1583, 0
      %v1670 = vsel %vm1632, %v1591, 0
      %v1673 = vsel %vm1632, %v1599, 0
      %v1676 = vsel %vm1632, %v1607, 0
      %v1679 = vsel %vm1632, %v1615, 0
      %v1682 = vsel %vm1632, %v1623, 0
      %v1685 = vsel %vm1632, %v1631, 0
      %vm1687 = vcmask 1041408
      %v1689 = vsel %vm1687, %v1389, 0
      %1691 = vmatprep.subr.bf16.mxu0 0
      %1692 = vmatpush1.bf16.msra.mxu0 %v1689
      %1693 = vmatprep.subr.bf16.mxu0 0
      %1694 = vmatpush1.bf16.msra.mxu0 0
      %1695 = vmatprep.subr.bf16.mxu0 0
      %1696 = vmatpush1.bf16.msra.mxu0 0
      %1697 = vmatprep.subr.bf16.mxu0 0
      %1698 = vmatpush1.bf16.msra.mxu0 0
      %1699 = vmatprep.subr.bf16.mxu0 0
      %1700 = vmatpush1.bf16.msra.mxu0 0
      %1701 = vmatprep.subr.bf16.mxu0 0
      %1702 = vmatpush1.bf16.msra.mxu0 0
      %1703 = vmatprep.subr.bf16.mxu0 0
      %1704 = vmatpush1.bf16.msra.mxu0 0
      %1705 = vmatprep.subr.bf16.mxu0 0
      %1706 = vmatpush1.bf16.msra.mxu0 0
      %1707 = vmatprep.subr.bf16.mxu0 0
      %1708 = vmatpush1.bf16.msra.mxu0 0
      %1709 = vmatprep.subr.bf16.mxu0 0
      %1710 = vmatpush1.bf16.msra.mxu0 0
      %1711 = vmatprep.subr.bf16.mxu0 0
      %1712 = vmatpush1.bf16.msra.mxu0 0
      %1713 = vmatprep.subr.bf16.mxu0 0
      %1714 = vmatpush1.bf16.msra.mxu0 0
      %1715 = vmatprep.subr.bf16.mxu0 0
      %1716 = vmatpush1.bf16.msra.mxu0 0
      %1717 = vmatprep.subr.bf16.mxu0 0
      %1718 = vmatpush1.bf16.msra.mxu0 0
      %1719 = vmatprep.subr.bf16.mxu0 0
      %1720 = vmatpush1.bf16.msra.mxu0 0
      %1721 = vmatprep.subr.bf16.mxu0 0
      %1722 = vmatpush1.bf16.msra.mxu0 0
      %1723 = vmatprep.mubr.bf16.mxu0 0
      %1724 = vmatmul.mubr.bf16.gmra.mrb[0].mxu0 %v1634
      %v1725 = vpop.f32.mrb[0].mxu0
      %v1726 = vadd.f32 0.0, %v1725
      %v1727 = vpop.f32.mrb[0].mxu0
      %v1728 = vpop.f32.mrb[0].mxu0
      %v1729 = vadd.f32 0.0, %v1728
      %v1730 = vpop.f32.mrb[0].mxu0
      %1731 = vmatprep.mubr.bf16.mxu0 0
      %1732 = vmatmul.mubr.bf16.gmra.mrb[0].mxu0 %v1637
      %v1733 = vpop.f32.mrb[0].mxu0
      %v1734 = vadd.f32 0.0, %v1733
      %v1735 = vpop.f32.mrb[0].mxu0
      %v1736 = vpop.f32.mrb[0].mxu0
      %v1737 = vadd.f32 0.0, %v1736
      %v1738 = vpop.f32.mrb[0].mxu0
      %1739 = vmatprep.mubr.bf16.mxu0 0
      %1740 = vmatmul.mubr.bf16.gmra.mrb[0].mxu0 %v1640
      %v1741 = vpop.f32.mrb[0].mxu0
      %v1742 = vadd.f32 0.0, %v1741
      %v1743 = vpop.f32.mrb[0].mxu0
      %v1744 = vpop.f32.mrb[0].mxu0
      %v1745 = vadd.f32 0.0, %v1744
      %v1746 = vpop.f32.mrb[0].mxu0
      %1747 = vmatprep.mubr.bf16.mxu0 0
      %1748 = vmatmul.mubr.bf16.gmra.mrb[0].mxu0 %v1643
      %v1749 = vpop.f32.mrb[0].mxu0
      %v1750 = vadd.f32 0.0, %v1749
      %v1751 = vpop.f32.mrb[0].mxu0
      %v1752 = vpop.f32.mrb[0].mxu0
      %v1753 = vadd.f32 0.0, %v1752
      %v1754 = vpop.f32.mrb[0].mxu0
      %1755 = vmatprep.mubr.bf16.mxu0 0
      %1756 = vmatmul.mubr.bf16.gmra.mrb[0].mxu0 %v1646
      %v1757 = vpop.f32.mrb[0].mxu0
      %v1758 = vadd.f32 0.0, %v1757
      %v1759 = vpop.f32.mrb[0].mxu0
      %v1760 = vpop.f32.mrb[0].mxu0
      %v1761 = vadd.f32 0.0, %v1760
      %v1762 = vpop.f32.mrb[0].mxu0
      %1763 = vmatprep.mubr.bf16.mxu0 0
      %1764 = vmatmul.mubr.bf16.gmra.mrb[0].mxu0 %v1649
      %v1765 = vpop.f32.mrb[0].mxu0
      %v1766 = vadd.f32 0.0, %v1765
      %v1767 = vpop.f32.mrb[0].mxu0
      %v1768 = vpop.f32.mrb[0].mxu0
      %v1769 = vadd.f32 0.0, %v1768
      %v1770 = vpop.f32.mrb[0].mxu0
      %1771 = vmatprep.mubr.bf16.mxu0 0
      %1772 = vmatmul.mubr.bf16.gmra.mrb[0].mxu0 %v1652
      %v1773 = vpop.f32.mrb[0].mxu0
      %v1774 = vadd.f32 0.0, %v1773
      %v1775 = vpop.f32.mrb[0].mxu0
      %v1776 = vpop.f32.mrb[0].mxu0
      %v1777 = vadd.f32 0.0, %v1776
      %v1778 = vpop.f32.mrb[0].mxu0
      %1779 = vmatprep.mubr.bf16.mxu0 0
      %1780 = vmatmul.mubr.bf16.gmra.mrb[0].mxu0 %v1655
      %v1781 = vpop.f32.mrb[0].mxu0
      %v1782 = vadd.f32 0.0, %v1781
      %v1783 = vpop.f32.mrb[0].mxu0
      %v1784 = vpop.f32.mrb[0].mxu0
      %v1785 = vadd.f32 0.0, %v1784
      %v1786 = vpop.f32.mrb[0].mxu0
      %1787 = vmatprep.mubr.bf16.mxu0 0
      %1788 = vmatmul.mubr.bf16.gmra.mrb[0].mxu0 %v1658
      %v1789 = vpop.f32.mrb[0].mxu0
      %v1790 = vadd.f32 0.0, %v1789
      %v1791 = vpop.f32.mrb[0].mxu0
      %v1792 = vpop.f32.mrb[0].mxu0
      %v1793 = vadd.f32 0.0, %v1792
      %v1794 = vpop.f32.mrb[0].mxu0
      %1795 = vmatprep.mubr.bf16.mxu0 0
      %1796 = vmatmul.mubr.bf16.gmra.mrb[0].mxu0 %v1661
      %v1797 = vpop.f32.mrb[0].mxu0
      %v1798 = vadd.f32 0.0, %v1797
      %v1799 = vpop.f32.mrb[0].mxu0
      %v1800 = vpop.f32.mrb[0].mxu0
      %v1801 = vadd.f32 0.0, %v1800
      %v1802 = vpop.f32.mrb[0].mxu0
      %1803 = vmatprep.mubr.bf16.mxu0 0
      %1804 = vmatmul.mubr.bf16.gmra.mrb[0].mxu0 %v1664
      %v1805 = vpop.f32.mrb[0].mxu0
      %v1806 = vadd.f32 0.0, %v1805
      %v1807 = vpop.f32.mrb[0].mxu0
      %v1808 = vpop.f32.mrb[0].mxu0
      %v1809 = vadd.f32 0.0, %v1808
      %v1810 = vpop.f32.mrb[0].mxu0
      %1811 = vmatprep.mubr.bf16.mxu0 0
      %1812 = vmatmul.mubr.bf16.gmra.mrb[0].mxu0 %v1667
      %v1813 = vpop.f32.mrb[0].mxu0
      %v1814 = vadd.f32 0.0, %v1813
      %v1815 = vpop.f32.mrb[0].mxu0
      %v1816 = vpop.f32.mrb[0].mxu0
      %v1817 = vadd.f32 0.0, %v1816
      %v1818 = vpop.f32.mrb[0].mxu0
      %1819 = vmatprep.mubr.bf16.mxu0 0
      %1820 = vmatmul.mubr.bf16.gmra.mrb[0].mxu0 %v1670
      %v1821 = vpop.f32.mrb[0].mxu0
      %v1822 = vadd.f32 0.0, %v1821
      %v1823 = vpop.f32.mrb[0].mxu0
      %v1824 = vpop.f32.mrb[0].mxu0
      %v1825 = vadd.f32 0.0, %v1824
      %v1826 = vpop.f32.mrb[0].mxu0
      %1827 = vmatprep.mubr.bf16.mxu0 0
      %1828 = vmatmul.mubr.bf16.gmra.mrb[0].mxu0 %v1673
      %v1829 = vpop.f32.mrb[0].mxu0
      %v1830 = vadd.f32 0.0, %v1829
      %v1831 = vpop.f32.mrb[0].mxu0
      %v1832 = vpop.f32.mrb[0].mxu0
      %v1833 = vadd.f32 0.0, %v1832
      %v1834 = vpop.f32.mrb[0].mxu0
      %1835 = vmatprep.mubr.bf16.mxu0 0
      %1836 = vmatmul.mubr.bf16.gmra.mrb[0].mxu0 %v1676
      %v1837 = vpop.f32.mrb[0].mxu0
      %v1838 = vadd.f32 0.0, %v1837
      %v1839 = vpop.f32.mrb[0].mxu0
      %v1840 = vpop.f32.mrb[0].mxu0
      %v1841 = vadd.f32 0.0, %v1840
      %v1842 = vpop.f32.mrb[0].mxu0
      %1843 = vmatprep.mubr.bf16.mxu0 0
      %1844 = vmatmul.mubr.bf16.gmra.mrb[0].mxu0 %v1679
      %v1845 = vpop.f32.mrb[0].mxu0
      %v1846 = vadd.f32 0.0, %v1845
      %v1847 = vpop.f32.mrb[0].mxu0
      %v1848 = vpop.f32.mrb[0].mxu0
      %v1849 = vadd.f32 0.0, %v1848
      %v1850 = vpop.f32.mrb[0].mxu0
      %1851 = vmatprep.mubr.bf16.mxu0 0
      %1852 = vmatmul.mubr.bf16.gmra.mrb[0].mxu0 %v1682
      %v1853 = vpop.f32.mrb[0].mxu0
      %v1854 = vadd.f32 0.0, %v1853
      %v1855 = vpop.f32.mrb[0].mxu0
      %v1856 = vpop.f32.mrb[0].mxu0
      %v1857 = vadd.f32 0.0, %v1856
      %v1858 = vpop.f32.mrb[0].mxu0
      %1859 = vmatprep.mubr.bf16.mxu0 0
      %1860 = vmatmul.mubr.bf16.gmra.mrb[0].mxu0 %v1685
      %v1861 = vpop.f32.mrb[0].mxu0
      %v1862 = vadd.f32 0.0, %v1861
      %v1863 = vpop.f32.mrb[0].mxu0
      %v1864 = vpop.f32.mrb[0].mxu0
      %v1865 = vadd.f32 0.0, %v1864
      %v1866 = vpop.f32.mrb[0].mxu0
      %1867 = vdwg.mxu0
      %v1868 = vsel %vm1632, %v1464, 0
      %v1870 = vsel %vm1632, %v1465, 0
      %v1872 = vsel %vm1632, %v1466, 0
      %v1874 = vsel %vm1632, %v1467, 0
      %v1876 = vsel %vm1632, %v1468, 0
      %v1878 = vsel %vm1632, %v1469, 0
      %v1880 = vsel %vm1632, %v1470, 0
      %v1882 = vsel %vm1632, %v1471, 0
      %v1884 = vsel %vm1632, %v1472, 0
      %v1886 = vsel %vm1632, %v1473, 0
      %v1888 = vsel %vm1632, %v1474, 0
      %v1890 = vsel %vm1632, %v1475, 0
      %v1892 = vsel %vm1632, %v1476, 0
      %v1894 = vsel %vm1632, %v1477, 0
      %v1896 = vsel %vm1632, %v1478, 0
      %v1898 = vsel %vm1632, %v1479, 0
      %v1900 = vsel %vm1632, %v1480, 0
      %v1902 = vsel %vm1632, %v1481, 0
      %v1905 = vsel %vm1687, %v1386, 0
      %1907 = vmatprep.subr.bf16.mxu0 0
      %1908 = vmatpush1.bf16.msra.mxu0 %v1905
      %1909 = vmatprep.subr.bf16.mxu0 0
      %1910 = vmatpush1.bf16.msra.mxu0 0
      %1911 = vmatprep.subr.bf16.mxu0 0
      %1912 = vmatpush1.bf16.msra.mxu0 0
      %1913 = vmatprep.subr.bf16.mxu0 0
      %1914 = vmatpush1.bf16.msra.mxu0 0
      %1915 = vmatprep.subr.bf16.mxu0 0
      %1916 = vmatpush1.bf16.msra.mxu0 0
      %1917 = vmatprep.subr.bf16.mxu0 0
      %1918 = vmatpush1.bf16.msra.mxu0 0
      %1919 = vmatprep.subr.bf16.mxu0 0
      %1920 = vmatpush1.bf16.msra.mxu0 0
      %1921 = vmatprep.subr.bf16.mxu0 0
      %1922 = vmatpush1.bf16.msra.mxu0 0
      %1923 = vmatprep.subr.bf16.mxu0 0
      %1924 = vmatpush1.bf16.msra.mxu0 0
      %1925 = vmatprep.subr.bf16.mxu0 0
      %1926 = vmatpush1.bf16.msra.mxu0 0
      %1927 = vmatprep.subr.bf16.mxu0 0
      %1928 = vmatpush1.bf16.msra.mxu0 0
      %1929 = vmatprep.subr.bf16.mxu0 0
      %1930 = vmatpush1.bf16.msra.mxu0 0
      %1931 = vmatprep.subr.bf16.mxu0 0
      %1932 = vmatpush1.bf16.msra.mxu0 0
      %1933 = vmatprep.subr.bf16.mxu0 0
      %1934 = vmatpush1.bf16.msra.mxu0 0
      %1935 = vmatprep.subr.bf16.mxu0 0
      %1936 = vmatpush1.bf16.msra.mxu0 0
      %1937 = vmatprep.subr.bf16.mxu0 0
      %1938 = vmatpush1.bf16.msra.mxu0 0
      %1939 = vmatprep.mubr.bf16.mxu0 0
      %1940 = vmatmul.mubr.bf16.gmra.mrb[0].mxu0 %v1868
      %v1941 = vpop.f32.mrb[0].mxu0
      %v1942 = vadd.f32 %v1726, %v1941
      %v1943 = vpop.f32.mrb[0].mxu0
      %v1944 = vpop.f32.mrb[0].mxu0
      %v1945 = vadd.f32 %v1729, %v1944
      %v1946 = vpop.f32.mrb[0].mxu0
      %1947 = vmatprep.mubr.bf16.mxu0 0
      %1948 = vmatmul.mubr.bf16.gmra.mrb[0].mxu0 %v1870
      %v1949 = vpop.f32.mrb[0].mxu0
      %v1950 = vadd.f32 %v1734, %v1949
      %v1951 = vpop.f32.mrb[0].mxu0
      %v1952 = vpop.f32.mrb[0].mxu0
      %v1953 = vadd.f32 %v1737, %v1952
      %v1954 = vpop.f32.mrb[0].mxu0
      %1955 = vmatprep.mubr.bf16.mxu0 0
      %1956 = vmatmul.mubr.bf16.gmra.mrb[0].mxu0 %v1872
      %v1957 = vpop.f32.mrb[0].mxu0
      %v1958 = vadd.f32 %v1742, %v1957
      %v1959 = vpop.f32.mrb[0].mxu0
      %v1960 = vpop.f32.mrb[0].mxu0
      %v1961 = vadd.f32 %v1745, %v1960
      %v1962 = vpop.f32.mrb[0].mxu0
      %1963 = vmatprep.mubr.bf16.mxu0 0
      %1964 = vmatmul.mubr.bf16.gmra.mrb[0].mxu0 %v1874
      %v1965 = vpop.f32.mrb[0].mxu0
      %v1966 = vadd.f32 %v1750, %v1965
      %v1967 = vpop.f32.mrb[0].mxu0
      %v1968 = vpop.f32.mrb[0].mxu0
      %v1969 = vadd.f32 %v1753, %v1968
      %v1970 = vpop.f32.mrb[0].mxu0
      %1971 = vmatprep.mubr.bf16.mxu0 0
      %1972 = vmatmul.mubr.bf16.gmra.mrb[0].mxu0 %v1876
      %v1973 = vpop.f32.mrb[0].mxu0
      %v1974 = vadd.f32 %v1758, %v1973
      %v1975 = vpop.f32.mrb[0].mxu0
      %v1976 = vpop.f32.mrb[0].mxu0
      %v1977 = vadd.f32 %v1761, %v1976
      %v1978 = vpop.f32.mrb[0].mxu0
      %1979 = vmatprep.mubr.bf16.mxu0 0
      %1980 = vmatmul.mubr.bf16.gmra.mrb[0].mxu0 %v1878
      %v1981 = vpop.f32.mrb[0].mxu0
      %v1982 = vadd.f32 %v1766, %v1981
      %v1983 = vpop.f32.mrb[0].mxu0
      %v1984 = vpop.f32.mrb[0].mxu0
      %v1985 = vadd.f32 %v1769, %v1984
      %v1986 = vpop.f32.mrb[0].mxu0
      %1987 = vmatprep.mubr.bf16.mxu0 0
      %1988 = vmatmul.mubr.bf16.gmra.mrb[0].mxu0 %v1880
      %v1989 = vpop.f32.mrb[0].mxu0
      %v1990 = vadd.f32 %v1774, %v1989
      %v1991 = vpop.f32.mrb[0].mxu0
      %v1992 = vpop.f32.mrb[0].mxu0
      %v1993 = vadd.f32 %v1777, %v1992
      %v1994 = vpop.f32.mrb[0].mxu0
      %1995 = vmatprep.mubr.bf16.mxu0 0
      %1996 = vmatmul.mubr.bf16.gmra.mrb[0].mxu0 %v1882
      %v1997 = vpop.f32.mrb[0].mxu0
      %v1998 = vadd.f32 %v1782, %v1997
      %v1999 = vpop.f32.mrb[0].mxu0
      %v2000 = vpop.f32.mrb[0].mxu0
      %v2001 = vadd.f32 %v1785, %v2000
      %v2002 = vpop.f32.mrb[0].mxu0
      %2003 = vmatprep.mubr.bf16.mxu0 0
      %2004 = vmatmul.mubr.bf16.gmra.mrb[0].mxu0 %v1884
      %v2005 = vpop.f32.mrb[0].mxu0
      %v2006 = vadd.f32 %v1790, %v2005
      %v2007 = vpop.f32.mrb[0].mxu0
      %v2008 = vpop.f32.mrb[0].mxu0
      %v2009 = vadd.f32 %v1793, %v2008
      %v2010 = vpop.f32.mrb[0].mxu0
      %2011 = vmatprep.mubr.bf16.mxu0 0
      %2012 = vmatmul.mubr.bf16.gmra.mrb[0].mxu0 %v1886
      %v2013 = vpop.f32.mrb[0].mxu0
      %v2014 = vadd.f32 %v1798, %v2013
      %v2015 = vpop.f32.mrb[0].mxu0
      %v2016 = vpop.f32.mrb[0].mxu0
      %v2017 = vadd.f32 %v1801, %v2016
      %v2018 = vpop.f32.mrb[0].mxu0
      %2019 = vmatprep.mubr.bf16.mxu0 0
      %2020 = vmatmul.mubr.bf16.gmra.mrb[0].mxu0 %v1888
      %v2021 = vpop.f32.mrb[0].mxu0
      %v2022 = vadd.f32 %v1806, %v2021
      %v2023 = vpop.f32.mrb[0].mxu0
      %v2024 = vpop.f32.mrb[0].mxu0
      %v2025 = vadd.f32 %v1809, %v2024
      %v2026 = vpop.f32.mrb[0].mxu0
      %2027 = vmatprep.mubr.bf16.mxu0 0
      %2028 = vmatmul.mubr.bf16.gmra.mrb[0].mxu0 %v1890
      %v2029 = vpop.f32.mrb[0].mxu0
      %v2030 = vadd.f32 %v1814, %v2029
      %v2031 = vpop.f32.mrb[0].mxu0
      %v2032 = vpop.f32.mrb[0].mxu0
      %v2033 = vadd.f32 %v1817, %v2032
      %v2034 = vpop.f32.mrb[0].mxu0
      %2035 = vmatprep.mubr.bf16.mxu0 0
      %2036 = vmatmul.mubr.bf16.gmra.mrb[0].mxu0 %v1892
      %v2037 = vpop.f32.mrb[0].mxu0
      %v2038 = vadd.f32 %v1822, %v2037
      %v2039 = vpop.f32.mrb[0].mxu0
      %v2040 = vpop.f32.mrb[0].mxu0
      %v2041 = vadd.f32 %v1825, %v2040
      %v2042 = vpop.f32.mrb[0].mxu0
      %2043 = vmatprep.mubr.bf16.mxu0 0
      %2044 = vmatmul.mubr.bf16.gmra.mrb[0].mxu0 %v1894
      %v2045 = vpop.f32.mrb[0].mxu0
      %v2046 = vadd.f32 %v1830, %v2045
      %v2047 = vpop.f32.mrb[0].mxu0
      %v2048 = vpop.f32.mrb[0].mxu0
      %v2049 = vadd.f32 %v1833, %v2048
      %v2050 = vpop.f32.mrb[0].mxu0
      %2051 = vmatprep.mubr.bf16.mxu0 0
      %2052 = vmatmul.mubr.bf16.gmra.mrb[0].mxu0 %v1896
      %v2053 = vpop.f32.mrb[0].mxu0
      %v2054 = vadd.f32 %v1838, %v2053
      %v2055 = vpop.f32.mrb[0].mxu0
      %v2056 = vpop.f32.mrb[0].mxu0
      %v2057 = vadd.f32 %v1841, %v2056
      %v2058 = vpop.f32.mrb[0].mxu0
      %2059 = vmatprep.mubr.bf16.mxu0 0
      %2060 = vmatmul.mubr.bf16.gmra.mrb[0].mxu0 %v1898
      %v2061 = vpop.f32.mrb[0].mxu0
      %v2062 = vadd.f32 %v1846, %v2061
      %v2063 = vpop.f32.mrb[0].mxu0
      %v2064 = vpop.f32.mrb[0].mxu0
      %v2065 = vadd.f32 %v1849, %v2064
      %v2066 = vpop.f32.mrb[0].mxu0
      %2067 = vmatprep.mubr.bf16.mxu0 0
      %2068 = vmatmul.mubr.bf16.gmra.mrb[0].mxu0 %v1900
      %v2069 = vpop.f32.mrb[0].mxu0
      %v2070 = vadd.f32 %v1854, %v2069
      %v2071 = vpop.f32.mrb[0].mxu0
      %v2072 = vpop.f32.mrb[0].mxu0
      %v2073 = vadd.f32 %v1857, %v2072
      %v2074 = vpop.f32.mrb[0].mxu0
      %2075 = vmatprep.mubr.bf16.mxu0 0
      %2076 = vmatmul.mubr.bf16.gmra.mrb[0].mxu0 %v1902
      %v2077 = vpop.f32.mrb[0].mxu0
      %v2078 = vadd.f32 %v1862, %v2077
      %v2079 = vpop.f32.mrb[0].mxu0
      %v2080 = vpop.f32.mrb[0].mxu0
      %v2081 = vadd.f32 %v1865, %v2080
      %v2082 = vpop.f32.mrb[0].mxu0
      %2083 = vdwg.mxu0
      %v2084 = vld [vmem:[#allocation2] sm:$0xe]
      %s2085 = scalar_lea.vmem %s4, 4
      %v2086 = vld [vmem:[%s2085] sm:$0x3]
      %v2088 = vunpack.c.l.b16 %v2084
      %v2089 = vpack.c.b16 %v1428, %v2088
      %vm2090 = vcmask 1046528
      %v2091 = vrot.slane %v2089, 1
      %v2092 = vrot.slane %v1465, 1
      %v2093 = vsel %vm2090, %v2091, %v2092
      %v2094 = vrot.slane %v1466, 1
      %v2095 = vsel %vm2090, %v2092, %v2094
      %v2096 = vrot.slane %v1467, 1
      %v2097 = vsel %vm2090, %v2094, %v2096
      %v2098 = vrot.slane %v1468, 1
      %v2099 = vsel %vm2090, %v2096, %v2098
      %v2100 = vrot.slane %v1469, 1
      %v2101 = vsel %vm2090, %v2098, %v2100
      %v2102 = vrot.slane %v1470, 1
      %v2103 = vsel %vm2090, %v2100, %v2102
      %v2104 = vrot.slane %v1471, 1
      %v2105 = vsel %vm2090, %v2102, %v2104
      %v2106 = vrot.slane %v1472, 1
      %v2107 = vsel %vm2090, %v2104, %v2106
      %v2108 = vrot.slane %v1473, 1
      %v2109 = vsel %vm2090, %v2106, %v2108
      %v2110 = vrot.slane %v1474, 1
      %v2111 = vsel %vm2090, %v2108, %v2110
      %v2112 = vrot.slane %v1475, 1
      %v2113 = vsel %vm2090, %v2110, %v2112
      %v2114 = vrot.slane %v1476, 1
      %v2115 = vsel %vm2090, %v2112, %v2114
      %v2116 = vrot.slane %v1477, 1
      %v2117 = vsel %vm2090, %v2114, %v2116
      %v2118 = vrot.slane %v1478, 1
      %v2119 = vsel %vm2090, %v2116, %v2118
      %v2120 = vrot.slane %v1479, 1
      %v2121 = vsel %vm2090, %v2118, %v2120
      %v2122 = vrot.slane %v1480, 1
      %v2123 = vsel %vm2090, %v2120, %v2122
      %v2124 = vrot.slane %v1481, 1
      %v2125 = vsel %vm2090, %v2122, %v2124
      %v2126 = vrot.slane %v1482, 1
      %v2127 = vsel %vm2090, %v2124, %v2126
      %v2129 = vsel %vm1632, %v2093, 0
      %v2132 = vsel %vm1632, %v2095, 0
      %v2135 = vsel %vm1632, %v2097, 0
      %v2138 = vsel %vm1632, %v2099, 0
      %v2141 = vsel %vm1632, %v2101, 0
      %v2144 = vsel %vm1632, %v2103, 0
      %v2147 = vsel %vm1632, %v2105, 0
      %v2150 = vsel %vm1632, %v2107, 0
      %v2153 = vsel %vm1632, %v2109, 0
      %v2156 = vsel %vm1632, %v2111, 0
      %v2159 = vsel %vm1632, %v2113, 0
      %v2162 = vsel %vm1632, %v2115, 0
      %v2165 = vsel %vm1632, %v2117, 0
      %v2168 = vsel %vm1632, %v2119, 0
      %v2171 = vsel %vm1632, %v2121, 0
      %v2174 = vsel %vm1632, %v2123, 0
      %v2177 = vsel %vm1632, %v2125, 0
      %v2180 = vsel %vm1632, %v2127, 0
      %v2183 = vsel %vm1687, %v2086, 0
      %2185 = vmatprep.subr.bf16.mxu0 0
      %2186 = vmatpush1.bf16.msra.mxu0 %v2183
      %2187 = vmatprep.subr.bf16.mxu0 0
      %2188 = vmatpush1.bf16.msra.mxu0 0
      %2189 = vmatprep.subr.bf16.mxu0 0
      %2190 = vmatpush1.bf16.msra.mxu0 0
      %2191 = vmatprep.subr.bf16.mxu0 0
      %2192 = vmatpush1.bf16.msra.mxu0 0
      %2193 = vmatprep.subr.bf16.mxu0 0
      %2194 = vmatpush1.bf16.msra.mxu0 0
      %2195 = vmatprep.subr.bf16.mxu0 0
      %2196 = vmatpush1.bf16.msra.mxu0 0
      %2197 = vmatprep.subr.bf16.mxu0 0
      %2198 = vmatpush1.bf16.msra.mxu0 0
      %2199 = vmatprep.subr.bf16.mxu0 0
      %2200 = vmatpush1.bf16.msra.mxu0 0
      %2201 = vmatprep.subr.bf16.mxu0 0
      %2202 = vmatpush1.bf16.msra.mxu0 0
      %2203 = vmatprep.subr.bf16.mxu0 0
      %2204 = vmatpush1.bf16.msra.mxu0 0
      %2205 = vmatprep.subr.bf16.mxu0 0
      %2206 = vmatpush1.bf16.msra.mxu0 0
      %2207 = vmatprep.subr.bf16.mxu0 0
      %2208 = vmatpush1.bf16.msra.mxu0 0
      %2209 = vmatprep.subr.bf16.mxu0 0
      %2210 = vmatpush1.bf16.msra.mxu0 0
      %2211 = vmatprep.subr.bf16.mxu0 0
      %2212 = vmatpush1.bf16.msra.mxu0 0
      %2213 = vmatprep.subr.bf16.mxu0 0
      %2214 = vmatpush1.bf16.msra.mxu0 0
      %2215 = vmatprep.subr.bf16.mxu0 0
      %2216 = vmatpush1.bf16.msra.mxu0 0
      %2217 = vmatprep.mubr.bf16.mxu0 0
      %2218 = vmatmul.mubr.bf16.gmra.mrb[0].mxu0 %v2129
      %v2219 = vpop.f32.mrb[0].mxu0
      %v2220 = vadd.f32 0.0, %v2219
      %v2221 = vpop.f32.mrb[0].mxu0
      %v2222 = vpop.f32.mrb[0].mxu0
      %v2223 = vadd.f32 0.0, %v2222
      %v2224 = vpop.f32.mrb[0].mxu0
      %2225 = vmatprep.mubr.bf16.mxu0 0
      %2226 = vmatmul.mubr.bf16.gmra.mrb[0].mxu0 %v2132
      %v2227 = vpop.f32.mrb[0].mxu0
      %v2228 = vadd.f32 0.0, %v2227
      %v2229 = vpop.f32.mrb[0].mxu0
      %v2230 = vpop.f32.mrb[0].mxu0
      %v2231 = vadd.f32 0.0, %v2230
      %v2232 = vpop.f32.mrb[0].mxu0
      %2233 = vmatprep.mubr.bf16.mxu0 0
      %2234 = vmatmul.mubr.bf16.gmra.mrb[0].mxu0 %v2135
      %v2235 = vpop.f32.mrb[0].mxu0
      %v2236 = vadd.f32 0.0, %v2235
      %v2237 = vpop.f32.mrb[0].mxu0
      %v2238 = vpop.f32.mrb[0].mxu0
      %v2239 = vadd.f32 0.0, %v2238
      %v2240 = vpop.f32.mrb[0].mxu0
      %2241 = vmatprep.mubr.bf16.mxu0 0
      %2242 = vmatmul.mubr.bf16.gmra.mrb[0].mxu0 %v2138
      %v2243 = vpop.f32.mrb[0].mxu0
      %v2244 = vadd.f32 0.0, %v2243
      %v2245 = vpop.f32.mrb[0].mxu0
      %v2246 = vpop.f32.mrb[0].mxu0
      %v2247 = vadd.f32 0.0, %v2246
      %v2248 = vpop.f32.mrb[0].mxu0
      %2249 = vmatprep.mubr.bf16.mxu0 0
      %2250 = vmatmul.mubr.bf16.gmra.mrb[0].mxu0 %v2141
      %v2251 = vpop.f32.mrb[0].mxu0
      %v2252 = vadd.f32 0.0, %v2251
      %v2253 = vpop.f32.mrb[0].mxu0
      %v2254 = vpop.f32.mrb[0].mxu0
      %v2255 = vadd.f32 0.0, %v2254
      %v2256 = vpop.f32.mrb[0].mxu0
      %2257 = vmatprep.mubr.bf16.mxu0 0
      %2258 = vmatmul.mubr.bf16.gmra.mrb[0].mxu0 %v2144
      %v2259 = vpop.f32.mrb[0].mxu0
      %v2260 = vadd.f32 0.0, %v2259
      %v2261 = vpop.f32.mrb[0].mxu0
      %v2262 = vpop.f32.mrb[0].mxu0
      %v2263 = vadd.f32 0.0, %v2262
      %v2264 = vpop.f32.mrb[0].mxu0
      %2265 = vmatprep.mubr.bf16.mxu0 0
      %2266 = vmatmul.mubr.bf16.gmra.mrb[0].mxu0 %v2147
      %v2267 = vpop.f32.mrb[0].mxu0
      %v2268 = vadd.f32 0.0, %v2267
      %v2269 = vpop.f32.mrb[0].mxu0
      %v2270 = vpop.f32.mrb[0].mxu0
      %v2271 = vadd.f32 0.0, %v2270
      %v2272 = vpop.f32.mrb[0].mxu0
      %2273 = vmatprep.mubr.bf16.mxu0 0
      %2274 = vmatmul.mubr.bf16.gmra.mrb[0].mxu0 %v2150
      %v2275 = vpop.f32.mrb[0].mxu0
      %v2276 = vadd.f32 0.0, %v2275
      %v2277 = vpop.f32.mrb[0].mxu0
      %v2278 = vpop.f32.mrb[0].mxu0
      %v2279 = vadd.f32 0.0, %v2278
      %v2280 = vpop.f32.mrb[0].mxu0
      %2281 = vmatprep.mubr.bf16.mxu0 0
      %2282 = vmatmul.mubr.bf16.gmra.mrb[0].mxu0 %v2153
      %v2283 = vpop.f32.mrb[0].mxu0
      %v2284 = vadd.f32 0.0, %v2283
      %v2285 = vpop.f32.mrb[0].mxu0
      %v2286 = vpop.f32.mrb[0].mxu0
      %v2287 = vadd.f32 0.0, %v2286
      %v2288 = vpop.f32.mrb[0].mxu0
      %2289 = vmatprep.mubr.bf16.mxu0 0
      %2290 = vmatmul.mubr.bf16.gmra.mrb[0].mxu0 %v2156
      %v2291 = vpop.f32.mrb[0].mxu0
      %v2292 = vadd.f32 0.0, %v2291
      %v2293 = vpop.f32.mrb[0].mxu0
      %v2294 = vpop.f32.mrb[0].mxu0
      %v2295 = vadd.f32 0.0, %v2294
      %v2296 = vpop.f32.mrb[0].mxu0
      %2297 = vmatprep.mubr.bf16.mxu0 0
      %2298 = vmatmul.mubr.bf16.gmra.mrb[0].mxu0 %v2159
      %v2299 = vpop.f32.mrb[0].mxu0
      %v2300 = vadd.f32 0.0, %v2299
      %v2301 = vpop.f32.mrb[0].mxu0
      %v2302 = vpop.f32.mrb[0].mxu0
      %v2303 = vadd.f32 0.0, %v2302
      %v2304 = vpop.f32.mrb[0].mxu0
      %2305 = vmatprep.mubr.bf16.mxu0 0
      %2306 = vmatmul.mubr.bf16.gmra.mrb[0].mxu0 %v2162
      %v2307 = vpop.f32.mrb[0].mxu0
      %v2308 = vadd.f32 0.0, %v2307
      %v2309 = vpop.f32.mrb[0].mxu0
      %v2310 = vpop.f32.mrb[0].mxu0
      %v2311 = vadd.f32 0.0, %v2310
      %v2312 = vpop.f32.mrb[0].mxu0
      %2313 = vmatprep.mubr.bf16.mxu0 0
      %2314 = vmatmul.mubr.bf16.gmra.mrb[0].mxu0 %v2165
      %v2315 = vpop.f32.mrb[0].mxu0
      %v2316 = vadd.f32 0.0, %v2315
      %v2317 = vpop.f32.mrb[0].mxu0
      %v2318 = vpop.f32.mrb[0].mxu0
      %v2319 = vadd.f32 0.0, %v2318
      %v2320 = vpop.f32.mrb[0].mxu0
      %2321 = vmatprep.mubr.bf16.mxu0 0
      %2322 = vmatmul.mubr.bf16.gmra.mrb[0].mxu0 %v2168
      %v2323 = vpop.f32.mrb[0].mxu0
      %v2324 = vadd.f32 0.0, %v2323
      %v2325 = vpop.f32.mrb[0].mxu0
      %v2326 = vpop.f32.mrb[0].mxu0
      %v2327 = vadd.f32 0.0, %v2326
      %v2328 = vpop.f32.mrb[0].mxu0
      %2329 = vmatprep.mubr.bf16.mxu0 0
      %2330 = vmatmul.mubr.bf16.gmra.mrb[0].mxu0 %v2171
      %v2331 = vpop.f32.mrb[0].mxu0
      %v2332 = vadd.f32 0.0, %v2331
      %v2333 = vpop.f32.mrb[0].mxu0
      %v2334 = vpop.f32.mrb[0].mxu0
      %v2335 = vadd.f32 0.0, %v2334
      %v2336 = vpop.f32.mrb[0].mxu0
      %2337 = vmatprep.mubr.bf16.mxu0 0
      %2338 = vmatmul.mubr.bf16.gmra.mrb[0].mxu0 %v2174
      %v2339 = vpop.f32.mrb[0].mxu0
      %v2340 = vadd.f32 0.0, %v2339
      %v2341 = vpop.f32.mrb[0].mxu0
      %v2342 = vpop.f32.mrb[0].mxu0
      %v2343 = vadd.f32 0.0, %v2342
      %v2344 = vpop.f32.mrb[0].mxu0
      %2345 = vmatprep.mubr.bf16.mxu0 0
      %2346 = vmatmul.mubr.bf16.gmra.mrb[0].mxu0 %v2177
      %v2347 = vpop.f32.mrb[0].mxu0
      %v2348 = vadd.f32 0.0, %v2347
      %v2349 = vpop.f32.mrb[0].mxu0
      %v2350 = vpop.f32.mrb[0].mxu0
      %v2351 = vadd.f32 0.0, %v2350
      %v2352 = vpop.f32.mrb[0].mxu0
      %2353 = vmatprep.mubr.bf16.mxu0 0
      %2354 = vmatmul.mubr.bf16.gmra.mrb[0].mxu0 %v2180
      %v2355 = vpop.f32.mrb[0].mxu0
      %v2356 = vadd.f32 0.0, %v2355
      %v2357 = vpop.f32.mrb[0].mxu0
      %v2358 = vpop.f32.mrb[0].mxu0
      %v2359 = vadd.f32 0.0, %v2358
      %v2360 = vpop.f32.mrb[0].mxu0
      %2361 = vdwg.mxu0
      %v2362 = vadd.f32 %v1942, %v2220
      %v2363 = vadd.f32 %v1945, %v2223
      %v2364 = vadd.f32 %v1950, %v2228
      %v2365 = vadd.f32 %v1953, %v2231
      %v2366 = vadd.f32 %v1958, %v2236
      %v2367 = vadd.f32 %v1961, %v2239
      %v2368 = vadd.f32 %v1966, %v2244
      %v2369 = vadd.f32 %v1969, %v2247
      %v2370 = vadd.f32 %v1974, %v2252
      %v2371 = vadd.f32 %v1977, %v2255
      %v2372 = vadd.f32 %v1982, %v2260
      %v2373 = vadd.f32 %v1985, %v2263
      %v2374 = vadd.f32 %v1990, %v2268
      %v2375 = vadd.f32 %v1993, %v2271
      %v2376 = vadd.f32 %v1998, %v2276
      %v2377 = vadd.f32 %v2001, %v2279
      %v2378 = vadd.f32 %v2006, %v2284
      %v2379 = vadd.f32 %v2009, %v2287
      %v2380 = vadd.f32 %v2014, %v2292
      %v2381 = vadd.f32 %v2017, %v2295
      %v2382 = vadd.f32 %v2022, %v2300
      %v2383 = vadd.f32 %v2025, %v2303
      %v2384 = vadd.f32 %v2030, %v2308
      %v2385 = vadd.f32 %v2033, %v2311
      %v2386 = vadd.f32 %v2038, %v2316
      %v2387 = vadd.f32 %v2041, %v2319
      %v2388 = vadd.f32 %v2046, %v2324
      %v2389 = vadd.f32 %v2049, %v2327
      %v2390 = vadd.f32 %v2054, %v2332
      %v2391 = vadd.f32 %v2057, %v2335
      %v2392 = vadd.f32 %v2062, %v2340
      %v2393 = vadd.f32 %v2065, %v2343
      %v2394 = vadd.f32 %v2070, %v2348
      %v2395 = vadd.f32 %v2073, %v2351
      %v2396 = vadd.f32 %v2078, %v2356
      %v2397 = vadd.f32 %v2081, %v2359
      %v2398 = vld [vmem:[#allocation2 + $0x8] sm:$0xe]
      %v2399 = vld [vmem:[#allocation2 + $0xc] sm:$0xf]
      %v2400 = vld [vmem:[#allocation2 + $0x10] sm:$0xf]
      %v2401 = vld [vmem:[#allocation2 + $0x14] sm:$0xf]
      %v2402 = vld [vmem:[#allocation2 + $0x18] sm:$0xf]
      %v2403 = vld [vmem:[#allocation2 + $0x1c] sm:$0xf]
      %v2404 = vld [vmem:[#allocation2 + $0x20] sm:$0xf]
      %v2405 = vld [vmem:[#allocation2 + $0x24] sm:$0xf]
      %v2406 = vld [vmem:[#allocation2 + $0x28] sm:$0xf]
      %v2407 = vld [vmem:[#allocation2 + $0x2c] sm:$0xf]
      %v2408 = vld [vmem:[#allocation2 + $0x30] sm:$0xf]
      %v2409 = vld [vmem:[#allocation2 + $0x34] sm:$0xf]
      %v2410 = vld [vmem:[#allocation2 + $0x38] sm:$0xf]
      %v2411 = vld [vmem:[#allocation2 + $0x3c] sm:$0xf]
      %v2412 = vld [vmem:[#allocation2 + $0x40] sm:$0xf]
      %v2413 = vld [vmem:[#allocation2 + $0x44] sm:$0xf]
      %v2414 = vld [vmem:[#allocation2 + $0x48] sm:$0xf]
      %v2415 = vld [vmem:[#allocation2 + $0x4c] sm:$0xf]
      %v2416 = vld [vmem:[#allocation2 + $0x50] sm:$0xf]
      %v2417 = vld [vmem:[#allocation2 + $0x54] sm:$0xf]
      %v2418 = vld [vmem:[#allocation2 + $0x58] sm:$0xf]
      %v2419 = vld [vmem:[#allocation2 + $0x5c] sm:$0xf]
      %v2420 = vld [vmem:[#allocation2 + $0x60] sm:$0xf]
      %v2421 = vld [vmem:[#allocation2 + $0x64] sm:$0xf]
      %v2422 = vld [vmem:[#allocation2 + $0x68] sm:$0xf]
      %v2423 = vld [vmem:[#allocation2 + $0x6c] sm:$0xf]
      %v2424 = vld [vmem:[#allocation2 + $0x70] sm:$0xf]
      %v2425 = vld [vmem:[#allocation2 + $0x74] sm:$0xf]
      %v2426 = vld [vmem:[#allocation2 + $0x78] sm:$0xf]
      %v2427 = vld [vmem:[#allocation2 + $0x7c] sm:$0xf]
      %v2428 = vld [vmem:[#allocation2 + $0x80] sm:$0xf]
      %v2429 = vld [vmem:[#allocation2 + $0x84] sm:$0xf]
      %v2430 = vld [vmem:[#allocation2 + $0x88] sm:$0xf]
      %v2431 = vld [vmem:[#allocation2 + $0x8c] sm:$0xf]
      %v2432 = vld [vmem:[#allocation2 + $0x90] sm:$0xf]
      %v2433 = vld [vmem:[#allocation2 + $0x94] sm:$0xf]
      %v2434 = vld [vmem:[#allocation2 + $0x98] sm:$0x1]
      %s2435 = scalar_lea.vmem %s4, 6
      %v2436 = vld [vmem:[%s2435] sm:$0x3]
      %v2474 = vunpack.c.l.b16 %v2398
      %v2475 = vunpack.c.l.b16 %v2399
      %v2476 = vunpack.c.l.b16 %v2400
      %v2477 = vunpack.c.l.b16 %v2401
      %v2478 = vunpack.c.l.b16 %v2402
      %v2479 = vunpack.c.l.b16 %v2403
      %v2480 = vunpack.c.l.b16 %v2404
      %v2481 = vunpack.c.l.b16 %v2405
      %v2482 = vunpack.c.l.b16 %v2406
      %v2483 = vunpack.c.l.b16 %v2407
      %v2484 = vunpack.c.l.b16 %v2408
      %v2485 = vunpack.c.l.b16 %v2409
      %v2486 = vunpack.c.l.b16 %v2410
      %v2487 = vunpack.c.l.b16 %v2411
      %v2488 = vunpack.c.l.b16 %v2412
      %v2489 = vunpack.c.l.b16 %v2413
      %v2490 = vunpack.c.l.b16 %v2414
      %v2491 = vunpack.c.l.b16 %v2415
      %v2492 = vunpack.c.l.b16 %v2416
      %v2493 = vunpack.c.l.b16 %v2417
      %v2494 = vunpack.c.l.b16 %v2418
      %v2495 = vunpack.c.l.b16 %v2419
      %v2496 = vunpack.c.l.b16 %v2420
      %v2497 = vunpack.c.l.b16 %v2421
      %v2498 = vunpack.c.l.b16 %v2422
      %v2499 = vunpack.c.l.b16 %v2423
      %v2500 = vunpack.c.l.b16 %v2424
      %v2501 = vunpack.c.l.b16 %v2425
      %v2502 = vunpack.c.l.b16 %v2426
      %v2503 = vunpack.c.l.b16 %v2427
      %v2504 = vunpack.c.l.b16 %v2428
      %v2505 = vunpack.c.l.b16 %v2429
      %v2506 = vunpack.c.l.b16 %v2430
      %v2507 = vunpack.c.l.b16 %v2431
      %v2508 = vunpack.c.l.b16 %v2432
      %v2509 = vunpack.c.l.b16 %v2433
      %v2510 = vunpack.c.l.b16 %v2434
      %v2511 = vpack.c.b16 %v2475, %v2474
      %v2512 = vpack.c.b16 %v2477, %v2476
      %v2513 = vpack.c.b16 %v2479, %v2478
      %v2514 = vpack.c.b16 %v2481, %v2480
      %v2515 = vpack.c.b16 %v2483, %v2482
      %v2516 = vpack.c.b16 %v2485, %v2484
      %v2517 = vpack.c.b16 %v2487, %v2486
      %v2518 = vpack.c.b16 %v2489, %v2488
      %v2519 = vpack.c.b16 %v2491, %v2490
      %v2520 = vpack.c.b16 %v2493, %v2492
      %v2521 = vpack.c.b16 %v2495, %v2494
      %v2522 = vpack.c.b16 %v2497, %v2496
      %v2523 = vpack.c.b16 %v2499, %v2498
      %v2524 = vpack.c.b16 %v2501, %v2500
      %v2525 = vpack.c.b16 %v2503, %v2502
      %v2526 = vpack.c.b16 %v2505, %v2504
      %v2527 = vpack.c.b16 %v2507, %v2506
      %v2528 = vpack.c.b16 %v2509, %v2508
      %v2529 = vpack.c.b16 %v2510, %v2510
      %v2530 = vrot.slane %v2511, 1
      %v2531 = vrot.slane %v2512, 1
      %v2532 = vsel %vm2090, %v2530, %v2531
      %v2533 = vrot.slane %v2513, 1
      %v2534 = vsel %vm2090, %v2531, %v2533
      %v2535 = vrot.slane %v2514, 1
      %v2536 = vsel %vm2090, %v2533, %v2535
      %v2537 = vrot.slane %v2515, 1
      %v2538 = vsel %vm2090, %v2535, %v2537
      %v2539 = vrot.slane %v2516, 1
      %v2540 = vsel %vm2090, %v2537, %v2539
      %v2541 = vrot.slane %v2517, 1
      %v2542 = vsel %vm2090, %v2539, %v2541
      %v2543 = vrot.slane %v2518, 1
      %v2544 = vsel %vm2090, %v2541, %v2543
      %v2545 = vrot.slane %v2519, 1
      %v2546 = vsel %vm2090, %v2543, %v2545
      %v2547 = vrot.slane %v2520, 1
      %v2548 = vsel %vm2090, %v2545, %v2547
      %v2549 = vrot.slane %v2521, 1
      %v2550 = vsel %vm2090, %v2547, %v2549
      %v2551 = vrot.slane %v2522, 1
      %v2552 = vsel %vm2090, %v2549, %v2551
      %v2553 = vrot.slane %v2523, 1
      %v2554 = vsel %vm2090, %v2551, %v2553
      %v2555 = vrot.slane %v2524, 1
      %v2556 = vsel %vm2090, %v2553, %v2555
      %v2557 = vrot.slane %v2525, 1
      %v2558 = vsel %vm2090, %v2555, %v2557
      %v2559 = vrot.slane %v2526, 1
      %v2560 = vsel %vm2090, %v2557, %v2559
      %v2561 = vrot.slane %v2527, 1
      %v2562 = vsel %vm2090, %v2559, %v2561
      %v2563 = vrot.slane %v2528, 1
      %v2564 = vsel %vm2090, %v2561, %v2563
      %v2565 = vrot.slane %v2529, 1
      %v2566 = vsel %vm2090, %v2563, %v2565
      %v2568 = vsel %vm1632, %v2532, 0
      %v2571 = vsel %vm1632, %v2534, 0
      %v2574 = vsel %vm1632, %v2536, 0
      %v2577 = vsel %vm1632, %v2538, 0
      %v2580 = vsel %vm1632, %v2540, 0
      %v2583 = vsel %vm1632, %v2542, 0
      %v2586 = vsel %vm1632, %v2544, 0
      %v2589 = vsel %vm1632, %v2546, 0
      %v2592 = vsel %vm1632, %v2548, 0
      %v2595 = vsel %vm1632, %v2550, 0
      %v2598 = vsel %vm1632, %v2552, 0
      %v2601 = vsel %vm1632, %v2554, 0
      %v2604 = vsel %vm1632, %v2556, 0
      %v2607 = vsel %vm1632, %v2558, 0
      %v2610 = vsel %vm1632, %v2560, 0
      %v2613 = vsel %vm1632, %v2562, 0
      %v2616 = vsel %vm1632, %v2564, 0
      %v2619 = vsel %vm1632, %v2566, 0
      %v2622 = vsel %vm1687, %v2436, 0
      %2624 = vmatprep.subr.bf16.mxu0 0
      %2625 = vmatpush1.bf16.msra.mxu0 %v2622
      %2626 = vmatprep.subr.bf16.mxu0 0
      %2627 = vmatpush1.bf16.msra.mxu0 0
      %2628 = vmatprep.subr.bf16.mxu0 0
      %2629 = vmatpush1.bf16.msra.mxu0 0
      %2630 = vmatprep.subr.bf16.mxu0 0
      %2631 = vmatpush1.bf16.msra.mxu0 0
      %2632 = vmatprep.subr.bf16.mxu0 0
      %2633 = vmatpush1.bf16.msra.mxu0 0
      %2634 = vmatprep.subr.bf16.mxu0 0
      %2635 = vmatpush1.bf16.msra.mxu0 0
      %2636 = vmatprep.subr.bf16.mxu0 0
      %2637 = vmatpush1.bf16.msra.mxu0 0
      %2638 = vmatprep.subr.bf16.mxu0 0
      %2639 = vmatpush1.bf16.msra.mxu0 0
      %2640 = vmatprep.subr.bf16.mxu0 0
      %2641 = vmatpush1.bf16.msra.mxu0 0
      %2642 = vmatprep.subr.bf16.mxu0 0
      %2643 = vmatpush1.bf16.msra.mxu0 0
      %2644 = vmatprep.subr.bf16.mxu0 0
      %2645 = vmatpush1.bf16.msra.mxu0 0
      %2646 = vmatprep.subr.bf16.mxu0 0
      %2647 = vmatpush1.bf16.msra.mxu0 0
      %2648 = vmatprep.subr.bf16.mxu0 0
      %2649 = vmatpush1.bf16.msra.mxu0 0
      %2650 = vmatprep.subr.bf16.mxu0 0
      %2651 = vmatpush1.bf16.msra.mxu0 0
      %2652 = vmatprep.subr.bf16.mxu0 0
      %2653 = vmatpush1.bf16.msra.mxu0 0
      %2654 = vmatprep.subr.bf16.mxu0 0
      %2655 = vmatpush1.bf16.msra.mxu0 0
      %2656 = vmatprep.mubr.bf16.mxu0 0
      %2657 = vmatmul.mubr.bf16.gmra.mrb[0].mxu0 %v2568
      %v2658 = vpop.f32.mrb[0].mxu0
      %v2659 = vadd.f32 0.0, %v2658
      %v2660 = vpop.f32.mrb[0].mxu0
      %v2661 = vpop.f32.mrb[0].mxu0
      %v2662 = vadd.f32 0.0, %v2661
      %v2663 = vpop.f32.mrb[0].mxu0
      %2664 = vmatprep.mubr.bf16.mxu0 0
      %2665 = vmatmul.mubr.bf16.gmra.mrb[0].mxu0 %v2571
      %v2666 = vpop.f32.mrb[0].mxu0
      %v2667 = vadd.f32 0.0, %v2666
      %v2668 = vpop.f32.mrb[0].mxu0
      %v2669 = vpop.f32.mrb[0].mxu0
      %v2670 = vadd.f32 0.0, %v2669
      %v2671 = vpop.f32.mrb[0].mxu0
      %2672 = vmatprep.mubr.bf16.mxu0 0
      %2673 = vmatmul.mubr.bf16.gmra.mrb[0].mxu0 %v2574
      %v2674 = vpop.f32.mrb[0].mxu0
      %v2675 = vadd.f32 0.0, %v2674
      %v2676 = vpop.f32.mrb[0].mxu0
      %v2677 = vpop.f32.mrb[0].mxu0
      %v2678 = vadd.f32 0.0, %v2677
      %v2679 = vpop.f32.mrb[0].mxu0
      %2680 = vmatprep.mubr.bf16.mxu0 0
      %2681 = vmatmul.mubr.bf16.gmra.mrb[0].mxu0 %v2577
      %v2682 = vpop.f32.mrb[0].mxu0
      %v2683 = vadd.f32 0.0, %v2682
      %v2684 = vpop.f32.mrb[0].mxu0
      %v2685 = vpop.f32.mrb[0].mxu0
      %v2686 = vadd.f32 0.0, %v2685
      %v2687 = vpop.f32.mrb[0].mxu0
      %2688 = vmatprep.mubr.bf16.mxu0 0
      %2689 = vmatmul.mubr.bf16.gmra.mrb[0].mxu0 %v2580
      %v2690 = vpop.f32.mrb[0].mxu0
      %v2691 = vadd.f32 0.0, %v2690
      %v2692 = vpop.f32.mrb[0].mxu0
      %v2693 = vpop.f32.mrb[0].mxu0
      %v2694 = vadd.f32 0.0, %v2693
      %v2695 = vpop.f32.mrb[0].mxu0
      %2696 = vmatprep.mubr.bf16.mxu0 0
      %2697 = vmatmul.mubr.bf16.gmra.mrb[0].mxu0 %v2583
      %v2698 = vpop.f32.mrb[0].mxu0
      %v2699 = vadd.f32 0.0, %v2698
      %v2700 = vpop.f32.mrb[0].mxu0
      %v2701 = vpop.f32.mrb[0].mxu0
      %v2702 = vadd.f32 0.0, %v2701
      %v2703 = vpop.f32.mrb[0].mxu0
      %2704 = vmatprep.mubr.bf16.mxu0 0
      %2705 = vmatmul.mubr.bf16.gmra.mrb[0].mxu0 %v2586
      %v2706 = vpop.f32.mrb[0].mxu0
      %v2707 = vadd.f32 0.0, %v2706
      %v2708 = vpop.f32.mrb[0].mxu0
      %v2709 = vpop.f32.mrb[0].mxu0
      %v2710 = vadd.f32 0.0, %v2709
      %v2711 = vpop.f32.mrb[0].mxu0
      %2712 = vmatprep.mubr.bf16.mxu0 0
      %2713 = vmatmul.mubr.bf16.gmra.mrb[0].mxu0 %v2589
      %v2714 = vpop.f32.mrb[0].mxu0
      %v2715 = vadd.f32 0.0, %v2714
      %v2716 = vpop.f32.mrb[0].mxu0
      %v2717 = vpop.f32.mrb[0].mxu0
      %v2718 = vadd.f32 0.0, %v2717
      %v2719 = vpop.f32.mrb[0].mxu0
      %2720 = vmatprep.mubr.bf16.mxu0 0
      %2721 = vmatmul.mubr.bf16.gmra.mrb[0].mxu0 %v2592
      %v2722 = vpop.f32.mrb[0].mxu0
      %v2723 = vadd.f32 0.0, %v2722
      %v2724 = vpop.f32.mrb[0].mxu0
      %v2725 = vpop.f32.mrb[0].mxu0
      %v2726 = vadd.f32 0.0, %v2725
      %v2727 = vpop.f32.mrb[0].mxu0
      %2728 = vmatprep.mubr.bf16.mxu0 0
      %2729 = vmatmul.mubr.bf16.gmra.mrb[0].mxu0 %v2595
      %v2730 = vpop.f32.mrb[0].mxu0
      %v2731 = vadd.f32 0.0, %v2730
      %v2732 = vpop.f32.mrb[0].mxu0
      %v2733 = vpop.f32.mrb[0].mxu0
      %v2734 = vadd.f32 0.0, %v2733
      %v2735 = vpop.f32.mrb[0].mxu0
      %2736 = vmatprep.mubr.bf16.mxu0 0
      %2737 = vmatmul.mubr.bf16.gmra.mrb[0].mxu0 %v2598
      %v2738 = vpop.f32.mrb[0].mxu0
      %v2739 = vadd.f32 0.0, %v2738
      %v2740 = vpop.f32.mrb[0].mxu0
      %v2741 = vpop.f32.mrb[0].mxu0
      %v2742 = vadd.f32 0.0, %v2741
      %v2743 = vpop.f32.mrb[0].mxu0
      %2744 = vmatprep.mubr.bf16.mxu0 0
      %2745 = vmatmul.mubr.bf16.gmra.mrb[0].mxu0 %v2601
      %v2746 = vpop.f32.mrb[0].mxu0
      %v2747 = vadd.f32 0.0, %v2746
      %v2748 = vpop.f32.mrb[0].mxu0
      %v2749 = vpop.f32.mrb[0].mxu0
      %v2750 = vadd.f32 0.0, %v2749
      %v2751 = vpop.f32.mrb[0].mxu0
      %2752 = vmatprep.mubr.bf16.mxu0 0
      %2753 = vmatmul.mubr.bf16.gmra.mrb[0].mxu0 %v2604
      %v2754 = vpop.f32.mrb[0].mxu0
      %v2755 = vadd.f32 0.0, %v2754
      %v2756 = vpop.f32.mrb[0].mxu0
      %v2757 = vpop.f32.mrb[0].mxu0
      %v2758 = vadd.f32 0.0, %v2757
      %v2759 = vpop.f32.mrb[0].mxu0
      %2760 = vmatprep.mubr.bf16.mxu0 0
      %2761 = vmatmul.mubr.bf16.gmra.mrb[0].mxu0 %v2607
      %v2762 = vpop.f32.mrb[0].mxu0
      %v2763 = vadd.f32 0.0, %v2762
      %v2764 = vpop.f32.mrb[0].mxu0
      %v2765 = vpop.f32.mrb[0].mxu0
      %v2766 = vadd.f32 0.0, %v2765
      %v2767 = vpop.f32.mrb[0].mxu0
      %2768 = vmatprep.mubr.bf16.mxu0 0
      %2769 = vmatmul.mubr.bf16.gmra.mrb[0].mxu0 %v2610
      %v2770 = vpop.f32.mrb[0].mxu0
      %v2771 = vadd.f32 0.0, %v2770
      %v2772 = vpop.f32.mrb[0].mxu0
      %v2773 = vpop.f32.mrb[0].mxu0
      %v2774 = vadd.f32 0.0, %v2773
      %v2775 = vpop.f32.mrb[0].mxu0
      %2776 = vmatprep.mubr.bf16.mxu0 0
      %2777 = vmatmul.mubr.bf16.gmra.mrb[0].mxu0 %v2613
      %v2778 = vpop.f32.mrb[0].mxu0
      %v2779 = vadd.f32 0.0, %v2778
      %v2780 = vpop.f32.mrb[0].mxu0
      %v2781 = vpop.f32.mrb[0].mxu0
      %v2782 = vadd.f32 0.0, %v2781
      %v2783 = vpop.f32.mrb[0].mxu0
      %2784 = vmatprep.mubr.bf16.mxu0 0
      %2785 = vmatmul.mubr.bf16.gmra.mrb[0].mxu0 %v2616
      %v2786 = vpop.f32.mrb[0].mxu0
      %v2787 = vadd.f32 0.0, %v2786
      %v2788 = vpop.f32.mrb[0].mxu0
      %v2789 = vpop.f32.mrb[0].mxu0
      %v2790 = vadd.f32 0.0, %v2789
      %v2791 = vpop.f32.mrb[0].mxu0
      %2792 = vmatprep.mubr.bf16.mxu0 0
      %2793 = vmatmul.mubr.bf16.gmra.mrb[0].mxu0 %v2619
      %v2794 = vpop.f32.mrb[0].mxu0
      %v2795 = vadd.f32 0.0, %v2794
      %v2796 = vpop.f32.mrb[0].mxu0
      %v2797 = vpop.f32.mrb[0].mxu0
      %v2798 = vadd.f32 0.0, %v2797
      %v2799 = vpop.f32.mrb[0].mxu0
      %2800 = vdwg.mxu0
      %v2801 = vadd.f32 %v2362, %v2659
      %v2802 = vadd.f32 %v2363, %v2662
      %v2803 = vadd.f32 %v2364, %v2667
      %v2804 = vadd.f32 %v2365, %v2670
      %v2805 = vadd.f32 %v2366, %v2675
      %v2806 = vadd.f32 %v2367, %v2678
      %v2807 = vadd.f32 %v2368, %v2683
      %v2808 = vadd.f32 %v2369, %v2686
      %v2809 = vadd.f32 %v2370, %v2691
      %v2810 = vadd.f32 %v2371, %v2694
      %v2811 = vadd.f32 %v2372, %v2699
      %v2812 = vadd.f32 %v2373, %v2702
      %v2813 = vadd.f32 %v2374, %v2707
      %v2814 = vadd.f32 %v2375, %v2710
      %v2815 = vadd.f32 %v2376, %v2715
      %v2816 = vadd.f32 %v2377, %v2718
      %v2817 = vadd.f32 %v2378, %v2723
      %v2818 = vadd.f32 %v2379, %v2726
      %v2819 = vadd.f32 %v2380, %v2731
      %v2820 = vadd.f32 %v2381, %v2734
      %v2821 = vadd.f32 %v2382, %v2739
      %v2822 = vadd.f32 %v2383, %v2742
      %v2823 = vadd.f32 %v2384, %v2747
      %v2824 = vadd.f32 %v2385, %v2750
      %v2825 = vadd.f32 %v2386, %v2755
      %v2826 = vadd.f32 %v2387, %v2758
      %v2827 = vadd.f32 %v2388, %v2763
      %v2828 = vadd.f32 %v2389, %v2766
      %v2829 = vadd.f32 %v2390, %v2771
      %v2830 = vadd.f32 %v2391, %v2774
      %v2831 = vadd.f32 %v2392, %v2779
      %v2832 = vadd.f32 %v2393, %v2782
      %v2833 = vadd.f32 %v2394, %v2787
      %v2834 = vadd.f32 %v2395, %v2790
      %v2835 = vadd.f32 %v2396, %v2795
      %v2836 = vadd.f32 %v2397, %v2798
      %v2837 = vld [vmem:[#allocation2 + $0x98] sm:$0x3]
      %s2838 = scalar_lea.vmem %s4, 8
      %v2839 = vld [vmem:[%s2838] sm:$0x3]
      %v2841 = vunpack.c.l.b16 %v2837
      %v2842 = vpack.c.b16 %v2841, %v2841
      %vm2843 = vsmask.f32 6400
      %v2845 = vshrl.u32 %v2511, 16
      %v2847 = vrot.slane %v2845, 1
      %v2848 = vshll.u32 %v2511, 16
      %v2850 = vrot.slane %v2848, 2
      %v2851 = vor.u32 %v2847, %v2850
      %v2853 = vshrl.u32 %v2512, 16
      %v2855 = vrot.slane %v2853, 1
      %v2856 = vshll.u32 %v2512, 16
      %v2858 = vrot.slane %v2856, 2
      %v2859 = vor.u32 %v2855, %v2858
      %v2860 = vsel %vm2843, %v2851, %v2859
      %v2862 = vshrl.u32 %v2513, 16
      %v2864 = vrot.slane %v2862, 1
      %v2865 = vshll.u32 %v2513, 16
      %v2867 = vrot.slane %v2865, 2
      %v2868 = vor.u32 %v2864, %v2867
      %v2869 = vsel %vm2843, %v2859, %v2868
      %v2871 = vshrl.u32 %v2514, 16
      %v2873 = vrot.slane %v2871, 1
      %v2874 = vshll.u32 %v2514, 16
      %v2876 = vrot.slane %v2874, 2
      %v2877 = vor.u32 %v2873, %v2876
      %v2878 = vsel %vm2843, %v2868, %v2877
      %v2880 = vshrl.u32 %v2515, 16
      %v2882 = vrot.slane %v2880, 1
      %v2883 = vshll.u32 %v2515, 16
      %v2885 = vrot.slane %v2883, 2
      %v2886 = vor.u32 %v2882, %v2885
      %v2887 = vsel %vm2843, %v2877, %v2886
      %v2889 = vshrl.u32 %v2516, 16
      %v2891 = vrot.slane %v2889, 1
      %v2892 = vshll.u32 %v2516, 16
      %v2894 = vrot.slane %v2892, 2
      %v2895 = vor.u32 %v2891, %v2894
      %v2896 = vsel %vm2843, %v2886, %v2895
      %v2898 = vshrl.u32 %v2517, 16
      %v2900 = vrot.slane %v2898, 1
      %v2901 = vshll.u32 %v2517, 16
      %v2903 = vrot.slane %v2901, 2
      %v2904 = vor.u32 %v2900, %v2903
      %v2905 = vsel %vm2843, %v2895, %v2904
      %v2907 = vshrl.u32 %v2518, 16
      %v2909 = vrot.slane %v2907, 1
      %v2910 = vshll.u32 %v2518, 16
      %v2912 = vrot.slane %v2910, 2
      %v2913 = vor.u32 %v2909, %v2912
      %v2914 = vsel %vm2843, %v2904, %v2913
      %v2916 = vshrl.u32 %v2519, 16
      %v2918 = vrot.slane %v2916, 1
      %v2919 = vshll.u32 %v2519, 16
      %v2921 = vrot.slane %v2919, 2
      %v2922 = vor.u32 %v2918, %v2921
      %v2923 = vsel %vm2843, %v2913, %v2922
      %v2925 = vshrl.u32 %v2520, 16
      %v2927 = vrot.slane %v2925, 1
      %v2928 = vshll.u32 %v2520, 16
      %v2930 = vrot.slane %v2928, 2
      %v2931 = vor.u32 %v2927, %v2930
      %v2932 = vsel %vm2843, %v2922, %v2931
      %v2934 = vshrl.u32 %v2521, 16
      %v2936 = vrot.slane %v2934, 1
      %v2937 = vshll.u32 %v2521, 16
      %v2939 = vrot.slane %v2937, 2
      %v2940 = vor.u32 %v2936, %v2939
      %v2941 = vsel %vm2843, %v2931, %v2940
      %v2943 = vshrl.u32 %v2522, 16
      %v2945 = vrot.slane %v2943, 1
      %v2946 = vshll.u32 %v2522, 16
      %v2948 = vrot.slane %v2946, 2
      %v2949 = vor.u32 %v2945, %v2948
      %v2950 = vsel %vm2843, %v2940, %v2949
      %v2952 = vshrl.u32 %v2523, 16
      %v2954 = vrot.slane %v2952, 1
      %v2955 = vshll.u32 %v2523, 16
      %v2957 = vrot.slane %v2955, 2
      %v2958 = vor.u32 %v2954, %v2957
      %v2959 = vsel %vm2843, %v2949, %v2958
      %v2961 = vshrl.u32 %v2524, 16
      %v2963 = vrot.slane %v2961, 1
      %v2964 = vshll.u32 %v2524, 16
      %v2966 = vrot.slane %v2964, 2
      %v2967 = vor.u32 %v2963, %v2966
      %v2968 = vsel %vm2843, %v2958, %v2967
      %v2970 = vshrl.u32 %v2525, 16
      %v2972 = vrot.slane %v2970, 1
      %v2973 = vshll.u32 %v2525, 16
      %v2975 = vrot.slane %v2973, 2
      %v2976 = vor.u32 %v2972, %v2975
      %v2977 = vsel %vm2843, %v2967, %v2976
      %v2979 = vshrl.u32 %v2526, 16
      %v2981 = vrot.slane %v2979, 1
      %v2982 = vshll.u32 %v2526, 16
      %v2984 = vrot.slane %v2982, 2
      %v2985 = vor.u32 %v2981, %v2984
      %v2986 = vsel %vm2843, %v2976, %v2985
      %v2988 = vshrl.u32 %v2527, 16
      %v2990 = vrot.slane %v2988, 1
      %v2991 = vshll.u32 %v2527, 16
      %v2993 = vrot.slane %v2991, 2
      %v2994 = vor.u32 %v2990, %v2993
      %v2995 = vsel %vm2843, %v2985, %v2994
      %v2997 = vshrl.u32 %v2528, 16
      %v2999 = vrot.slane %v2997, 1
      %v3000 = vshll.u32 %v2528, 16
      %v3002 = vrot.slane %v3000, 2
      %v3003 = vor.u32 %v2999, %v3002
      %v3004 = vsel %vm2843, %v2994, %v3003
      %v3006 = vshrl.u32 %v2842, 16
      %v3008 = vrot.slane %v3006, 1
      %v3009 = vshll.u32 %v2842, 16
      %v3011 = vrot.slane %v3009, 2
      %v3012 = vor.u32 %v3008, %v3011
      %v3013 = vsel %vm2843, %v3003, %v3012
      %v3015 = vsel %vm1632, %v2860, 0
      %v3018 = vsel %vm1632, %v2869, 0
      %v3021 = vsel %vm1632, %v2878, 0
      %v3024 = vsel %vm1632, %v2887, 0
      %v3027 = vsel %vm1632, %v2896, 0
      %v3030 = vsel %vm1632, %v2905, 0
      %v3033 = vsel %vm1632, %v2914, 0
      %v3036 = vsel %vm1632, %v2923, 0
      %v3039 = vsel %vm1632, %v2932, 0
      %v3042 = vsel %vm1632, %v2941, 0
      %v3045 = vsel %vm1632, %v2950, 0
      %v3048 = vsel %vm1632, %v2959, 0
      %v3051 = vsel %vm1632, %v2968, 0
      %v3054 = vsel %vm1632, %v2977, 0
      %v3057 = vsel %vm1632, %v2986, 0
      %v3060 = vsel %vm1632, %v2995, 0
      %v3063 = vsel %vm1632, %v3004, 0
      %v3066 = vsel %vm1632, %v3013, 0
      %v3069 = vsel %vm1687, %v2839, 0
      %3071 = vmatprep.subr.bf16.mxu0 0
      %3072 = vmatpush1.bf16.msra.mxu0 %v3069
      %3073 = vmatprep.subr.bf16.mxu0 0
      %3074 = vmatpush1.bf16.msra.mxu0 0
      %3075 = vmatprep.subr.bf16.mxu0 0
      %3076 = vmatpush1.bf16.msra.mxu0 0
      %3077 = vmatprep.subr.bf16.mxu0 0
      %3078 = vmatpush1.bf16.msra.mxu0 0
      %3079 = vmatprep.subr.bf16.mxu0 0
      %3080 = vmatpush1.bf16.msra.mxu0 0
      %3081 = vmatprep.subr.bf16.mxu0 0
      %3082 = vmatpush1.bf16.msra.mxu0 0
      %3083 = vmatprep.subr.bf16.mxu0 0
      %3084 = vmatpush1.bf16.msra.mxu0 0
      %3085 = vmatprep.subr.bf16.mxu0 0
      %3086 = vmatpush1.bf16.msra.mxu0 0
      %3087 = vmatprep.subr.bf16.mxu0 0
      %3088 = vmatpush1.bf16.msra.mxu0 0
      %3089 = vmatprep.subr.bf16.mxu0 0
      %3090 = vmatpush1.bf16.msra.mxu0 0
      %3091 = vmatprep.subr.bf16.mxu0 0
      %3092 = vmatpush1.bf16.msra.mxu0 0
      %3093 = vmatprep.subr.bf16.mxu0 0
      %3094 = vmatpush1.bf16.msra.mxu0 0
      %3095 = vmatprep.subr.bf16.mxu0 0
      %3096 = vmatpush1.bf16.msra.mxu0 0
      %3097 = vmatprep.subr.bf16.mxu0 0
      %3098 = vmatpush1.bf16.msra.mxu0 0
      %3099 = vmatprep.subr.bf16.mxu0 0
      %3100 = vmatpush1.bf16.msra.mxu0 0
      %3101 = vmatprep.subr.bf16.mxu0 0
      %3102 = vmatpush1.bf16.msra.mxu0 0
      %3103 = vmatprep.mubr.bf16.mxu0 0
      %3104 = vmatmul.mubr.bf16.gmra.mrb[0].mxu0 %v3015
      %v3105 = vpop.f32.mrb[0].mxu0
      %v3106 = vadd.f32 0.0, %v3105
      %v3107 = vpop.f32.mrb[0].mxu0
      %v3108 = vpop.f32.mrb[0].mxu0
      %v3109 = vadd.f32 0.0, %v3108
      %v3110 = vpop.f32.mrb[0].mxu0
      %3111 = vmatprep.mubr.bf16.mxu0 0
      %3112 = vmatmul.mubr.bf16.gmra.mrb[0].mxu0 %v3018
      %v3113 = vpop.f32.mrb[0].mxu0
      %v3114 = vadd.f32 0.0, %v3113
      %v3115 = vpop.f32.mrb[0].mxu0
      %v3116 = vpop.f32.mrb[0].mxu0
      %v3117 = vadd.f32 0.0, %v3116
      %v3118 = vpop.f32.mrb[0].mxu0
      %3119 = vmatprep.mubr.bf16.mxu0 0
      %3120 = vmatmul.mubr.bf16.gmra.mrb[0].mxu0 %v3021
      %v3121 = vpop.f32.mrb[0].mxu0
      %v3122 = vadd.f32 0.0, %v3121
      %v3123 = vpop.f32.mrb[0].mxu0
      %v3124 = vpop.f32.mrb[0].mxu0
      %v3125 = vadd.f32 0.0, %v3124
      %v3126 = vpop.f32.mrb[0].mxu0
      %3127 = vmatprep.mubr.bf16.mxu0 0
      %3128 = vmatmul.mubr.bf16.gmra.mrb[0].mxu0 %v3024
      %v3129 = vpop.f32.mrb[0].mxu0
      %v3130 = vadd.f32 0.0, %v3129
      %v3131 = vpop.f32.mrb[0].mxu0
      %v3132 = vpop.f32.mrb[0].mxu0
      %v3133 = vadd.f32 0.0, %v3132
      %v3134 = vpop.f32.mrb[0].mxu0
      %3135 = vmatprep.mubr.bf16.mxu0 0
      %3136 = vmatmul.mubr.bf16.gmra.mrb[0].mxu0 %v3027
      %v3137 = vpop.f32.mrb[0].mxu0
      %v3138 = vadd.f32 0.0, %v3137
      %v3139 = vpop.f32.mrb[0].mxu0
      %v3140 = vpop.f32.mrb[0].mxu0
      %v3141 = vadd.f32 0.0, %v3140
      %v3142 = vpop.f32.mrb[0].mxu0
      %3143 = vmatprep.mubr.bf16.mxu0 0
      %3144 = vmatmul.mubr.bf16.gmra.mrb[0].mxu0 %v3030
      %v3145 = vpop.f32.mrb[0].mxu0
      %v3146 = vadd.f32 0.0, %v3145
      %v3147 = vpop.f32.mrb[0].mxu0
      %v3148 = vpop.f32.mrb[0].mxu0
      %v3149 = vadd.f32 0.0, %v3148
      %v3150 = vpop.f32.mrb[0].mxu0
      %3151 = vmatprep.mubr.bf16.mxu0 0
      %3152 = vmatmul.mubr.bf16.gmra.mrb[0].mxu0 %v3033
      %v3153 = vpop.f32.mrb[0].mxu0
      %v3154 = vadd.f32 0.0, %v3153
      %v3155 = vpop.f32.mrb[0].mxu0
      %v3156 = vpop.f32.mrb[0].mxu0
      %v3157 = vadd.f32 0.0, %v3156
      %v3158 = vpop.f32.mrb[0].mxu0
      %3159 = vmatprep.mubr.bf16.mxu0 0
      %3160 = vmatmul.mubr.bf16.gmra.mrb[0].mxu0 %v3036
      %v3161 = vpop.f32.mrb[0].mxu0
      %v3162 = vadd.f32 0.0, %v3161
      %v3163 = vpop.f32.mrb[0].mxu0
      %v3164 = vpop.f32.mrb[0].mxu0
      %v3165 = vadd.f32 0.0, %v3164
      %v3166 = vpop.f32.mrb[0].mxu0
      %3167 = vmatprep.mubr.bf16.mxu0 0
      %3168 = vmatmul.mubr.bf16.gmra.mrb[0].mxu0 %v3039
      %v3169 = vpop.f32.mrb[0].mxu0
      %v3170 = vadd.f32 0.0, %v3169
      %v3171 = vpop.f32.mrb[0].mxu0
      %v3172 = vpop.f32.mrb[0].mxu0
      %v3173 = vadd.f32 0.0, %v3172
      %v3174 = vpop.f32.mrb[0].mxu0
      %3175 = vmatprep.mubr.bf16.mxu0 0
      %3176 = vmatmul.mubr.bf16.gmra.mrb[0].mxu0 %v3042
      %v3177 = vpop.f32.mrb[0].mxu0
      %v3178 = vadd.f32 0.0, %v3177
      %v3179 = vpop.f32.mrb[0].mxu0
      %v3180 = vpop.f32.mrb[0].mxu0
      %v3181 = vadd.f32 0.0, %v3180
      %v3182 = vpop.f32.mrb[0].mxu0
      %3183 = vmatprep.mubr.bf16.mxu0 0
      %3184 = vmatmul.mubr.bf16.gmra.mrb[0].mxu0 %v3045
      %v3185 = vpop.f32.mrb[0].mxu0
      %v3186 = vadd.f32 0.0, %v3185
      %v3187 = vpop.f32.mrb[0].mxu0
      %v3188 = vpop.f32.mrb[0].mxu0
      %v3189 = vadd.f32 0.0, %v3188
      %v3190 = vpop.f32.mrb[0].mxu0
      %3191 = vmatprep.mubr.bf16.mxu0 0
      %3192 = vmatmul.mubr.bf16.gmra.mrb[0].mxu0 %v3048
      %v3193 = vpop.f32.mrb[0].mxu0
      %v3194 = vadd.f32 0.0, %v3193
      %v3195 = vpop.f32.mrb[0].mxu0
      %v3196 = vpop.f32.mrb[0].mxu0
      %v3197 = vadd.f32 0.0, %v3196
      %v3198 = vpop.f32.mrb[0].mxu0
      %3199 = vmatprep.mubr.bf16.mxu0 0
      %3200 = vmatmul.mubr.bf16.gmra.mrb[0].mxu0 %v3051
      %v3201 = vpop.f32.mrb[0].mxu0
      %v3202 = vadd.f32 0.0, %v3201
      %v3203 = vpop.f32.mrb[0].mxu0
      %v3204 = vpop.f32.mrb[0].mxu0
      %v3205 = vadd.f32 0.0, %v3204
      %v3206 = vpop.f32.mrb[0].mxu0
      %3207 = vmatprep.mubr.bf16.mxu0 0
      %3208 = vmatmul.mubr.bf16.gmra.mrb[0].mxu0 %v3054
      %v3209 = vpop.f32.mrb[0].mxu0
      %v3210 = vadd.f32 0.0, %v3209
      %v3211 = vpop.f32.mrb[0].mxu0
      %v3212 = vpop.f32.mrb[0].mxu0
      %v3213 = vadd.f32 0.0, %v3212
      %v3214 = vpop.f32.mrb[0].mxu0
      %3215 = vmatprep.mubr.bf16.mxu0 0
      %3216 = vmatmul.mubr.bf16.gmra.mrb[0].mxu0 %v3057
      %v3217 = vpop.f32.mrb[0].mxu0
      %v3218 = vadd.f32 0.0, %v3217
      %v3219 = vpop.f32.mrb[0].mxu0
      %v3220 = vpop.f32.mrb[0].mxu0
      %v3221 = vadd.f32 0.0, %v3220
      %v3222 = vpop.f32.mrb[0].mxu0
      %3223 = vmatprep.mubr.bf16.mxu0 0
      %3224 = vmatmul.mubr.bf16.gmra.mrb[0].mxu0 %v3060
      %v3225 = vpop.f32.mrb[0].mxu0
      %v3226 = vadd.f32 0.0, %v3225
      %v3227 = vpop.f32.mrb[0].mxu0
      %v3228 = vpop.f32.mrb[0].mxu0
      %v3229 = vadd.f32 0.0, %v3228
      %v3230 = vpop.f32.mrb[0].mxu0
      %3231 = vmatprep.mubr.bf16.mxu0 0
      %3232 = vmatmul.mubr.bf16.gmra.mrb[0].mxu0 %v3063
      %v3233 = vpop.f32.mrb[0].mxu0
      %v3234 = vadd.f32 0.0, %v3233
      %v3235 = vpop.f32.mrb[0].mxu0
      %v3236 = vpop.f32.mrb[0].mxu0
      %v3237 = vadd.f32 0.0, %v3236
      %v3238 = vpop.f32.mrb[0].mxu0
      %3239 = vmatprep.mubr.bf16.mxu0 0
      %3240 = vmatmul.mubr.bf16.gmra.mrb[0].mxu0 %v3066
      %v3241 = vpop.f32.mrb[0].mxu0
      %v3242 = vadd.f32 0.0, %v3241
      %v3243 = vpop.f32.mrb[0].mxu0
      %v3244 = vpop.f32.mrb[0].mxu0
      %v3245 = vadd.f32 0.0, %v3244
      %v3246 = vpop.f32.mrb[0].mxu0
      %3247 = vdwg.mxu0
      %v3248 = vadd.f32 %v2801, %v3106
      %v3249 = vadd.f32 %v2802, %v3109
      %v3250 = vadd.f32 %v2803, %v3114
      %v3251 = vadd.f32 %v2804, %v3117
      %v3252 = vadd.f32 %v2805, %v3122
      %v3253 = vadd.f32 %v2806, %v3125
      %v3254 = vadd.f32 %v2807, %v3130
      %v3255 = vadd.f32 %v2808, %v3133
      %v3256 = vadd.f32 %v2809, %v3138
      %v3257 = vadd.f32 %v2810, %v3141
      %v3258 = vadd.f32 %v2811, %v3146
      %v3259 = vadd.f32 %v2812, %v3149
      %v3260 = vadd.f32 %v2813, %v3154
      %v3261 = vadd.f32 %v2814, %v3157
      %v3262 = vadd.f32 %v2815, %v3162
      %v3263 = vadd.f32 %v2816, %v3165
      %v3264 = vadd.f32 %v2817, %v3170
      %v3265 = vadd.f32 %v2818, %v3173
      %v3266 = vadd.f32 %v2819, %v3178
      %v3267 = vadd.f32 %v2820, %v3181
      %v3268 = vadd.f32 %v2821, %v3186
      %v3269 = vadd.f32 %v2822, %v3189
      %v3270 = vadd.f32 %v2823, %v3194
      %v3271 = vadd.f32 %v2824, %v3197
      %v3272 = vadd.f32 %v2825, %v3202
      %v3273 = vadd.f32 %v2826, %v3205
      %v3274 = vadd.f32 %v2827, %v3210
      %v3275 = vadd.f32 %v2828, %v3213
      %v3276 = vadd.f32 %v2829, %v3218
      %v3277 = vadd.f32 %v2830, %v3221
      %v3278 = vadd.f32 %v2831, %v3226
      %v3279 = vadd.f32 %v2832, %v3229
      %v3280 = vadd.f32 %v2833, %v3234
      %v3281 = vadd.f32 %v2834, %v3237
      %v3282 = vadd.f32 %v2835, %v3242
      %v3283 = vadd.f32 %v2836, %v3245
      %v3284 = vld [vmem:[#allocation2 + $0x8] sm:$0xc]
      %s3285 = scalar_lea.vmem %s4, 10
      %v3286 = vld [vmem:[%s3285] sm:$0x3]
      %v3288 = vunpack.c.l.b16 %v3284
      %v3289 = vpack.c.b16 %v2475, %v3288
      %vm3290 = vcmask 1045504
      %v3291 = vrot.slane %v3289, 2
      %v3292 = vrot.slane %v2512, 2
      %v3293 = vsel %vm3290, %v3291, %v3292
      %v3294 = vrot.slane %v2513, 2
      %v3295 = vsel %vm3290, %v3292, %v3294
      %v3296 = vrot.slane %v2514, 2
      %v3297 = vsel %vm3290, %v3294, %v3296
      %v3298 = vrot.slane %v2515, 2
      %v3299 = vsel %vm3290, %v3296, %v3298
      %v3300 = vrot.slane %v2516, 2
      %v3301 = vsel %vm3290, %v3298, %v3300
      %v3302 = vrot.slane %v2517, 2
      %v3303 = vsel %vm3290, %v3300, %v3302
      %v3304 = vrot.slane %v2518, 2
      %v3305 = vsel %vm3290, %v3302, %v3304
      %v3306 = vrot.slane %v2519, 2
      %v3307 = vsel %vm3290, %v3304, %v3306
      %v3308 = vrot.slane %v2520, 2
      %v3309 = vsel %vm3290, %v3306, %v3308
      %v3310 = vrot.slane %v2521, 2
      %v3311 = vsel %vm3290, %v3308, %v3310
      %v3312 = vrot.slane %v2522, 2
      %v3313 = vsel %vm3290, %v3310, %v3312
      %v3314 = vrot.slane %v2523, 2
      %v3315 = vsel %vm3290, %v3312, %v3314
      %v3316 = vrot.slane %v2524, 2
      %v3317 = vsel %vm3290, %v3314, %v3316
      %v3318 = vrot.slane %v2525, 2
      %v3319 = vsel %vm3290, %v3316, %v3318
      %v3320 = vrot.slane %v2526, 2
      %v3321 = vsel %vm3290, %v3318, %v3320
      %v3322 = vrot.slane %v2527, 2
      %v3323 = vsel %vm3290, %v3320, %v3322
      %v3324 = vrot.slane %v2528, 2
      %v3325 = vsel %vm3290, %v3322, %v3324
      %v3326 = vrot.slane %v2842, 2
      %v3327 = vsel %vm3290, %v3324, %v3326
      %v3329 = vsel %vm1632, %v3293, 0
      %v3332 = vsel %vm1632, %v3295, 0
      %v3335 = vsel %vm1632, %v3297, 0
      %v3338 = vsel %vm1632, %v3299, 0
      %v3341 = vsel %vm1632, %v3301, 0
      %v3344 = vsel %vm1632, %v3303, 0
      %v3347 = vsel %vm1632, %v3305, 0
      %v3350 = vsel %vm1632, %v3307, 0
      %v3353 = vsel %vm1632, %v3309, 0
      %v3356 = vsel %vm1632, %v3311, 0
      %v3359 = vsel %vm1632, %v3313, 0
      %v3362 = vsel %vm1632, %v3315, 0
      %v3365 = vsel %vm1632, %v3317, 0
      %v3368 = vsel %vm1632, %v3319, 0
      %v3371 = vsel %vm1632, %v3321, 0
      %v3374 = vsel %vm1632, %v3323, 0
      %v3377 = vsel %vm1632, %v3325, 0
      %v3380 = vsel %vm1632, %v3327, 0
      %v3383 = vsel %vm1687, %v3286, 0
      %3385 = vmatprep.subr.bf16.mxu0 0
      %3386 = vmatpush1.bf16.msra.mxu0 %v3383
      %3387 = vmatprep.subr.bf16.mxu0 0
      %3388 = vmatpush1.bf16.msra.mxu0 0
      %3389 = vmatprep.subr.bf16.mxu0 0
      %3390 = vmatpush1.bf16.msra.mxu0 0
      %3391 = vmatprep.subr.bf16.mxu0 0
      %3392 = vmatpush1.bf16.msra.mxu0 0
      %3393 = vmatprep.subr.bf16.mxu0 0
      %3394 = vmatpush1.bf16.msra.mxu0 0
      %3395 = vmatprep.subr.bf16.mxu0 0
      %3396 = vmatpush1.bf16.msra.mxu0 0
      %3397 = vmatprep.subr.bf16.mxu0 0
      %3398 = vmatpush1.bf16.msra.mxu0 0
      %3399 = vmatprep.subr.bf16.mxu0 0
      %3400 = vmatpush1.bf16.msra.mxu0 0
      %3401 = vmatprep.subr.bf16.mxu0 0
      %3402 = vmatpush1.bf16.msra.mxu0 0
      %3403 = vmatprep.subr.bf16.mxu0 0
      %3404 = vmatpush1.bf16.msra.mxu0 0
      %3405 = vmatprep.subr.bf16.mxu0 0
      %3406 = vmatpush1.bf16.msra.mxu0 0
      %3407 = vmatprep.subr.bf16.mxu0 0
      %3408 = vmatpush1.bf16.msra.mxu0 0
      %3409 = vmatprep.subr.bf16.mxu0 0
      %3410 = vmatpush1.bf16.msra.mxu0 0
      %3411 = vmatprep.subr.bf16.mxu0 0
      %3412 = vmatpush1.bf16.msra.mxu0 0
      %3413 = vmatprep.subr.bf16.mxu0 0
      %3414 = vmatpush1.bf16.msra.mxu0 0
      %3415 = vmatprep.subr.bf16.mxu0 0
      %3416 = vmatpush1.bf16.msra.mxu0 0
      %3417 = vmatprep.mubr.bf16.mxu0 0
      %3418 = vmatmul.mubr.bf16.gmra.mrb[0].mxu0 %v3329
      %v3419 = vpop.f32.mrb[0].mxu0
      %v3420 = vadd.f32 0.0, %v3419
      %v3421 = vpop.f32.mrb[0].mxu0
      %v3422 = vpop.f32.mrb[0].mxu0
      %v3423 = vadd.f32 0.0, %v3422
      %v3424 = vpop.f32.mrb[0].mxu0
      %3425 = vmatprep.mubr.bf16.mxu0 0
      %3426 = vmatmul.mubr.bf16.gmra.mrb[0].mxu0 %v3332
      %v3427 = vpop.f32.mrb[0].mxu0
      %v3428 = vadd.f32 0.0, %v3427
      %v3429 = vpop.f32.mrb[0].mxu0
      %v3430 = vpop.f32.mrb[0].mxu0
      %v3431 = vadd.f32 0.0, %v3430
      %v3432 = vpop.f32.mrb[0].mxu0
      %3433 = vmatprep.mubr.bf16.mxu0 0
      %3434 = vmatmul.mubr.bf16.gmra.mrb[0].mxu0 %v3335
      %v3435 = vpop.f32.mrb[0].mxu0
      %v3436 = vadd.f32 0.0, %v3435
      %v3437 = vpop.f32.mrb[0].mxu0
      %v3438 = vpop.f32.mrb[0].mxu0
      %v3439 = vadd.f32 0.0, %v3438
      %v3440 = vpop.f32.mrb[0].mxu0
      %3441 = vmatprep.mubr.bf16.mxu0 0
      %3442 = vmatmul.mubr.bf16.gmra.mrb[0].mxu0 %v3338
      %v3443 = vpop.f32.mrb[0].mxu0
      %v3444 = vadd.f32 0.0, %v3443
      %v3445 = vpop.f32.mrb[0].mxu0
      %v3446 = vpop.f32.mrb[0].mxu0
      %v3447 = vadd.f32 0.0, %v3446
      %v3448 = vpop.f32.mrb[0].mxu0
      %3449 = vmatprep.mubr.bf16.mxu0 0
      %3450 = vmatmul.mubr.bf16.gmra.mrb[0].mxu0 %v3341
      %v3451 = vpop.f32.mrb[0].mxu0
      %v3452 = vadd.f32 0.0, %v3451
      %v3453 = vpop.f32.mrb[0].mxu0
      %v3454 = vpop.f32.mrb[0].mxu0
      %v3455 = vadd.f32 0.0, %v3454
      %v3456 = vpop.f32.mrb[0].mxu0
      %3457 = vmatprep.mubr.bf16.mxu0 0
      %3458 = vmatmul.mubr.bf16.gmra.mrb[0].mxu0 %v3344
      %v3459 = vpop.f32.mrb[0].mxu0
      %v3460 = vadd.f32 0.0, %v3459
      %v3461 = vpop.f32.mrb[0].mxu0
      %v3462 = vpop.f32.mrb[0].mxu0
      %v3463 = vadd.f32 0.0, %v3462
      %v3464 = vpop.f32.mrb[0].mxu0
      %3465 = vmatprep.mubr.bf16.mxu0 0
      %3466 = vmatmul.mubr.bf16.gmra.mrb[0].mxu0 %v3347
      %v3467 = vpop.f32.mrb[0].mxu0
      %v3468 = vadd.f32 0.0, %v3467
      %v3469 = vpop.f32.mrb[0].mxu0
      %v3470 = vpop.f32.mrb[0].mxu0
      %v3471 = vadd.f32 0.0, %v3470
      %v3472 = vpop.f32.mrb[0].mxu0
      %3473 = vmatprep.mubr.bf16.mxu0 0
      %3474 = vmatmul.mubr.bf16.gmra.mrb[0].mxu0 %v3350
      %v3475 = vpop.f32.mrb[0].mxu0
      %v3476 = vadd.f32 0.0, %v3475
      %v3477 = vpop.f32.mrb[0].mxu0
      %v3478 = vpop.f32.mrb[0].mxu0
      %v3479 = vadd.f32 0.0, %v3478
      %v3480 = vpop.f32.mrb[0].mxu0
      %3481 = vmatprep.mubr.bf16.mxu0 0
      %3482 = vmatmul.mubr.bf16.gmra.mrb[0].mxu0 %v3353
      %v3483 = vpop.f32.mrb[0].mxu0
      %v3484 = vadd.f32 0.0, %v3483
      %v3485 = vpop.f32.mrb[0].mxu0
      %v3486 = vpop.f32.mrb[0].mxu0
      %v3487 = vadd.f32 0.0, %v3486
      %v3488 = vpop.f32.mrb[0].mxu0
      %3489 = vmatprep.mubr.bf16.mxu0 0
      %3490 = vmatmul.mubr.bf16.gmra.mrb[0].mxu0 %v3356
      %v3491 = vpop.f32.mrb[0].mxu0
      %v3492 = vadd.f32 0.0, %v3491
      %v3493 = vpop.f32.mrb[0].mxu0
      %v3494 = vpop.f32.mrb[0].mxu0
      %v3495 = vadd.f32 0.0, %v3494
      %v3496 = vpop.f32.mrb[0].mxu0
      %3497 = vmatprep.mubr.bf16.mxu0 0
      %3498 = vmatmul.mubr.bf16.gmra.mrb[0].mxu0 %v3359
      %v3499 = vpop.f32.mrb[0].mxu0
      %v3500 = vadd.f32 0.0, %v3499
      %v3501 = vpop.f32.mrb[0].mxu0
      %v3502 = vpop.f32.mrb[0].mxu0
      %v3503 = vadd.f32 0.0, %v3502
      %v3504 = vpop.f32.mrb[0].mxu0
      %3505 = vmatprep.mubr.bf16.mxu0 0
      %3506 = vmatmul.mubr.bf16.gmra.mrb[0].mxu0 %v3362
      %v3507 = vpop.f32.mrb[0].mxu0
      %v3508 = vadd.f32 0.0, %v3507
      %v3509 = vpop.f32.mrb[0].mxu0
      %v3510 = vpop.f32.mrb[0].mxu0
      %v3511 = vadd.f32 0.0, %v3510
      %v3512 = vpop.f32.mrb[0].mxu0
      %3513 = vmatprep.mubr.bf16.mxu0 0
      %3514 = vmatmul.mubr.bf16.gmra.mrb[0].mxu0 %v3365
      %v3515 = vpop.f32.mrb[0].mxu0
      %v3516 = vadd.f32 0.0, %v3515
      %v3517 = vpop.f32.mrb[0].mxu0
      %v3518 = vpop.f32.mrb[0].mxu0
      %v3519 = vadd.f32 0.0, %v3518
      %v3520 = vpop.f32.mrb[0].mxu0
      %3521 = vmatprep.mubr.bf16.mxu0 0
      %3522 = vmatmul.mubr.bf16.gmra.mrb[0].mxu0 %v3368
      %v3523 = vpop.f32.mrb[0].mxu0
      %v3524 = vadd.f32 0.0, %v3523
      %v3525 = vpop.f32.mrb[0].mxu0
      %v3526 = vpop.f32.mrb[0].mxu0
      %v3527 = vadd.f32 0.0, %v3526
      %v3528 = vpop.f32.mrb[0].mxu0
      %3529 = vmatprep.mubr.bf16.mxu0 0
      %3530 = vmatmul.mubr.bf16.gmra.mrb[0].mxu0 %v3371
      %v3531 = vpop.f32.mrb[0].mxu0
      %v3532 = vadd.f32 0.0, %v3531
      %v3533 = vpop.f32.mrb[0].mxu0
      %v3534 = vpop.f32.mrb[0].mxu0
      %v3535 = vadd.f32 0.0, %v3534
      %v3536 = vpop.f32.mrb[0].mxu0
      %3537 = vmatprep.mubr.bf16.mxu0 0
      %3538 = vmatmul.mubr.bf16.gmra.mrb[0].mxu0 %v3374
      %v3539 = vpop.f32.mrb[0].mxu0
      %v3540 = vadd.f32 0.0, %v3539
      %v3541 = vpop.f32.mrb[0].mxu0
      %v3542 = vpop.f32.mrb[0].mxu0
      %v3543 = vadd.f32 0.0, %v3542
      %v3544 = vpop.f32.mrb[0].mxu0
      %3545 = vmatprep.mubr.bf16.mxu0 0
      %3546 = vmatmul.mubr.bf16.gmra.mrb[0].mxu0 %v3377
      %v3547 = vpop.f32.mrb[0].mxu0
      %v3548 = vadd.f32 0.0, %v3547
      %v3549 = vpop.f32.mrb[0].mxu0
      %v3550 = vpop.f32.mrb[0].mxu0
      %v3551 = vadd.f32 0.0, %v3550
      %v3552 = vpop.f32.mrb[0].mxu0
      %3553 = vmatprep.mubr.bf16.mxu0 0
      %3554 = vmatmul.mubr.bf16.gmra.mrb[0].mxu0 %v3380
      %v3555 = vpop.f32.mrb[0].mxu0
      %v3556 = vadd.f32 0.0, %v3555
      %v3557 = vpop.f32.mrb[0].mxu0
      %v3558 = vpop.f32.mrb[0].mxu0
      %v3559 = vadd.f32 0.0, %v3558
      %v3560 = vpop.f32.mrb[0].mxu0
      %3561 = vdwg.mxu0
      %v3562 = vadd.f32 %v3248, %v3420
      %v3563 = vadd.f32 %v3249, %v3423
      %v3564 = vadd.f32 %v3250, %v3428
      %v3565 = vadd.f32 %v3251, %v3431
      %v3566 = vadd.f32 %v3252, %v3436
      %v3567 = vadd.f32 %v3253, %v3439
      %v3568 = vadd.f32 %v3254, %v3444
      %v3569 = vadd.f32 %v3255, %v3447
      %v3570 = vadd.f32 %v3256, %v3452
      %v3571 = vadd.f32 %v3257, %v3455
      %v3572 = vadd.f32 %v3258, %v3460
      %v3573 = vadd.f32 %v3259, %v3463
      %v3574 = vadd.f32 %v3260, %v3468
      %v3575 = vadd.f32 %v3261, %v3471
      %v3576 = vadd.f32 %v3262, %v3476
      %v3577 = vadd.f32 %v3263, %v3479
      %v3578 = vadd.f32 %v3264, %v3484
      %v3579 = vadd.f32 %v3265, %v3487
      %v3580 = vadd.f32 %v3266, %v3492
      %v3581 = vadd.f32 %v3267, %v3495
      %v3582 = vadd.f32 %v3268, %v3500
      %v3583 = vadd.f32 %v3269, %v3503
      %v3584 = vadd.f32 %v3270, %v3508
      %v3585 = vadd.f32 %v3271, %v3511
      %v3586 = vadd.f32 %v3272, %v3516
      %v3587 = vadd.f32 %v3273, %v3519
      %v3588 = vadd.f32 %v3274, %v3524
      %v3589 = vadd.f32 %v3275, %v3527
      %v3590 = vadd.f32 %v3276, %v3532
      %v3591 = vadd.f32 %v3277, %v3535
      %v3592 = vadd.f32 %v3278, %v3540
      %v3593 = vadd.f32 %v3279, %v3543
      %v3594 = vadd.f32 %v3280, %v3548
      %v3595 = vadd.f32 %v3281, %v3551
      %v3596 = vadd.f32 %v3282, %v3556
      %v3597 = vadd.f32 %v3283, %v3559
      %v3598 = vld [vmem:[#allocation2 + $0x10] sm:$0xc]
      %v3599 = vld [vmem:[#allocation2 + $0x14] sm:$0xf]
      %v3600 = vld [vmem:[#allocation2 + $0x18] sm:$0xf]
      %v3601 = vld [vmem:[#allocation2 + $0x1c] sm:$0xf]
      %v3602 = vld [vmem:[#allocation2 + $0x20] sm:$0xf]
      %v3603 = vld [vmem:[#allocation2 + $0x24] sm:$0xf]
      %v3604 = vld [vmem:[#allocation2 + $0x28] sm:$0xf]
      %v3605 = vld [vmem:[#allocation2 + $0x2c] sm:$0xf]
      %v3606 = vld [vmem:[#allocation2 + $0x30] sm:$0xf]
      %v3607 = vld [vmem:[#allocation2 + $0x34] sm:$0xf]
      %v3608 = vld [vmem:[#allocation2 + $0x38] sm:$0xf]
      %v3609 = vld [vmem:[#allocation2 + $0x3c] sm:$0xf]
      %v3610 = vld [vmem:[#allocation2 + $0x40] sm:$0xf]
      %v3611 = vld [vmem:[#allocation2 + $0x44] sm:$0xf]
      %v3612 = vld [vmem:[#allocation2 + $0x48] sm:$0xf]
      %v3613 = vld [vmem:[#allocation2 + $0x4c] sm:$0xf]
      %v3614 = vld [vmem:[#allocation2 + $0x50] sm:$0xf]
      %v3615 = vld [vmem:[#allocation2 + $0x54] sm:$0xf]
      %v3616 = vld [vmem:[#allocation2 + $0x58] sm:$0xf]
      %v3617 = vld [vmem:[#allocation2 + $0x5c] sm:$0xf]
      %v3618 = vld [vmem:[#allocation2 + $0x60] sm:$0xf]
      %v3619 = vld [vmem:[#allocation2 + $0x64] sm:$0xf]
      %v3620 = vld [vmem:[#allocation2 + $0x68] sm:$0xf]
      %v3621 = vld [vmem:[#allocation2 + $0x6c] sm:$0xf]
      %v3622 = vld [vmem:[#allocation2 + $0x70] sm:$0xf]
      %v3623 = vld [vmem:[#allocation2 + $0x74] sm:$0xf]
      %v3624 = vld [vmem:[#allocation2 + $0x78] sm:$0xf]
      %v3625 = vld [vmem:[#allocation2 + $0x7c] sm:$0xf]
      %v3626 = vld [vmem:[#allocation2 + $0x80] sm:$0xf]
      %v3627 = vld [vmem:[#allocation2 + $0x84] sm:$0xf]
      %v3628 = vld [vmem:[#allocation2 + $0x88] sm:$0xf]
      %v3629 = vld [vmem:[#allocation2 + $0x8c] sm:$0xf]
      %v3630 = vld [vmem:[#allocation2 + $0x90] sm:$0xf]
      %v3631 = vld [vmem:[#allocation2 + $0x94] sm:$0xf]
      %v3632 = vld [vmem:[#allocation2 + $0x98] sm:$0xf]
      %v3633 = vld [vmem:[#allocation2 + $0x9c] sm:$0xf]
      %v3634 = vld [vmem:[#allocation2 + $0xa0] sm:$0x3]
      %s3635 = scalar_lea.vmem %s4, 12
      %v3636 = vld [vmem:[%s3635] sm:$0x3]
      %v3674 = vunpack.c.l.b16 %v3598
      %v3675 = vunpack.c.l.b16 %v3599
      %v3676 = vunpack.c.l.b16 %v3600
      %v3677 = vunpack.c.l.b16 %v3601
      %v3678 = vunpack.c.l.b16 %v3602
      %v3679 = vunpack.c.l.b16 %v3603
      %v3680 = vunpack.c.l.b16 %v3604
      %v3681 = vunpack.c.l.b16 %v3605
      %v3682 = vunpack.c.l.b16 %v3606
      %v3683 = vunpack.c.l.b16 %v3607
      %v3684 = vunpack.c.l.b16 %v3608
      %v3685 = vunpack.c.l.b16 %v3609
      %v3686 = vunpack.c.l.b16 %v3610
      %v3687 = vunpack.c.l.b16 %v3611
      %v3688 = vunpack.c.l.b16 %v3612
      %v3689 = vunpack.c.l.b16 %v3613
      %v3690 = vunpack.c.l.b16 %v3614
      %v3691 = vunpack.c.l.b16 %v3615
      %v3692 = vunpack.c.l.b16 %v3616
      %v3693 = vunpack.c.l.b16 %v3617
      %v3694 = vunpack.c.l.b16 %v3618
      %v3695 = vunpack.c.l.b16 %v3619
      %v3696 = vunpack.c.l.b16 %v3620
      %v3697 = vunpack.c.l.b16 %v3621
      %v3698 = vunpack.c.l.b16 %v3622
      %v3699 = vunpack.c.l.b16 %v3623
      %v3700 = vunpack.c.l.b16 %v3624
      %v3701 = vunpack.c.l.b16 %v3625
      %v3702 = vunpack.c.l.b16 %v3626
      %v3703 = vunpack.c.l.b16 %v3627
      %v3704 = vunpack.c.l.b16 %v3628
      %v3705 = vunpack.c.l.b16 %v3629
      %v3706 = vunpack.c.l.b16 %v3630
      %v3707 = vunpack.c.l.b16 %v3631
      %v3708 = vunpack.c.l.b16 %v3632
      %v3709 = vunpack.c.l.b16 %v3633
      %v3710 = vunpack.c.l.b16 %v3634
      %v3711 = vpack.c.b16 %v3675, %v3674
      %v3712 = vpack.c.b16 %v3677, %v3676
      %v3713 = vpack.c.b16 %v3679, %v3678
      %v3714 = vpack.c.b16 %v3681, %v3680
      %v3715 = vpack.c.b16 %v3683, %v3682
      %v3716 = vpack.c.b16 %v3685, %v3684
      %v3717 = vpack.c.b16 %v3687, %v3686
      %v3718 = vpack.c.b16 %v3689, %v3688
      %v3719 = vpack.c.b16 %v3691, %v3690
      %v3720 = vpack.c.b16 %v3693, %v3692
      %v3721 = vpack.c.b16 %v3695, %v3694
      %v3722 = vpack.c.b16 %v3697, %v3696
      %v3723 = vpack.c.b16 %v3699, %v3698
      %v3724 = vpack.c.b16 %v3701, %v3700
      %v3725 = vpack.c.b16 %v3703, %v3702
      %v3726 = vpack.c.b16 %v3705, %v3704
      %v3727 = vpack.c.b16 %v3707, %v3706
      %v3728 = vpack.c.b16 %v3709, %v3708
      %v3729 = vpack.c.b16 %v3710, %v3710
      %v3730 = vrot.slane %v3711, 2
      %v3731 = vrot.slane %v3712, 2
      %v3732 = vsel %vm3290, %v3730, %v3731
      %v3733 = vrot.slane %v3713, 2
      %v3734 = vsel %vm3290, %v3731, %v3733
      %v3735 = vrot.slane %v3714, 2
      %v3736 = vsel %vm3290, %v3733, %v3735
      %v3737 = vrot.slane %v3715, 2
      %v3738 = vsel %vm3290, %v3735, %v3737
      %v3739 = vrot.slane %v3716, 2
      %v3740 = vsel %vm3290, %v3737, %v3739
      %v3741 = vrot.slane %v3717, 2
      %v3742 = vsel %vm3290, %v3739, %v3741
      %v3743 = vrot.slane %v3718, 2
      %v3744 = vsel %vm3290, %v3741, %v3743
      %v3745 = vrot.slane %v3719, 2
      %v3746 = vsel %vm3290, %v3743, %v3745
      %v3747 = vrot.slane %v3720, 2
      %v3748 = vsel %vm3290, %v3745, %v3747
      %v3749 = vrot.slane %v3721, 2
      %v3750 = vsel %vm3290, %v3747, %v3749
      %v3751 = vrot.slane %v3722, 2
      %v3752 = vsel %vm3290, %v3749, %v3751
      %v3753 = vrot.slane %v3723, 2
      %v3754 = vsel %vm3290, %v3751, %v3753
      %v3755 = vrot.slane %v3724, 2
      %v3756 = vsel %vm3290, %v3753, %v3755
      %v3757 = vrot.slane %v3725, 2
      %v3758 = vsel %vm3290, %v3755, %v3757
      %v3759 = vrot.slane %v3726, 2
      %v3760 = vsel %vm3290, %v3757, %v3759
      %v3761 = vrot.slane %v3727, 2
      %v3762 = vsel %vm3290, %v3759, %v3761
      %v3763 = vrot.slane %v3728, 2
      %v3764 = vsel %vm3290, %v3761, %v3763
      %v3765 = vrot.slane %v3729, 2
      %v3766 = vsel %vm3290, %v3763, %v3765
      %v3768 = vsel %vm1632, %v3732, 0
      %v3771 = vsel %vm1632, %v3734, 0
      %v3774 = vsel %vm1632, %v3736, 0
      %v3777 = vsel %vm1632, %v3738, 0
      %v3780 = vsel %vm1632, %v3740, 0
      %v3783 = vsel %vm1632, %v3742, 0
      %v3786 = vsel %vm1632, %v3744, 0
      %v3789 = vsel %vm1632, %v3746, 0
      %v3792 = vsel %vm1632, %v3748, 0
      %v3795 = vsel %vm1632, %v3750, 0
      %v3798 = vsel %vm1632, %v3752, 0
      %v3801 = vsel %vm1632, %v3754, 0
      %v3804 = vsel %vm1632, %v3756, 0
      %v3807 = vsel %vm1632, %v3758, 0
      %v3810 = vsel %vm1632, %v3760, 0
      %v3813 = vsel %vm1632, %v3762, 0
      %v3816 = vsel %vm1632, %v3764, 0
      %v3819 = vsel %vm1632, %v3766, 0
      %v3822 = vsel %vm1687, %v3636, 0
      %3824 = vmatprep.subr.bf16.mxu0 0
      %3825 = vmatpush1.bf16.msra.mxu0 %v3822
      %3826 = vmatprep.subr.bf16.mxu0 0
      %3827 = vmatpush1.bf16.msra.mxu0 0
      %3828 = vmatprep.subr.bf16.mxu0 0
      %3829 = vmatpush1.bf16.msra.mxu0 0
      %3830 = vmatprep.subr.bf16.mxu0 0
      %3831 = vmatpush1.bf16.msra.mxu0 0
      %3832 = vmatprep.subr.bf16.mxu0 0
      %3833 = vmatpush1.bf16.msra.mxu0 0
      %3834 = vmatprep.subr.bf16.mxu0 0
      %3835 = vmatpush1.bf16.msra.mxu0 0
      %3836 = vmatprep.subr.bf16.mxu0 0
      %3837 = vmatpush1.bf16.msra.mxu0 0
      %3838 = vmatprep.subr.bf16.mxu0 0
      %3839 = vmatpush1.bf16.msra.mxu0 0
      %3840 = vmatprep.subr.bf16.mxu0 0
      %3841 = vmatpush1.bf16.msra.mxu0 0
      %3842 = vmatprep.subr.bf16.mxu0 0
      %3843 = vmatpush1.bf16.msra.mxu0 0
      %3844 = vmatprep.subr.bf16.mxu0 0
      %3845 = vmatpush1.bf16.msra.mxu0 0
      %3846 = vmatprep.subr.bf16.mxu0 0
      %3847 = vmatpush1.bf16.msra.mxu0 0
      %3848 = vmatprep.subr.bf16.mxu0 0
      %3849 = vmatpush1.bf16.msra.mxu0 0
      %3850 = vmatprep.subr.bf16.mxu0 0
      %3851 = vmatpush1.bf16.msra.mxu0 0
      %3852 = vmatprep.subr.bf16.mxu0 0
      %3853 = vmatpush1.bf16.msra.mxu0 0
      %3854 = vmatprep.subr.bf16.mxu0 0
      %3855 = vmatpush1.bf16.msra.mxu0 0
      %3856 = vmatprep.mubr.bf16.mxu0 0
      %3857 = vmatmul.mubr.bf16.gmra.mrb[0].mxu0 %v3768
      %v3858 = vpop.f32.mrb[0].mxu0
      %v3859 = vadd.f32 0.0, %v3858
      %v3860 = vpop.f32.mrb[0].mxu0
      %v3861 = vpop.f32.mrb[0].mxu0
      %v3862 = vadd.f32 0.0, %v3861
      %v3863 = vpop.f32.mrb[0].mxu0
      %3864 = vmatprep.mubr.bf16.mxu0 0
      %3865 = vmatmul.mubr.bf16.gmra.mrb[0].mxu0 %v3771
      %v3866 = vpop.f32.mrb[0].mxu0
      %v3867 = vadd.f32 0.0, %v3866
      %v3868 = vpop.f32.mrb[0].mxu0
      %v3869 = vpop.f32.mrb[0].mxu0
      %v3870 = vadd.f32 0.0, %v3869
      %v3871 = vpop.f32.mrb[0].mxu0
      %3872 = vmatprep.mubr.bf16.mxu0 0
      %3873 = vmatmul.mubr.bf16.gmra.mrb[0].mxu0 %v3774
      %v3874 = vpop.f32.mrb[0].mxu0
      %v3875 = vadd.f32 0.0, %v3874
      %v3876 = vpop.f32.mrb[0].mxu0
      %v3877 = vpop.f32.mrb[0].mxu0
      %v3878 = vadd.f32 0.0, %v3877
      %v3879 = vpop.f32.mrb[0].mxu0
      %3880 = vmatprep.mubr.bf16.mxu0 0
      %3881 = vmatmul.mubr.bf16.gmra.mrb[0].mxu0 %v3777
      %v3882 = vpop.f32.mrb[0].mxu0
      %v3883 = vadd.f32 0.0, %v3882
      %v3884 = vpop.f32.mrb[0].mxu0
      %v3885 = vpop.f32.mrb[0].mxu0
      %v3886 = vadd.f32 0.0, %v3885
      %v3887 = vpop.f32.mrb[0].mxu0
      %3888 = vmatprep.mubr.bf16.mxu0 0
      %3889 = vmatmul.mubr.bf16.gmra.mrb[0].mxu0 %v3780
      %v3890 = vpop.f32.mrb[0].mxu0
      %v3891 = vadd.f32 0.0, %v3890
      %v3892 = vpop.f32.mrb[0].mxu0
      %v3893 = vpop.f32.mrb[0].mxu0
      %v3894 = vadd.f32 0.0, %v3893
      %v3895 = vpop.f32.mrb[0].mxu0
      %3896 = vmatprep.mubr.bf16.mxu0 0
      %3897 = vmatmul.mubr.bf16.gmra.mrb[0].mxu0 %v3783
      %v3898 = vpop.f32.mrb[0].mxu0
      %v3899 = vadd.f32 0.0, %v3898
      %v3900 = vpop.f32.mrb[0].mxu0
      %v3901 = vpop.f32.mrb[0].mxu0
      %v3902 = vadd.f32 0.0, %v3901
      %v3903 = vpop.f32.mrb[0].mxu0
      %3904 = vmatprep.mubr.bf16.mxu0 0
      %3905 = vmatmul.mubr.bf16.gmra.mrb[0].mxu0 %v3786
      %v3906 = vpop.f32.mrb[0].mxu0
      %v3907 = vadd.f32 0.0, %v3906
      %v3908 = vpop.f32.mrb[0].mxu0
      %v3909 = vpop.f32.mrb[0].mxu0
      %v3910 = vadd.f32 0.0, %v3909
      %v3911 = vpop.f32.mrb[0].mxu0
      %3912 = vmatprep.mubr.bf16.mxu0 0
      %3913 = vmatmul.mubr.bf16.gmra.mrb[0].mxu0 %v3789
      %v3914 = vpop.f32.mrb[0].mxu0
      %v3915 = vadd.f32 0.0, %v3914
      %v3916 = vpop.f32.mrb[0].mxu0
      %v3917 = vpop.f32.mrb[0].mxu0
      %v3918 = vadd.f32 0.0, %v3917
      %v3919 = vpop.f32.mrb[0].mxu0
      %3920 = vmatprep.mubr.bf16.mxu0 0
      %3921 = vmatmul.mubr.bf16.gmra.mrb[0].mxu0 %v3792
      %v3922 = vpop.f32.mrb[0].mxu0
      %v3923 = vadd.f32 0.0, %v3922
      %v3924 = vpop.f32.mrb[0].mxu0
      %v3925 = vpop.f32.mrb[0].mxu0
      %v3926 = vadd.f32 0.0, %v3925
      %v3927 = vpop.f32.mrb[0].mxu0
      %3928 = vmatprep.mubr.bf16.mxu0 0
      %3929 = vmatmul.mubr.bf16.gmra.mrb[0].mxu0 %v3795
      %v3930 = vpop.f32.mrb[0].mxu0
      %v3931 = vadd.f32 0.0, %v3930
      %v3932 = vpop.f32.mrb[0].mxu0
      %v3933 = vpop.f32.mrb[0].mxu0
      %v3934 = vadd.f32 0.0, %v3933
      %v3935 = vpop.f32.mrb[0].mxu0
      %3936 = vmatprep.mubr.bf16.mxu0 0
      %3937 = vmatmul.mubr.bf16.gmra.mrb[0].mxu0 %v3798
      %v3938 = vpop.f32.mrb[0].mxu0
      %v3939 = vadd.f32 0.0, %v3938
      %v3940 = vpop.f32.mrb[0].mxu0
      %v3941 = vpop.f32.mrb[0].mxu0
      %v3942 = vadd.f32 0.0, %v3941
      %v3943 = vpop.f32.mrb[0].mxu0
      %3944 = vmatprep.mubr.bf16.mxu0 0
      %3945 = vmatmul.mubr.bf16.gmra.mrb[0].mxu0 %v3801
      %v3946 = vpop.f32.mrb[0].mxu0
      %v3947 = vadd.f32 0.0, %v3946
      %v3948 = vpop.f32.mrb[0].mxu0
      %v3949 = vpop.f32.mrb[0].mxu0
      %v3950 = vadd.f32 0.0, %v3949
      %v3951 = vpop.f32.mrb[0].mxu0
      %3952 = vmatprep.mubr.bf16.mxu0 0
      %3953 = vmatmul.mubr.bf16.gmra.mrb[0].mxu0 %v3804
      %v3954 = vpop.f32.mrb[0].mxu0
      %v3955 = vadd.f32 0.0, %v3954
      %v3956 = vpop.f32.mrb[0].mxu0
      %v3957 = vpop.f32.mrb[0].mxu0
      %v3958 = vadd.f32 0.0, %v3957
      %v3959 = vpop.f32.mrb[0].mxu0
      %3960 = vmatprep.mubr.bf16.mxu0 0
      %3961 = vmatmul.mubr.bf16.gmra.mrb[0].mxu0 %v3807
      %v3962 = vpop.f32.mrb[0].mxu0
      %v3963 = vadd.f32 0.0, %v3962
      %v3964 = vpop.f32.mrb[0].mxu0
      %v3965 = vpop.f32.mrb[0].mxu0
      %v3966 = vadd.f32 0.0, %v3965
      %v3967 = vpop.f32.mrb[0].mxu0
      %3968 = vmatprep.mubr.bf16.mxu0 0
      %3969 = vmatmul.mubr.bf16.gmra.mrb[0].mxu0 %v3810
      %v3970 = vpop.f32.mrb[0].mxu0
      %v3971 = vadd.f32 0.0, %v3970
      %v3972 = vpop.f32.mrb[0].mxu0
      %v3973 = vpop.f32.mrb[0].mxu0
      %v3974 = vadd.f32 0.0, %v3973
      %v3975 = vpop.f32.mrb[0].mxu0
      %3976 = vmatprep.mubr.bf16.mxu0 0
      %3977 = vmatmul.mubr.bf16.gmra.mrb[0].mxu0 %v3813
      %v3978 = vpop.f32.mrb[0].mxu0
      %v3979 = vadd.f32 0.0, %v3978
      %v3980 = vpop.f32.mrb[0].mxu0
      %v3981 = vpop.f32.mrb[0].mxu0
      %v3982 = vadd.f32 0.0, %v3981
      %v3983 = vpop.f32.mrb[0].mxu0
      %3984 = vmatprep.mubr.bf16.mxu0 0
      %3985 = vmatmul.mubr.bf16.gmra.mrb[0].mxu0 %v3816
      %v3986 = vpop.f32.mrb[0].mxu0
      %v3987 = vadd.f32 0.0, %v3986
      %v3988 = vpop.f32.mrb[0].mxu0
      %v3989 = vpop.f32.mrb[0].mxu0
      %v3990 = vadd.f32 0.0, %v3989
      %v3991 = vpop.f32.mrb[0].mxu0
      %3992 = vmatprep.mubr.bf16.mxu0 0
      %3993 = vmatmul.mubr.bf16.gmra.mrb[0].mxu0 %v3819
      %v3994 = vpop.f32.mrb[0].mxu0
      %v3995 = vadd.f32 0.0, %v3994
      %v3996 = vpop.f32.mrb[0].mxu0
      %v3997 = vpop.f32.mrb[0].mxu0
      %v3998 = vadd.f32 0.0, %v3997
      %v3999 = vpop.f32.mrb[0].mxu0
      %4000 = vdwg.mxu0
      %v4001 = vadd.f32 %v3562, %v3859
      %v4002 = vadd.f32 %v3563, %v3862
      %v4003 = vadd.f32 %v3564, %v3867
      %v4004 = vadd.f32 %v3565, %v3870
      %v4005 = vadd.f32 %v3566, %v3875
      %v4006 = vadd.f32 %v3567, %v3878
      %v4007 = vadd.f32 %v3568, %v3883
      %v4008 = vadd.f32 %v3569, %v3886
      %v4009 = vadd.f32 %v3570, %v3891
      %v4010 = vadd.f32 %v3571, %v3894
      %v4011 = vadd.f32 %v3572, %v3899
      %v4012 = vadd.f32 %v3573, %v3902
      %v4013 = vadd.f32 %v3574, %v3907
      %v4014 = vadd.f32 %v3575, %v3910
      %v4015 = vadd.f32 %v3576, %v3915
      %v4016 = vadd.f32 %v3577, %v3918
      %v4017 = vadd.f32 %v3578, %v3923
      %v4018 = vadd.f32 %v3579, %v3926
      %v4019 = vadd.f32 %v3580, %v3931
      %v4020 = vadd.f32 %v3581, %v3934
      %v4021 = vadd.f32 %v3582, %v3939
      %v4022 = vadd.f32 %v3583, %v3942
      %v4023 = vadd.f32 %v3584, %v3947
      %v4024 = vadd.f32 %v3585, %v3950
      %v4025 = vadd.f32 %v3586, %v3955
      %v4026 = vadd.f32 %v3587, %v3958
      %v4027 = vadd.f32 %v3588, %v3963
      %v4028 = vadd.f32 %v3589, %v3966
      %v4029 = vadd.f32 %v3590, %v3971
      %v4030 = vadd.f32 %v3591, %v3974
      %v4031 = vadd.f32 %v3592, %v3979
      %v4032 = vadd.f32 %v3593, %v3982
      %v4033 = vadd.f32 %v3594, %v3987
      %v4034 = vadd.f32 %v3595, %v3990
      %v4035 = vadd.f32 %v3596, %v3995
      %v4036 = vadd.f32 %v3597, %v3998
      %v4037 = vld [vmem:[#allocation2 + $0xa0] sm:$0x7]
      %s4038 = scalar_lea.vmem %s4, 14
      %v4039 = vld [vmem:[%s4038] sm:$0x3]
      %v4041 = vunpack.c.l.b16 %v4037
      %v4042 = vpack.c.b16 %v4041, %v4041
      %vm4043 = vsmask.f32 5376
      %v4045 = vshrl.u32 %v3711, 16
      %v4047 = vrot.slane %v4045, 2
      %v4048 = vshll.u32 %v3711, 16
      %v4050 = vrot.slane %v4048, 3
      %v4051 = vor.u32 %v4047, %v4050
      %v4053 = vshrl.u32 %v3712, 16
      %v4055 = vrot.slane %v4053, 2
      %v4056 = vshll.u32 %v3712, 16
      %v4058 = vrot.slane %v4056, 3
      %v4059 = vor.u32 %v4055, %v4058
      %v4060 = vsel %vm4043, %v4051, %v4059
      %v4062 = vshrl.u32 %v3713, 16
      %v4064 = vrot.slane %v4062, 2
      %v4065 = vshll.u32 %v3713, 16
      %v4067 = vrot.slane %v4065, 3
      %v4068 = vor.u32 %v4064, %v4067
      %v4069 = vsel %vm4043, %v4059, %v4068
      %v4071 = vshrl.u32 %v3714, 16
      %v4073 = vrot.slane %v4071, 2
      %v4074 = vshll.u32 %v3714, 16
      %v4076 = vrot.slane %v4074, 3
      %v4077 = vor.u32 %v4073, %v4076
      %v4078 = vsel %vm4043, %v4068, %v4077
      %v4080 = vshrl.u32 %v3715, 16
      %v4082 = vrot.slane %v4080, 2
      %v4083 = vshll.u32 %v3715, 16
      %v4085 = vrot.slane %v4083, 3
      %v4086 = vor.u32 %v4082, %v4085
      %v4087 = vsel %vm4043, %v4077, %v4086
      %v4089 = vshrl.u32 %v3716, 16
      %v4091 = vrot.slane %v4089, 2
      %v4092 = vshll.u32 %v3716, 16
      %v4094 = vrot.slane %v4092, 3
      %v4095 = vor.u32 %v4091, %v4094
      %v4096 = vsel %vm4043, %v4086, %v4095
      %v4098 = vshrl.u32 %v3717, 16
      %v4100 = vrot.slane %v4098, 2
      %v4101 = vshll.u32 %v3717, 16
      %v4103 = vrot.slane %v4101, 3
      %v4104 = vor.u32 %v4100, %v4103
      %v4105 = vsel %vm4043, %v4095, %v4104
      %v4107 = vshrl.u32 %v3718, 16
      %v4109 = vrot.slane %v4107, 2
      %v4110 = vshll.u32 %v3718, 16
      %v4112 = vrot.slane %v4110, 3
      %v4113 = vor.u32 %v4109, %v4112
      %v4114 = vsel %vm4043, %v4104, %v4113
      %v4116 = vshrl.u32 %v3719, 16
      %v4118 = vrot.slane %v4116, 2
      %v4119 = vshll.u32 %v3719, 16
      %v4121 = vrot.slane %v4119, 3
      %v4122 = vor.u32 %v4118, %v4121
      %v4123 = vsel %vm4043, %v4113, %v4122
      %v4125 = vshrl.u32 %v3720, 16
      %v4127 = vrot.slane %v4125, 2
      %v4128 = vshll.u32 %v3720, 16
      %v4130 = vrot.slane %v4128, 3
      %v4131 = vor.u32 %v4127, %v4130
      %v4132 = vsel %vm4043, %v4122, %v4131
      %v4134 = vshrl.u32 %v3721, 16
      %v4136 = vrot.slane %v4134, 2
      %v4137 = vshll.u32 %v3721, 16
      %v4139 = vrot.slane %v4137, 3
      %v4140 = vor.u32 %v4136, %v4139
      %v4141 = vsel %vm4043, %v4131, %v4140
      %v4143 = vshrl.u32 %v3722, 16
      %v4145 = vrot.slane %v4143, 2
      %v4146 = vshll.u32 %v3722, 16
      %v4148 = vrot.slane %v4146, 3
      %v4149 = vor.u32 %v4145, %v4148
      %v4150 = vsel %vm4043, %v4140, %v4149
      %v4152 = vshrl.u32 %v3723, 16
      %v4154 = vrot.slane %v4152, 2
      %v4155 = vshll.u32 %v3723, 16
      %v4157 = vrot.slane %v4155, 3
      %v4158 = vor.u32 %v4154, %v4157
      %v4159 = vsel %vm4043, %v4149, %v4158
      %v4161 = vshrl.u32 %v3724, 16
      %v4163 = vrot.slane %v4161, 2
      %v4164 = vshll.u32 %v3724, 16
      %v4166 = vrot.slane %v4164, 3
      %v4167 = vor.u32 %v4163, %v4166
      %v4168 = vsel %vm4043, %v4158, %v4167
      %v4170 = vshrl.u32 %v3725, 16
      %v4172 = vrot.slane %v4170, 2
      %v4173 = vshll.u32 %v3725, 16
      %v4175 = vrot.slane %v4173, 3
      %v4176 = vor.u32 %v4172, %v4175
      %v4177 = vsel %vm4043, %v4167, %v4176
      %v4179 = vshrl.u32 %v3726, 16
      %v4181 = vrot.slane %v4179, 2
      %v4182 = vshll.u32 %v3726, 16
      %v4184 = vrot.slane %v4182, 3
      %v4185 = vor.u32 %v4181, %v4184
      %v4186 = vsel %vm4043, %v4176, %v4185
      %v4188 = vshrl.u32 %v3727, 16
      %v4190 = vrot.slane %v4188, 2
      %v4191 = vshll.u32 %v3727, 16
      %v4193 = vrot.slane %v4191, 3
      %v4194 = vor.u32 %v4190, %v4193
      %v4195 = vsel %vm4043, %v4185, %v4194
      %v4197 = vshrl.u32 %v3728, 16
      %v4199 = vrot.slane %v4197, 2
      %v4200 = vshll.u32 %v3728, 16
      %v4202 = vrot.slane %v4200, 3
      %v4203 = vor.u32 %v4199, %v4202
      %v4204 = vsel %vm4043, %v4194, %v4203
      %v4206 = vshrl.u32 %v4042, 16
      %v4208 = vrot.slane %v4206, 2
      %v4209 = vshll.u32 %v4042, 16
      %v4211 = vrot.slane %v4209, 3
      %v4212 = vor.u32 %v4208, %v4211
      %v4213 = vsel %vm4043, %v4203, %v4212
      %v4215 = vsel %vm1632, %v4060, 0
      %v4218 = vsel %vm1632, %v4069, 0
      %v4221 = vsel %vm1632, %v4078, 0
      %v4224 = vsel %vm1632, %v4087, 0
      %v4227 = vsel %vm1632, %v4096, 0
      %v4230 = vsel %vm1632, %v4105, 0
      %v4233 = vsel %vm1632, %v4114, 0
      %v4236 = vsel %vm1632, %v4123, 0
      %v4239 = vsel %vm1632, %v4132, 0
      %v4242 = vsel %vm1632, %v4141, 0
      %v4245 = vsel %vm1632, %v4150, 0
      %v4248 = vsel %vm1632, %v4159, 0
      %v4251 = vsel %vm1632, %v4168, 0
      %v4254 = vsel %vm1632, %v4177, 0
      %v4257 = vsel %vm1632, %v4186, 0
      %v4260 = vsel %vm1632, %v4195, 0
      %v4263 = vsel %vm1632, %v4204, 0
      %v4266 = vsel %vm1632, %v4213, 0
      %v4269 = vsel %vm1687, %v4039, 0
      %4271 = vmatprep.subr.bf16.mxu0 0
      %4272 = vmatpush1.bf16.msra.mxu0 %v4269
      %4273 = vmatprep.subr.bf16.mxu0 0
      %4274 = vmatpush1.bf16.msra.mxu0 0
      %4275 = vmatprep.subr.bf16.mxu0 0
      %4276 = vmatpush1.bf16.msra.mxu0 0
      %4277 = vmatprep.subr.bf16.mxu0 0
      %4278 = vmatpush1.bf16.msra.mxu0 0
      %4279 = vmatprep.subr.bf16.mxu0 0
      %4280 = vmatpush1.bf16.msra.mxu0 0
      %4281 = vmatprep.subr.bf16.mxu0 0
      %4282 = vmatpush1.bf16.msra.mxu0 0
      %4283 = vmatprep.subr.bf16.mxu0 0
      %4284 = vmatpush1.bf16.msra.mxu0 0
      %4285 = vmatprep.subr.bf16.mxu0 0
      %4286 = vmatpush1.bf16.msra.mxu0 0
      %4287 = vmatprep.subr.bf16.mxu0 0
      %4288 = vmatpush1.bf16.msra.mxu0 0
      %4289 = vmatprep.subr.bf16.mxu0 0
      %4290 = vmatpush1.bf16.msra.mxu0 0
      %4291 = vmatprep.subr.bf16.mxu0 0
      %4292 = vmatpush1.bf16.msra.mxu0 0
      %4293 = vmatprep.subr.bf16.mxu0 0
      %4294 = vmatpush1.bf16.msra.mxu0 0
      %4295 = vmatprep.subr.bf16.mxu0 0
      %4296 = vmatpush1.bf16.msra.mxu0 0
      %4297 = vmatprep.subr.bf16.mxu0 0
      %4298 = vmatpush1.bf16.msra.mxu0 0
      %4299 = vmatprep.subr.bf16.mxu0 0
      %4300 = vmatpush1.bf16.msra.mxu0 0
      %4301 = vmatprep.subr.bf16.mxu0 0
      %4302 = vmatpush1.bf16.msra.mxu0 0
      %4303 = vmatprep.mubr.bf16.mxu0 0
      %4304 = vmatmul.mubr.bf16.gmra.mrb[0].mxu0 %v4215
      %v4305 = vpop.f32.mrb[0].mxu0
      %v4306 = vadd.f32 0.0, %v4305
      %v4307 = vpop.f32.mrb[0].mxu0
      %v4308 = vpop.f32.mrb[0].mxu0
      %v4309 = vadd.f32 0.0, %v4308
      %v4310 = vpop.f32.mrb[0].mxu0
      %4311 = vmatprep.mubr.bf16.mxu0 0
      %4312 = vmatmul.mubr.bf16.gmra.mrb[0].mxu0 %v4218
      %v4313 = vpop.f32.mrb[0].mxu0
      %v4314 = vadd.f32 0.0, %v4313
      %v4315 = vpop.f32.mrb[0].mxu0
      %v4316 = vpop.f32.mrb[0].mxu0
      %v4317 = vadd.f32 0.0, %v4316
      %v4318 = vpop.f32.mrb[0].mxu0
      %4319 = vmatprep.mubr.bf16.mxu0 0
      %4320 = vmatmul.mubr.bf16.gmra.mrb[0].mxu0 %v4221
      %v4321 = vpop.f32.mrb[0].mxu0
      %v4322 = vadd.f32 0.0, %v4321
      %v4323 = vpop.f32.mrb[0].mxu0
      %v4324 = vpop.f32.mrb[0].mxu0
      %v4325 = vadd.f32 0.0, %v4324
      %v4326 = vpop.f32.mrb[0].mxu0
      %4327 = vmatprep.mubr.bf16.mxu0 0
      %4328 = vmatmul.mubr.bf16.gmra.mrb[0].mxu0 %v4224
      %v4329 = vpop.f32.mrb[0].mxu0
      %v4330 = vadd.f32 0.0, %v4329
      %v4331 = vpop.f32.mrb[0].mxu0
      %v4332 = vpop.f32.mrb[0].mxu0
      %v4333 = vadd.f32 0.0, %v4332
      %v4334 = vpop.f32.mrb[0].mxu0
      %4335 = vmatprep.mubr.bf16.mxu0 0
      %4336 = vmatmul.mubr.bf16.gmra.mrb[0].mxu0 %v4227
      %v4337 = vpop.f32.mrb[0].mxu0
      %v4338 = vadd.f32 0.0, %v4337
      %v4339 = vpop.f32.mrb[0].mxu0
      %v4340 = vpop.f32.mrb[0].mxu0
      %v4341 = vadd.f32 0.0, %v4340
      %v4342 = vpop.f32.mrb[0].mxu0
      %4343 = vmatprep.mubr.bf16.mxu0 0
      %4344 = vmatmul.mubr.bf16.gmra.mrb[0].mxu0 %v4230
      %v4345 = vpop.f32.mrb[0].mxu0
      %v4346 = vadd.f32 0.0, %v4345
      %v4347 = vpop.f32.mrb[0].mxu0
      %v4348 = vpop.f32.mrb[0].mxu0
      %v4349 = vadd.f32 0.0, %v4348
      %v4350 = vpop.f32.mrb[0].mxu0
      %4351 = vmatprep.mubr.bf16.mxu0 0
      %4352 = vmatmul.mubr.bf16.gmra.mrb[0].mxu0 %v4233
      %v4353 = vpop.f32.mrb[0].mxu0
      %v4354 = vadd.f32 0.0, %v4353
      %v4355 = vpop.f32.mrb[0].mxu0
      %v4356 = vpop.f32.mrb[0].mxu0
      %v4357 = vadd.f32 0.0, %v4356
      %v4358 = vpop.f32.mrb[0].mxu0
      %4359 = vmatprep.mubr.bf16.mxu0 0
      %4360 = vmatmul.mubr.bf16.gmra.mrb[0].mxu0 %v4236
      %v4361 = vpop.f32.mrb[0].mxu0
      %v4362 = vadd.f32 0.0, %v4361
      %v4363 = vpop.f32.mrb[0].mxu0
      %v4364 = vpop.f32.mrb[0].mxu0
      %v4365 = vadd.f32 0.0, %v4364
      %v4366 = vpop.f32.mrb[0].mxu0
      %4367 = vmatprep.mubr.bf16.mxu0 0
      %4368 = vmatmul.mubr.bf16.gmra.mrb[0].mxu0 %v4239
      %v4369 = vpop.f32.mrb[0].mxu0
      %v4370 = vadd.f32 0.0, %v4369
      %v4371 = vpop.f32.mrb[0].mxu0
      %v4372 = vpop.f32.mrb[0].mxu0
      %v4373 = vadd.f32 0.0, %v4372
      %v4374 = vpop.f32.mrb[0].mxu0
      %4375 = vmatprep.mubr.bf16.mxu0 0
      %4376 = vmatmul.mubr.bf16.gmra.mrb[0].mxu0 %v4242
      %v4377 = vpop.f32.mrb[0].mxu0
      %v4378 = vadd.f32 0.0, %v4377
      %v4379 = vpop.f32.mrb[0].mxu0
      %v4380 = vpop.f32.mrb[0].mxu0
      %v4381 = vadd.f32 0.0, %v4380
      %v4382 = vpop.f32.mrb[0].mxu0
      %4383 = vmatprep.mubr.bf16.mxu0 0
      %4384 = vmatmul.mubr.bf16.gmra.mrb[0].mxu0 %v4245
      %v4385 = vpop.f32.mrb[0].mxu0
      %v4386 = vadd.f32 0.0, %v4385
      %v4387 = vpop.f32.mrb[0].mxu0
      %v4388 = vpop.f32.mrb[0].mxu0
      %v4389 = vadd.f32 0.0, %v4388
      %v4390 = vpop.f32.mrb[0].mxu0
      %4391 = vmatprep.mubr.bf16.mxu0 0
      %4392 = vmatmul.mubr.bf16.gmra.mrb[0].mxu0 %v4248
      %v4393 = vpop.f32.mrb[0].mxu0
      %v4394 = vadd.f32 0.0, %v4393
      %v4395 = vpop.f32.mrb[0].mxu0
      %v4396 = vpop.f32.mrb[0].mxu0
      %v4397 = vadd.f32 0.0, %v4396
      %v4398 = vpop.f32.mrb[0].mxu0
      %4399 = vmatprep.mubr.bf16.mxu0 0
      %4400 = vmatmul.mubr.bf16.gmra.mrb[0].mxu0 %v4251
      %v4401 = vpop.f32.mrb[0].mxu0
      %v4402 = vadd.f32 0.0, %v4401
      %v4403 = vpop.f32.mrb[0].mxu0
      %v4404 = vpop.f32.mrb[0].mxu0
      %v4405 = vadd.f32 0.0, %v4404
      %v4406 = vpop.f32.mrb[0].mxu0
      %4407 = vmatprep.mubr.bf16.mxu0 0
      %4408 = vmatmul.mubr.bf16.gmra.mrb[0].mxu0 %v4254
      %v4409 = vpop.f32.mrb[0].mxu0
      %v4410 = vadd.f32 0.0, %v4409
      %v4411 = vpop.f32.mrb[0].mxu0
      %v4412 = vpop.f32.mrb[0].mxu0
      %v4413 = vadd.f32 0.0, %v4412
      %v4414 = vpop.f32.mrb[0].mxu0
      %4415 = vmatprep.mubr.bf16.mxu0 0
      %4416 = vmatmul.mubr.bf16.gmra.mrb[0].mxu0 %v4257
      %v4417 = vpop.f32.mrb[0].mxu0
      %v4418 = vadd.f32 0.0, %v4417
      %v4419 = vpop.f32.mrb[0].mxu0
      %v4420 = vpop.f32.mrb[0].mxu0
      %v4421 = vadd.f32 0.0, %v4420
      %v4422 = vpop.f32.mrb[0].mxu0
      %4423 = vmatprep.mubr.bf16.mxu0 0
      %4424 = vmatmul.mubr.bf16.gmra.mrb[0].mxu0 %v4260
      %v4425 = vpop.f32.mrb[0].mxu0
      %v4426 = vadd.f32 0.0, %v4425
      %v4427 = vpop.f32.mrb[0].mxu0
      %v4428 = vpop.f32.mrb[0].mxu0
      %v4429 = vadd.f32 0.0, %v4428
      %v4430 = vpop.f32.mrb[0].mxu0
      %4431 = vmatprep.mubr.bf16.mxu0 0
      %4432 = vmatmul.mubr.bf16.gmra.mrb[0].mxu0 %v4263
      %v4433 = vpop.f32.mrb[0].mxu0
      %v4434 = vadd.f32 0.0, %v4433
      %v4435 = vpop.f32.mrb[0].mxu0
      %v4436 = vpop.f32.mrb[0].mxu0
      %v4437 = vadd.f32 0.0, %v4436
      %v4438 = vpop.f32.mrb[0].mxu0
      %4439 = vmatprep.mubr.bf16.mxu0 0
      %4440 = vmatmul.mubr.bf16.gmra.mrb[0].mxu0 %v4266
      %v4441 = vpop.f32.mrb[0].mxu0
      %v4442 = vadd.f32 0.0, %v4441
      %v4443 = vpop.f32.mrb[0].mxu0
      %v4444 = vpop.f32.mrb[0].mxu0
      %v4445 = vadd.f32 0.0, %v4444
      %v4446 = vpop.f32.mrb[0].mxu0
      %4447 = vdwg.mxu0
      %v4448 = vadd.f32 %v4001, %v4306
      %v4449 = vadd.f32 %v4002, %v4309
      %v4450 = vadd.f32 %v4003, %v4314
      %v4451 = vadd.f32 %v4004, %v4317
      %v4452 = vadd.f32 %v4005, %v4322
      %v4453 = vadd.f32 %v4006, %v4325
      %v4454 = vadd.f32 %v4007, %v4330
      %v4455 = vadd.f32 %v4008, %v4333
      %v4456 = vadd.f32 %v4009, %v4338
      %v4457 = vadd.f32 %v4010, %v4341
      %v4458 = vadd.f32 %v4011, %v4346
      %v4459 = vadd.f32 %v4012, %v4349
      %v4460 = vadd.f32 %v4013, %v4354
      %v4461 = vadd.f32 %v4014, %v4357
      %v4462 = vadd.f32 %v4015, %v4362
      %v4463 = vadd.f32 %v4016, %v4365
      %v4464 = vadd.f32 %v4017, %v4370
      %v4465 = vadd.f32 %v4018, %v4373
      %v4466 = vadd.f32 %v4019, %v4378
      %v4467 = vadd.f32 %v4020, %v4381
      %v4468 = vadd.f32 %v4021, %v4386
      %v4469 = vadd.f32 %v4022, %v4389
      %v4470 = vadd.f32 %v4023, %v4394
      %v4471 = vadd.f32 %v4024, %v4397
      %v4472 = vadd.f32 %v4025, %v4402
      %v4473 = vadd.f32 %v4026, %v4405
      %v4474 = vadd.f32 %v4027, %v4410
      %v4475 = vadd.f32 %v4028, %v4413
      %v4476 = vadd.f32 %v4029, %v4418
      %v4477 = vadd.f32 %v4030, %v4421
      %v4478 = vadd.f32 %v4031, %v4426
      %v4479 = vadd.f32 %v4032, %v4429
      %v4480 = vadd.f32 %v4033, %v4434
      %v4481 = vadd.f32 %v4034, %v4437
      %v4482 = vadd.f32 %v4035, %v4442
      %v4483 = vadd.f32 %v4036, %v4445
      %v4484 = vld [vmem:[#allocation2 + $0x10] sm:$0x8]
      %s4485 = scalar_lea.vmem %s4, 16
      %v4486 = vld [vmem:[%s4485] sm:$0x3]
      %v4488 = vunpack.c.l.b16 %v4484
      %v4489 = vpack.c.b16 %v3675, %v4488
      %vm4490 = vcmask 1044480
      %v4491 = vrot.slane %v4489, 3
      %v4492 = vrot.slane %v3712, 3
      %v4493 = vsel %vm4490, %v4491, %v4492
      %v4494 = vrot.slane %v3713, 3
      %v4495 = vsel %vm4490, %v4492, %v4494
      %v4496 = vrot.slane %v3714, 3
      %v4497 = vsel %vm4490, %v4494, %v4496
      %v4498 = vrot.slane %v3715, 3
      %v4499 = vsel %vm4490, %v4496, %v4498
      %v4500 = vrot.slane %v3716, 3
      %v4501 = vsel %vm4490, %v4498, %v4500
      %v4502 = vrot.slane %v3717, 3
      %v4503 = vsel %vm4490, %v4500, %v4502
      %v4504 = vrot.slane %v3718, 3
      %v4505 = vsel %vm4490, %v4502, %v4504
      %v4506 = vrot.slane %v3719, 3
      %v4507 = vsel %vm4490, %v4504, %v4506
      %v4508 = vrot.slane %v3720, 3
      %v4509 = vsel %vm4490, %v4506, %v4508
      %v4510 = vrot.slane %v3721, 3
      %v4511 = vsel %vm4490, %v4508, %v4510
      %v4512 = vrot.slane %v3722, 3
      %v4513 = vsel %vm4490, %v4510, %v4512
      %v4514 = vrot.slane %v3723, 3
      %v4515 = vsel %vm4490, %v4512, %v4514
      %v4516 = vrot.slane %v3724, 3
      %v4517 = vsel %vm4490, %v4514, %v4516
      %v4518 = vrot.slane %v3725, 3
      %v4519 = vsel %vm4490, %v4516, %v4518
      %v4520 = vrot.slane %v3726, 3
      %v4521 = vsel %vm4490, %v4518, %v4520
      %v4522 = vrot.slane %v3727, 3
      %v4523 = vsel %vm4490, %v4520, %v4522
      %v4524 = vrot.slane %v3728, 3
      %v4525 = vsel %vm4490, %v4522, %v4524
      %v4526 = vrot.slane %v4042, 3
      %v4527 = vsel %vm4490, %v4524, %v4526
      %v4529 = vsel %vm1632, %v4493, 0
      %v4532 = vsel %vm1632, %v4495, 0
      %v4535 = vsel %vm1632, %v4497, 0
      %v4538 = vsel %vm1632, %v4499, 0
      %v4541 = vsel %vm1632, %v4501, 0
      %v4544 = vsel %vm1632, %v4503, 0
      %v4547 = vsel %vm1632, %v4505, 0
      %v4550 = vsel %vm1632, %v4507, 0
      %v4553 = vsel %vm1632, %v4509, 0
      %v4556 = vsel %vm1632, %v4511, 0
      %v4559 = vsel %vm1632, %v4513, 0
      %v4562 = vsel %vm1632, %v4515, 0
      %v4565 = vsel %vm1632, %v4517, 0
      %v4568 = vsel %vm1632, %v4519, 0
      %v4571 = vsel %vm1632, %v4521, 0
      %v4574 = vsel %vm1632, %v4523, 0
      %v4577 = vsel %vm1632, %v4525, 0
      %v4580 = vsel %vm1632, %v4527, 0
      %v4583 = vsel %vm1687, %v4486, 0
      %4585 = vmatprep.subr.bf16.mxu0 0
      %4586 = vmatpush1.bf16.msra.mxu0 %v4583
      %4587 = vmatprep.subr.bf16.mxu0 0
      %4588 = vmatpush1.bf16.msra.mxu0 0
      %4589 = vmatprep.subr.bf16.mxu0 0
      %4590 = vmatpush1.bf16.msra.mxu0 0
      %4591 = vmatprep.subr.bf16.mxu0 0
      %4592 = vmatpush1.bf16.msra.mxu0 0
      %4593 = vmatprep.subr.bf16.mxu0 0
      %4594 = vmatpush1.bf16.msra.mxu0 0
      %4595 = vmatprep.subr.bf16.mxu0 0
      %4596 = vmatpush1.bf16.msra.mxu0 0
      %4597 = vmatprep.subr.bf16.mxu0 0
      %4598 = vmatpush1.bf16.msra.mxu0 0
      %4599 = vmatprep.subr.bf16.mxu0 0
      %4600 = vmatpush1.bf16.msra.mxu0 0
      %4601 = vmatprep.subr.bf16.mxu0 0
      %4602 = vmatpush1.bf16.msra.mxu0 0
      %4603 = vmatprep.subr.bf16.mxu0 0
      %4604 = vmatpush1.bf16.msra.mxu0 0
      %4605 = vmatprep.subr.bf16.mxu0 0
      %4606 = vmatpush1.bf16.msra.mxu0 0
      %4607 = vmatprep.subr.bf16.mxu0 0
      %4608 = vmatpush1.bf16.msra.mxu0 0
      %4609 = vmatprep.subr.bf16.mxu0 0
      %4610 = vmatpush1.bf16.msra.mxu0 0
      %4611 = vmatprep.subr.bf16.mxu0 0
      %4612 = vmatpush1.bf16.msra.mxu0 0
      %4613 = vmatprep.subr.bf16.mxu0 0
      %4614 = vmatpush1.bf16.msra.mxu0 0
      %4615 = vmatprep.subr.bf16.mxu0 0
      %4616 = vmatpush1.bf16.msra.mxu0 0
      %4617 = vmatprep.mubr.bf16.mxu0 0
      %4618 = vmatmul.mubr.bf16.gmra.mrb[0].mxu0 %v4529
      %v4619 = vpop.f32.mrb[0].mxu0
      %v4620 = vadd.f32 0.0, %v4619
      %v4621 = vpop.f32.mrb[0].mxu0
      %v4622 = vpop.f32.mrb[0].mxu0
      %v4623 = vadd.f32 0.0, %v4622
      %v4624 = vpop.f32.mrb[0].mxu0
      %4625 = vmatprep.mubr.bf16.mxu0 0
      %4626 = vmatmul.mubr.bf16.gmra.mrb[0].mxu0 %v4532
      %v4627 = vpop.f32.mrb[0].mxu0
      %v4628 = vadd.f32 0.0, %v4627
      %v4629 = vpop.f32.mrb[0].mxu0
      %v4630 = vpop.f32.mrb[0].mxu0
      %v4631 = vadd.f32 0.0, %v4630
      %v4632 = vpop.f32.mrb[0].mxu0
      %4633 = vmatprep.mubr.bf16.mxu0 0
      %4634 = vmatmul.mubr.bf16.gmra.mrb[0].mxu0 %v4535
      %v4635 = vpop.f32.mrb[0].mxu0
      %v4636 = vadd.f32 0.0, %v4635
      %v4637 = vpop.f32.mrb[0].mxu0
      %v4638 = vpop.f32.mrb[0].mxu0
      %v4639 = vadd.f32 0.0, %v4638
      %v4640 = vpop.f32.mrb[0].mxu0
      %4641 = vmatprep.mubr.bf16.mxu0 0
      %4642 = vmatmul.mubr.bf16.gmra.mrb[0].mxu0 %v4538
      %v4643 = vpop.f32.mrb[0].mxu0
      %v4644 = vadd.f32 0.0, %v4643
      %v4645 = vpop.f32.mrb[0].mxu0
      %v4646 = vpop.f32.mrb[0].mxu0
      %v4647 = vadd.f32 0.0, %v4646
      %v4648 = vpop.f32.mrb[0].mxu0
      %4649 = vmatprep.mubr.bf16.mxu0 0
      %4650 = vmatmul.mubr.bf16.gmra.mrb[0].mxu0 %v4541
      %v4651 = vpop.f32.mrb[0].mxu0
      %v4652 = vadd.f32 0.0, %v4651
      %v4653 = vpop.f32.mrb[0].mxu0
      %v4654 = vpop.f32.mrb[0].mxu0
      %v4655 = vadd.f32 0.0, %v4654
      %v4656 = vpop.f32.mrb[0].mxu0
      %4657 = vmatprep.mubr.bf16.mxu0 0
      %4658 = vmatmul.mubr.bf16.gmra.mrb[0].mxu0 %v4544
      %v4659 = vpop.f32.mrb[0].mxu0
      %v4660 = vadd.f32 0.0, %v4659
      %v4661 = vpop.f32.mrb[0].mxu0
      %v4662 = vpop.f32.mrb[0].mxu0
      %v4663 = vadd.f32 0.0, %v4662
      %v4664 = vpop.f32.mrb[0].mxu0
      %4665 = vmatprep.mubr.bf16.mxu0 0
      %4666 = vmatmul.mubr.bf16.gmra.mrb[0].mxu0 %v4547
      %v4667 = vpop.f32.mrb[0].mxu0
      %v4668 = vadd.f32 0.0, %v4667
      %v4669 = vpop.f32.mrb[0].mxu0
      %v4670 = vpop.f32.mrb[0].mxu0
      %v4671 = vadd.f32 0.0, %v4670
      %v4672 = vpop.f32.mrb[0].mxu0
      %4673 = vmatprep.mubr.bf16.mxu0 0
      %4674 = vmatmul.mubr.bf16.gmra.mrb[0].mxu0 %v4550
      %v4675 = vpop.f32.mrb[0].mxu0
      %v4676 = vadd.f32 0.0, %v4675
      %v4677 = vpop.f32.mrb[0].mxu0
      %v4678 = vpop.f32.mrb[0].mxu0
      %v4679 = vadd.f32 0.0, %v4678
      %v4680 = vpop.f32.mrb[0].mxu0
      %4681 = vmatprep.mubr.bf16.mxu0 0
      %4682 = vmatmul.mubr.bf16.gmra.mrb[0].mxu0 %v4553
      %v4683 = vpop.f32.mrb[0].mxu0
      %v4684 = vadd.f32 0.0, %v4683
      %v4685 = vpop.f32.mrb[0].mxu0
      %v4686 = vpop.f32.mrb[0].mxu0
      %v4687 = vadd.f32 0.0, %v4686
      %v4688 = vpop.f32.mrb[0].mxu0
      %4689 = vmatprep.mubr.bf16.mxu0 0
      %4690 = vmatmul.mubr.bf16.gmra.mrb[0].mxu0 %v4556
      %v4691 = vpop.f32.mrb[0].mxu0
      %v4692 = vadd.f32 0.0, %v4691
      %v4693 = vpop.f32.mrb[0].mxu0
      %v4694 = vpop.f32.mrb[0].mxu0
      %v4695 = vadd.f32 0.0, %v4694
      %v4696 = vpop.f32.mrb[0].mxu0
      %4697 = vmatprep.mubr.bf16.mxu0 0
      %4698 = vmatmul.mubr.bf16.gmra.mrb[0].mxu0 %v4559
      %v4699 = vpop.f32.mrb[0].mxu0
      %v4700 = vadd.f32 0.0, %v4699
      %v4701 = vpop.f32.mrb[0].mxu0
      %v4702 = vpop.f32.mrb[0].mxu0
      %v4703 = vadd.f32 0.0, %v4702
      %v4704 = vpop.f32.mrb[0].mxu0
      %4705 = vmatprep.mubr.bf16.mxu0 0
      %4706 = vmatmul.mubr.bf16.gmra.mrb[0].mxu0 %v4562
      %v4707 = vpop.f32.mrb[0].mxu0
      %v4708 = vadd.f32 0.0, %v4707
      %v4709 = vpop.f32.mrb[0].mxu0
      %v4710 = vpop.f32.mrb[0].mxu0
      %v4711 = vadd.f32 0.0, %v4710
      %v4712 = vpop.f32.mrb[0].mxu0
      %4713 = vmatprep.mubr.bf16.mxu0 0
      %4714 = vmatmul.mubr.bf16.gmra.mrb[0].mxu0 %v4565
      %v4715 = vpop.f32.mrb[0].mxu0
      %v4716 = vadd.f32 0.0, %v4715
      %v4717 = vpop.f32.mrb[0].mxu0
      %v4718 = vpop.f32.mrb[0].mxu0
      %v4719 = vadd.f32 0.0, %v4718
      %v4720 = vpop.f32.mrb[0].mxu0
      %4721 = vmatprep.mubr.bf16.mxu0 0
      %4722 = vmatmul.mubr.bf16.gmra.mrb[0].mxu0 %v4568
      %v4723 = vpop.f32.mrb[0].mxu0
      %v4724 = vadd.f32 0.0, %v4723
      %v4725 = vpop.f32.mrb[0].mxu0
      %v4726 = vpop.f32.mrb[0].mxu0
      %v4727 = vadd.f32 0.0, %v4726
      %v4728 = vpop.f32.mrb[0].mxu0
      %4729 = vmatprep.mubr.bf16.mxu0 0
      %4730 = vmatmul.mubr.bf16.gmra.mrb[0].mxu0 %v4571
      %v4731 = vpop.f32.mrb[0].mxu0
      %v4732 = vadd.f32 0.0, %v4731
      %v4733 = vpop.f32.mrb[0].mxu0
      %v4734 = vpop.f32.mrb[0].mxu0
      %v4735 = vadd.f32 0.0, %v4734
      %v4736 = vpop.f32.mrb[0].mxu0
      %4737 = vmatprep.mubr.bf16.mxu0 0
      %4738 = vmatmul.mubr.bf16.gmra.mrb[0].mxu0 %v4574
      %v4739 = vpop.f32.mrb[0].mxu0
      %v4740 = vadd.f32 0.0, %v4739
      %v4741 = vpop.f32.mrb[0].mxu0
      %v4742 = vpop.f32.mrb[0].mxu0
      %v4743 = vadd.f32 0.0, %v4742
      %v4744 = vpop.f32.mrb[0].mxu0
      %4745 = vmatprep.mubr.bf16.mxu0 0
      %4746 = vmatmul.mubr.bf16.gmra.mrb[0].mxu0 %v4577
      %v4747 = vpop.f32.mrb[0].mxu0
      %v4748 = vadd.f32 0.0, %v4747
      %v4749 = vpop.f32.mrb[0].mxu0
      %v4750 = vpop.f32.mrb[0].mxu0
      %v4751 = vadd.f32 0.0, %v4750
      %v4752 = vpop.f32.mrb[0].mxu0
      %4753 = vmatprep.mubr.bf16.mxu0 0
      %4754 = vmatmul.mubr.bf16.gmra.mrb[0].mxu0 %v4580
      %v4755 = vpop.f32.mrb[0].mxu0
      %v4756 = vadd.f32 0.0, %v4755
      %v4757 = vpop.f32.mrb[0].mxu0
      %v4758 = vpop.f32.mrb[0].mxu0
      %v4759 = vadd.f32 0.0, %v4758
      %v4760 = vpop.f32.mrb[0].mxu0
      %4761 = vdwg.mxu0
      %v4762 = vadd.f32 %v4448, %v4620
      %v4763 = vadd.f32 %v4449, %v4623
      %v4764 = vadd.f32 %v4450, %v4628
      %v4765 = vadd.f32 %v4451, %v4631
      %v4766 = vadd.f32 %v4452, %v4636
      %v4767 = vadd.f32 %v4453, %v4639
      %v4768 = vadd.f32 %v4454, %v4644
      %v4769 = vadd.f32 %v4455, %v4647
      %v4770 = vadd.f32 %v4456, %v4652
      %v4771 = vadd.f32 %v4457, %v4655
      %v4772 = vadd.f32 %v4458, %v4660
      %v4773 = vadd.f32 %v4459, %v4663
      %v4774 = vadd.f32 %v4460, %v4668
      %v4775 = vadd.f32 %v4461, %v4671
      %v4776 = vadd.f32 %v4462, %v4676
      %v4777 = vadd.f32 %v4463, %v4679
      %v4778 = vadd.f32 %v4464, %v4684
      %v4779 = vadd.f32 %v4465, %v4687
      %v4780 = vadd.f32 %v4466, %v4692
      %v4781 = vadd.f32 %v4467, %v4695
      %v4782 = vadd.f32 %v4468, %v4700
      %v4783 = vadd.f32 %v4469, %v4703
      %v4784 = vadd.f32 %v4470, %v4708
      %v4785 = vadd.f32 %v4471, %v4711
      %v4786 = vadd.f32 %v4472, %v4716
      %v4787 = vadd.f32 %v4473, %v4719
      %v4788 = vadd.f32 %v4474, %v4724
      %v4789 = vadd.f32 %v4475, %v4727
      %v4790 = vadd.f32 %v4476, %v4732
      %v4791 = vadd.f32 %v4477, %v4735
      %v4792 = vadd.f32 %v4478, %v4740
      %v4793 = vadd.f32 %v4479, %v4743
      %v4794 = vadd.f32 %v4480, %v4748
      %v4795 = vadd.f32 %v4481, %v4751
      %v4796 = vadd.f32 %v4482, %v4756
      %v4797 = vadd.f32 %v4483, %v4759
      %v4798 = vld [vmem:[%s5] sm:$0x1]
      %v4800 = vlaneseq
      %v4801 = vshrl.u32 %v4800, 7
      %v4802 = vsub.s32 0, %v4801
      %v4803 = vrot.slane %v4798, %v4802
      %v4805 = vmul.f32 %v4762, %v4803
      %v4806 = vmul.f32 %v4763, %v4803
      %v4807 = vmul.f32 %v4764, %v4803
      %v4808 = vmul.f32 %v4765, %v4803
      %v4809 = vmul.f32 %v4766, %v4803
      %v4810 = vmul.f32 %v4767, %v4803
      %v4811 = vmul.f32 %v4768, %v4803
      %v4812 = vmul.f32 %v4769, %v4803
      %v4813 = vmul.f32 %v4770, %v4803
      %v4814 = vmul.f32 %v4771, %v4803
      %v4815 = vmul.f32 %v4772, %v4803
      %v4816 = vmul.f32 %v4773, %v4803
      %v4817 = vmul.f32 %v4774, %v4803
      %v4818 = vmul.f32 %v4775, %v4803
      %v4819 = vmul.f32 %v4776, %v4803
      %v4820 = vmul.f32 %v4777, %v4803
      %v4821 = vmul.f32 %v4778, %v4803
      %v4822 = vmul.f32 %v4779, %v4803
      %v4823 = vmul.f32 %v4780, %v4803
      %v4824 = vmul.f32 %v4781, %v4803
      %v4825 = vmul.f32 %v4782, %v4803
      %v4826 = vmul.f32 %v4783, %v4803
      %v4827 = vmul.f32 %v4784, %v4803
      %v4828 = vmul.f32 %v4785, %v4803
      %v4829 = vmul.f32 %v4786, %v4803
      %v4830 = vmul.f32 %v4787, %v4803
      %v4831 = vmul.f32 %v4788, %v4803
      %v4832 = vmul.f32 %v4789, %v4803
      %v4833 = vmul.f32 %v4790, %v4803
      %v4834 = vmul.f32 %v4791, %v4803
      %v4835 = vmul.f32 %v4792, %v4803
      %v4836 = vmul.f32 %v4793, %v4803
      %v4837 = vmul.f32 %v4794, %v4803
      %v4838 = vmul.f32 %v4795, %v4803
      %v4839 = vmul.f32 %v4796, %v4803
      %v4840 = vmul.f32 %v4797, %v4803
      %v4841 = vld [vmem:[%s6] sm:$0x1]
      %v4843 = vlaneseq
      %v4844 = vshrl.u32 %v4843, 7
      %v4845 = vsub.s32 0, %v4844
      %v4846 = vrot.slane %v4841, %v4845
      %v4848 = vadd.f32 %v4805, %v4846
      %v4849 = vadd.f32 %v4806, %v4846
      %v4850 = vadd.f32 %v4807, %v4846
      %v4851 = vadd.f32 %v4808, %v4846
      %v4852 = vadd.f32 %v4809, %v4846
      %v4853 = vadd.f32 %v4810, %v4846
      %v4854 = vadd.f32 %v4811, %v4846
      %v4855 = vadd.f32 %v4812, %v4846
      %v4856 = vadd.f32 %v4813, %v4846
      %v4857 = vadd.f32 %v4814, %v4846
      %v4858 = vadd.f32 %v4815, %v4846
      %v4859 = vadd.f32 %v4816, %v4846
      %v4860 = vadd.f32 %v4817, %v4846
      %v4861 = vadd.f32 %v4818, %v4846
      %v4862 = vadd.f32 %v4819, %v4846
      %v4863 = vadd.f32 %v4820, %v4846
      %v4864 = vadd.f32 %v4821, %v4846
      %v4865 = vadd.f32 %v4822, %v4846
      %v4866 = vadd.f32 %v4823, %v4846
      %v4867 = vadd.f32 %v4824, %v4846
      %v4868 = vadd.f32 %v4825, %v4846
      %v4869 = vadd.f32 %v4826, %v4846
      %v4870 = vadd.f32 %v4827, %v4846
      %v4871 = vadd.f32 %v4828, %v4846
      %v4872 = vadd.f32 %v4829, %v4846
      %v4873 = vadd.f32 %v4830, %v4846
      %v4874 = vadd.f32 %v4831, %v4846
      %v4875 = vadd.f32 %v4832, %v4846
      %v4876 = vadd.f32 %v4833, %v4846
      %v4877 = vadd.f32 %v4834, %v4846
      %v4878 = vadd.f32 %v4835, %v4846
      %v4879 = vadd.f32 %v4836, %v4846
      %v4880 = vadd.f32 %v4837, %v4846
      %v4881 = vadd.f32 %v4838, %v4846
      %v4882 = vadd.f32 %v4839, %v4846
      %v4883 = vadd.f32 %v4840, %v4846
      %v4884 = vmax.f32 %v4848, 0.0
      %v4885 = vmax.f32 %v4849, 0.0
      %v4886 = vmax.f32 %v4850, 0.0
      %v4887 = vmax.f32 %v4851, 0.0
      %v4888 = vmax.f32 %v4852, 0.0
      %v4889 = vmax.f32 %v4853, 0.0
      %v4890 = vmax.f32 %v4854, 0.0
      %v4891 = vmax.f32 %v4855, 0.0
      %v4892 = vmax.f32 %v4856, 0.0
      %v4893 = vmax.f32 %v4857, 0.0
      %v4894 = vmax.f32 %v4858, 0.0
      %v4895 = vmax.f32 %v4859, 0.0
      %v4896 = vmax.f32 %v4860, 0.0
      %v4897 = vmax.f32 %v4861, 0.0
      %v4898 = vmax.f32 %v4862, 0.0
      %v4899 = vmax.f32 %v4863, 0.0
      %v4900 = vmax.f32 %v4864, 0.0
      %v4901 = vmax.f32 %v4865, 0.0
      %v4902 = vmax.f32 %v4866, 0.0
      %v4903 = vmax.f32 %v4867, 0.0
      %v4904 = vmax.f32 %v4868, 0.0
      %v4905 = vmax.f32 %v4869, 0.0
      %v4906 = vmax.f32 %v4870, 0.0
      %v4907 = vmax.f32 %v4871, 0.0
      %v4908 = vmax.f32 %v4872, 0.0
      %v4909 = vmax.f32 %v4873, 0.0
      %v4910 = vmax.f32 %v4874, 0.0
      %v4911 = vmax.f32 %v4875, 0.0
      %v4912 = vmax.f32 %v4876, 0.0
      %v4913 = vmax.f32 %v4877, 0.0
      %v4914 = vmax.f32 %v4878, 0.0
      %v4915 = vmax.f32 %v4879, 0.0
      %v4916 = vmax.f32 %v4880, 0.0
      %v4917 = vmax.f32 %v4881, 0.0
      %v4918 = vmax.f32 %v4882, 0.0
      %v4919 = vmax.f32 %v4883, 0.0
      %v4920 = vmul.f32 %v4884, %v590
      %v4921 = vmul.f32 %v4885, %v595
      %v4922 = vmul.f32 %v4886, %v600
      %v4923 = vmul.f32 %v4887, %v605
      %v4924 = vmul.f32 %v4888, %v610
      %v4925 = vmul.f32 %v4889, %v615
      %v4926 = vmul.f32 %v4890, %v620
      %v4927 = vmul.f32 %v4891, %v625
      %v4928 = vmul.f32 %v4892, %v630
      %v4929 = vmul.f32 %v4893, %v635
      %v4930 = vmul.f32 %v4894, %v640
      %v4931 = vmul.f32 %v4895, %v645
      %v4932 = vmul.f32 %v4896, %v650
      %v4933 = vmul.f32 %v4897, %v655
      %v4934 = vmul.f32 %v4898, %v660
      %v4935 = vmul.f32 %v4899, %v665
      %v4936 = vmul.f32 %v4900, %v670
      %v4937 = vmul.f32 %v4901, %v675
      %v4938 = vmul.f32 %v4902, %v680
      %v4939 = vmul.f32 %v4903, %v685
      %v4940 = vmul.f32 %v4904, %v690
      %v4941 = vmul.f32 %v4905, %v695
      %v4942 = vmul.f32 %v4906, %v700
      %v4943 = vmul.f32 %v4907, %v705
      %v4944 = vmul.f32 %v4908, %v710
      %v4945 = vmul.f32 %v4909, %v715
      %v4946 = vmul.f32 %v4910, %v720
      %v4947 = vmul.f32 %v4911, %v725
      %v4948 = vmul.f32 %v4912, %v730
      %v4949 = vmul.f32 %v4913, %v735
      %v4950 = vmul.f32 %v4914, %v740
      %v4951 = vmul.f32 %v4915, %v745
      %v4952 = vmul.f32 %v4916, %v750
      %v4953 = vmul.f32 %v4917, %v755
      %v4954 = vmul.f32 %v4918, %v760
      %v4955 = vmul.f32 %v4919, %v765
      %v4956 = vpack.c.bf16 %v4921, %v4920
      %v4957 = vpack.c.bf16 %v4923, %v4922
      %v4958 = vpack.c.bf16 %v4925, %v4924
      %v4959 = vpack.c.bf16 %v4927, %v4926
      %v4960 = vpack.c.bf16 %v4929, %v4928
      %v4961 = vpack.c.bf16 %v4931, %v4930
      %v4962 = vpack.c.bf16 %v4933, %v4932
      %v4963 = vpack.c.bf16 %v4935, %v4934
      %v4964 = vpack.c.bf16 %v4937, %v4936
      %v4965 = vpack.c.bf16 %v4939, %v4938
      %v4966 = vpack.c.bf16 %v4941, %v4940
      %v4967 = vpack.c.bf16 %v4943, %v4942
      %v4968 = vpack.c.bf16 %v4945, %v4944
      %v4969 = vpack.c.bf16 %v4947, %v4946
      %v4970 = vpack.c.bf16 %v4949, %v4948
      %v4971 = vpack.c.bf16 %v4951, %v4950
      %v4972 = vpack.c.bf16 %v4953, %v4952
      %v4973 = vpack.c.bf16 %v4955, %v4954
      %v4992 = vunpack.c.l.b16 %v4956
      %v4993 = vunpack.c.h.b16 %v4956
      %v4994 = vunpack.c.l.b16 %v4957
      %v4995 = vunpack.c.h.b16 %v4957
      %v4996 = vunpack.c.l.b16 %v4958
      %v4997 = vunpack.c.h.b16 %v4958
      %v4998 = vunpack.c.l.b16 %v4959
      %v4999 = vunpack.c.h.b16 %v4959
      %v5000 = vunpack.c.l.b16 %v4960
      %v5001 = vunpack.c.h.b16 %v4960
      %v5002 = vunpack.c.l.b16 %v4961
      %v5003 = vunpack.c.h.b16 %v4961
      %v5004 = vunpack.c.l.b16 %v4962
      %v5005 = vunpack.c.h.b16 %v4962
      %v5006 = vunpack.c.l.b16 %v4963
      %v5007 = vunpack.c.h.b16 %v4963
      %v5008 = vunpack.c.l.b16 %v4964
      %v5009 = vunpack.c.h.b16 %v4964
      %v5010 = vunpack.c.l.b16 %v4965
      %v5011 = vunpack.c.h.b16 %v4965
      %v5012 = vunpack.c.l.b16 %v4966
      %v5013 = vunpack.c.h.b16 %v4966
      %v5014 = vunpack.c.l.b16 %v4967
      %v5015 = vunpack.c.h.b16 %v4967
      %v5016 = vunpack.c.l.b16 %v4968
      %v5017 = vunpack.c.h.b16 %v4968
      %v5018 = vunpack.c.l.b16 %v4969
      %v5019 = vunpack.c.h.b16 %v4969
      %v5020 = vunpack.c.l.b16 %v4970
      %v5021 = vunpack.c.h.b16 %v4970
      %v5022 = vunpack.c.l.b16 %v4971
      %v5023 = vunpack.c.h.b16 %v4971
      %v5024 = vunpack.c.l.b16 %v4972
      %v5025 = vunpack.c.h.b16 %v4972
      %v5026 = vunpack.c.l.b16 %v4973
      %v5027 = vunpack.c.h.b16 %v4973
      %v5028 = vpack.c.b16 %v4992, %v4992
      %v5029 = vpack.c.b16 %v4993, %v4993
      %v5030 = vpack.c.b16 %v4994, %v4994
      %v5031 = vpack.c.b16 %v4995, %v4995
      %v5032 = vpack.c.b16 %v4996, %v4996
      %v5033 = vpack.c.b16 %v4997, %v4997
      %v5034 = vpack.c.b16 %v4998, %v4998
      %v5035 = vpack.c.b16 %v4999, %v4999
      %v5036 = vpack.c.b16 %v5000, %v5000
      %v5037 = vpack.c.b16 %v5001, %v5001
      %v5038 = vpack.c.b16 %v5002, %v5002
      %v5039 = vpack.c.b16 %v5003, %v5003
      %v5040 = vpack.c.b16 %v5004, %v5004
      %v5041 = vpack.c.b16 %v5005, %v5005
      %v5042 = vpack.c.b16 %v5006, %v5006
      %v5043 = vpack.c.b16 %v5007, %v5007
      %v5044 = vpack.c.b16 %v5008, %v5008
      %v5045 = vpack.c.b16 %v5009, %v5009
      %v5046 = vpack.c.b16 %v5010, %v5010
      %v5047 = vpack.c.b16 %v5011, %v5011
      %v5048 = vpack.c.b16 %v5012, %v5012
      %v5049 = vpack.c.b16 %v5013, %v5013
      %v5050 = vpack.c.b16 %v5014, %v5014
      %v5051 = vpack.c.b16 %v5015, %v5015
      %v5052 = vpack.c.b16 %v5016, %v5016
      %v5053 = vpack.c.b16 %v5017, %v5017
      %v5054 = vpack.c.b16 %v5018, %v5018
      %v5055 = vpack.c.b16 %v5019, %v5019
      %v5056 = vpack.c.b16 %v5020, %v5020
      %v5057 = vpack.c.b16 %v5021, %v5021
      %v5058 = vpack.c.b16 %v5022, %v5022
      %v5059 = vpack.c.b16 %v5023, %v5023
      %v5060 = vpack.c.b16 %v5024, %v5024
      %v5061 = vpack.c.b16 %v5025, %v5025
      %v5062 = vpack.c.b16 %v5026, %v5026
      %v5063 = vpack.c.b16 %v5027, %v5027
      %v5065 = vshrl.u32 %v5028, 16
      %v5067 = vrot.slane %v5065, 6
      %v5068 = vshll.u32 %v5028, 16
      %v5070 = vrot.slane %v5068, 7
      %v5071 = vor.u32 %v5067, %v5070
      %v5072 = vrot.slane %v5071, 4
      %v5074 = vshrl.u32 %v5029, 16
      %v5076 = vrot.slane %v5074, 6
      %v5077 = vshll.u32 %v5029, 16
      %v5079 = vrot.slane %v5077, 7
      %v5080 = vor.u32 %v5076, %v5079
      %v5081 = vsel %vm912, %v5072, %v5080
      %v5082 = vrot.slane %v5080, 4
      %v5084 = vshrl.u32 %v5030, 16
      %v5086 = vrot.slane %v5084, 6
      %v5087 = vshll.u32 %v5030, 16
      %v5089 = vrot.slane %v5087, 7
      %v5090 = vor.u32 %v5086, %v5089
      %v5091 = vsel %vm912, %v5082, %v5090
      %v5092 = vrot.slane %v5090, 4
      %v5094 = vshrl.u32 %v5031, 16
      %v5096 = vrot.slane %v5094, 6
      %v5097 = vshll.u32 %v5031, 16
      %v5099 = vrot.slane %v5097, 7
      %v5100 = vor.u32 %v5096, %v5099
      %v5101 = vsel %vm912, %v5092, %v5100
      %v5102 = vrot.slane %v5100, 4
      %v5104 = vshrl.u32 %v5032, 16
      %v5106 = vrot.slane %v5104, 6
      %v5107 = vshll.u32 %v5032, 16
      %v5109 = vrot.slane %v5107, 7
      %v5110 = vor.u32 %v5106, %v5109
      %v5111 = vsel %vm912, %v5102, %v5110
      %v5112 = vrot.slane %v5110, 4
      %v5114 = vshrl.u32 %v5033, 16
      %v5116 = vrot.slane %v5114, 6
      %v5117 = vshll.u32 %v5033, 16
      %v5119 = vrot.slane %v5117, 7
      %v5120 = vor.u32 %v5116, %v5119
      %v5121 = vsel %vm912, %v5112, %v5120
      %v5122 = vrot.slane %v5120, 4
      %v5124 = vshrl.u32 %v5034, 16
      %v5126 = vrot.slane %v5124, 6
      %v5127 = vshll.u32 %v5034, 16
      %v5129 = vrot.slane %v5127, 7
      %v5130 = vor.u32 %v5126, %v5129
      %v5131 = vsel %vm912, %v5122, %v5130
      %v5132 = vrot.slane %v5130, 4
      %v5134 = vshrl.u32 %v5035, 16
      %v5136 = vrot.slane %v5134, 6
      %v5137 = vshll.u32 %v5035, 16
      %v5139 = vrot.slane %v5137, 7
      %v5140 = vor.u32 %v5136, %v5139
      %v5141 = vsel %vm912, %v5132, %v5140
      %v5142 = vrot.slane %v5140, 4
      %v5144 = vshrl.u32 %v5036, 16
      %v5146 = vrot.slane %v5144, 6
      %v5147 = vshll.u32 %v5036, 16
      %v5149 = vrot.slane %v5147, 7
      %v5150 = vor.u32 %v5146, %v5149
      %v5151 = vsel %vm912, %v5142, %v5150
      %v5152 = vrot.slane %v5150, 4
      %v5154 = vshrl.u32 %v5037, 16
      %v5156 = vrot.slane %v5154, 6
      %v5157 = vshll.u32 %v5037, 16
      %v5159 = vrot.slane %v5157, 7
      %v5160 = vor.u32 %v5156, %v5159
      %v5161 = vsel %vm912, %v5152, %v5160
      %v5162 = vrot.slane %v5160, 4
      %v5164 = vshrl.u32 %v5038, 16
      %v5166 = vrot.slane %v5164, 6
      %v5167 = vshll.u32 %v5038, 16
      %v5169 = vrot.slane %v5167, 7
      %v5170 = vor.u32 %v5166, %v5169
      %v5171 = vsel %vm912, %v5162, %v5170
      %v5172 = vrot.slane %v5170, 4
      %v5174 = vshrl.u32 %v5039, 16
      %v5176 = vrot.slane %v5174, 6
      %v5177 = vshll.u32 %v5039, 16
      %v5179 = vrot.slane %v5177, 7
      %v5180 = vor.u32 %v5176, %v5179
      %v5181 = vsel %vm912, %v5172, %v5180
      %v5182 = vrot.slane %v5180, 4
      %v5184 = vshrl.u32 %v5040, 16
      %v5186 = vrot.slane %v5184, 6
      %v5187 = vshll.u32 %v5040, 16
      %v5189 = vrot.slane %v5187, 7
      %v5190 = vor.u32 %v5186, %v5189
      %v5191 = vsel %vm912, %v5182, %v5190
      %v5192 = vrot.slane %v5190, 4
      %v5194 = vshrl.u32 %v5041, 16
      %v5196 = vrot.slane %v5194, 6
      %v5197 = vshll.u32 %v5041, 16
      %v5199 = vrot.slane %v5197, 7
      %v5200 = vor.u32 %v5196, %v5199
      %v5201 = vsel %vm912, %v5192, %v5200
      %v5202 = vrot.slane %v5200, 4
      %v5204 = vshrl.u32 %v5042, 16
      %v5206 = vrot.slane %v5204, 6
      %v5207 = vshll.u32 %v5042, 16
      %v5209 = vrot.slane %v5207, 7
      %v5210 = vor.u32 %v5206, %v5209
      %v5211 = vsel %vm912, %v5202, %v5210
      %v5212 = vrot.slane %v5210, 4
      %v5214 = vshrl.u32 %v5043, 16
      %v5216 = vrot.slane %v5214, 6
      %v5217 = vshll.u32 %v5043, 16
      %v5219 = vrot.slane %v5217, 7
      %v5220 = vor.u32 %v5216, %v5219
      %v5221 = vsel %vm912, %v5212, %v5220
      %v5222 = vrot.slane %v5220, 4
      %v5224 = vshrl.u32 %v5044, 16
      %v5226 = vrot.slane %v5224, 6
      %v5227 = vshll.u32 %v5044, 16
      %v5229 = vrot.slane %v5227, 7
      %v5230 = vor.u32 %v5226, %v5229
      %v5231 = vsel %vm912, %v5222, %v5230
      %v5232 = vrot.slane %v5230, 4
      %v5234 = vshrl.u32 %v5045, 16
      %v5236 = vrot.slane %v5234, 6
      %v5237 = vshll.u32 %v5045, 16
      %v5239 = vrot.slane %v5237, 7
      %v5240 = vor.u32 %v5236, %v5239
      %v5241 = vsel %vm912, %v5232, %v5240
      %v5242 = vrot.slane %v5240, 4
      %v5244 = vshrl.u32 %v5046, 16
      %v5246 = vrot.slane %v5244, 6
      %v5247 = vshll.u32 %v5046, 16
      %v5249 = vrot.slane %v5247, 7
      %v5250 = vor.u32 %v5246, %v5249
      %v5251 = vsel %vm912, %v5242, %v5250
      %v5252 = vrot.slane %v5250, 4
      %v5254 = vshrl.u32 %v5047, 16
      %v5256 = vrot.slane %v5254, 6
      %v5257 = vshll.u32 %v5047, 16
      %v5259 = vrot.slane %v5257, 7
      %v5260 = vor.u32 %v5256, %v5259
      %v5261 = vsel %vm912, %v5252, %v5260
      %v5262 = vrot.slane %v5260, 4
      %v5264 = vshrl.u32 %v5048, 16
      %v5266 = vrot.slane %v5264, 6
      %v5267 = vshll.u32 %v5048, 16
      %v5269 = vrot.slane %v5267, 7
      %v5270 = vor.u32 %v5266, %v5269
      %v5271 = vsel %vm912, %v5262, %v5270
      %v5272 = vrot.slane %v5270, 4
      %v5274 = vshrl.u32 %v5049, 16
      %v5276 = vrot.slane %v5274, 6
      %v5277 = vshll.u32 %v5049, 16
      %v5279 = vrot.slane %v5277, 7
      %v5280 = vor.u32 %v5276, %v5279
      %v5281 = vsel %vm912, %v5272, %v5280
      %v5282 = vrot.slane %v5280, 4
      %v5284 = vshrl.u32 %v5050, 16
      %v5286 = vrot.slane %v5284, 6
      %v5287 = vshll.u32 %v5050, 16
      %v5289 = vrot.slane %v5287, 7
      %v5290 = vor.u32 %v5286, %v5289
      %v5291 = vsel %vm912, %v5282, %v5290
      %v5292 = vrot.slane %v5290, 4
      %v5294 = vshrl.u32 %v5051, 16
      %v5296 = vrot.slane %v5294, 6
      %v5297 = vshll.u32 %v5051, 16
      %v5299 = vrot.slane %v5297, 7
      %v5300 = vor.u32 %v5296, %v5299
      %v5301 = vsel %vm912, %v5292, %v5300
      %v5302 = vrot.slane %v5300, 4
      %v5304 = vshrl.u32 %v5052, 16
      %v5306 = vrot.slane %v5304, 6
      %v5307 = vshll.u32 %v5052, 16
      %v5309 = vrot.slane %v5307, 7
      %v5310 = vor.u32 %v5306, %v5309
      %v5311 = vsel %vm912, %v5302, %v5310
      %v5312 = vrot.slane %v5310, 4
      %v5314 = vshrl.u32 %v5053, 16
      %v5316 = vrot.slane %v5314, 6
      %v5317 = vshll.u32 %v5053, 16
      %v5319 = vrot.slane %v5317, 7
      %v5320 = vor.u32 %v5316, %v5319
      %v5321 = vsel %vm912, %v5312, %v5320
      %v5322 = vrot.slane %v5320, 4
      %v5324 = vshrl.u32 %v5054, 16
      %v5326 = vrot.slane %v5324, 6
      %v5327 = vshll.u32 %v5054, 16
      %v5329 = vrot.slane %v5327, 7
      %v5330 = vor.u32 %v5326, %v5329
      %v5331 = vsel %vm912, %v5322, %v5330
      %v5332 = vrot.slane %v5330, 4
      %v5334 = vshrl.u32 %v5055, 16
      %v5336 = vrot.slane %v5334, 6
      %v5337 = vshll.u32 %v5055, 16
      %v5339 = vrot.slane %v5337, 7
      %v5340 = vor.u32 %v5336, %v5339
      %v5341 = vsel %vm912, %v5332, %v5340
      %v5342 = vrot.slane %v5340, 4
      %v5344 = vshrl.u32 %v5056, 16
      %v5346 = vrot.slane %v5344, 6
      %v5347 = vshll.u32 %v5056, 16
      %v5349 = vrot.slane %v5347, 7
      %v5350 = vor.u32 %v5346, %v5349
      %v5351 = vsel %vm912, %v5342, %v5350
      %v5352 = vrot.slane %v5350, 4
      %v5354 = vshrl.u32 %v5057, 16
      %v5356 = vrot.slane %v5354, 6
      %v5357 = vshll.u32 %v5057, 16
      %v5359 = vrot.slane %v5357, 7
      %v5360 = vor.u32 %v5356, %v5359
      %v5361 = vsel %vm912, %v5352, %v5360
      %v5362 = vrot.slane %v5360, 4
      %v5364 = vshrl.u32 %v5058, 16
      %v5366 = vrot.slane %v5364, 6
      %v5367 = vshll.u32 %v5058, 16
      %v5369 = vrot.slane %v5367, 7
      %v5370 = vor.u32 %v5366, %v5369
      %v5371 = vsel %vm912, %v5362, %v5370
      %v5372 = vrot.slane %v5370, 4
      %v5374 = vshrl.u32 %v5059, 16
      %v5376 = vrot.slane %v5374, 6
      %v5377 = vshll.u32 %v5059, 16
      %v5379 = vrot.slane %v5377, 7
      %v5380 = vor.u32 %v5376, %v5379
      %v5381 = vsel %vm912, %v5372, %v5380
      %v5382 = vrot.slane %v5380, 4
      %v5384 = vshrl.u32 %v5060, 16
      %v5386 = vrot.slane %v5384, 6
      %v5387 = vshll.u32 %v5060, 16
      %v5389 = vrot.slane %v5387, 7
      %v5390 = vor.u32 %v5386, %v5389
      %v5391 = vsel %vm912, %v5382, %v5390
      %v5392 = vrot.slane %v5390, 4
      %v5394 = vshrl.u32 %v5061, 16
      %v5396 = vrot.slane %v5394, 6
      %v5397 = vshll.u32 %v5061, 16
      %v5399 = vrot.slane %v5397, 7
      %v5400 = vor.u32 %v5396, %v5399
      %v5401 = vsel %vm912, %v5392, %v5400
      %v5402 = vrot.slane %v5400, 4
      %v5404 = vshrl.u32 %v5062, 16
      %v5406 = vrot.slane %v5404, 6
      %v5407 = vshll.u32 %v5062, 16
      %v5409 = vrot.slane %v5407, 7
      %v5410 = vor.u32 %v5406, %v5409
      %v5411 = vsel %vm912, %v5402, %v5410
      %v5412 = vrot.slane %v5410, 4
      %v5414 = vshrl.u32 %v5063, 16
      %v5416 = vrot.slane %v5414, 6
      %v5417 = vshll.u32 %v5063, 16
      %v5419 = vrot.slane %v5417, 7
      %v5420 = vor.u32 %v5416, %v5419
      %v5421 = vsel %vm912, %v5412, %v5420
      %v5422 = vrot.slane %v5420, 4
      %v5460 = vld [vmem:[#allocation3 + $0x8] sm:$0xe]
      %v5461 = vsel %vm387, %v5071, %v5460
      %5462 = vst [vmem:[#allocation3 + $0x8] sm:$0xe] %v5461
      %5463 = vst.msk [vmem:[#allocation3 + $0xc] sm:$0xf] %vm378, %v5081
      %5464 = vst.msk [vmem:[#allocation3 + $0x10] sm:$0xf] %vm378, %v5091
      %5465 = vst.msk [vmem:[#allocation3 + $0x14] sm:$0xf] %vm378, %v5101
      %5466 = vst.msk [vmem:[#allocation3 + $0x18] sm:$0xf] %vm378, %v5111
      %5467 = vst.msk [vmem:[#allocation3 + $0x1c] sm:$0xf] %vm378, %v5121
      %5468 = vst.msk [vmem:[#allocation3 + $0x20] sm:$0xf] %vm378, %v5131
      %5469 = vst.msk [vmem:[#allocation3 + $0x24] sm:$0xf] %vm378, %v5141
      %5470 = vst.msk [vmem:[#allocation3 + $0x28] sm:$0xf] %vm378, %v5151
      %5471 = vst.msk [vmem:[#allocation3 + $0x2c] sm:$0xf] %vm378, %v5161
      %5472 = vst.msk [vmem:[#allocation3 + $0x30] sm:$0xf] %vm378, %v5171
      %5473 = vst.msk [vmem:[#allocation3 + $0x34] sm:$0xf] %vm378, %v5181
      %5474 = vst.msk [vmem:[#allocation3 + $0x38] sm:$0xf] %vm378, %v5191
      %5475 = vst.msk [vmem:[#allocation3 + $0x3c] sm:$0xf] %vm378, %v5201
      %5476 = vst.msk [vmem:[#allocation3 + $0x40] sm:$0xf] %vm378, %v5211
      %5477 = vst.msk [vmem:[#allocation3 + $0x44] sm:$0xf] %vm378, %v5221
      %5478 = vst.msk [vmem:[#allocation3 + $0x48] sm:$0xf] %vm378, %v5231
      %5479 = vst.msk [vmem:[#allocation3 + $0x4c] sm:$0xf] %vm378, %v5241
      %5480 = vst.msk [vmem:[#allocation3 + $0x50] sm:$0xf] %vm378, %v5251
      %5481 = vst.msk [vmem:[#allocation3 + $0x54] sm:$0xf] %vm378, %v5261
      %5482 = vst.msk [vmem:[#allocation3 + $0x58] sm:$0xf] %vm378, %v5271
      %5483 = vst.msk [vmem:[#allocation3 + $0x5c] sm:$0xf] %vm378, %v5281
      %5484 = vst.msk [vmem:[#allocation3 + $0x60] sm:$0xf] %vm378, %v5291
      %5485 = vst.msk [vmem:[#allocation3 + $0x64] sm:$0xf] %vm378, %v5301
      %5486 = vst.msk [vmem:[#allocation3 + $0x68] sm:$0xf] %vm378, %v5311
      %5487 = vst.msk [vmem:[#allocation3 + $0x6c] sm:$0xf] %vm378, %v5321
      %5488 = vst.msk [vmem:[#allocation3 + $0x70] sm:$0xf] %vm378, %v5331
      %5489 = vst.msk [vmem:[#allocation3 + $0x74] sm:$0xf] %vm378, %v5341
      %5490 = vst.msk [vmem:[#allocation3 + $0x78] sm:$0xf] %vm378, %v5351
      %5491 = vst.msk [vmem:[#allocation3 + $0x7c] sm:$0xf] %vm378, %v5361
      %5492 = vst.msk [vmem:[#allocation3 + $0x80] sm:$0xf] %vm378, %v5371
      %5493 = vst.msk [vmem:[#allocation3 + $0x84] sm:$0xf] %vm378, %v5381
      %5494 = vst.msk [vmem:[#allocation3 + $0x88] sm:$0xf] %vm378, %v5391
      %5495 = vst.msk [vmem:[#allocation3 + $0x8c] sm:$0xf] %vm378, %v5401
      %5496 = vst.msk [vmem:[#allocation3 + $0x90] sm:$0xf] %vm378, %v5411
      %5497 = vst.msk [vmem:[#allocation3 + $0x94] sm:$0xf] %vm378, %v5421
      %v5498 = vld [vmem:[#allocation3 + $0x98] sm:$0x3]
      %v5499 = vsel %vm382, %v5422, %v5498
      %5500 = vst [vmem:[#allocation3 + $0x98] sm:$0x3] %v5499
      %v5501 = vld [vmem:[#allocation3] sm:$0xf]
      %v5502 = vld [vmem:[#allocation3 + $0x4] sm:$0xf]
      %v5503 = vld [vmem:[#allocation3 + $0x8] sm:$0xf]
      %v5504 = vld [vmem:[#allocation3 + $0xc] sm:$0xf]
      %v5505 = vld [vmem:[#allocation3 + $0x10] sm:$0xf]
      %v5506 = vld [vmem:[#allocation3 + $0x14] sm:$0xf]
      %v5507 = vld [vmem:[#allocation3 + $0x18] sm:$0xf]
      %v5508 = vld [vmem:[#allocation3 + $0x1c] sm:$0xf]
      %v5509 = vld [vmem:[#allocation3 + $0x20] sm:$0xf]
      %v5510 = vld [vmem:[#allocation3 + $0x24] sm:$0xf]
      %v5511 = vld [vmem:[#allocation3 + $0x28] sm:$0xf]
      %v5512 = vld [vmem:[#allocation3 + $0x2c] sm:$0xf]
      %v5513 = vld [vmem:[#allocation3 + $0x30] sm:$0xf]
      %v5514 = vld [vmem:[#allocation3 + $0x34] sm:$0xf]
      %v5515 = vld [vmem:[#allocation3 + $0x38] sm:$0xf]
      %v5516 = vld [vmem:[#allocation3 + $0x3c] sm:$0xf]
      %v5517 = vld [vmem:[#allocation3 + $0x40] sm:$0xf]
      %v5518 = vld [vmem:[#allocation3 + $0x44] sm:$0xf]
      %v5519 = vld [vmem:[#allocation3 + $0x48] sm:$0xf]
      %v5520 = vld [vmem:[#allocation3 + $0x4c] sm:$0xf]
      %v5521 = vld [vmem:[#allocation3 + $0x50] sm:$0xf]
      %v5522 = vld [vmem:[#allocation3 + $0x54] sm:$0xf]
      %v5523 = vld [vmem:[#allocation3 + $0x58] sm:$0xf]
      %v5524 = vld [vmem:[#allocation3 + $0x5c] sm:$0xf]
      %v5525 = vld [vmem:[#allocation3 + $0x60] sm:$0xf]
      %v5526 = vld [vmem:[#allocation3 + $0x64] sm:$0xf]
      %v5527 = vld [vmem:[#allocation3 + $0x68] sm:$0xf]
      %v5528 = vld [vmem:[#allocation3 + $0x6c] sm:$0xf]
      %v5529 = vld [vmem:[#allocation3 + $0x70] sm:$0xf]
      %v5530 = vld [vmem:[#allocation3 + $0x74] sm:$0xf]
      %v5531 = vld [vmem:[#allocation3 + $0x78] sm:$0xf]
      %v5532 = vld [vmem:[#allocation3 + $0x7c] sm:$0xf]
      %v5533 = vld [vmem:[#allocation3 + $0x80] sm:$0xf]
      %v5534 = vld [vmem:[#allocation3 + $0x84] sm:$0xf]
      %v5535 = vld [vmem:[#allocation3 + $0x88] sm:$0xf]
      %v5536 = vld [vmem:[#allocation3 + $0x8c] sm:$0xf]
      %v5537 = vld [vmem:[%s7] sm:$0xf]
      %v5538 = vld [vmem:[#allocation3 + $0x90] sm:$0x1]
      %s5539 = scalar_lea.vmem %s7, 4
      %v5540 = vld [vmem:[%s5539] sm:$0xf]
      %v5578 = vunpack.c.l.b16 %v5501
      %v5579 = vunpack.c.l.b16 %v5502
      %v5580 = vunpack.c.l.b16 %v5503
      %v5581 = vunpack.c.l.b16 %v5504
      %v5582 = vunpack.c.l.b16 %v5505
      %v5583 = vunpack.c.l.b16 %v5506
      %v5584 = vunpack.c.l.b16 %v5507
      %v5585 = vunpack.c.l.b16 %v5508
      %v5586 = vunpack.c.l.b16 %v5509
      %v5587 = vunpack.c.l.b16 %v5510
      %v5588 = vunpack.c.l.b16 %v5511
      %v5589 = vunpack.c.l.b16 %v5512
      %v5590 = vunpack.c.l.b16 %v5513
      %v5591 = vunpack.c.l.b16 %v5514
      %v5592 = vunpack.c.l.b16 %v5515
      %v5593 = vunpack.c.l.b16 %v5516
      %v5594 = vunpack.c.l.b16 %v5517
      %v5595 = vunpack.c.l.b16 %v5518
      %v5596 = vunpack.c.l.b16 %v5519
      %v5597 = vunpack.c.l.b16 %v5520
      %v5598 = vunpack.c.l.b16 %v5521
      %v5599 = vunpack.c.l.b16 %v5522
      %v5600 = vunpack.c.l.b16 %v5523
      %v5601 = vunpack.c.l.b16 %v5524
      %v5602 = vunpack.c.l.b16 %v5525
      %v5603 = vunpack.c.l.b16 %v5526
      %v5604 = vunpack.c.l.b16 %v5527
      %v5605 = vunpack.c.l.b16 %v5528
      %v5606 = vunpack.c.l.b16 %v5529
      %v5607 = vunpack.c.l.b16 %v5530
      %v5608 = vunpack.c.l.b16 %v5531
      %v5609 = vunpack.c.l.b16 %v5532
      %v5610 = vunpack.c.l.b16 %v5533
      %v5611 = vunpack.c.l.b16 %v5534
      %v5612 = vunpack.c.l.b16 %v5535
      %v5613 = vunpack.c.l.b16 %v5536
      %v5614 = vunpack.c.l.b16 %v5538
      %v5615 = vpack.c.b16 %v5579, %v5578
      %v5616 = vpack.c.b16 %v5581, %v5580
      %v5617 = vpack.c.b16 %v5583, %v5582
      %v5618 = vpack.c.b16 %v5585, %v5584
      %v5619 = vpack.c.b16 %v5587, %v5586
      %v5620 = vpack.c.b16 %v5589, %v5588
      %v5621 = vpack.c.b16 %v5591, %v5590
      %v5622 = vpack.c.b16 %v5593, %v5592
      %v5623 = vpack.c.b16 %v5595, %v5594
      %v5624 = vpack.c.b16 %v5597, %v5596
      %v5625 = vpack.c.b16 %v5599, %v5598
      %v5626 = vpack.c.b16 %v5601, %v5600
      %v5627 = vpack.c.b16 %v5603, %v5602
      %v5628 = vpack.c.b16 %v5605, %v5604
      %v5629 = vpack.c.b16 %v5607, %v5606
      %v5630 = vpack.c.b16 %v5609, %v5608
      %v5631 = vpack.c.b16 %v5611, %v5610
      %v5632 = vpack.c.b16 %v5613, %v5612
      %v5633 = vpack.c.b16 %v5614, %v5614
      %v5635 = vshrl.u32 %v5615, 16
      %v5637 = vshll.u32 %v5615, 16
      %v5639 = vrot.slane %v5637, 1
      %v5640 = vor.u32 %v5635, %v5639
      %v5642 = vshll.u32 %v5616, 16
      %v5644 = vrot.slane %v5642, 1
      %v5645 = vsel %vm1483, %v5640, %v5644
      %v5646 = vshrl.u32 %v5616, 16
      %v5648 = vor.u32 %v5646, %v5644
      %v5650 = vshll.u32 %v5617, 16
      %v5652 = vrot.slane %v5650, 1
      %v5653 = vsel %vm1483, %v5648, %v5652
      %v5654 = vshrl.u32 %v5617, 16
      %v5656 = vor.u32 %v5654, %v5652
      %v5658 = vshll.u32 %v5618, 16
      %v5660 = vrot.slane %v5658, 1
      %v5661 = vsel %vm1483, %v5656, %v5660
      %v5662 = vshrl.u32 %v5618, 16
      %v5664 = vor.u32 %v5662, %v5660
      %v5666 = vshll.u32 %v5619, 16
      %v5668 = vrot.slane %v5666, 1
      %v5669 = vsel %vm1483, %v5664, %v5668
      %v5670 = vshrl.u32 %v5619, 16
      %v5672 = vor.u32 %v5670, %v5668
      %v5674 = vshll.u32 %v5620, 16
      %v5676 = vrot.slane %v5674, 1
      %v5677 = vsel %vm1483, %v5672, %v5676
      %v5678 = vshrl.u32 %v5620, 16
      %v5680 = vor.u32 %v5678, %v5676
      %v5682 = vshll.u32 %v5621, 16
      %v5684 = vrot.slane %v5682, 1
      %v5685 = vsel %vm1483, %v5680, %v5684
      %v5686 = vshrl.u32 %v5621, 16
      %v5688 = vor.u32 %v5686, %v5684
      %v5690 = vshll.u32 %v5622, 16
      %v5692 = vrot.slane %v5690, 1
      %v5693 = vsel %vm1483, %v5688, %v5692
      %v5694 = vshrl.u32 %v5622, 16
      %v5696 = vor.u32 %v5694, %v5692
      %v5698 = vshll.u32 %v5623, 16
      %v5700 = vrot.slane %v5698, 1
      %v5701 = vsel %vm1483, %v5696, %v5700
      %v5702 = vshrl.u32 %v5623, 16
      %v5704 = vor.u32 %v5702, %v5700
      %v5706 = vshll.u32 %v5624, 16
      %v5708 = vrot.slane %v5706, 1
      %v5709 = vsel %vm1483, %v5704, %v5708
      %v5710 = vshrl.u32 %v5624, 16
      %v5712 = vor.u32 %v5710, %v5708
      %v5714 = vshll.u32 %v5625, 16
      %v5716 = vrot.slane %v5714, 1
      %v5717 = vsel %vm1483, %v5712, %v5716
      %v5718 = vshrl.u32 %v5625, 16
      %v5720 = vor.u32 %v5718, %v5716
      %v5722 = vshll.u32 %v5626, 16
      %v5724 = vrot.slane %v5722, 1
      %v5725 = vsel %vm1483, %v5720, %v5724
      %v5726 = vshrl.u32 %v5626, 16
      %v5728 = vor.u32 %v5726, %v5724
      %v5730 = vshll.u32 %v5627, 16
      %v5732 = vrot.slane %v5730, 1
      %v5733 = vsel %vm1483, %v5728, %v5732
      %v5734 = vshrl.u32 %v5627, 16
      %v5736 = vor.u32 %v5734, %v5732
      %v5738 = vshll.u32 %v5628, 16
      %v5740 = vrot.slane %v5738, 1
      %v5741 = vsel %vm1483, %v5736, %v5740
      %v5742 = vshrl.u32 %v5628, 16
      %v5744 = vor.u32 %v5742, %v5740
      %v5746 = vshll.u32 %v5629, 16
      %v5748 = vrot.slane %v5746, 1
      %v5749 = vsel %vm1483, %v5744, %v5748
      %v5750 = vshrl.u32 %v5629, 16
      %v5752 = vor.u32 %v5750, %v5748
      %v5754 = vshll.u32 %v5630, 16
      %v5756 = vrot.slane %v5754, 1
      %v5757 = vsel %vm1483, %v5752, %v5756
      %v5758 = vshrl.u32 %v5630, 16
      %v5760 = vor.u32 %v5758, %v5756
      %v5762 = vshll.u32 %v5631, 16
      %v5764 = vrot.slane %v5762, 1
      %v5765 = vsel %vm1483, %v5760, %v5764
      %v5766 = vshrl.u32 %v5631, 16
      %v5768 = vor.u32 %v5766, %v5764
      %v5770 = vshll.u32 %v5632, 16
      %v5772 = vrot.slane %v5770, 1
      %v5773 = vsel %vm1483, %v5768, %v5772
      %v5774 = vshrl.u32 %v5632, 16
      %v5776 = vor.u32 %v5774, %v5772
      %v5778 = vshll.u32 %v5633, 16
      %v5780 = vrot.slane %v5778, 1
      %v5781 = vsel %vm1483, %v5776, %v5780
      %vm5782 = vcmask 64512
      %v5784 = vsel %vm5782, %v5645, 0
      %v5787 = vsel %vm5782, %v5653, 0
      %v5790 = vsel %vm5782, %v5661, 0
      %v5793 = vsel %vm5782, %v5669, 0
      %v5796 = vsel %vm5782, %v5677, 0
      %v5799 = vsel %vm5782, %v5685, 0
      %v5802 = vsel %vm5782, %v5693, 0
      %v5805 = vsel %vm5782, %v5701, 0
      %v5808 = vsel %vm5782, %v5709, 0
      %v5811 = vsel %vm5782, %v5717, 0
      %v5814 = vsel %vm5782, %v5725, 0
      %v5817 = vsel %vm5782, %v5733, 0
      %v5820 = vsel %vm5782, %v5741, 0
      %v5823 = vsel %vm5782, %v5749, 0
      %v5826 = vsel %vm5782, %v5757, 0
      %v5829 = vsel %vm5782, %v5765, 0
      %v5832 = vsel %vm5782, %v5773, 0
      %v5835 = vsel %vm5782, %v5781, 0
      %vm5837 = vcmask 1043456
      %v5839 = vsel %vm5837, %v5540, 0
      %5841 = vmatprep.subr.bf16.mxu0 0
      %5842 = vmatpush1.bf16.msra.mxu0 %v5839
      %5843 = vmatprep.subr.bf16.mxu0 0
      %5844 = vmatpush1.bf16.msra.mxu0 0
      %5845 = vmatprep.subr.bf16.mxu0 0
      %5846 = vmatpush1.bf16.msra.mxu0 0
      %5847 = vmatprep.subr.bf16.mxu0 0
      %5848 = vmatpush1.bf16.msra.mxu0 0
      %5849 = vmatprep.subr.bf16.mxu0 0
      %5850 = vmatpush1.bf16.msra.mxu0 0
      %5851 = vmatprep.subr.bf16.mxu0 0
      %5852 = vmatpush1.bf16.msra.mxu0 0
      %5853 = vmatprep.subr.bf16.mxu0 0
      %5854 = vmatpush1.bf16.msra.mxu0 0
      %5855 = vmatprep.subr.bf16.mxu0 0
      %5856 = vmatpush1.bf16.msra.mxu0 0
      %5857 = vmatprep.subr.bf16.mxu0 0
      %5858 = vmatpush1.bf16.msra.mxu0 0
      %5859 = vmatprep.subr.bf16.mxu0 0
      %5860 = vmatpush1.bf16.msra.mxu0 0
      %5861 = vmatprep.subr.bf16.mxu0 0
      %5862 = vmatpush1.bf16.msra.mxu0 0
      %5863 = vmatprep.subr.bf16.mxu0 0
      %5864 = vmatpush1.bf16.msra.mxu0 0
      %5865 = vmatprep.subr.bf16.mxu0 0
      %5866 = vmatpush1.bf16.msra.mxu0 0
      %5867 = vmatprep.subr.bf16.mxu0 0
      %5868 = vmatpush1.bf16.msra.mxu0 0
      %5869 = vmatprep.subr.bf16.mxu0 0
      %5870 = vmatpush1.bf16.msra.mxu0 0
      %5871 = vmatprep.subr.bf16.mxu0 0
      %5872 = vmatpush1.bf16.msra.mxu0 0
      %5873 = vmatprep.mubr.bf16.mxu0 0
      %5874 = vmatmul.mubr.bf16.gmra.mrb[0].mxu0 %v5784
      %v5875 = vpop.f32.mrb[0].mxu0
      %v5876 = vadd.f32 0.0, %v5875
      %v5877 = vpop.f32.mrb[0].mxu0
      %v5878 = vpop.f32.mrb[0].mxu0
      %v5879 = vadd.f32 0.0, %v5878
      %v5880 = vpop.f32.mrb[0].mxu0
      %5881 = vmatprep.mubr.bf16.mxu0 0
      %5882 = vmatmul.mubr.bf16.gmra.mrb[0].mxu0 %v5787
      %v5883 = vpop.f32.mrb[0].mxu0
      %v5884 = vadd.f32 0.0, %v5883
      %v5885 = vpop.f32.mrb[0].mxu0
      %v5886 = vpop.f32.mrb[0].mxu0
      %v5887 = vadd.f32 0.0, %v5886
      %v5888 = vpop.f32.mrb[0].mxu0
      %5889 = vmatprep.mubr.bf16.mxu0 0
      %5890 = vmatmul.mubr.bf16.gmra.mrb[0].mxu0 %v5790
      %v5891 = vpop.f32.mrb[0].mxu0
      %v5892 = vadd.f32 0.0, %v5891
      %v5893 = vpop.f32.mrb[0].mxu0
      %v5894 = vpop.f32.mrb[0].mxu0
      %v5895 = vadd.f32 0.0, %v5894
      %v5896 = vpop.f32.mrb[0].mxu0
      %5897 = vmatprep.mubr.bf16.mxu0 0
      %5898 = vmatmul.mubr.bf16.gmra.mrb[0].mxu0 %v5793
      %v5899 = vpop.f32.mrb[0].mxu0
      %v5900 = vadd.f32 0.0, %v5899
      %v5901 = vpop.f32.mrb[0].mxu0
      %v5902 = vpop.f32.mrb[0].mxu0
      %v5903 = vadd.f32 0.0, %v5902
      %v5904 = vpop.f32.mrb[0].mxu0
      %5905 = vmatprep.mubr.bf16.mxu0 0
      %5906 = vmatmul.mubr.bf16.gmra.mrb[0].mxu0 %v5796
      %v5907 = vpop.f32.mrb[0].mxu0
      %v5908 = vadd.f32 0.0, %v5907
      %v5909 = vpop.f32.mrb[0].mxu0
      %v5910 = vpop.f32.mrb[0].mxu0
      %v5911 = vadd.f32 0.0, %v5910
      %v5912 = vpop.f32.mrb[0].mxu0
      %5913 = vmatprep.mubr.bf16.mxu0 0
      %5914 = vmatmul.mubr.bf16.gmra.mrb[0].mxu0 %v5799
      %v5915 = vpop.f32.mrb[0].mxu0
      %v5916 = vadd.f32 0.0, %v5915
      %v5917 = vpop.f32.mrb[0].mxu0
      %v5918 = vpop.f32.mrb[0].mxu0
      %v5919 = vadd.f32 0.0, %v5918
      %v5920 = vpop.f32.mrb[0].mxu0
      %5921 = vmatprep.mubr.bf16.mxu0 0
      %5922 = vmatmul.mubr.bf16.gmra.mrb[0].mxu0 %v5802
      %v5923 = vpop.f32.mrb[0].mxu0
      %v5924 = vadd.f32 0.0, %v5923
      %v5925 = vpop.f32.mrb[0].mxu0
      %v5926 = vpop.f32.mrb[0].mxu0
      %v5927 = vadd.f32 0.0, %v5926
      %v5928 = vpop.f32.mrb[0].mxu0
      %5929 = vmatprep.mubr.bf16.mxu0 0
      %5930 = vmatmul.mubr.bf16.gmra.mrb[0].mxu0 %v5805
      %v5931 = vpop.f32.mrb[0].mxu0
      %v5932 = vadd.f32 0.0, %v5931
      %v5933 = vpop.f32.mrb[0].mxu0
      %v5934 = vpop.f32.mrb[0].mxu0
      %v5935 = vadd.f32 0.0, %v5934
      %v5936 = vpop.f32.mrb[0].mxu0
      %5937 = vmatprep.mubr.bf16.mxu0 0
      %5938 = vmatmul.mubr.bf16.gmra.mrb[0].mxu0 %v5808
      %v5939 = vpop.f32.mrb[0].mxu0
      %v5940 = vadd.f32 0.0, %v5939
      %v5941 = vpop.f32.mrb[0].mxu0
      %v5942 = vpop.f32.mrb[0].mxu0
      %v5943 = vadd.f32 0.0, %v5942
      %v5944 = vpop.f32.mrb[0].mxu0
      %5945 = vmatprep.mubr.bf16.mxu0 0
      %5946 = vmatmul.mubr.bf16.gmra.mrb[0].mxu0 %v5811
      %v5947 = vpop.f32.mrb[0].mxu0
      %v5948 = vadd.f32 0.0, %v5947
      %v5949 = vpop.f32.mrb[0].mxu0
      %v5950 = vpop.f32.mrb[0].mxu0
      %v5951 = vadd.f32 0.0, %v5950
      %v5952 = vpop.f32.mrb[0].mxu0
      %5953 = vmatprep.mubr.bf16.mxu0 0
      %5954 = vmatmul.mubr.bf16.gmra.mrb[0].mxu0 %v5814
      %v5955 = vpop.f32.mrb[0].mxu0
      %v5956 = vadd.f32 0.0, %v5955
      %v5957 = vpop.f32.mrb[0].mxu0
      %v5958 = vpop.f32.mrb[0].mxu0
      %v5959 = vadd.f32 0.0, %v5958
      %v5960 = vpop.f32.mrb[0].mxu0
      %5961 = vmatprep.mubr.bf16.mxu0 0
      %5962 = vmatmul.mubr.bf16.gmra.mrb[0].mxu0 %v5817
      %v5963 = vpop.f32.mrb[0].mxu0
      %v5964 = vadd.f32 0.0, %v5963
      %v5965 = vpop.f32.mrb[0].mxu0
      %v5966 = vpop.f32.mrb[0].mxu0
      %v5967 = vadd.f32 0.0, %v5966
      %v5968 = vpop.f32.mrb[0].mxu0
      %5969 = vmatprep.mubr.bf16.mxu0 0
      %5970 = vmatmul.mubr.bf16.gmra.mrb[0].mxu0 %v5820
      %v5971 = vpop.f32.mrb[0].mxu0
      %v5972 = vadd.f32 0.0, %v5971
      %v5973 = vpop.f32.mrb[0].mxu0
      %v5974 = vpop.f32.mrb[0].mxu0
      %v5975 = vadd.f32 0.0, %v5974
      %v5976 = vpop.f32.mrb[0].mxu0
      %5977 = vmatprep.mubr.bf16.mxu0 0
      %5978 = vmatmul.mubr.bf16.gmra.mrb[0].mxu0 %v5823
      %v5979 = vpop.f32.mrb[0].mxu0
      %v5980 = vadd.f32 0.0, %v5979
      %v5981 = vpop.f32.mrb[0].mxu0
      %v5982 = vpop.f32.mrb[0].mxu0
      %v5983 = vadd.f32 0.0, %v5982
      %v5984 = vpop.f32.mrb[0].mxu0
      %5985 = vmatprep.mubr.bf16.mxu0 0
      %5986 = vmatmul.mubr.bf16.gmra.mrb[0].mxu0 %v5826
      %v5987 = vpop.f32.mrb[0].mxu0
      %v5988 = vadd.f32 0.0, %v5987
      %v5989 = vpop.f32.mrb[0].mxu0
      %v5990 = vpop.f32.mrb[0].mxu0
      %v5991 = vadd.f32 0.0, %v5990
      %v5992 = vpop.f32.mrb[0].mxu0
      %5993 = vmatprep.mubr.bf16.mxu0 0
      %5994 = vmatmul.mubr.bf16.gmra.mrb[0].mxu0 %v5829
      %v5995 = vpop.f32.mrb[0].mxu0
      %v5996 = vadd.f32 0.0, %v5995
      %v5997 = vpop.f32.mrb[0].mxu0
      %v5998 = vpop.f32.mrb[0].mxu0
      %v5999 = vadd.f32 0.0, %v5998
      %v6000 = vpop.f32.mrb[0].mxu0
      %6001 = vmatprep.mubr.bf16.mxu0 0
      %6002 = vmatmul.mubr.bf16.gmra.mrb[0].mxu0 %v5832
      %v6003 = vpop.f32.mrb[0].mxu0
      %v6004 = vadd.f32 0.0, %v6003
      %v6005 = vpop.f32.mrb[0].mxu0
      %v6006 = vpop.f32.mrb[0].mxu0
      %v6007 = vadd.f32 0.0, %v6006
      %v6008 = vpop.f32.mrb[0].mxu0
      %6009 = vmatprep.mubr.bf16.mxu0 0
      %6010 = vmatmul.mubr.bf16.gmra.mrb[0].mxu0 %v5835
      %v6011 = vpop.f32.mrb[0].mxu0
      %v6012 = vadd.f32 0.0, %v6011
      %v6013 = vpop.f32.mrb[0].mxu0
      %v6014 = vpop.f32.mrb[0].mxu0
      %v6015 = vadd.f32 0.0, %v6014
      %v6016 = vpop.f32.mrb[0].mxu0
      %6017 = vdwg.mxu0
      %v6018 = vsel %vm5782, %v5615, 0
      %v6020 = vsel %vm5782, %v5616, 0
      %v6022 = vsel %vm5782, %v5617, 0
      %v6024 = vsel %vm5782, %v5618, 0
      %v6026 = vsel %vm5782, %v5619, 0
      %v6028 = vsel %vm5782, %v5620, 0
      %v6030 = vsel %vm5782, %v5621, 0
      %v6032 = vsel %vm5782, %v5622, 0
      %v6034 = vsel %vm5782, %v5623, 0
      %v6036 = vsel %vm5782, %v5624, 0
      %v6038 = vsel %vm5782, %v5625, 0
      %v6040 = vsel %vm5782, %v5626, 0
      %v6042 = vsel %vm5782, %v5627, 0
      %v6044 = vsel %vm5782, %v5628, 0
      %v6046 = vsel %vm5782, %v5629, 0
      %v6048 = vsel %vm5782, %v5630, 0
      %v6050 = vsel %vm5782, %v5631, 0
      %v6052 = vsel %vm5782, %v5632, 0
      %v6055 = vsel %vm5837, %v5537, 0
      %6057 = vmatprep.subr.bf16.mxu0 0
      %6058 = vmatpush1.bf16.msra.mxu0 %v6055
      %6059 = vmatprep.subr.bf16.mxu0 0
      %6060 = vmatpush1.bf16.msra.mxu0 0
      %6061 = vmatprep.subr.bf16.mxu0 0
      %6062 = vmatpush1.bf16.msra.mxu0 0
      %6063 = vmatprep.subr.bf16.mxu0 0
      %6064 = vmatpush1.bf16.msra.mxu0 0
      %6065 = vmatprep.subr.bf16.mxu0 0
      %6066 = vmatpush1.bf16.msra.mxu0 0
      %6067 = vmatprep.subr.bf16.mxu0 0
      %6068 = vmatpush1.bf16.msra.mxu0 0
      %6069 = vmatprep.subr.bf16.mxu0 0
      %6070 = vmatpush1.bf16.msra.mxu0 0
      %6071 = vmatprep.subr.bf16.mxu0 0
      %6072 = vmatpush1.bf16.msra.mxu0 0
      %6073 = vmatprep.subr.bf16.mxu0 0
      %6074 = vmatpush1.bf16.msra.mxu0 0
      %6075 = vmatprep.subr.bf16.mxu0 0
      %6076 = vmatpush1.bf16.msra.mxu0 0
      %6077 = vmatprep.subr.bf16.mxu0 0
      %6078 = vmatpush1.bf16.msra.mxu0 0
      %6079 = vmatprep.subr.bf16.mxu0 0
      %6080 = vmatpush1.bf16.msra.mxu0 0
      %6081 = vmatprep.subr.bf16.mxu0 0
      %6082 = vmatpush1.bf16.msra.mxu0 0
      %6083 = vmatprep.subr.bf16.mxu0 0
      %6084 = vmatpush1.bf16.msra.mxu0 0
      %6085 = vmatprep.subr.bf16.mxu0 0
      %6086 = vmatpush1.bf16.msra.mxu0 0
      %6087 = vmatprep.subr.bf16.mxu0 0
      %6088 = vmatpush1.bf16.msra.mxu0 0
      %6089 = vmatprep.mubr.bf16.mxu0 0
      %6090 = vmatmul.mubr.bf16.gmra.mrb[0].mxu0 %v6018
      %v6091 = vpop.f32.mrb[0].mxu0
      %v6092 = vadd.f32 %v5876, %v6091
      %v6093 = vpop.f32.mrb[0].mxu0
      %v6094 = vpop.f32.mrb[0].mxu0
      %v6095 = vadd.f32 %v5879, %v6094
      %v6096 = vpop.f32.mrb[0].mxu0
      %6097 = vmatprep.mubr.bf16.mxu0 0
      %6098 = vmatmul.mubr.bf16.gmra.mrb[0].mxu0 %v6020
      %v6099 = vpop.f32.mrb[0].mxu0
      %v6100 = vadd.f32 %v5884, %v6099
      %v6101 = vpop.f32.mrb[0].mxu0
      %v6102 = vpop.f32.mrb[0].mxu0
      %v6103 = vadd.f32 %v5887, %v6102
      %v6104 = vpop.f32.mrb[0].mxu0
      %6105 = vmatprep.mubr.bf16.mxu0 0
      %6106 = vmatmul.mubr.bf16.gmra.mrb[0].mxu0 %v6022
      %v6107 = vpop.f32.mrb[0].mxu0
      %v6108 = vadd.f32 %v5892, %v6107
      %v6109 = vpop.f32.mrb[0].mxu0
      %v6110 = vpop.f32.mrb[0].mxu0
      %v6111 = vadd.f32 %v5895, %v6110
      %v6112 = vpop.f32.mrb[0].mxu0
      %6113 = vmatprep.mubr.bf16.mxu0 0
      %6114 = vmatmul.mubr.bf16.gmra.mrb[0].mxu0 %v6024
      %v6115 = vpop.f32.mrb[0].mxu0
      %v6116 = vadd.f32 %v5900, %v6115
      %v6117 = vpop.f32.mrb[0].mxu0
      %v6118 = vpop.f32.mrb[0].mxu0
      %v6119 = vadd.f32 %v5903, %v6118
      %v6120 = vpop.f32.mrb[0].mxu0
      %6121 = vmatprep.mubr.bf16.mxu0 0
      %6122 = vmatmul.mubr.bf16.gmra.mrb[0].mxu0 %v6026
      %v6123 = vpop.f32.mrb[0].mxu0
      %v6124 = vadd.f32 %v5908, %v6123
      %v6125 = vpop.f32.mrb[0].mxu0
      %v6126 = vpop.f32.mrb[0].mxu0
      %v6127 = vadd.f32 %v5911, %v6126
      %v6128 = vpop.f32.mrb[0].mxu0
      %6129 = vmatprep.mubr.bf16.mxu0 0
      %6130 = vmatmul.mubr.bf16.gmra.mrb[0].mxu0 %v6028
      %v6131 = vpop.f32.mrb[0].mxu0
      %v6132 = vadd.f32 %v5916, %v6131
      %v6133 = vpop.f32.mrb[0].mxu0
      %v6134 = vpop.f32.mrb[0].mxu0
      %v6135 = vadd.f32 %v5919, %v6134
      %v6136 = vpop.f32.mrb[0].mxu0
      %6137 = vmatprep.mubr.bf16.mxu0 0
      %6138 = vmatmul.mubr.bf16.gmra.mrb[0].mxu0 %v6030
      %v6139 = vpop.f32.mrb[0].mxu0
      %v6140 = vadd.f32 %v5924, %v6139
      %v6141 = vpop.f32.mrb[0].mxu0
      %v6142 = vpop.f32.mrb[0].mxu0
      %v6143 = vadd.f32 %v5927, %v6142
      %v6144 = vpop.f32.mrb[0].mxu0
      %6145 = vmatprep.mubr.bf16.mxu0 0
      %6146 = vmatmul.mubr.bf16.gmra.mrb[0].mxu0 %v6032
      %v6147 = vpop.f32.mrb[0].mxu0
      %v6148 = vadd.f32 %v5932, %v6147
      %v6149 = vpop.f32.mrb[0].mxu0
      %v6150 = vpop.f32.mrb[0].mxu0
      %v6151 = vadd.f32 %v5935, %v6150
      %v6152 = vpop.f32.mrb[0].mxu0
      %6153 = vmatprep.mubr.bf16.mxu0 0
      %6154 = vmatmul.mubr.bf16.gmra.mrb[0].mxu0 %v6034
      %v6155 = vpop.f32.mrb[0].mxu0
      %v6156 = vadd.f32 %v5940, %v6155
      %v6157 = vpop.f32.mrb[0].mxu0
      %v6158 = vpop.f32.mrb[0].mxu0
      %v6159 = vadd.f32 %v5943, %v6158
      %v6160 = vpop.f32.mrb[0].mxu0
      %6161 = vmatprep.mubr.bf16.mxu0 0
      %6162 = vmatmul.mubr.bf16.gmra.mrb[0].mxu0 %v6036
      %v6163 = vpop.f32.mrb[0].mxu0
      %v6164 = vadd.f32 %v5948, %v6163
      %v6165 = vpop.f32.mrb[0].mxu0
      %v6166 = vpop.f32.mrb[0].mxu0
      %v6167 = vadd.f32 %v5951, %v6166
      %v6168 = vpop.f32.mrb[0].mxu0
      %6169 = vmatprep.mubr.bf16.mxu0 0
      %6170 = vmatmul.mubr.bf16.gmra.mrb[0].mxu0 %v6038
      %v6171 = vpop.f32.mrb[0].mxu0
      %v6172 = vadd.f32 %v5956, %v6171
      %v6173 = vpop.f32.mrb[0].mxu0
      %v6174 = vpop.f32.mrb[0].mxu0
      %v6175 = vadd.f32 %v5959, %v6174
      %v6176 = vpop.f32.mrb[0].mxu0
      %6177 = vmatprep.mubr.bf16.mxu0 0
      %6178 = vmatmul.mubr.bf16.gmra.mrb[0].mxu0 %v6040
      %v6179 = vpop.f32.mrb[0].mxu0
      %v6180 = vadd.f32 %v5964, %v6179
      %v6181 = vpop.f32.mrb[0].mxu0
      %v6182 = vpop.f32.mrb[0].mxu0
      %v6183 = vadd.f32 %v5967, %v6182
      %v6184 = vpop.f32.mrb[0].mxu0
      %6185 = vmatprep.mubr.bf16.mxu0 0
      %6186 = vmatmul.mubr.bf16.gmra.mrb[0].mxu0 %v6042
      %v6187 = vpop.f32.mrb[0].mxu0
      %v6188 = vadd.f32 %v5972, %v6187
      %v6189 = vpop.f32.mrb[0].mxu0
      %v6190 = vpop.f32.mrb[0].mxu0
      %v6191 = vadd.f32 %v5975, %v6190
      %v6192 = vpop.f32.mrb[0].mxu0
      %6193 = vmatprep.mubr.bf16.mxu0 0
      %6194 = vmatmul.mubr.bf16.gmra.mrb[0].mxu0 %v6044
      %v6195 = vpop.f32.mrb[0].mxu0
      %v6196 = vadd.f32 %v5980, %v6195
      %v6197 = vpop.f32.mrb[0].mxu0
      %v6198 = vpop.f32.mrb[0].mxu0
      %v6199 = vadd.f32 %v5983, %v6198
      %v6200 = vpop.f32.mrb[0].mxu0
      %6201 = vmatprep.mubr.bf16.mxu0 0
      %6202 = vmatmul.mubr.bf16.gmra.mrb[0].mxu0 %v6046
      %v6203 = vpop.f32.mrb[0].mxu0
      %v6204 = vadd.f32 %v5988, %v6203
      %v6205 = vpop.f32.mrb[0].mxu0
      %v6206 = vpop.f32.mrb[0].mxu0
      %v6207 = vadd.f32 %v5991, %v6206
      %v6208 = vpop.f32.mrb[0].mxu0
      %6209 = vmatprep.mubr.bf16.mxu0 0
      %6210 = vmatmul.mubr.bf16.gmra.mrb[0].mxu0 %v6048
      %v6211 = vpop.f32.mrb[0].mxu0
      %v6212 = vadd.f32 %v5996, %v6211
      %v6213 = vpop.f32.mrb[0].mxu0
      %v6214 = vpop.f32.mrb[0].mxu0
      %v6215 = vadd.f32 %v5999, %v6214
      %v6216 = vpop.f32.mrb[0].mxu0
      %6217 = vmatprep.mubr.bf16.mxu0 0
      %6218 = vmatmul.mubr.bf16.gmra.mrb[0].mxu0 %v6050
      %v6219 = vpop.f32.mrb[0].mxu0
      %v6220 = vadd.f32 %v6004, %v6219
      %v6221 = vpop.f32.mrb[0].mxu0
      %v6222 = vpop.f32.mrb[0].mxu0
      %v6223 = vadd.f32 %v6007, %v6222
      %v6224 = vpop.f32.mrb[0].mxu0
      %6225 = vmatprep.mubr.bf16.mxu0 0
      %6226 = vmatmul.mubr.bf16.gmra.mrb[0].mxu0 %v6052
      %v6227 = vpop.f32.mrb[0].mxu0
      %v6228 = vadd.f32 %v6012, %v6227
      %v6229 = vpop.f32.mrb[0].mxu0
      %v6230 = vpop.f32.mrb[0].mxu0
      %v6231 = vadd.f32 %v6015, %v6230
      %v6232 = vpop.f32.mrb[0].mxu0
      %6233 = vdwg.mxu0
      %v6234 = vld [vmem:[#allocation3] sm:$0xe]
      %s6235 = scalar_lea.vmem %s7, 8
      %v6236 = vld [vmem:[%s6235] sm:$0xf]
      %v6238 = vunpack.c.l.b16 %v6234
      %v6239 = vpack.c.b16 %v5579, %v6238
      %v6240 = vrot.slane %v6239, 1
      %v6241 = vrot.slane %v5616, 1
      %v6242 = vsel %vm2090, %v6240, %v6241
      %v6243 = vrot.slane %v5617, 1
      %v6244 = vsel %vm2090, %v6241, %v6243
      %v6245 = vrot.slane %v5618, 1
      %v6246 = vsel %vm2090, %v6243, %v6245
      %v6247 = vrot.slane %v5619, 1
      %v6248 = vsel %vm2090, %v6245, %v6247
      %v6249 = vrot.slane %v5620, 1
      %v6250 = vsel %vm2090, %v6247, %v6249
      %v6251 = vrot.slane %v5621, 1
      %v6252 = vsel %vm2090, %v6249, %v6251
      %v6253 = vrot.slane %v5622, 1
      %v6254 = vsel %vm2090, %v6251, %v6253
      %v6255 = vrot.slane %v5623, 1
      %v6256 = vsel %vm2090, %v6253, %v6255
      %v6257 = vrot.slane %v5624, 1
      %v6258 = vsel %vm2090, %v6255, %v6257
      %v6259 = vrot.slane %v5625, 1
      %v6260 = vsel %vm2090, %v6257, %v6259
      %v6261 = vrot.slane %v5626, 1
      %v6262 = vsel %vm2090, %v6259, %v6261
      %v6263 = vrot.slane %v5627, 1
      %v6264 = vsel %vm2090, %v6261, %v6263
      %v6265 = vrot.slane %v5628, 1
      %v6266 = vsel %vm2090, %v6263, %v6265
      %v6267 = vrot.slane %v5629, 1
      %v6268 = vsel %vm2090, %v6265, %v6267
      %v6269 = vrot.slane %v5630, 1
      %v6270 = vsel %vm2090, %v6267, %v6269
      %v6271 = vrot.slane %v5631, 1
      %v6272 = vsel %vm2090, %v6269, %v6271
      %v6273 = vrot.slane %v5632, 1
      %v6274 = vsel %vm2090, %v6271, %v6273
      %v6275 = vrot.slane %v5633, 1
      %v6276 = vsel %vm2090, %v6273, %v6275
      %v6278 = vsel %vm5782, %v6242, 0
      %v6281 = vsel %vm5782, %v6244, 0
      %v6284 = vsel %vm5782, %v6246, 0
      %v6287 = vsel %vm5782, %v6248, 0
      %v6290 = vsel %vm5782, %v6250, 0
      %v6293 = vsel %vm5782, %v6252, 0
      %v6296 = vsel %vm5782, %v6254, 0
      %v6299 = vsel %vm5782, %v6256, 0
      %v6302 = vsel %vm5782, %v6258, 0
      %v6305 = vsel %vm5782, %v6260, 0
      %v6308 = vsel %vm5782, %v6262, 0
      %v6311 = vsel %vm5782, %v6264, 0
      %v6314 = vsel %vm5782, %v6266, 0
      %v6317 = vsel %vm5782, %v6268, 0
      %v6320 = vsel %vm5782, %v6270, 0
      %v6323 = vsel %vm5782, %v6272, 0
      %v6326 = vsel %vm5782, %v6274, 0
      %v6329 = vsel %vm5782, %v6276, 0
      %v6332 = vsel %vm5837, %v6236, 0
      %6334 = vmatprep.subr.bf16.mxu0 0
      %6335 = vmatpush1.bf16.msra.mxu0 %v6332
      %6336 = vmatprep.subr.bf16.mxu0 0
      %6337 = vmatpush1.bf16.msra.mxu0 0
      %6338 = vmatprep.subr.bf16.mxu0 0
      %6339 = vmatpush1.bf16.msra.mxu0 0
      %6340 = vmatprep.subr.bf16.mxu0 0
      %6341 = vmatpush1.bf16.msra.mxu0 0
      %6342 = vmatprep.subr.bf16.mxu0 0
      %6343 = vmatpush1.bf16.msra.mxu0 0
      %6344 = vmatprep.subr.bf16.mxu0 0
      %6345 = vmatpush1.bf16.msra.mxu0 0
      %6346 = vmatprep.subr.bf16.mxu0 0
      %6347 = vmatpush1.bf16.msra.mxu0 0
      %6348 = vmatprep.subr.bf16.mxu0 0
      %6349 = vmatpush1.bf16.msra.mxu0 0
      %6350 = vmatprep.subr.bf16.mxu0 0
      %6351 = vmatpush1.bf16.msra.mxu0 0
      %6352 = vmatprep.subr.bf16.mxu0 0
      %6353 = vmatpush1.bf16.msra.mxu0 0
      %6354 = vmatprep.subr.bf16.mxu0 0
      %6355 = vmatpush1.bf16.msra.mxu0 0
      %6356 = vmatprep.subr.bf16.mxu0 0
      %6357 = vmatpush1.bf16.msra.mxu0 0
      %6358 = vmatprep.subr.bf16.mxu0 0
      %6359 = vmatpush1.bf16.msra.mxu0 0
      %6360 = vmatprep.subr.bf16.mxu0 0
      %6361 = vmatpush1.bf16.msra.mxu0 0
      %6362 = vmatprep.subr.bf16.mxu0 0
      %6363 = vmatpush1.bf16.msra.mxu0 0
      %6364 = vmatprep.subr.bf16.mxu0 0
      %6365 = vmatpush1.bf16.msra.mxu0 0
      %6366 = vmatprep.mubr.bf16.mxu0 0
      %6367 = vmatmul.mubr.bf16.gmra.mrb[0].mxu0 %v6278
      %v6368 = vpop.f32.mrb[0].mxu0
      %v6369 = vadd.f32 0.0, %v6368
      %v6370 = vpop.f32.mrb[0].mxu0
      %v6371 = vpop.f32.mrb[0].mxu0
      %v6372 = vadd.f32 0.0, %v6371
      %v6373 = vpop.f32.mrb[0].mxu0
      %6374 = vmatprep.mubr.bf16.mxu0 0
      %6375 = vmatmul.mubr.bf16.gmra.mrb[0].mxu0 %v6281
      %v6376 = vpop.f32.mrb[0].mxu0
      %v6377 = vadd.f32 0.0, %v6376
      %v6378 = vpop.f32.mrb[0].mxu0
      %v6379 = vpop.f32.mrb[0].mxu0
      %v6380 = vadd.f32 0.0, %v6379
      %v6381 = vpop.f32.mrb[0].mxu0
      %6382 = vmatprep.mubr.bf16.mxu0 0
      %6383 = vmatmul.mubr.bf16.gmra.mrb[0].mxu0 %v6284
      %v6384 = vpop.f32.mrb[0].mxu0
      %v6385 = vadd.f32 0.0, %v6384
      %v6386 = vpop.f32.mrb[0].mxu0
      %v6387 = vpop.f32.mrb[0].mxu0
      %v6388 = vadd.f32 0.0, %v6387
      %v6389 = vpop.f32.mrb[0].mxu0
      %6390 = vmatprep.mubr.bf16.mxu0 0
      %6391 = vmatmul.mubr.bf16.gmra.mrb[0].mxu0 %v6287
      %v6392 = vpop.f32.mrb[0].mxu0
      %v6393 = vadd.f32 0.0, %v6392
      %v6394 = vpop.f32.mrb[0].mxu0
      %v6395 = vpop.f32.mrb[0].mxu0
      %v6396 = vadd.f32 0.0, %v6395
      %v6397 = vpop.f32.mrb[0].mxu0
      %6398 = vmatprep.mubr.bf16.mxu0 0
      %6399 = vmatmul.mubr.bf16.gmra.mrb[0].mxu0 %v6290
      %v6400 = vpop.f32.mrb[0].mxu0
      %v6401 = vadd.f32 0.0, %v6400
      %v6402 = vpop.f32.mrb[0].mxu0
      %v6403 = vpop.f32.mrb[0].mxu0
      %v6404 = vadd.f32 0.0, %v6403
      %v6405 = vpop.f32.mrb[0].mxu0
      %6406 = vmatprep.mubr.bf16.mxu0 0
      %6407 = vmatmul.mubr.bf16.gmra.mrb[0].mxu0 %v6293
      %v6408 = vpop.f32.mrb[0].mxu0
      %v6409 = vadd.f32 0.0, %v6408
      %v6410 = vpop.f32.mrb[0].mxu0
      %v6411 = vpop.f32.mrb[0].mxu0
      %v6412 = vadd.f32 0.0, %v6411
      %v6413 = vpop.f32.mrb[0].mxu0
      %6414 = vmatprep.mubr.bf16.mxu0 0
      %6415 = vmatmul.mubr.bf16.gmra.mrb[0].mxu0 %v6296
      %v6416 = vpop.f32.mrb[0].mxu0
      %v6417 = vadd.f32 0.0, %v6416
      %v6418 = vpop.f32.mrb[0].mxu0
      %v6419 = vpop.f32.mrb[0].mxu0
      %v6420 = vadd.f32 0.0, %v6419
      %v6421 = vpop.f32.mrb[0].mxu0
      %6422 = vmatprep.mubr.bf16.mxu0 0
      %6423 = vmatmul.mubr.bf16.gmra.mrb[0].mxu0 %v6299
      %v6424 = vpop.f32.mrb[0].mxu0
      %v6425 = vadd.f32 0.0, %v6424
      %v6426 = vpop.f32.mrb[0].mxu0
      %v6427 = vpop.f32.mrb[0].mxu0
      %v6428 = vadd.f32 0.0, %v6427
      %v6429 = vpop.f32.mrb[0].mxu0
      %6430 = vmatprep.mubr.bf16.mxu0 0
      %6431 = vmatmul.mubr.bf16.gmra.mrb[0].mxu0 %v6302
      %v6432 = vpop.f32.mrb[0].mxu0
      %v6433 = vadd.f32 0.0, %v6432
      %v6434 = vpop.f32.mrb[0].mxu0
      %v6435 = vpop.f32.mrb[0].mxu0
      %v6436 = vadd.f32 0.0, %v6435
      %v6437 = vpop.f32.mrb[0].mxu0
      %6438 = vmatprep.mubr.bf16.mxu0 0
      %6439 = vmatmul.mubr.bf16.gmra.mrb[0].mxu0 %v6305
      %v6440 = vpop.f32.mrb[0].mxu0
      %v6441 = vadd.f32 0.0, %v6440
      %v6442 = vpop.f32.mrb[0].mxu0
      %v6443 = vpop.f32.mrb[0].mxu0
      %v6444 = vadd.f32 0.0, %v6443
      %v6445 = vpop.f32.mrb[0].mxu0
      %6446 = vmatprep.mubr.bf16.mxu0 0
      %6447 = vmatmul.mubr.bf16.gmra.mrb[0].mxu0 %v6308
      %v6448 = vpop.f32.mrb[0].mxu0
      %v6449 = vadd.f32 0.0, %v6448
      %v6450 = vpop.f32.mrb[0].mxu0
      %v6451 = vpop.f32.mrb[0].mxu0
      %v6452 = vadd.f32 0.0, %v6451
      %v6453 = vpop.f32.mrb[0].mxu0
      %6454 = vmatprep.mubr.bf16.mxu0 0
      %6455 = vmatmul.mubr.bf16.gmra.mrb[0].mxu0 %v6311
      %v6456 = vpop.f32.mrb[0].mxu0
      %v6457 = vadd.f32 0.0, %v6456
      %v6458 = vpop.f32.mrb[0].mxu0
      %v6459 = vpop.f32.mrb[0].mxu0
      %v6460 = vadd.f32 0.0, %v6459
      %v6461 = vpop.f32.mrb[0].mxu0
      %6462 = vmatprep.mubr.bf16.mxu0 0
      %6463 = vmatmul.mubr.bf16.gmra.mrb[0].mxu0 %v6314
      %v6464 = vpop.f32.mrb[0].mxu0
      %v6465 = vadd.f32 0.0, %v6464
      %v6466 = vpop.f32.mrb[0].mxu0
      %v6467 = vpop.f32.mrb[0].mxu0
      %v6468 = vadd.f32 0.0, %v6467
      %v6469 = vpop.f32.mrb[0].mxu0
      %6470 = vmatprep.mubr.bf16.mxu0 0
      %6471 = vmatmul.mubr.bf16.gmra.mrb[0].mxu0 %v6317
      %v6472 = vpop.f32.mrb[0].mxu0
      %v6473 = vadd.f32 0.0, %v6472
      %v6474 = vpop.f32.mrb[0].mxu0
      %v6475 = vpop.f32.mrb[0].mxu0
      %v6476 = vadd.f32 0.0, %v6475
      %v6477 = vpop.f32.mrb[0].mxu0
      %6478 = vmatprep.mubr.bf16.mxu0 0
      %6479 = vmatmul.mubr.bf16.gmra.mrb[0].mxu0 %v6320
      %v6480 = vpop.f32.mrb[0].mxu0
      %v6481 = vadd.f32 0.0, %v6480
      %v6482 = vpop.f32.mrb[0].mxu0
      %v6483 = vpop.f32.mrb[0].mxu0
      %v6484 = vadd.f32 0.0, %v6483
      %v6485 = vpop.f32.mrb[0].mxu0
      %6486 = vmatprep.mubr.bf16.mxu0 0
      %6487 = vmatmul.mubr.bf16.gmra.mrb[0].mxu0 %v6323
      %v6488 = vpop.f32.mrb[0].mxu0
      %v6489 = vadd.f32 0.0, %v6488
      %v6490 = vpop.f32.mrb[0].mxu0
      %v6491 = vpop.f32.mrb[0].mxu0
      %v6492 = vadd.f32 0.0, %v6491
      %v6493 = vpop.f32.mrb[0].mxu0
      %6494 = vmatprep.mubr.bf16.mxu0 0
      %6495 = vmatmul.mubr.bf16.gmra.mrb[0].mxu0 %v6326
      %v6496 = vpop.f32.mrb[0].mxu0
      %v6497 = vadd.f32 0.0, %v6496
      %v6498 = vpop.f32.mrb[0].mxu0
      %v6499 = vpop.f32.mrb[0].mxu0
      %v6500 = vadd.f32 0.0, %v6499
      %v6501 = vpop.f32.mrb[0].mxu0
      %6502 = vmatprep.mubr.bf16.mxu0 0
      %6503 = vmatmul.mubr.bf16.gmra.mrb[0].mxu0 %v6329
      %v6504 = vpop.f32.mrb[0].mxu0
      %v6505 = vadd.f32 0.0, %v6504
      %v6506 = vpop.f32.mrb[0].mxu0
      %v6507 = vpop.f32.mrb[0].mxu0
      %v6508 = vadd.f32 0.0, %v6507
      %v6509 = vpop.f32.mrb[0].mxu0
      %6510 = vdwg.mxu0
      %v6511 = vadd.f32 %v6092, %v6369
      %v6512 = vadd.f32 %v6095, %v6372
      %v6513 = vadd.f32 %v6100, %v6377
      %v6514 = vadd.f32 %v6103, %v6380
      %v6515 = vadd.f32 %v6108, %v6385
      %v6516 = vadd.f32 %v6111, %v6388
      %v6517 = vadd.f32 %v6116, %v6393
      %v6518 = vadd.f32 %v6119, %v6396
      %v6519 = vadd.f32 %v6124, %v6401
      %v6520 = vadd.f32 %v6127, %v6404
      %v6521 = vadd.f32 %v6132, %v6409
      %v6522 = vadd.f32 %v6135, %v6412
      %v6523 = vadd.f32 %v6140, %v6417
      %v6524 = vadd.f32 %v6143, %v6420
      %v6525 = vadd.f32 %v6148, %v6425
      %v6526 = vadd.f32 %v6151, %v6428
      %v6527 = vadd.f32 %v6156, %v6433
      %v6528 = vadd.f32 %v6159, %v6436
      %v6529 = vadd.f32 %v6164, %v6441
      %v6530 = vadd.f32 %v6167, %v6444
      %v6531 = vadd.f32 %v6172, %v6449
      %v6532 = vadd.f32 %v6175, %v6452
      %v6533 = vadd.f32 %v6180, %v6457
      %v6534 = vadd.f32 %v6183, %v6460
      %v6535 = vadd.f32 %v6188, %v6465
      %v6536 = vadd.f32 %v6191, %v6468
      %v6537 = vadd.f32 %v6196, %v6473
      %v6538 = vadd.f32 %v6199, %v6476
      %v6539 = vadd.f32 %v6204, %v6481
      %v6540 = vadd.f32 %v6207, %v6484
      %v6541 = vadd.f32 %v6212, %v6489
      %v6542 = vadd.f32 %v6215, %v6492
      %v6543 = vadd.f32 %v6220, %v6497
      %v6544 = vadd.f32 %v6223, %v6500
      %v6545 = vadd.f32 %v6228, %v6505
      %v6546 = vadd.f32 %v6231, %v6508
      %v6547 = vld [vmem:[#allocation3 + $0x8] sm:$0xe]
      %v6548 = vld [vmem:[#allocation3 + $0xc] sm:$0xf]
      %v6549 = vld [vmem:[#allocation3 + $0x10] sm:$0xf]
      %v6550 = vld [vmem:[#allocation3 + $0x14] sm:$0xf]
      %v6551 = vld [vmem:[#allocation3 + $0x18] sm:$0xf]
      %v6552 = vld [vmem:[#allocation3 + $0x1c] sm:$0xf]
      %v6553 = vld [vmem:[#allocation3 + $0x20] sm:$0xf]
      %v6554 = vld [vmem:[#allocation3 + $0x24] sm:$0xf]
      %v6555 = vld [vmem:[#allocation3 + $0x28] sm:$0xf]
      %v6556 = vld [vmem:[#allocation3 + $0x2c] sm:$0xf]
      %v6557 = vld [vmem:[#allocation3 + $0x30] sm:$0xf]
      %v6558 = vld [vmem:[#allocation3 + $0x34] sm:$0xf]
      %v6559 = vld [vmem:[#allocation3 + $0x38] sm:$0xf]
      %v6560 = vld [vmem:[#allocation3 + $0x3c] sm:$0xf]
      %v6561 = vld [vmem:[#allocation3 + $0x40] sm:$0xf]
      %v6562 = vld [vmem:[#allocation3 + $0x44] sm:$0xf]
      %v6563 = vld [vmem:[#allocation3 + $0x48] sm:$0xf]
      %v6564 = vld [vmem:[#allocation3 + $0x4c] sm:$0xf]
      %v6565 = vld [vmem:[#allocation3 + $0x50] sm:$0xf]
      %v6566 = vld [vmem:[#allocation3 + $0x54] sm:$0xf]
      %v6567 = vld [vmem:[#allocation3 + $0x58] sm:$0xf]
      %v6568 = vld [vmem:[#allocation3 + $0x5c] sm:$0xf]
      %v6569 = vld [vmem:[#allocation3 + $0x60] sm:$0xf]
      %v6570 = vld [vmem:[#allocation3 + $0x64] sm:$0xf]
      %v6571 = vld [vmem:[#allocation3 + $0x68] sm:$0xf]
      %v6572 = vld [vmem:[#allocation3 + $0x6c] sm:$0xf]
      %v6573 = vld [vmem:[#allocation3 + $0x70] sm:$0xf]
      %v6574 = vld [vmem:[#allocation3 + $0x74] sm:$0xf]
      %v6575 = vld [vmem:[#allocation3 + $0x78] sm:$0xf]
      %v6576 = vld [vmem:[#allocation3 + $0x7c] sm:$0xf]
      %v6577 = vld [vmem:[#allocation3 + $0x80] sm:$0xf]
      %v6578 = vld [vmem:[#allocation3 + $0x84] sm:$0xf]
      %v6579 = vld [vmem:[#allocation3 + $0x88] sm:$0xf]
      %v6580 = vld [vmem:[#allocation3 + $0x8c] sm:$0xf]
      %v6581 = vld [vmem:[#allocation3 + $0x90] sm:$0xf]
      %v6582 = vld [vmem:[#allocation3 + $0x94] sm:$0xf]
      %v6583 = vld [vmem:[#allocation3 + $0x98] sm:$0x1]
      %s6584 = scalar_lea.vmem %s7, 12
      %v6585 = vld [vmem:[%s6584] sm:$0xf]
      %v6623 = vunpack.c.l.b16 %v6547
      %v6624 = vunpack.c.l.b16 %v6548
      %v6625 = vunpack.c.l.b16 %v6549
      %v6626 = vunpack.c.l.b16 %v6550
      %v6627 = vunpack.c.l.b16 %v6551
      %v6628 = vunpack.c.l.b16 %v6552
      %v6629 = vunpack.c.l.b16 %v6553
      %v6630 = vunpack.c.l.b16 %v6554
      %v6631 = vunpack.c.l.b16 %v6555
      %v6632 = vunpack.c.l.b16 %v6556
      %v6633 = vunpack.c.l.b16 %v6557
      %v6634 = vunpack.c.l.b16 %v6558
      %v6635 = vunpack.c.l.b16 %v6559
      %v6636 = vunpack.c.l.b16 %v6560
      %v6637 = vunpack.c.l.b16 %v6561
      %v6638 = vunpack.c.l.b16 %v6562
      %v6639 = vunpack.c.l.b16 %v6563
      %v6640 = vunpack.c.l.b16 %v6564
      %v6641 = vunpack.c.l.b16 %v6565
      %v6642 = vunpack.c.l.b16 %v6566
      %v6643 = vunpack.c.l.b16 %v6567
      %v6644 = vunpack.c.l.b16 %v6568
      %v6645 = vunpack.c.l.b16 %v6569
      %v6646 = vunpack.c.l.b16 %v6570
      %v6647 = vunpack.c.l.b16 %v6571
      %v6648 = vunpack.c.l.b16 %v6572
      %v6649 = vunpack.c.l.b16 %v6573
      %v6650 = vunpack.c.l.b16 %v6574
      %v6651 = vunpack.c.l.b16 %v6575
      %v6652 = vunpack.c.l.b16 %v6576
      %v6653 = vunpack.c.l.b16 %v6577
      %v6654 = vunpack.c.l.b16 %v6578
      %v6655 = vunpack.c.l.b16 %v6579
      %v6656 = vunpack.c.l.b16 %v6580
      %v6657 = vunpack.c.l.b16 %v6581
      %v6658 = vunpack.c.l.b16 %v6582
      %v6659 = vunpack.c.l.b16 %v6583
      %v6660 = vpack.c.b16 %v6624, %v6623
      %v6661 = vpack.c.b16 %v6626, %v6625
      %v6662 = vpack.c.b16 %v6628, %v6627
      %v6663 = vpack.c.b16 %v6630, %v6629
      %v6664 = vpack.c.b16 %v6632, %v6631
      %v6665 = vpack.c.b16 %v6634, %v6633
      %v6666 = vpack.c.b16 %v6636, %v6635
      %v6667 = vpack.c.b16 %v6638, %v6637
      %v6668 = vpack.c.b16 %v6640, %v6639
      %v6669 = vpack.c.b16 %v6642, %v6641
      %v6670 = vpack.c.b16 %v6644, %v6643
      %v6671 = vpack.c.b16 %v6646, %v6645
      %v6672 = vpack.c.b16 %v6648, %v6647
      %v6673 = vpack.c.b16 %v6650, %v6649
      %v6674 = vpack.c.b16 %v6652, %v6651
      %v6675 = vpack.c.b16 %v6654, %v6653
      %v6676 = vpack.c.b16 %v6656, %v6655
      %v6677 = vpack.c.b16 %v6658, %v6657
      %v6678 = vpack.c.b16 %v6659, %v6659
      %v6679 = vrot.slane %v6660, 1
      %v6680 = vrot.slane %v6661, 1
      %v6681 = vsel %vm2090, %v6679, %v6680
      %v6682 = vrot.slane %v6662, 1
      %v6683 = vsel %vm2090, %v6680, %v6682
      %v6684 = vrot.slane %v6663, 1
      %v6685 = vsel %vm2090, %v6682, %v6684
      %v6686 = vrot.slane %v6664, 1
      %v6687 = vsel %vm2090, %v6684, %v6686
      %v6688 = vrot.slane %v6665, 1
      %v6689 = vsel %vm2090, %v6686, %v6688
      %v6690 = vrot.slane %v6666, 1
      %v6691 = vsel %vm2090, %v6688, %v6690
      %v6692 = vrot.slane %v6667, 1
      %v6693 = vsel %vm2090, %v6690, %v6692
      %v6694 = vrot.slane %v6668, 1
      %v6695 = vsel %vm2090, %v6692, %v6694
      %v6696 = vrot.slane %v6669, 1
      %v6697 = vsel %vm2090, %v6694, %v6696
      %v6698 = vrot.slane %v6670, 1
      %v6699 = vsel %vm2090, %v6696, %v6698
      %v6700 = vrot.slane %v6671, 1
      %v6701 = vsel %vm2090, %v6698, %v6700
      %v6702 = vrot.slane %v6672, 1
      %v6703 = vsel %vm2090, %v6700, %v6702
      %v6704 = vrot.slane %v6673, 1
      %v6705 = vsel %vm2090, %v6702, %v6704
      %v6706 = vrot.slane %v6674, 1
      %v6707 = vsel %vm2090, %v6704, %v6706
      %v6708 = vrot.slane %v6675, 1
      %v6709 = vsel %vm2090, %v6706, %v6708
      %v6710 = vrot.slane %v6676, 1
      %v6711 = vsel %vm2090, %v6708, %v6710
      %v6712 = vrot.slane %v6677, 1
      %v6713 = vsel %vm2090, %v6710, %v6712
      %v6714 = vrot.slane %v6678, 1
      %v6715 = vsel %vm2090, %v6712, %v6714
      %v6717 = vsel %vm5782, %v6681, 0
      %v6720 = vsel %vm5782, %v6683, 0
      %v6723 = vsel %vm5782, %v6685, 0
      %v6726 = vsel %vm5782, %v6687, 0
      %v6729 = vsel %vm5782, %v6689, 0
      %v6732 = vsel %vm5782, %v6691, 0
      %v6735 = vsel %vm5782, %v6693, 0
      %v6738 = vsel %vm5782, %v6695, 0
      %v6741 = vsel %vm5782, %v6697, 0
      %v6744 = vsel %vm5782, %v6699, 0
      %v6747 = vsel %vm5782, %v6701, 0
      %v6750 = vsel %vm5782, %v6703, 0
      %v6753 = vsel %vm5782, %v6705, 0
      %v6756 = vsel %vm5782, %v6707, 0
      %v6759 = vsel %vm5782, %v6709, 0
      %v6762 = vsel %vm5782, %v6711, 0
      %v6765 = vsel %vm5782, %v6713, 0
      %v6768 = vsel %vm5782, %v6715, 0
      %v6771 = vsel %vm5837, %v6585, 0
      %6773 = vmatprep.subr.bf16.mxu0 0
      %6774 = vmatpush1.bf16.msra.mxu0 %v6771
      %6775 = vmatprep.subr.bf16.mxu0 0
      %6776 = vmatpush1.bf16.msra.mxu0 0
      %6777 = vmatprep.subr.bf16.mxu0 0
      %6778 = vmatpush1.bf16.msra.mxu0 0
      %6779 = vmatprep.subr.bf16.mxu0 0
      %6780 = vmatpush1.bf16.msra.mxu0 0
      %6781 = vmatprep.subr.bf16.mxu0 0
      %6782 = vmatpush1.bf16.msra.mxu0 0
      %6783 = vmatprep.subr.bf16.mxu0 0
      %6784 = vmatpush1.bf16.msra.mxu0 0
      %6785 = vmatprep.subr.bf16.mxu0 0
      %6786 = vmatpush1.bf16.msra.mxu0 0
      %6787 = vmatprep.subr.bf16.mxu0 0
      %6788 = vmatpush1.bf16.msra.mxu0 0
      %6789 = vmatprep.subr.bf16.mxu0 0
      %6790 = vmatpush1.bf16.msra.mxu0 0
      %6791 = vmatprep.subr.bf16.mxu0 0
      %6792 = vmatpush1.bf16.msra.mxu0 0
      %6793 = vmatprep.subr.bf16.mxu0 0
      %6794 = vmatpush1.bf16.msra.mxu0 0
      %6795 = vmatprep.subr.bf16.mxu0 0
      %6796 = vmatpush1.bf16.msra.mxu0 0
      %6797 = vmatprep.subr.bf16.mxu0 0
      %6798 = vmatpush1.bf16.msra.mxu0 0
      %6799 = vmatprep.subr.bf16.mxu0 0
      %6800 = vmatpush1.bf16.msra.mxu0 0
      %6801 = vmatprep.subr.bf16.mxu0 0
      %6802 = vmatpush1.bf16.msra.mxu0 0
      %6803 = vmatprep.subr.bf16.mxu0 0
      %6804 = vmatpush1.bf16.msra.mxu0 0
      %6805 = vmatprep.mubr.bf16.mxu0 0
      %6806 = vmatmul.mubr.bf16.gmra.mrb[0].mxu0 %v6717
      %v6807 = vpop.f32.mrb[0].mxu0
      %v6808 = vadd.f32 0.0, %v6807
      %v6809 = vpop.f32.mrb[0].mxu0
      %v6810 = vpop.f32.mrb[0].mxu0
      %v6811 = vadd.f32 0.0, %v6810
      %v6812 = vpop.f32.mrb[0].mxu0
      %6813 = vmatprep.mubr.bf16.mxu0 0
      %6814 = vmatmul.mubr.bf16.gmra.mrb[0].mxu0 %v6720
      %v6815 = vpop.f32.mrb[0].mxu0
      %v6816 = vadd.f32 0.0, %v6815
      %v6817 = vpop.f32.mrb[0].mxu0
      %v6818 = vpop.f32.mrb[0].mxu0
      %v6819 = vadd.f32 0.0, %v6818
      %v6820 = vpop.f32.mrb[0].mxu0
      %6821 = vmatprep.mubr.bf16.mxu0 0
      %6822 = vmatmul.mubr.bf16.gmra.mrb[0].mxu0 %v6723
      %v6823 = vpop.f32.mrb[0].mxu0
      %v6824 = vadd.f32 0.0, %v6823
      %v6825 = vpop.f32.mrb[0].mxu0
      %v6826 = vpop.f32.mrb[0].mxu0
      %v6827 = vadd.f32 0.0, %v6826
      %v6828 = vpop.f32.mrb[0].mxu0
      %6829 = vmatprep.mubr.bf16.mxu0 0
      %6830 = vmatmul.mubr.bf16.gmra.mrb[0].mxu0 %v6726
      %v6831 = vpop.f32.mrb[0].mxu0
      %v6832 = vadd.f32 0.0, %v6831
      %v6833 = vpop.f32.mrb[0].mxu0
      %v6834 = vpop.f32.mrb[0].mxu0
      %v6835 = vadd.f32 0.0, %v6834
      %v6836 = vpop.f32.mrb[0].mxu0
      %6837 = vmatprep.mubr.bf16.mxu0 0
      %6838 = vmatmul.mubr.bf16.gmra.mrb[0].mxu0 %v6729
      %v6839 = vpop.f32.mrb[0].mxu0
      %v6840 = vadd.f32 0.0, %v6839
      %v6841 = vpop.f32.mrb[0].mxu0
      %v6842 = vpop.f32.mrb[0].mxu0
      %v6843 = vadd.f32 0.0, %v6842
      %v6844 = vpop.f32.mrb[0].mxu0
      %6845 = vmatprep.mubr.bf16.mxu0 0
      %6846 = vmatmul.mubr.bf16.gmra.mrb[0].mxu0 %v6732
      %v6847 = vpop.f32.mrb[0].mxu0
      %v6848 = vadd.f32 0.0, %v6847
      %v6849 = vpop.f32.mrb[0].mxu0
      %v6850 = vpop.f32.mrb[0].mxu0
      %v6851 = vadd.f32 0.0, %v6850
      %v6852 = vpop.f32.mrb[0].mxu0
      %6853 = vmatprep.mubr.bf16.mxu0 0
      %6854 = vmatmul.mubr.bf16.gmra.mrb[0].mxu0 %v6735
      %v6855 = vpop.f32.mrb[0].mxu0
      %v6856 = vadd.f32 0.0, %v6855
      %v6857 = vpop.f32.mrb[0].mxu0
      %v6858 = vpop.f32.mrb[0].mxu0
      %v6859 = vadd.f32 0.0, %v6858
      %v6860 = vpop.f32.mrb[0].mxu0
      %6861 = vmatprep.mubr.bf16.mxu0 0
      %6862 = vmatmul.mubr.bf16.gmra.mrb[0].mxu0 %v6738
      %v6863 = vpop.f32.mrb[0].mxu0
      %v6864 = vadd.f32 0.0, %v6863
      %v6865 = vpop.f32.mrb[0].mxu0
      %v6866 = vpop.f32.mrb[0].mxu0
      %v6867 = vadd.f32 0.0, %v6866
      %v6868 = vpop.f32.mrb[0].mxu0
      %6869 = vmatprep.mubr.bf16.mxu0 0
      %6870 = vmatmul.mubr.bf16.gmra.mrb[0].mxu0 %v6741
      %v6871 = vpop.f32.mrb[0].mxu0
      %v6872 = vadd.f32 0.0, %v6871
      %v6873 = vpop.f32.mrb[0].mxu0
      %v6874 = vpop.f32.mrb[0].mxu0
      %v6875 = vadd.f32 0.0, %v6874
      %v6876 = vpop.f32.mrb[0].mxu0
      %6877 = vmatprep.mubr.bf16.mxu0 0
      %6878 = vmatmul.mubr.bf16.gmra.mrb[0].mxu0 %v6744
      %v6879 = vpop.f32.mrb[0].mxu0
      %v6880 = vadd.f32 0.0, %v6879
      %v6881 = vpop.f32.mrb[0].mxu0
      %v6882 = vpop.f32.mrb[0].mxu0
      %v6883 = vadd.f32 0.0, %v6882
      %v6884 = vpop.f32.mrb[0].mxu0
      %6885 = vmatprep.mubr.bf16.mxu0 0
      %6886 = vmatmul.mubr.bf16.gmra.mrb[0].mxu0 %v6747
      %v6887 = vpop.f32.mrb[0].mxu0
      %v6888 = vadd.f32 0.0, %v6887
      %v6889 = vpop.f32.mrb[0].mxu0
      %v6890 = vpop.f32.mrb[0].mxu0
      %v6891 = vadd.f32 0.0, %v6890
      %v6892 = vpop.f32.mrb[0].mxu0
      %6893 = vmatprep.mubr.bf16.mxu0 0
      %6894 = vmatmul.mubr.bf16.gmra.mrb[0].mxu0 %v6750
      %v6895 = vpop.f32.mrb[0].mxu0
      %v6896 = vadd.f32 0.0, %v6895
      %v6897 = vpop.f32.mrb[0].mxu0
      %v6898 = vpop.f32.mrb[0].mxu0
      %v6899 = vadd.f32 0.0, %v6898
      %v6900 = vpop.f32.mrb[0].mxu0
      %6901 = vmatprep.mubr.bf16.mxu0 0
      %6902 = vmatmul.mubr.bf16.gmra.mrb[0].mxu0 %v6753
      %v6903 = vpop.f32.mrb[0].mxu0
      %v6904 = vadd.f32 0.0, %v6903
      %v6905 = vpop.f32.mrb[0].mxu0
      %v6906 = vpop.f32.mrb[0].mxu0
      %v6907 = vadd.f32 0.0, %v6906
      %v6908 = vpop.f32.mrb[0].mxu0
      %6909 = vmatprep.mubr.bf16.mxu0 0
      %6910 = vmatmul.mubr.bf16.gmra.mrb[0].mxu0 %v6756
      %v6911 = vpop.f32.mrb[0].mxu0
      %v6912 = vadd.f32 0.0, %v6911
      %v6913 = vpop.f32.mrb[0].mxu0
      %v6914 = vpop.f32.mrb[0].mxu0
      %v6915 = vadd.f32 0.0, %v6914
      %v6916 = vpop.f32.mrb[0].mxu0
      %6917 = vmatprep.mubr.bf16.mxu0 0
      %6918 = vmatmul.mubr.bf16.gmra.mrb[0].mxu0 %v6759
      %v6919 = vpop.f32.mrb[0].mxu0
      %v6920 = vadd.f32 0.0, %v6919
      %v6921 = vpop.f32.mrb[0].mxu0
      %v6922 = vpop.f32.mrb[0].mxu0
      %v6923 = vadd.f32 0.0, %v6922
      %v6924 = vpop.f32.mrb[0].mxu0
      %6925 = vmatprep.mubr.bf16.mxu0 0
      %6926 = vmatmul.mubr.bf16.gmra.mrb[0].mxu0 %v6762
      %v6927 = vpop.f32.mrb[0].mxu0
      %v6928 = vadd.f32 0.0, %v6927
      %v6929 = vpop.f32.mrb[0].mxu0
      %v6930 = vpop.f32.mrb[0].mxu0
      %v6931 = vadd.f32 0.0, %v6930
      %v6932 = vpop.f32.mrb[0].mxu0
      %6933 = vmatprep.mubr.bf16.mxu0 0
      %6934 = vmatmul.mubr.bf16.gmra.mrb[0].mxu0 %v6765
      %v6935 = vpop.f32.mrb[0].mxu0
      %v6936 = vadd.f32 0.0, %v6935
      %v6937 = vpop.f32.mrb[0].mxu0
      %v6938 = vpop.f32.mrb[0].mxu0
      %v6939 = vadd.f32 0.0, %v6938
      %v6940 = vpop.f32.mrb[0].mxu0
      %6941 = vmatprep.mubr.bf16.mxu0 0
      %6942 = vmatmul.mubr.bf16.gmra.mrb[0].mxu0 %v6768
      %v6943 = vpop.f32.mrb[0].mxu0
      %v6944 = vadd.f32 0.0, %v6943
      %v6945 = vpop.f32.mrb[0].mxu0
      %v6946 = vpop.f32.mrb[0].mxu0
      %v6947 = vadd.f32 0.0, %v6946
      %v6948 = vpop.f32.mrb[0].mxu0
      %6949 = vdwg.mxu0
      %v6950 = vadd.f32 %v6511, %v6808
      %v6951 = vadd.f32 %v6512, %v6811
      %v6952 = vadd.f32 %v6513, %v6816
      %v6953 = vadd.f32 %v6514, %v6819
      %v6954 = vadd.f32 %v6515, %v6824
      %v6955 = vadd.f32 %v6516, %v6827
      %v6956 = vadd.f32 %v6517, %v6832
      %v6957 = vadd.f32 %v6518, %v6835
      %v6958 = vadd.f32 %v6519, %v6840
      %v6959 = vadd.f32 %v6520, %v6843
      %v6960 = vadd.f32 %v6521, %v6848
      %v6961 = vadd.f32 %v6522, %v6851
      %v6962 = vadd.f32 %v6523, %v6856
      %v6963 = vadd.f32 %v6524, %v6859
      %v6964 = vadd.f32 %v6525, %v6864
      %v6965 = vadd.f32 %v6526, %v6867
      %v6966 = vadd.f32 %v6527, %v6872
      %v6967 = vadd.f32 %v6528, %v6875
      %v6968 = vadd.f32 %v6529, %v6880
      %v6969 = vadd.f32 %v6530, %v6883
      %v6970 = vadd.f32 %v6531, %v6888
      %v6971 = vadd.f32 %v6532, %v6891
      %v6972 = vadd.f32 %v6533, %v6896
      %v6973 = vadd.f32 %v6534, %v6899
      %v6974 = vadd.f32 %v6535, %v6904
      %v6975 = vadd.f32 %v6536, %v6907
      %v6976 = vadd.f32 %v6537, %v6912
      %v6977 = vadd.f32 %v6538, %v6915
      %v6978 = vadd.f32 %v6539, %v6920
      %v6979 = vadd.f32 %v6540, %v6923
      %v6980 = vadd.f32 %v6541, %v6928
      %v6981 = vadd.f32 %v6542, %v6931
      %v6982 = vadd.f32 %v6543, %v6936
      %v6983 = vadd.f32 %v6544, %v6939
      %v6984 = vadd.f32 %v6545, %v6944
      %v6985 = vadd.f32 %v6546, %v6947
      %v6986 = vld [vmem:[#allocation3 + $0x98] sm:$0x3]
      %s6987 = scalar_lea.vmem %s7, 16
      %v6988 = vld [vmem:[%s6987] sm:$0xf]
      %v6990 = vunpack.c.l.b16 %v6986
      %v6991 = vpack.c.b16 %v6990, %v6990
      %v6993 = vshrl.u32 %v6660, 16
      %v6995 = vrot.slane %v6993, 1
      %v6996 = vshll.u32 %v6660, 16
      %v6998 = vrot.slane %v6996, 2
      %v6999 = vor.u32 %v6995, %v6998
      %v7001 = vshrl.u32 %v6661, 16
      %v7003 = vrot.slane %v7001, 1
      %v7004 = vshll.u32 %v6661, 16
      %v7006 = vrot.slane %v7004, 2
      %v7007 = vor.u32 %v7003, %v7006
      %v7008 = vsel %vm2843, %v6999, %v7007
      %v7010 = vshrl.u32 %v6662, 16
      %v7012 = vrot.slane %v7010, 1
      %v7013 = vshll.u32 %v6662, 16
      %v7015 = vrot.slane %v7013, 2
      %v7016 = vor.u32 %v7012, %v7015
      %v7017 = vsel %vm2843, %v7007, %v7016
      %v7019 = vshrl.u32 %v6663, 16
      %v7021 = vrot.slane %v7019, 1
      %v7022 = vshll.u32 %v6663, 16
      %v7024 = vrot.slane %v7022, 2
      %v7025 = vor.u32 %v7021, %v7024
      %v7026 = vsel %vm2843, %v7016, %v7025
      %v7028 = vshrl.u32 %v6664, 16
      %v7030 = vrot.slane %v7028, 1
      %v7031 = vshll.u32 %v6664, 16
      %v7033 = vrot.slane %v7031, 2
      %v7034 = vor.u32 %v7030, %v7033
      %v7035 = vsel %vm2843, %v7025, %v7034
      %v7037 = vshrl.u32 %v6665, 16
      %v7039 = vrot.slane %v7037, 1
      %v7040 = vshll.u32 %v6665, 16
      %v7042 = vrot.slane %v7040, 2
      %v7043 = vor.u32 %v7039, %v7042
      %v7044 = vsel %vm2843, %v7034, %v7043
      %v7046 = vshrl.u32 %v6666, 16
      %v7048 = vrot.slane %v7046, 1
      %v7049 = vshll.u32 %v6666, 16
      %v7051 = vrot.slane %v7049, 2
      %v7052 = vor.u32 %v7048, %v7051
      %v7053 = vsel %vm2843, %v7043, %v7052
      %v7055 = vshrl.u32 %v6667, 16
      %v7057 = vrot.slane %v7055, 1
      %v7058 = vshll.u32 %v6667, 16
      %v7060 = vrot.slane %v7058, 2
      %v7061 = vor.u32 %v7057, %v7060
      %v7062 = vsel %vm2843, %v7052, %v7061
      %v7064 = vshrl.u32 %v6668, 16
      %v7066 = vrot.slane %v7064, 1
      %v7067 = vshll.u32 %v6668, 16
      %v7069 = vrot.slane %v7067, 2
      %v7070 = vor.u32 %v7066, %v7069
      %v7071 = vsel %vm2843, %v7061, %v7070
      %v7073 = vshrl.u32 %v6669, 16
      %v7075 = vrot.slane %v7073, 1
      %v7076 = vshll.u32 %v6669, 16
      %v7078 = vrot.slane %v7076, 2
      %v7079 = vor.u32 %v7075, %v7078
      %v7080 = vsel %vm2843, %v7070, %v7079
      %v7082 = vshrl.u32 %v6670, 16
      %v7084 = vrot.slane %v7082, 1
      %v7085 = vshll.u32 %v6670, 16
      %v7087 = vrot.slane %v7085, 2
      %v7088 = vor.u32 %v7084, %v7087
      %v7089 = vsel %vm2843, %v7079, %v7088
      %v7091 = vshrl.u32 %v6671, 16
      %v7093 = vrot.slane %v7091, 1
      %v7094 = vshll.u32 %v6671, 16
      %v7096 = vrot.slane %v7094, 2
      %v7097 = vor.u32 %v7093, %v7096
      %v7098 = vsel %vm2843, %v7088, %v7097
      %v7100 = vshrl.u32 %v6672, 16
      %v7102 = vrot.slane %v7100, 1
      %v7103 = vshll.u32 %v6672, 16
      %v7105 = vrot.slane %v7103, 2
      %v7106 = vor.u32 %v7102, %v7105
      %v7107 = vsel %vm2843, %v7097, %v7106
      %v7109 = vshrl.u32 %v6673, 16
      %v7111 = vrot.slane %v7109, 1
      %v7112 = vshll.u32 %v6673, 16
      %v7114 = vrot.slane %v7112, 2
      %v7115 = vor.u32 %v7111, %v7114
      %v7116 = vsel %vm2843, %v7106, %v7115
      %v7118 = vshrl.u32 %v6674, 16
      %v7120 = vrot.slane %v7118, 1
      %v7121 = vshll.u32 %v6674, 16
      %v7123 = vrot.slane %v7121, 2
      %v7124 = vor.u32 %v7120, %v7123
      %v7125 = vsel %vm2843, %v7115, %v7124
      %v7127 = vshrl.u32 %v6675, 16
      %v7129 = vrot.slane %v7127, 1
      %v7130 = vshll.u32 %v6675, 16
      %v7132 = vrot.slane %v7130, 2
      %v7133 = vor.u32 %v7129, %v7132
      %v7134 = vsel %vm2843, %v7124, %v7133
      %v7136 = vshrl.u32 %v6676, 16
      %v7138 = vrot.slane %v7136, 1
      %v7139 = vshll.u32 %v6676, 16
      %v7141 = vrot.slane %v7139, 2
      %v7142 = vor.u32 %v7138, %v7141
      %v7143 = vsel %vm2843, %v7133, %v7142
      %v7145 = vshrl.u32 %v6677, 16
      %v7147 = vrot.slane %v7145, 1
      %v7148 = vshll.u32 %v6677, 16
      %v7150 = vrot.slane %v7148, 2
      %v7151 = vor.u32 %v7147, %v7150
      %v7152 = vsel %vm2843, %v7142, %v7151
      %v7154 = vshrl.u32 %v6991, 16
      %v7156 = vrot.slane %v7154, 1
      %v7157 = vshll.u32 %v6991, 16
      %v7159 = vrot.slane %v7157, 2
      %v7160 = vor.u32 %v7156, %v7159
      %v7161 = vsel %vm2843, %v7151, %v7160
      %v7163 = vsel %vm5782, %v7008, 0
      %v7166 = vsel %vm5782, %v7017, 0
      %v7169 = vsel %vm5782, %v7026, 0
      %v7172 = vsel %vm5782, %v7035, 0
      %v7175 = vsel %vm5782, %v7044, 0
      %v7178 = vsel %vm5782, %v7053, 0
      %v7181 = vsel %vm5782, %v7062, 0
      %v7184 = vsel %vm5782, %v7071, 0
      %v7187 = vsel %vm5782, %v7080, 0
      %v7190 = vsel %vm5782, %v7089, 0
      %v7193 = vsel %vm5782, %v7098, 0
      %v7196 = vsel %vm5782, %v7107, 0
      %v7199 = vsel %vm5782, %v7116, 0
      %v7202 = vsel %vm5782, %v7125, 0
      %v7205 = vsel %vm5782, %v7134, 0
      %v7208 = vsel %vm5782, %v7143, 0
      %v7211 = vsel %vm5782, %v7152, 0
      %v7214 = vsel %vm5782, %v7161, 0
      %v7217 = vsel %vm5837, %v6988, 0
      %7219 = vmatprep.subr.bf16.mxu0 0
      %7220 = vmatpush1.bf16.msra.mxu0 %v7217
      %7221 = vmatprep.subr.bf16.mxu0 0
      %7222 = vmatpush1.bf16.msra.mxu0 0
      %7223 = vmatprep.subr.bf16.mxu0 0
      %7224 = vmatpush1.bf16.msra.mxu0 0
      %7225 = vmatprep.subr.bf16.mxu0 0
      %7226 = vmatpush1.bf16.msra.mxu0 0
      %7227 = vmatprep.subr.bf16.mxu0 0
      %7228 = vmatpush1.bf16.msra.mxu0 0
      %7229 = vmatprep.subr.bf16.mxu0 0
      %7230 = vmatpush1.bf16.msra.mxu0 0
      %7231 = vmatprep.subr.bf16.mxu0 0
      %7232 = vmatpush1.bf16.msra.mxu0 0
      %7233 = vmatprep.subr.bf16.mxu0 0
      %7234 = vmatpush1.bf16.msra.mxu0 0
      %7235 = vmatprep.subr.bf16.mxu0 0
      %7236 = vmatpush1.bf16.msra.mxu0 0
      %7237 = vmatprep.subr.bf16.mxu0 0
      %7238 = vmatpush1.bf16.msra.mxu0 0
      %7239 = vmatprep.subr.bf16.mxu0 0
      %7240 = vmatpush1.bf16.msra.mxu0 0
      %7241 = vmatprep.subr.bf16.mxu0 0
      %7242 = vmatpush1.bf16.msra.mxu0 0
      %7243 = vmatprep.subr.bf16.mxu0 0
      %7244 = vmatpush1.bf16.msra.mxu0 0
      %7245 = vmatprep.subr.bf16.mxu0 0
      %7246 = vmatpush1.bf16.msra.mxu0 0
      %7247 = vmatprep.subr.bf16.mxu0 0
      %7248 = vmatpush1.bf16.msra.mxu0 0
      %7249 = vmatprep.subr.bf16.mxu0 0
      %7250 = vmatpush1.bf16.msra.mxu0 0
      %7251 = vmatprep.mubr.bf16.mxu0 0
      %7252 = vmatmul.mubr.bf16.gmra.mrb[0].mxu0 %v7163
      %v7253 = vpop.f32.mrb[0].mxu0
      %v7254 = vadd.f32 0.0, %v7253
      %v7255 = vpop.f32.mrb[0].mxu0
      %v7256 = vpop.f32.mrb[0].mxu0
      %v7257 = vadd.f32 0.0, %v7256
      %v7258 = vpop.f32.mrb[0].mxu0
      %7259 = vmatprep.mubr.bf16.mxu0 0
      %7260 = vmatmul.mubr.bf16.gmra.mrb[0].mxu0 %v7166
      %v7261 = vpop.f32.mrb[0].mxu0
      %v7262 = vadd.f32 0.0, %v7261
      %v7263 = vpop.f32.mrb[0].mxu0
      %v7264 = vpop.f32.mrb[0].mxu0
      %v7265 = vadd.f32 0.0, %v7264
      %v7266 = vpop.f32.mrb[0].mxu0
      %7267 = vmatprep.mubr.bf16.mxu0 0
      %7268 = vmatmul.mubr.bf16.gmra.mrb[0].mxu0 %v7169
      %v7269 = vpop.f32.mrb[0].mxu0
      %v7270 = vadd.f32 0.0, %v7269
      %v7271 = vpop.f32.mrb[0].mxu0
      %v7272 = vpop.f32.mrb[0].mxu0
      %v7273 = vadd.f32 0.0, %v7272
      %v7274 = vpop.f32.mrb[0].mxu0
      %7275 = vmatprep.mubr.bf16.mxu0 0
      %7276 = vmatmul.mubr.bf16.gmra.mrb[0].mxu0 %v7172
      %v7277 = vpop.f32.mrb[0].mxu0
      %v7278 = vadd.f32 0.0, %v7277
      %v7279 = vpop.f32.mrb[0].mxu0
      %v7280 = vpop.f32.mrb[0].mxu0
      %v7281 = vadd.f32 0.0, %v7280
      %v7282 = vpop.f32.mrb[0].mxu0
      %7283 = vmatprep.mubr.bf16.mxu0 0
      %7284 = vmatmul.mubr.bf16.gmra.mrb[0].mxu0 %v7175
      %v7285 = vpop.f32.mrb[0].mxu0
      %v7286 = vadd.f32 0.0, %v7285
      %v7287 = vpop.f32.mrb[0].mxu0
      %v7288 = vpop.f32.mrb[0].mxu0
      %v7289 = vadd.f32 0.0, %v7288
      %v7290 = vpop.f32.mrb[0].mxu0
      %7291 = vmatprep.mubr.bf16.mxu0 0
      %7292 = vmatmul.mubr.bf16.gmra.mrb[0].mxu0 %v7178
      %v7293 = vpop.f32.mrb[0].mxu0
      %v7294 = vadd.f32 0.0, %v7293
      %v7295 = vpop.f32.mrb[0].mxu0
      %v7296 = vpop.f32.mrb[0].mxu0
      %v7297 = vadd.f32 0.0, %v7296
      %v7298 = vpop.f32.mrb[0].mxu0
      %7299 = vmatprep.mubr.bf16.mxu0 0
      %7300 = vmatmul.mubr.bf16.gmra.mrb[0].mxu0 %v7181
      %v7301 = vpop.f32.mrb[0].mxu0
      %v7302 = vadd.f32 0.0, %v7301
      %v7303 = vpop.f32.mrb[0].mxu0
      %v7304 = vpop.f32.mrb[0].mxu0
      %v7305 = vadd.f32 0.0, %v7304
      %v7306 = vpop.f32.mrb[0].mxu0
      %7307 = vmatprep.mubr.bf16.mxu0 0
      %7308 = vmatmul.mubr.bf16.gmra.mrb[0].mxu0 %v7184
      %v7309 = vpop.f32.mrb[0].mxu0
      %v7310 = vadd.f32 0.0, %v7309
      %v7311 = vpop.f32.mrb[0].mxu0
      %v7312 = vpop.f32.mrb[0].mxu0
      %v7313 = vadd.f32 0.0, %v7312
      %v7314 = vpop.f32.mrb[0].mxu0
      %7315 = vmatprep.mubr.bf16.mxu0 0
      %7316 = vmatmul.mubr.bf16.gmra.mrb[0].mxu0 %v7187
      %v7317 = vpop.f32.mrb[0].mxu0
      %v7318 = vadd.f32 0.0, %v7317
      %v7319 = vpop.f32.mrb[0].mxu0
      %v7320 = vpop.f32.mrb[0].mxu0
      %v7321 = vadd.f32 0.0, %v7320
      %v7322 = vpop.f32.mrb[0].mxu0
      %7323 = vmatprep.mubr.bf16.mxu0 0
      %7324 = vmatmul.mubr.bf16.gmra.mrb[0].mxu0 %v7190
      %v7325 = vpop.f32.mrb[0].mxu0
      %v7326 = vadd.f32 0.0, %v7325
      %v7327 = vpop.f32.mrb[0].mxu0
      %v7328 = vpop.f32.mrb[0].mxu0
      %v7329 = vadd.f32 0.0, %v7328
      %v7330 = vpop.f32.mrb[0].mxu0
      %7331 = vmatprep.mubr.bf16.mxu0 0
      %7332 = vmatmul.mubr.bf16.gmra.mrb[0].mxu0 %v7193
      %v7333 = vpop.f32.mrb[0].mxu0
      %v7334 = vadd.f32 0.0, %v7333
      %v7335 = vpop.f32.mrb[0].mxu0
      %v7336 = vpop.f32.mrb[0].mxu0
      %v7337 = vadd.f32 0.0, %v7336
      %v7338 = vpop.f32.mrb[0].mxu0
      %7339 = vmatprep.mubr.bf16.mxu0 0
      %7340 = vmatmul.mubr.bf16.gmra.mrb[0].mxu0 %v7196
      %v7341 = vpop.f32.mrb[0].mxu0
      %v7342 = vadd.f32 0.0, %v7341
      %v7343 = vpop.f32.mrb[0].mxu0
      %v7344 = vpop.f32.mrb[0].mxu0
      %v7345 = vadd.f32 0.0, %v7344
      %v7346 = vpop.f32.mrb[0].mxu0
      %7347 = vmatprep.mubr.bf16.mxu0 0
      %7348 = vmatmul.mubr.bf16.gmra.mrb[0].mxu0 %v7199
      %v7349 = vpop.f32.mrb[0].mxu0
      %v7350 = vadd.f32 0.0, %v7349
      %v7351 = vpop.f32.mrb[0].mxu0
      %v7352 = vpop.f32.mrb[0].mxu0
      %v7353 = vadd.f32 0.0, %v7352
      %v7354 = vpop.f32.mrb[0].mxu0
      %7355 = vmatprep.mubr.bf16.mxu0 0
      %7356 = vmatmul.mubr.bf16.gmra.mrb[0].mxu0 %v7202
      %v7357 = vpop.f32.mrb[0].mxu0
      %v7358 = vadd.f32 0.0, %v7357
      %v7359 = vpop.f32.mrb[0].mxu0
      %v7360 = vpop.f32.mrb[0].mxu0
      %v7361 = vadd.f32 0.0, %v7360
      %v7362 = vpop.f32.mrb[0].mxu0
      %7363 = vmatprep.mubr.bf16.mxu0 0
      %7364 = vmatmul.mubr.bf16.gmra.mrb[0].mxu0 %v7205
      %v7365 = vpop.f32.mrb[0].mxu0
      %v7366 = vadd.f32 0.0, %v7365
      %v7367 = vpop.f32.mrb[0].mxu0
      %v7368 = vpop.f32.mrb[0].mxu0
      %v7369 = vadd.f32 0.0, %v7368
      %v7370 = vpop.f32.mrb[0].mxu0
      %7371 = vmatprep.mubr.bf16.mxu0 0
      %7372 = vmatmul.mubr.bf16.gmra.mrb[0].mxu0 %v7208
      %v7373 = vpop.f32.mrb[0].mxu0
      %v7374 = vadd.f32 0.0, %v7373
      %v7375 = vpop.f32.mrb[0].mxu0
      %v7376 = vpop.f32.mrb[0].mxu0
      %v7377 = vadd.f32 0.0, %v7376
      %v7378 = vpop.f32.mrb[0].mxu0
      %7379 = vmatprep.mubr.bf16.mxu0 0
      %7380 = vmatmul.mubr.bf16.gmra.mrb[0].mxu0 %v7211
      %v7381 = vpop.f32.mrb[0].mxu0
      %v7382 = vadd.f32 0.0, %v7381
      %v7383 = vpop.f32.mrb[0].mxu0
      %v7384 = vpop.f32.mrb[0].mxu0
      %v7385 = vadd.f32 0.0, %v7384
      %v7386 = vpop.f32.mrb[0].mxu0
      %7387 = vmatprep.mubr.bf16.mxu0 0
      %7388 = vmatmul.mubr.bf16.gmra.mrb[0].mxu0 %v7214
      %v7389 = vpop.f32.mrb[0].mxu0
      %v7390 = vadd.f32 0.0, %v7389
      %v7391 = vpop.f32.mrb[0].mxu0
      %v7392 = vpop.f32.mrb[0].mxu0
      %v7393 = vadd.f32 0.0, %v7392
      %v7394 = vpop.f32.mrb[0].mxu0
      %7395 = vdwg.mxu0
      %v7396 = vadd.f32 %v6950, %v7254
      %v7397 = vadd.f32 %v6951, %v7257
      %v7398 = vadd.f32 %v6952, %v7262
      %v7399 = vadd.f32 %v6953, %v7265
      %v7400 = vadd.f32 %v6954, %v7270
      %v7401 = vadd.f32 %v6955, %v7273
      %v7402 = vadd.f32 %v6956, %v7278
      %v7403 = vadd.f32 %v6957, %v7281
      %v7404 = vadd.f32 %v6958, %v7286
      %v7405 = vadd.f32 %v6959, %v7289
      %v7406 = vadd.f32 %v6960, %v7294
      %v7407 = vadd.f32 %v6961, %v7297
      %v7408 = vadd.f32 %v6962, %v7302
      %v7409 = vadd.f32 %v6963, %v7305
      %v7410 = vadd.f32 %v6964, %v7310
      %v7411 = vadd.f32 %v6965, %v7313
      %v7412 = vadd.f32 %v6966, %v7318
      %v7413 = vadd.f32 %v6967, %v7321
      %v7414 = vadd.f32 %v6968, %v7326
      %v7415 = vadd.f32 %v6969, %v7329
      %v7416 = vadd.f32 %v6970, %v7334
      %v7417 = vadd.f32 %v6971, %v7337
      %v7418 = vadd.f32 %v6972, %v7342
      %v7419 = vadd.f32 %v6973, %v7345
      %v7420 = vadd.f32 %v6974, %v7350
      %v7421 = vadd.f32 %v6975, %v7353
      %v7422 = vadd.f32 %v6976, %v7358
      %v7423 = vadd.f32 %v6977, %v7361
      %v7424 = vadd.f32 %v6978, %v7366
      %v7425 = vadd.f32 %v6979, %v7369
      %v7426 = vadd.f32 %v6980, %v7374
      %v7427 = vadd.f32 %v6981, %v7377
      %v7428 = vadd.f32 %v6982, %v7382
      %v7429 = vadd.f32 %v6983, %v7385
      %v7430 = vadd.f32 %v6984, %v7390
      %v7431 = vadd.f32 %v6985, %v7393
      %v7432 = vld [vmem:[#allocation3 + $0x8] sm:$0xc]
      %s7433 = scalar_lea.vmem %s7, 20
      %v7434 = vld [vmem:[%s7433] sm:$0xf]
      %v7436 = vunpack.c.l.b16 %v7432
      %v7437 = vpack.c.b16 %v6624, %v7436
      %v7438 = vrot.slane %v7437, 2
      %v7439 = vrot.slane %v6661, 2
      %v7440 = vsel %vm3290, %v7438, %v7439
      %v7441 = vrot.slane %v6662, 2
      %v7442 = vsel %vm3290, %v7439, %v7441
      %v7443 = vrot.slane %v6663, 2
      %v7444 = vsel %vm3290, %v7441, %v7443
      %v7445 = vrot.slane %v6664, 2
      %v7446 = vsel %vm3290, %v7443, %v7445
      %v7447 = vrot.slane %v6665, 2
      %v7448 = vsel %vm3290, %v7445, %v7447
      %v7449 = vrot.slane %v6666, 2
      %v7450 = vsel %vm3290, %v7447, %v7449
      %v7451 = vrot.slane %v6667, 2
      %v7452 = vsel %vm3290, %v7449, %v7451
      %v7453 = vrot.slane %v6668, 2
      %v7454 = vsel %vm3290, %v7451, %v7453
      %v7455 = vrot.slane %v6669, 2
      %v7456 = vsel %vm3290, %v7453, %v7455
      %v7457 = vrot.slane %v6670, 2
      %v7458 = vsel %vm3290, %v7455, %v7457
      %v7459 = vrot.slane %v6671, 2
      %v7460 = vsel %vm3290, %v7457, %v7459
      %v7461 = vrot.slane %v6672, 2
      %v7462 = vsel %vm3290, %v7459, %v7461
      %v7463 = vrot.slane %v6673, 2
      %v7464 = vsel %vm3290, %v7461, %v7463
      %v7465 = vrot.slane %v6674, 2
      %v7466 = vsel %vm3290, %v7463, %v7465
      %v7467 = vrot.slane %v6675, 2
      %v7468 = vsel %vm3290, %v7465, %v7467
      %v7469 = vrot.slane %v6676, 2
      %v7470 = vsel %vm3290, %v7467, %v7469
      %v7471 = vrot.slane %v6677, 2
      %v7472 = vsel %vm3290, %v7469, %v7471
      %v7473 = vrot.slane %v6991, 2
      %v7474 = vsel %vm3290, %v7471, %v7473
      %v7476 = vsel %vm5782, %v7440, 0
      %v7479 = vsel %vm5782, %v7442, 0
      %v7482 = vsel %vm5782, %v7444, 0
      %v7485 = vsel %vm5782, %v7446, 0
      %v7488 = vsel %vm5782, %v7448, 0
      %v7491 = vsel %vm5782, %v7450, 0
      %v7494 = vsel %vm5782, %v7452, 0
      %v7497 = vsel %vm5782, %v7454, 0
      %v7500 = vsel %vm5782, %v7456, 0
      %v7503 = vsel %vm5782, %v7458, 0
      %v7506 = vsel %vm5782, %v7460, 0
      %v7509 = vsel %vm5782, %v7462, 0
      %v7512 = vsel %vm5782, %v7464, 0
      %v7515 = vsel %vm5782, %v7466, 0
      %v7518 = vsel %vm5782, %v7468, 0
      %v7521 = vsel %vm5782, %v7470, 0
      %v7524 = vsel %vm5782, %v7472, 0
      %v7527 = vsel %vm5782, %v7474, 0
      %v7530 = vsel %vm5837, %v7434, 0
      %7532 = vmatprep.subr.bf16.mxu0 0
      %7533 = vmatpush1.bf16.msra.mxu0 %v7530
      %7534 = vmatprep.subr.bf16.mxu0 0
      %7535 = vmatpush1.bf16.msra.mxu0 0
      %7536 = vmatprep.subr.bf16.mxu0 0
      %7537 = vmatpush1.bf16.msra.mxu0 0
      %7538 = vmatprep.subr.bf16.mxu0 0
      %7539 = vmatpush1.bf16.msra.mxu0 0
      %7540 = vmatprep.subr.bf16.mxu0 0
      %7541 = vmatpush1.bf16.msra.mxu0 0
      %7542 = vmatprep.subr.bf16.mxu0 0
      %7543 = vmatpush1.bf16.msra.mxu0 0
      %7544 = vmatprep.subr.bf16.mxu0 0
      %7545 = vmatpush1.bf16.msra.mxu0 0
      %7546 = vmatprep.subr.bf16.mxu0 0
      %7547 = vmatpush1.bf16.msra.mxu0 0
      %7548 = vmatprep.subr.bf16.mxu0 0
      %7549 = vmatpush1.bf16.msra.mxu0 0
      %7550 = vmatprep.subr.bf16.mxu0 0
      %7551 = vmatpush1.bf16.msra.mxu0 0
      %7552 = vmatprep.subr.bf16.mxu0 0
      %7553 = vmatpush1.bf16.msra.mxu0 0
      %7554 = vmatprep.subr.bf16.mxu0 0
      %7555 = vmatpush1.bf16.msra.mxu0 0
      %7556 = vmatprep.subr.bf16.mxu0 0
      %7557 = vmatpush1.bf16.msra.mxu0 0
      %7558 = vmatprep.subr.bf16.mxu0 0
      %7559 = vmatpush1.bf16.msra.mxu0 0
      %7560 = vmatprep.subr.bf16.mxu0 0
      %7561 = vmatpush1.bf16.msra.mxu0 0
      %7562 = vmatprep.subr.bf16.mxu0 0
      %7563 = vmatpush1.bf16.msra.mxu0 0
      %7564 = vmatprep.mubr.bf16.mxu0 0
      %7565 = vmatmul.mubr.bf16.gmra.mrb[0].mxu0 %v7476
      %v7566 = vpop.f32.mrb[0].mxu0
      %v7567 = vadd.f32 0.0, %v7566
      %v7568 = vpop.f32.mrb[0].mxu0
      %v7569 = vpop.f32.mrb[0].mxu0
      %v7570 = vadd.f32 0.0, %v7569
      %v7571 = vpop.f32.mrb[0].mxu0
      %7572 = vmatprep.mubr.bf16.mxu0 0
      %7573 = vmatmul.mubr.bf16.gmra.mrb[0].mxu0 %v7479
      %v7574 = vpop.f32.mrb[0].mxu0
      %v7575 = vadd.f32 0.0, %v7574
      %v7576 = vpop.f32.mrb[0].mxu0
      %v7577 = vpop.f32.mrb[0].mxu0
      %v7578 = vadd.f32 0.0, %v7577
      %v7579 = vpop.f32.mrb[0].mxu0
      %7580 = vmatprep.mubr.bf16.mxu0 0
      %7581 = vmatmul.mubr.bf16.gmra.mrb[0].mxu0 %v7482
      %v7582 = vpop.f32.mrb[0].mxu0
      %v7583 = vadd.f32 0.0, %v7582
      %v7584 = vpop.f32.mrb[0].mxu0
      %v7585 = vpop.f32.mrb[0].mxu0
      %v7586 = vadd.f32 0.0, %v7585
      %v7587 = vpop.f32.mrb[0].mxu0
      %7588 = vmatprep.mubr.bf16.mxu0 0
      %7589 = vmatmul.mubr.bf16.gmra.mrb[0].mxu0 %v7485
      %v7590 = vpop.f32.mrb[0].mxu0
      %v7591 = vadd.f32 0.0, %v7590
      %v7592 = vpop.f32.mrb[0].mxu0
      %v7593 = vpop.f32.mrb[0].mxu0
      %v7594 = vadd.f32 0.0, %v7593
      %v7595 = vpop.f32.mrb[0].mxu0
      %7596 = vmatprep.mubr.bf16.mxu0 0
      %7597 = vmatmul.mubr.bf16.gmra.mrb[0].mxu0 %v7488
      %v7598 = vpop.f32.mrb[0].mxu0
      %v7599 = vadd.f32 0.0, %v7598
      %v7600 = vpop.f32.mrb[0].mxu0
      %v7601 = vpop.f32.mrb[0].mxu0
      %v7602 = vadd.f32 0.0, %v7601
      %v7603 = vpop.f32.mrb[0].mxu0
      %7604 = vmatprep.mubr.bf16.mxu0 0
      %7605 = vmatmul.mubr.bf16.gmra.mrb[0].mxu0 %v7491
      %v7606 = vpop.f32.mrb[0].mxu0
      %v7607 = vadd.f32 0.0, %v7606
      %v7608 = vpop.f32.mrb[0].mxu0
      %v7609 = vpop.f32.mrb[0].mxu0
      %v7610 = vadd.f32 0.0, %v7609
      %v7611 = vpop.f32.mrb[0].mxu0
      %7612 = vmatprep.mubr.bf16.mxu0 0
      %7613 = vmatmul.mubr.bf16.gmra.mrb[0].mxu0 %v7494
      %v7614 = vpop.f32.mrb[0].mxu0
      %v7615 = vadd.f32 0.0, %v7614
      %v7616 = vpop.f32.mrb[0].mxu0
      %v7617 = vpop.f32.mrb[0].mxu0
      %v7618 = vadd.f32 0.0, %v7617
      %v7619 = vpop.f32.mrb[0].mxu0
      %7620 = vmatprep.mubr.bf16.mxu0 0
      %7621 = vmatmul.mubr.bf16.gmra.mrb[0].mxu0 %v7497
      %v7622 = vpop.f32.mrb[0].mxu0
      %v7623 = vadd.f32 0.0, %v7622
      %v7624 = vpop.f32.mrb[0].mxu0
      %v7625 = vpop.f32.mrb[0].mxu0
      %v7626 = vadd.f32 0.0, %v7625
      %v7627 = vpop.f32.mrb[0].mxu0
      %7628 = vmatprep.mubr.bf16.mxu0 0
      %7629 = vmatmul.mubr.bf16.gmra.mrb[0].mxu0 %v7500
      %v7630 = vpop.f32.mrb[0].mxu0
      %v7631 = vadd.f32 0.0, %v7630
      %v7632 = vpop.f32.mrb[0].mxu0
      %v7633 = vpop.f32.mrb[0].mxu0
      %v7634 = vadd.f32 0.0, %v7633
      %v7635 = vpop.f32.mrb[0].mxu0
      %7636 = vmatprep.mubr.bf16.mxu0 0
      %7637 = vmatmul.mubr.bf16.gmra.mrb[0].mxu0 %v7503
      %v7638 = vpop.f32.mrb[0].mxu0
      %v7639 = vadd.f32 0.0, %v7638
      %v7640 = vpop.f32.mrb[0].mxu0
      %v7641 = vpop.f32.mrb[0].mxu0
      %v7642 = vadd.f32 0.0, %v7641
      %v7643 = vpop.f32.mrb[0].mxu0
      %7644 = vmatprep.mubr.bf16.mxu0 0
      %7645 = vmatmul.mubr.bf16.gmra.mrb[0].mxu0 %v7506
      %v7646 = vpop.f32.mrb[0].mxu0
      %v7647 = vadd.f32 0.0, %v7646
      %v7648 = vpop.f32.mrb[0].mxu0
      %v7649 = vpop.f32.mrb[0].mxu0
      %v7650 = vadd.f32 0.0, %v7649
      %v7651 = vpop.f32.mrb[0].mxu0
      %7652 = vmatprep.mubr.bf16.mxu0 0
      %7653 = vmatmul.mubr.bf16.gmra.mrb[0].mxu0 %v7509
      %v7654 = vpop.f32.mrb[0].mxu0
      %v7655 = vadd.f32 0.0, %v7654
      %v7656 = vpop.f32.mrb[0].mxu0
      %v7657 = vpop.f32.mrb[0].mxu0
      %v7658 = vadd.f32 0.0, %v7657
      %v7659 = vpop.f32.mrb[0].mxu0
      %7660 = vmatprep.mubr.bf16.mxu0 0
      %7661 = vmatmul.mubr.bf16.gmra.mrb[0].mxu0 %v7512
      %v7662 = vpop.f32.mrb[0].mxu0
      %v7663 = vadd.f32 0.0, %v7662
      %v7664 = vpop.f32.mrb[0].mxu0
      %v7665 = vpop.f32.mrb[0].mxu0
      %v7666 = vadd.f32 0.0, %v7665
      %v7667 = vpop.f32.mrb[0].mxu0
      %7668 = vmatprep.mubr.bf16.mxu0 0
      %7669 = vmatmul.mubr.bf16.gmra.mrb[0].mxu0 %v7515
      %v7670 = vpop.f32.mrb[0].mxu0
      %v7671 = vadd.f32 0.0, %v7670
      %v7672 = vpop.f32.mrb[0].mxu0
      %v7673 = vpop.f32.mrb[0].mxu0
      %v7674 = vadd.f32 0.0, %v7673
      %v7675 = vpop.f32.mrb[0].mxu0
      %7676 = vmatprep.mubr.bf16.mxu0 0
      %7677 = vmatmul.mubr.bf16.gmra.mrb[0].mxu0 %v7518
      %v7678 = vpop.f32.mrb[0].mxu0
      %v7679 = vadd.f32 0.0, %v7678
      %v7680 = vpop.f32.mrb[0].mxu0
      %v7681 = vpop.f32.mrb[0].mxu0
      %v7682 = vadd.f32 0.0, %v7681
      %v7683 = vpop.f32.mrb[0].mxu0
      %7684 = vmatprep.mubr.bf16.mxu0 0
      %7685 = vmatmul.mubr.bf16.gmra.mrb[0].mxu0 %v7521
      %v7686 = vpop.f32.mrb[0].mxu0
      %v7687 = vadd.f32 0.0, %v7686
      %v7688 = vpop.f32.mrb[0].mxu0
      %v7689 = vpop.f32.mrb[0].mxu0
      %v7690 = vadd.f32 0.0, %v7689
      %v7691 = vpop.f32.mrb[0].mxu0
      %7692 = vmatprep.mubr.bf16.mxu0 0
      %7693 = vmatmul.mubr.bf16.gmra.mrb[0].mxu0 %v7524
      %v7694 = vpop.f32.mrb[0].mxu0
      %v7695 = vadd.f32 0.0, %v7694
      %v7696 = vpop.f32.mrb[0].mxu0
      %v7697 = vpop.f32.mrb[0].mxu0
      %v7698 = vadd.f32 0.0, %v7697
      %v7699 = vpop.f32.mrb[0].mxu0
      %7700 = vmatprep.mubr.bf16.mxu0 0
      %7701 = vmatmul.mubr.bf16.gmra.mrb[0].mxu0 %v7527
      %v7702 = vpop.f32.mrb[0].mxu0
      %v7703 = vadd.f32 0.0, %v7702
      %v7704 = vpop.f32.mrb[0].mxu0
      %v7705 = vpop.f32.mrb[0].mxu0
      %v7706 = vadd.f32 0.0, %v7705
      %v7707 = vpop.f32.mrb[0].mxu0
      %7708 = vdwg.mxu0
      %v7709 = vadd.f32 %v7396, %v7567
      %v7710 = vadd.f32 %v7397, %v7570
      %v7711 = vadd.f32 %v7398, %v7575
      %v7712 = vadd.f32 %v7399, %v7578
      %v7713 = vadd.f32 %v7400, %v7583
      %v7714 = vadd.f32 %v7401, %v7586
      %v7715 = vadd.f32 %v7402, %v7591
      %v7716 = vadd.f32 %v7403, %v7594
      %v7717 = vadd.f32 %v7404, %v7599
      %v7718 = vadd.f32 %v7405, %v7602
      %v7719 = vadd.f32 %v7406, %v7607
      %v7720 = vadd.f32 %v7407, %v7610
      %v7721 = vadd.f32 %v7408, %v7615
      %v7722 = vadd.f32 %v7409, %v7618
      %v7723 = vadd.f32 %v7410, %v7623
      %v7724 = vadd.f32 %v7411, %v7626
      %v7725 = vadd.f32 %v7412, %v7631
      %v7726 = vadd.f32 %v7413, %v7634
      %v7727 = vadd.f32 %v7414, %v7639
      %v7728 = vadd.f32 %v7415, %v7642
      %v7729 = vadd.f32 %v7416, %v7647
      %v7730 = vadd.f32 %v7417, %v7650
      %v7731 = vadd.f32 %v7418, %v7655
      %v7732 = vadd.f32 %v7419, %v7658
      %v7733 = vadd.f32 %v7420, %v7663
      %v7734 = vadd.f32 %v7421, %v7666
      %v7735 = vadd.f32 %v7422, %v7671
      %v7736 = vadd.f32 %v7423, %v7674
      %v7737 = vadd.f32 %v7424, %v7679
      %v7738 = vadd.f32 %v7425, %v7682
      %v7739 = vadd.f32 %v7426, %v7687
      %v7740 = vadd.f32 %v7427, %v7690
      %v7741 = vadd.f32 %v7428, %v7695
      %v7742 = vadd.f32 %v7429, %v7698
      %v7743 = vadd.f32 %v7430, %v7703
      %v7744 = vadd.f32 %v7431, %v7706
      %v7745 = vld [vmem:[#allocation3 + $0x10] sm:$0xc]
      %v7746 = vld [vmem:[#allocation3 + $0x14] sm:$0xf]
      %v7747 = vld [vmem:[#allocation3 + $0x18] sm:$0xf]
      %v7748 = vld [vmem:[#allocation3 + $0x1c] sm:$0xf]
      %v7749 = vld [vmem:[#allocation3 + $0x20] sm:$0xf]
      %v7750 = vld [vmem:[#allocation3 + $0x24] sm:$0xf]
      %v7751 = vld [vmem:[#allocation3 + $0x28] sm:$0xf]
      %v7752 = vld [vmem:[#allocation3 + $0x2c] sm:$0xf]
      %v7753 = vld [vmem:[#allocation3 + $0x30] sm:$0xf]
      %v7754 = vld [vmem:[#allocation3 + $0x34] sm:$0xf]
      %v7755 = vld [vmem:[#allocation3 + $0x38] sm:$0xf]
      %v7756 = vld [vmem:[#allocation3 + $0x3c] sm:$0xf]
      %v7757 = vld [vmem:[#allocation3 + $0x40] sm:$0xf]
      %v7758 = vld [vmem:[#allocation3 + $0x44] sm:$0xf]
      %v7759 = vld [vmem:[#allocation3 + $0x48] sm:$0xf]
      %v7760 = vld [vmem:[#allocation3 + $0x4c] sm:$0xf]
      %v7761 = vld [vmem:[#allocation3 + $0x50] sm:$0xf]
      %v7762 = vld [vmem:[#allocation3 + $0x54] sm:$0xf]
      %v7763 = vld [vmem:[#allocation3 + $0x58] sm:$0xf]
      %v7764 = vld [vmem:[#allocation3 + $0x5c] sm:$0xf]
      %v7765 = vld [vmem:[#allocation3 + $0x60] sm:$0xf]
      %v7766 = vld [vmem:[#allocation3 + $0x64] sm:$0xf]
      %v7767 = vld [vmem:[#allocation3 + $0x68] sm:$0xf]
      %v7768 = vld [vmem:[#allocation3 + $0x6c] sm:$0xf]
      %v7769 = vld [vmem:[#allocation3 + $0x70] sm:$0xf]
      %v7770 = vld [vmem:[#allocation3 + $0x74] sm:$0xf]
      %v7771 = vld [vmem:[#allocation3 + $0x78] sm:$0xf]
      %v7772 = vld [vmem:[#allocation3 + $0x7c] sm:$0xf]
      %v7773 = vld [vmem:[#allocation3 + $0x80] sm:$0xf]
      %v7774 = vld [vmem:[#allocation3 + $0x84] sm:$0xf]
      %v7775 = vld [vmem:[#allocation3 + $0x88] sm:$0xf]
      %v7776 = vld [vmem:[#allocation3 + $0x8c] sm:$0xf]
      %v7777 = vld [vmem:[#allocation3 + $0x90] sm:$0xf]
      %v7778 = vld [vmem:[#allocation3 + $0x94] sm:$0xf]
      %v7779 = vld [vmem:[#allocation3 + $0x98] sm:$0xf]
      %v7780 = vld [vmem:[#allocation3 + $0x9c] sm:$0xf]
      %v7781 = vld [vmem:[#allocation3 + $0xa0] sm:$0x3]
      %s7782 = scalar_lea.vmem %s7, 24
      %v7783 = vld [vmem:[%s7782] sm:$0xf]
      %v7821 = vunpack.c.l.b16 %v7745
      %v7822 = vunpack.c.l.b16 %v7746
      %v7823 = vunpack.c.l.b16 %v7747
      %v7824 = vunpack.c.l.b16 %v7748
      %v7825 = vunpack.c.l.b16 %v7749
      %v7826 = vunpack.c.l.b16 %v7750
      %v7827 = vunpack.c.l.b16 %v7751
      %v7828 = vunpack.c.l.b16 %v7752
      %v7829 = vunpack.c.l.b16 %v7753
      %v7830 = vunpack.c.l.b16 %v7754
      %v7831 = vunpack.c.l.b16 %v7755
      %v7832 = vunpack.c.l.b16 %v7756
      %v7833 = vunpack.c.l.b16 %v7757
      %v7834 = vunpack.c.l.b16 %v7758
      %v7835 = vunpack.c.l.b16 %v7759
      %v7836 = vunpack.c.l.b16 %v7760
      %v7837 = vunpack.c.l.b16 %v7761
      %v7838 = vunpack.c.l.b16 %v7762
      %v7839 = vunpack.c.l.b16 %v7763
      %v7840 = vunpack.c.l.b16 %v7764
      %v7841 = vunpack.c.l.b16 %v7765
      %v7842 = vunpack.c.l.b16 %v7766
      %v7843 = vunpack.c.l.b16 %v7767
      %v7844 = vunpack.c.l.b16 %v7768
      %v7845 = vunpack.c.l.b16 %v7769
      %v7846 = vunpack.c.l.b16 %v7770
      %v7847 = vunpack.c.l.b16 %v7771
      %v7848 = vunpack.c.l.b16 %v7772
      %v7849 = vunpack.c.l.b16 %v7773
      %v7850 = vunpack.c.l.b16 %v7774
      %v7851 = vunpack.c.l.b16 %v7775
      %v7852 = vunpack.c.l.b16 %v7776
      %v7853 = vunpack.c.l.b16 %v7777
      %v7854 = vunpack.c.l.b16 %v7778
      %v7855 = vunpack.c.l.b16 %v7779
      %v7856 = vunpack.c.l.b16 %v7780
      %v7857 = vunpack.c.l.b16 %v7781
      %v7858 = vpack.c.b16 %v7822, %v7821
      %v7859 = vpack.c.b16 %v7824, %v7823
      %v7860 = vpack.c.b16 %v7826, %v7825
      %v7861 = vpack.c.b16 %v7828, %v7827
      %v7862 = vpack.c.b16 %v7830, %v7829
      %v7863 = vpack.c.b16 %v7832, %v7831
      %v7864 = vpack.c.b16 %v7834, %v7833
      %v7865 = vpack.c.b16 %v7836, %v7835
      %v7866 = vpack.c.b16 %v7838, %v7837
      %v7867 = vpack.c.b16 %v7840, %v7839
      %v7868 = vpack.c.b16 %v7842, %v7841
      %v7869 = vpack.c.b16 %v7844, %v7843
      %v7870 = vpack.c.b16 %v7846, %v7845
      %v7871 = vpack.c.b16 %v7848, %v7847
      %v7872 = vpack.c.b16 %v7850, %v7849
      %v7873 = vpack.c.b16 %v7852, %v7851
      %v7874 = vpack.c.b16 %v7854, %v7853
      %v7875 = vpack.c.b16 %v7856, %v7855
      %v7876 = vpack.c.b16 %v7857, %v7857
      %v7877 = vrot.slane %v7858, 2
      %v7878 = vrot.slane %v7859, 2
      %v7879 = vsel %vm3290, %v7877, %v7878
      %v7880 = vrot.slane %v7860, 2
      %v7881 = vsel %vm3290, %v7878, %v7880
      %v7882 = vrot.slane %v7861, 2
      %v7883 = vsel %vm3290, %v7880, %v7882
      %v7884 = vrot.slane %v7862, 2
      %v7885 = vsel %vm3290, %v7882, %v7884
      %v7886 = vrot.slane %v7863, 2
      %v7887 = vsel %vm3290, %v7884, %v7886
      %v7888 = vrot.slane %v7864, 2
      %v7889 = vsel %vm3290, %v7886, %v7888
      %v7890 = vrot.slane %v7865, 2
      %v7891 = vsel %vm3290, %v7888, %v7890
      %v7892 = vrot.slane %v7866, 2
      %v7893 = vsel %vm3290, %v7890, %v7892
      %v7894 = vrot.slane %v7867, 2
      %v7895 = vsel %vm3290, %v7892, %v7894
      %v7896 = vrot.slane %v7868, 2
      %v7897 = vsel %vm3290, %v7894, %v7896
      %v7898 = vrot.slane %v7869, 2
      %v7899 = vsel %vm3290, %v7896, %v7898
      %v7900 = vrot.slane %v7870, 2
      %v7901 = vsel %vm3290, %v7898, %v7900
      %v7902 = vrot.slane %v7871, 2
      %v7903 = vsel %vm3290, %v7900, %v7902
      %v7904 = vrot.slane %v7872, 2
      %v7905 = vsel %vm3290, %v7902, %v7904
      %v7906 = vrot.slane %v7873, 2
      %v7907 = vsel %vm3290, %v7904, %v7906
      %v7908 = vrot.slane %v7874, 2
      %v7909 = vsel %vm3290, %v7906, %v7908
      %v7910 = vrot.slane %v7875, 2
      %v7911 = vsel %vm3290, %v7908, %v7910
      %v7912 = vrot.slane %v7876, 2
      %v7913 = vsel %vm3290, %v7910, %v7912
      %v7915 = vsel %vm5782, %v7879, 0
      %v7918 = vsel %vm5782, %v7881, 0
      %v7921 = vsel %vm5782, %v7883, 0
      %v7924 = vsel %vm5782, %v7885, 0
      %v7927 = vsel %vm5782, %v7887, 0
      %v7930 = vsel %vm5782, %v7889, 0
      %v7933 = vsel %vm5782, %v7891, 0
      %v7936 = vsel %vm5782, %v7893, 0
      %v7939 = vsel %vm5782, %v7895, 0
      %v7942 = vsel %vm5782, %v7897, 0
      %v7945 = vsel %vm5782, %v7899, 0
      %v7948 = vsel %vm5782, %v7901, 0
      %v7951 = vsel %vm5782, %v7903, 0
      %v7954 = vsel %vm5782, %v7905, 0
      %v7957 = vsel %vm5782, %v7907, 0
      %v7960 = vsel %vm5782, %v7909, 0
      %v7963 = vsel %vm5782, %v7911, 0
      %v7966 = vsel %vm5782, %v7913, 0
      %v7969 = vsel %vm5837, %v7783, 0
      %7971 = vmatprep.subr.bf16.mxu0 0
      %7972 = vmatpush1.bf16.msra.mxu0 %v7969
      %7973 = vmatprep.subr.bf16.mxu0 0
      %7974 = vmatpush1.bf16.msra.mxu0 0
      %7975 = vmatprep.subr.bf16.mxu0 0
      %7976 = vmatpush1.bf16.msra.mxu0 0
      %7977 = vmatprep.subr.bf16.mxu0 0
      %7978 = vmatpush1.bf16.msra.mxu0 0
      %7979 = vmatprep.subr.bf16.mxu0 0
      %7980 = vmatpush1.bf16.msra.mxu0 0
      %7981 = vmatprep.subr.bf16.mxu0 0
      %7982 = vmatpush1.bf16.msra.mxu0 0
      %7983 = vmatprep.subr.bf16.mxu0 0
      %7984 = vmatpush1.bf16.msra.mxu0 0
      %7985 = vmatprep.subr.bf16.mxu0 0
      %7986 = vmatpush1.bf16.msra.mxu0 0
      %7987 = vmatprep.subr.bf16.mxu0 0
      %7988 = vmatpush1.bf16.msra.mxu0 0
      %7989 = vmatprep.subr.bf16.mxu0 0
      %7990 = vmatpush1.bf16.msra.mxu0 0
      %7991 = vmatprep.subr.bf16.mxu0 0
      %7992 = vmatpush1.bf16.msra.mxu0 0
      %7993 = vmatprep.subr.bf16.mxu0 0
      %7994 = vmatpush1.bf16.msra.mxu0 0
      %7995 = vmatprep.subr.bf16.mxu0 0
      %7996 = vmatpush1.bf16.msra.mxu0 0
      %7997 = vmatprep.subr.bf16.mxu0 0
      %7998 = vmatpush1.bf16.msra.mxu0 0
      %7999 = vmatprep.subr.bf16.mxu0 0
      %8000 = vmatpush1.bf16.msra.mxu0 0
      %8001 = vmatprep.subr.bf16.mxu0 0
      %8002 = vmatpush1.bf16.msra.mxu0 0
      %8003 = vmatprep.mubr.bf16.mxu0 0
      %8004 = vmatmul.mubr.bf16.gmra.mrb[0].mxu0 %v7915
      %v8005 = vpop.f32.mrb[0].mxu0
      %v8006 = vadd.f32 0.0, %v8005
      %v8007 = vpop.f32.mrb[0].mxu0
      %v8008 = vpop.f32.mrb[0].mxu0
      %v8009 = vadd.f32 0.0, %v8008
      %v8010 = vpop.f32.mrb[0].mxu0
      %8011 = vmatprep.mubr.bf16.mxu0 0
      %8012 = vmatmul.mubr.bf16.gmra.mrb[0].mxu0 %v7918
      %v8013 = vpop.f32.mrb[0].mxu0
      %v8014 = vadd.f32 0.0, %v8013
      %v8015 = vpop.f32.mrb[0].mxu0
      %v8016 = vpop.f32.mrb[0].mxu0
      %v8017 = vadd.f32 0.0, %v8016
      %v8018 = vpop.f32.mrb[0].mxu0
      %8019 = vmatprep.mubr.bf16.mxu0 0
      %8020 = vmatmul.mubr.bf16.gmra.mrb[0].mxu0 %v7921
      %v8021 = vpop.f32.mrb[0].mxu0
      %v8022 = vadd.f32 0.0, %v8021
      %v8023 = vpop.f32.mrb[0].mxu0
      %v8024 = vpop.f32.mrb[0].mxu0
      %v8025 = vadd.f32 0.0, %v8024
      %v8026 = vpop.f32.mrb[0].mxu0
      %8027 = vmatprep.mubr.bf16.mxu0 0
      %8028 = vmatmul.mubr.bf16.gmra.mrb[0].mxu0 %v7924
      %v8029 = vpop.f32.mrb[0].mxu0
      %v8030 = vadd.f32 0.0, %v8029
      %v8031 = vpop.f32.mrb[0].mxu0
      %v8032 = vpop.f32.mrb[0].mxu0
      %v8033 = vadd.f32 0.0, %v8032
      %v8034 = vpop.f32.mrb[0].mxu0
      %8035 = vmatprep.mubr.bf16.mxu0 0
      %8036 = vmatmul.mubr.bf16.gmra.mrb[0].mxu0 %v7927
      %v8037 = vpop.f32.mrb[0].mxu0
      %v8038 = vadd.f32 0.0, %v8037
      %v8039 = vpop.f32.mrb[0].mxu0
      %v8040 = vpop.f32.mrb[0].mxu0
      %v8041 = vadd.f32 0.0, %v8040
      %v8042 = vpop.f32.mrb[0].mxu0
      %8043 = vmatprep.mubr.bf16.mxu0 0
      %8044 = vmatmul.mubr.bf16.gmra.mrb[0].mxu0 %v7930
      %v8045 = vpop.f32.mrb[0].mxu0
      %v8046 = vadd.f32 0.0, %v8045
      %v8047 = vpop.f32.mrb[0].mxu0
      %v8048 = vpop.f32.mrb[0].mxu0
      %v8049 = vadd.f32 0.0, %v8048
      %v8050 = vpop.f32.mrb[0].mxu0
      %8051 = vmatprep.mubr.bf16.mxu0 0
      %8052 = vmatmul.mubr.bf16.gmra.mrb[0].mxu0 %v7933
      %v8053 = vpop.f32.mrb[0].mxu0
      %v8054 = vadd.f32 0.0, %v8053
      %v8055 = vpop.f32.mrb[0].mxu0
      %v8056 = vpop.f32.mrb[0].mxu0
      %v8057 = vadd.f32 0.0, %v8056
      %v8058 = vpop.f32.mrb[0].mxu0
      %8059 = vmatprep.mubr.bf16.mxu0 0
      %8060 = vmatmul.mubr.bf16.gmra.mrb[0].mxu0 %v7936
      %v8061 = vpop.f32.mrb[0].mxu0
      %v8062 = vadd.f32 0.0, %v8061
      %v8063 = vpop.f32.mrb[0].mxu0
      %v8064 = vpop.f32.mrb[0].mxu0
      %v8065 = vadd.f32 0.0, %v8064
      %v8066 = vpop.f32.mrb[0].mxu0
      %8067 = vmatprep.mubr.bf16.mxu0 0
      %8068 = vmatmul.mubr.bf16.gmra.mrb[0].mxu0 %v7939
      %v8069 = vpop.f32.mrb[0].mxu0
      %v8070 = vadd.f32 0.0, %v8069
      %v8071 = vpop.f32.mrb[0].mxu0
      %v8072 = vpop.f32.mrb[0].mxu0
      %v8073 = vadd.f32 0.0, %v8072
      %v8074 = vpop.f32.mrb[0].mxu0
      %8075 = vmatprep.mubr.bf16.mxu0 0
      %8076 = vmatmul.mubr.bf16.gmra.mrb[0].mxu0 %v7942
      %v8077 = vpop.f32.mrb[0].mxu0
      %v8078 = vadd.f32 0.0, %v8077
      %v8079 = vpop.f32.mrb[0].mxu0
      %v8080 = vpop.f32.mrb[0].mxu0
      %v8081 = vadd.f32 0.0, %v8080
      %v8082 = vpop.f32.mrb[0].mxu0
      %8083 = vmatprep.mubr.bf16.mxu0 0
      %8084 = vmatmul.mubr.bf16.gmra.mrb[0].mxu0 %v7945
      %v8085 = vpop.f32.mrb[0].mxu0
      %v8086 = vadd.f32 0.0, %v8085
      %v8087 = vpop.f32.mrb[0].mxu0
      %v8088 = vpop.f32.mrb[0].mxu0
      %v8089 = vadd.f32 0.0, %v8088
      %v8090 = vpop.f32.mrb[0].mxu0
      %8091 = vmatprep.mubr.bf16.mxu0 0
      %8092 = vmatmul.mubr.bf16.gmra.mrb[0].mxu0 %v7948
      %v8093 = vpop.f32.mrb[0].mxu0
      %v8094 = vadd.f32 0.0, %v8093
      %v8095 = vpop.f32.mrb[0].mxu0
      %v8096 = vpop.f32.mrb[0].mxu0
      %v8097 = vadd.f32 0.0, %v8096
      %v8098 = vpop.f32.mrb[0].mxu0
      %8099 = vmatprep.mubr.bf16.mxu0 0
      %8100 = vmatmul.mubr.bf16.gmra.mrb[0].mxu0 %v7951
      %v8101 = vpop.f32.mrb[0].mxu0
      %v8102 = vadd.f32 0.0, %v8101
      %v8103 = vpop.f32.mrb[0].mxu0
      %v8104 = vpop.f32.mrb[0].mxu0
      %v8105 = vadd.f32 0.0, %v8104
      %v8106 = vpop.f32.mrb[0].mxu0
      %8107 = vmatprep.mubr.bf16.mxu0 0
      %8108 = vmatmul.mubr.bf16.gmra.mrb[0].mxu0 %v7954
      %v8109 = vpop.f32.mrb[0].mxu0
      %v8110 = vadd.f32 0.0, %v8109
      %v8111 = vpop.f32.mrb[0].mxu0
      %v8112 = vpop.f32.mrb[0].mxu0
      %v8113 = vadd.f32 0.0, %v8112
      %v8114 = vpop.f32.mrb[0].mxu0
      %8115 = vmatprep.mubr.bf16.mxu0 0
      %8116 = vmatmul.mubr.bf16.gmra.mrb[0].mxu0 %v7957
      %v8117 = vpop.f32.mrb[0].mxu0
      %v8118 = vadd.f32 0.0, %v8117
      %v8119 = vpop.f32.mrb[0].mxu0
      %v8120 = vpop.f32.mrb[0].mxu0
      %v8121 = vadd.f32 0.0, %v8120
      %v8122 = vpop.f32.mrb[0].mxu0
      %8123 = vmatprep.mubr.bf16.mxu0 0
      %8124 = vmatmul.mubr.bf16.gmra.mrb[0].mxu0 %v7960
      %v8125 = vpop.f32.mrb[0].mxu0
      %v8126 = vadd.f32 0.0, %v8125
      %v8127 = vpop.f32.mrb[0].mxu0
      %v8128 = vpop.f32.mrb[0].mxu0
      %v8129 = vadd.f32 0.0, %v8128
      %v8130 = vpop.f32.mrb[0].mxu0
      %8131 = vmatprep.mubr.bf16.mxu0 0
      %8132 = vmatmul.mubr.bf16.gmra.mrb[0].mxu0 %v7963
      %v8133 = vpop.f32.mrb[0].mxu0
      %v8134 = vadd.f32 0.0, %v8133
      %v8135 = vpop.f32.mrb[0].mxu0
      %v8136 = vpop.f32.mrb[0].mxu0
      %v8137 = vadd.f32 0.0, %v8136
      %v8138 = vpop.f32.mrb[0].mxu0
      %8139 = vmatprep.mubr.bf16.mxu0 0
      %8140 = vmatmul.mubr.bf16.gmra.mrb[0].mxu0 %v7966
      %v8141 = vpop.f32.mrb[0].mxu0
      %v8142 = vadd.f32 0.0, %v8141
      %v8143 = vpop.f32.mrb[0].mxu0
      %v8144 = vpop.f32.mrb[0].mxu0
      %v8145 = vadd.f32 0.0, %v8144
      %v8146 = vpop.f32.mrb[0].mxu0
      %8147 = vdwg.mxu0
      %v8148 = vadd.f32 %v7709, %v8006
      %v8149 = vadd.f32 %v7710, %v8009
      %v8150 = vadd.f32 %v7711, %v8014
      %v8151 = vadd.f32 %v7712, %v8017
      %v8152 = vadd.f32 %v7713, %v8022
      %v8153 = vadd.f32 %v7714, %v8025
      %v8154 = vadd.f32 %v7715, %v8030
      %v8155 = vadd.f32 %v7716, %v8033
      %v8156 = vadd.f32 %v7717, %v8038
      %v8157 = vadd.f32 %v7718, %v8041
      %v8158 = vadd.f32 %v7719, %v8046
      %v8159 = vadd.f32 %v7720, %v8049
      %v8160 = vadd.f32 %v7721, %v8054
      %v8161 = vadd.f32 %v7722, %v8057
      %v8162 = vadd.f32 %v7723, %v8062
      %v8163 = vadd.f32 %v7724, %v8065
      %v8164 = vadd.f32 %v7725, %v8070
      %v8165 = vadd.f32 %v7726, %v8073
      %v8166 = vadd.f32 %v7727, %v8078
      %v8167 = vadd.f32 %v7728, %v8081
      %v8168 = vadd.f32 %v7729, %v8086
      %v8169 = vadd.f32 %v7730, %v8089
      %v8170 = vadd.f32 %v7731, %v8094
      %v8171 = vadd.f32 %v7732, %v8097
      %v8172 = vadd.f32 %v7733, %v8102
      %v8173 = vadd.f32 %v7734, %v8105
      %v8174 = vadd.f32 %v7735, %v8110
      %v8175 = vadd.f32 %v7736, %v8113
      %v8176 = vadd.f32 %v7737, %v8118
      %v8177 = vadd.f32 %v7738, %v8121
      %v8178 = vadd.f32 %v7739, %v8126
      %v8179 = vadd.f32 %v7740, %v8129
      %v8180 = vadd.f32 %v7741, %v8134
      %v8181 = vadd.f32 %v7742, %v8137
      %v8182 = vadd.f32 %v7743, %v8142
      %v8183 = vadd.f32 %v7744, %v8145
      %v8184 = vld [vmem:[#allocation3 + $0xa0] sm:$0x7]
      %s8185 = scalar_lea.vmem %s7, 28
      %v8186 = vld [vmem:[%s8185] sm:$0xf]
      %v8188 = vunpack.c.l.b16 %v8184
      %v8189 = vpack.c.b16 %v8188, %v8188
      %v8191 = vshrl.u32 %v7858, 16
      %v8193 = vrot.slane %v8191, 2
      %v8194 = vshll.u32 %v7858, 16
      %v8196 = vrot.slane %v8194, 3
      %v8197 = vor.u32 %v8193, %v8196
      %v8199 = vshrl.u32 %v7859, 16
      %v8201 = vrot.slane %v8199, 2
      %v8202 = vshll.u32 %v7859, 16
      %v8204 = vrot.slane %v8202, 3
      %v8205 = vor.u32 %v8201, %v8204
      %v8206 = vsel %vm4043, %v8197, %v8205
      %v8208 = vshrl.u32 %v7860, 16
      %v8210 = vrot.slane %v8208, 2
      %v8211 = vshll.u32 %v7860, 16
      %v8213 = vrot.slane %v8211, 3
      %v8214 = vor.u32 %v8210, %v8213
      %v8215 = vsel %vm4043, %v8205, %v8214
      %v8217 = vshrl.u32 %v7861, 16
      %v8219 = vrot.slane %v8217, 2
      %v8220 = vshll.u32 %v7861, 16
      %v8222 = vrot.slane %v8220, 3
      %v8223 = vor.u32 %v8219, %v8222
      %v8224 = vsel %vm4043, %v8214, %v8223
      %v8226 = vshrl.u32 %v7862, 16
      %v8228 = vrot.slane %v8226, 2
      %v8229 = vshll.u32 %v7862, 16
      %v8231 = vrot.slane %v8229, 3
      %v8232 = vor.u32 %v8228, %v8231
      %v8233 = vsel %vm4043, %v8223, %v8232
      %v8235 = vshrl.u32 %v7863, 16
      %v8237 = vrot.slane %v8235, 2
      %v8238 = vshll.u32 %v7863, 16
      %v8240 = vrot.slane %v8238, 3
      %v8241 = vor.u32 %v8237, %v8240
      %v8242 = vsel %vm4043, %v8232, %v8241
      %v8244 = vshrl.u32 %v7864, 16
      %v8246 = vrot.slane %v8244, 2
      %v8247 = vshll.u32 %v7864, 16
      %v8249 = vrot.slane %v8247, 3
      %v8250 = vor.u32 %v8246, %v8249
      %v8251 = vsel %vm4043, %v8241, %v8250
      %v8253 = vshrl.u32 %v7865, 16
      %v8255 = vrot.slane %v8253, 2
      %v8256 = vshll.u32 %v7865, 16
      %v8258 = vrot.slane %v8256, 3
      %v8259 = vor.u32 %v8255, %v8258
      %v8260 = vsel %vm4043, %v8250, %v8259
      %v8262 = vshrl.u32 %v7866, 16
      %v8264 = vrot.slane %v8262, 2
      %v8265 = vshll.u32 %v7866, 16
      %v8267 = vrot.slane %v8265, 3
      %v8268 = vor.u32 %v8264, %v8267
      %v8269 = vsel %vm4043, %v8259, %v8268
      %v8271 = vshrl.u32 %v7867, 16
      %v8273 = vrot.slane %v8271, 2
      %v8274 = vshll.u32 %v7867, 16
      %v8276 = vrot.slane %v8274, 3
      %v8277 = vor.u32 %v8273, %v8276
      %v8278 = vsel %vm4043, %v8268, %v8277
      %v8280 = vshrl.u32 %v7868, 16
      %v8282 = vrot.slane %v8280, 2
      %v8283 = vshll.u32 %v7868, 16
      %v8285 = vrot.slane %v8283, 3
      %v8286 = vor.u32 %v8282, %v8285
      %v8287 = vsel %vm4043, %v8277, %v8286
      %v8289 = vshrl.u32 %v7869, 16
      %v8291 = vrot.slane %v8289, 2
      %v8292 = vshll.u32 %v7869, 16
      %v8294 = vrot.slane %v8292, 3
      %v8295 = vor.u32 %v8291, %v8294
      %v8296 = vsel %vm4043, %v8286, %v8295
      %v8298 = vshrl.u32 %v7870, 16
      %v8300 = vrot.slane %v8298, 2
      %v8301 = vshll.u32 %v7870, 16
      %v8303 = vrot.slane %v8301, 3
      %v8304 = vor.u32 %v8300, %v8303
      %v8305 = vsel %vm4043, %v8295, %v8304
      %v8307 = vshrl.u32 %v7871, 16
      %v8309 = vrot.slane %v8307, 2
      %v8310 = vshll.u32 %v7871, 16
      %v8312 = vrot.slane %v8310, 3
      %v8313 = vor.u32 %v8309, %v8312
      %v8314 = vsel %vm4043, %v8304, %v8313
      %v8316 = vshrl.u32 %v7872, 16
      %v8318 = vrot.slane %v8316, 2
      %v8319 = vshll.u32 %v7872, 16
      %v8321 = vrot.slane %v8319, 3
      %v8322 = vor.u32 %v8318, %v8321
      %v8323 = vsel %vm4043, %v8313, %v8322
      %v8325 = vshrl.u32 %v7873, 16
      %v8327 = vrot.slane %v8325, 2
      %v8328 = vshll.u32 %v7873, 16
      %v8330 = vrot.slane %v8328, 3
      %v8331 = vor.u32 %v8327, %v8330
      %v8332 = vsel %vm4043, %v8322, %v8331
      %v8334 = vshrl.u32 %v7874, 16
      %v8336 = vrot.slane %v8334, 2
      %v8337 = vshll.u32 %v7874, 16
      %v8339 = vrot.slane %v8337, 3
      %v8340 = vor.u32 %v8336, %v8339
      %v8341 = vsel %vm4043, %v8331, %v8340
      %v8343 = vshrl.u32 %v7875, 16
      %v8345 = vrot.slane %v8343, 2
      %v8346 = vshll.u32 %v7875, 16
      %v8348 = vrot.slane %v8346, 3
      %v8349 = vor.u32 %v8345, %v8348
      %v8350 = vsel %vm4043, %v8340, %v8349
      %v8352 = vshrl.u32 %v8189, 16
      %v8354 = vrot.slane %v8352, 2
      %v8355 = vshll.u32 %v8189, 16
      %v8357 = vrot.slane %v8355, 3
      %v8358 = vor.u32 %v8354, %v8357
      %v8359 = vsel %vm4043, %v8349, %v8358
      %v8361 = vsel %vm5782, %v8206, 0
      %v8364 = vsel %vm5782, %v8215, 0
      %v8367 = vsel %vm5782, %v8224, 0
      %v8370 = vsel %vm5782, %v8233, 0
      %v8373 = vsel %vm5782, %v8242, 0
      %v8376 = vsel %vm5782, %v8251, 0
      %v8379 = vsel %vm5782, %v8260, 0
      %v8382 = vsel %vm5782, %v8269, 0
      %v8385 = vsel %vm5782, %v8278, 0
      %v8388 = vsel %vm5782, %v8287, 0
      %v8391 = vsel %vm5782, %v8296, 0
      %v8394 = vsel %vm5782, %v8305, 0
      %v8397 = vsel %vm5782, %v8314, 0
      %v8400 = vsel %vm5782, %v8323, 0
      %v8403 = vsel %vm5782, %v8332, 0
      %v8406 = vsel %vm5782, %v8341, 0
      %v8409 = vsel %vm5782, %v8350, 0
      %v8412 = vsel %vm5782, %v8359, 0
      %v8415 = vsel %vm5837, %v8186, 0
      %8417 = vmatprep.subr.bf16.mxu0 0
      %8418 = vmatpush1.bf16.msra.mxu0 %v8415
      %8419 = vmatprep.subr.bf16.mxu0 0
      %8420 = vmatpush1.bf16.msra.mxu0 0
      %8421 = vmatprep.subr.bf16.mxu0 0
      %8422 = vmatpush1.bf16.msra.mxu0 0
      %8423 = vmatprep.subr.bf16.mxu0 0
      %8424 = vmatpush1.bf16.msra.mxu0 0
      %8425 = vmatprep.subr.bf16.mxu0 0
      %8426 = vmatpush1.bf16.msra.mxu0 0
      %8427 = vmatprep.subr.bf16.mxu0 0
      %8428 = vmatpush1.bf16.msra.mxu0 0
      %8429 = vmatprep.subr.bf16.mxu0 0
      %8430 = vmatpush1.bf16.msra.mxu0 0
      %8431 = vmatprep.subr.bf16.mxu0 0
      %8432 = vmatpush1.bf16.msra.mxu0 0
      %8433 = vmatprep.subr.bf16.mxu0 0
      %8434 = vmatpush1.bf16.msra.mxu0 0
      %8435 = vmatprep.subr.bf16.mxu0 0
      %8436 = vmatpush1.bf16.msra.mxu0 0
      %8437 = vmatprep.subr.bf16.mxu0 0
      %8438 = vmatpush1.bf16.msra.mxu0 0
      %8439 = vmatprep.subr.bf16.mxu0 0
      %8440 = vmatpush1.bf16.msra.mxu0 0
      %8441 = vmatprep.subr.bf16.mxu0 0
      %8442 = vmatpush1.bf16.msra.mxu0 0
      %8443 = vmatprep.subr.bf16.mxu0 0
      %8444 = vmatpush1.bf16.msra.mxu0 0
      %8445 = vmatprep.subr.bf16.mxu0 0
      %8446 = vmatpush1.bf16.msra.mxu0 0
      %8447 = vmatprep.subr.bf16.mxu0 0
      %8448 = vmatpush1.bf16.msra.mxu0 0
      %8449 = vmatprep.mubr.bf16.mxu0 0
      %8450 = vmatmul.mubr.bf16.gmra.mrb[0].mxu0 %v8361
      %v8451 = vpop.f32.mrb[0].mxu0
      %v8452 = vadd.f32 0.0, %v8451
      %v8453 = vpop.f32.mrb[0].mxu0
      %v8454 = vpop.f32.mrb[0].mxu0
      %v8455 = vadd.f32 0.0, %v8454
      %v8456 = vpop.f32.mrb[0].mxu0
      %8457 = vmatprep.mubr.bf16.mxu0 0
      %8458 = vmatmul.mubr.bf16.gmra.mrb[0].mxu0 %v8364
      %v8459 = vpop.f32.mrb[0].mxu0
      %v8460 = vadd.f32 0.0, %v8459
      %v8461 = vpop.f32.mrb[0].mxu0
      %v8462 = vpop.f32.mrb[0].mxu0
      %v8463 = vadd.f32 0.0, %v8462
      %v8464 = vpop.f32.mrb[0].mxu0
      %8465 = vmatprep.mubr.bf16.mxu0 0
      %8466 = vmatmul.mubr.bf16.gmra.mrb[0].mxu0 %v8367
      %v8467 = vpop.f32.mrb[0].mxu0
      %v8468 = vadd.f32 0.0, %v8467
      %v8469 = vpop.f32.mrb[0].mxu0
      %v8470 = vpop.f32.mrb[0].mxu0
      %v8471 = vadd.f32 0.0, %v8470
      %v8472 = vpop.f32.mrb[0].mxu0
      %8473 = vmatprep.mubr.bf16.mxu0 0
      %8474 = vmatmul.mubr.bf16.gmra.mrb[0].mxu0 %v8370
      %v8475 = vpop.f32.mrb[0].mxu0
      %v8476 = vadd.f32 0.0, %v8475
      %v8477 = vpop.f32.mrb[0].mxu0
      %v8478 = vpop.f32.mrb[0].mxu0
      %v8479 = vadd.f32 0.0, %v8478
      %v8480 = vpop.f32.mrb[0].mxu0
      %8481 = vmatprep.mubr.bf16.mxu0 0
      %8482 = vmatmul.mubr.bf16.gmra.mrb[0].mxu0 %v8373
      %v8483 = vpop.f32.mrb[0].mxu0
      %v8484 = vadd.f32 0.0, %v8483
      %v8485 = vpop.f32.mrb[0].mxu0
      %v8486 = vpop.f32.mrb[0].mxu0
      %v8487 = vadd.f32 0.0, %v8486
      %v8488 = vpop.f32.mrb[0].mxu0
      %8489 = vmatprep.mubr.bf16.mxu0 0
      %8490 = vmatmul.mubr.bf16.gmra.mrb[0].mxu0 %v8376
      %v8491 = vpop.f32.mrb[0].mxu0
      %v8492 = vadd.f32 0.0, %v8491
      %v8493 = vpop.f32.mrb[0].mxu0
      %v8494 = vpop.f32.mrb[0].mxu0
      %v8495 = vadd.f32 0.0, %v8494
      %v8496 = vpop.f32.mrb[0].mxu0
      %8497 = vmatprep.mubr.bf16.mxu0 0
      %8498 = vmatmul.mubr.bf16.gmra.mrb[0].mxu0 %v8379
      %v8499 = vpop.f32.mrb[0].mxu0
      %v8500 = vadd.f32 0.0, %v8499
      %v8501 = vpop.f32.mrb[0].mxu0
      %v8502 = vpop.f32.mrb[0].mxu0
      %v8503 = vadd.f32 0.0, %v8502
      %v8504 = vpop.f32.mrb[0].mxu0
      %8505 = vmatprep.mubr.bf16.mxu0 0
      %8506 = vmatmul.mubr.bf16.gmra.mrb[0].mxu0 %v8382
      %v8507 = vpop.f32.mrb[0].mxu0
      %v8508 = vadd.f32 0.0, %v8507
      %v8509 = vpop.f32.mrb[0].mxu0
      %v8510 = vpop.f32.mrb[0].mxu0
      %v8511 = vadd.f32 0.0, %v8510
      %v8512 = vpop.f32.mrb[0].mxu0
      %8513 = vmatprep.mubr.bf16.mxu0 0
      %8514 = vmatmul.mubr.bf16.gmra.mrb[0].mxu0 %v8385
      %v8515 = vpop.f32.mrb[0].mxu0
      %v8516 = vadd.f32 0.0, %v8515
      %v8517 = vpop.f32.mrb[0].mxu0
      %v8518 = vpop.f32.mrb[0].mxu0
      %v8519 = vadd.f32 0.0, %v8518
      %v8520 = vpop.f32.mrb[0].mxu0
      %8521 = vmatprep.mubr.bf16.mxu0 0
      %8522 = vmatmul.mubr.bf16.gmra.mrb[0].mxu0 %v8388
      %v8523 = vpop.f32.mrb[0].mxu0
      %v8524 = vadd.f32 0.0, %v8523
      %v8525 = vpop.f32.mrb[0].mxu0
      %v8526 = vpop.f32.mrb[0].mxu0
      %v8527 = vadd.f32 0.0, %v8526
      %v8528 = vpop.f32.mrb[0].mxu0
      %8529 = vmatprep.mubr.bf16.mxu0 0
      %8530 = vmatmul.mubr.bf16.gmra.mrb[0].mxu0 %v8391
      %v8531 = vpop.f32.mrb[0].mxu0
      %v8532 = vadd.f32 0.0, %v8531
      %v8533 = vpop.f32.mrb[0].mxu0
      %v8534 = vpop.f32.mrb[0].mxu0
      %v8535 = vadd.f32 0.0, %v8534
      %v8536 = vpop.f32.mrb[0].mxu0
      %8537 = vmatprep.mubr.bf16.mxu0 0
      %8538 = vmatmul.mubr.bf16.gmra.mrb[0].mxu0 %v8394
      %v8539 = vpop.f32.mrb[0].mxu0
      %v8540 = vadd.f32 0.0, %v8539
      %v8541 = vpop.f32.mrb[0].mxu0
      %v8542 = vpop.f32.mrb[0].mxu0
      %v8543 = vadd.f32 0.0, %v8542
      %v8544 = vpop.f32.mrb[0].mxu0
      %8545 = vmatprep.mubr.bf16.mxu0 0
      %8546 = vmatmul.mubr.bf16.gmra.mrb[0].mxu0 %v8397
      %v8547 = vpop.f32.mrb[0].mxu0
      %v8548 = vadd.f32 0.0, %v8547
      %v8549 = vpop.f32.mrb[0].mxu0
      %v8550 = vpop.f32.mrb[0].mxu0
      %v8551 = vadd.f32 0.0, %v8550
      %v8552 = vpop.f32.mrb[0].mxu0
      %8553 = vmatprep.mubr.bf16.mxu0 0
      %8554 = vmatmul.mubr.bf16.gmra.mrb[0].mxu0 %v8400
      %v8555 = vpop.f32.mrb[0].mxu0
      %v8556 = vadd.f32 0.0, %v8555
      %v8557 = vpop.f32.mrb[0].mxu0
      %v8558 = vpop.f32.mrb[0].mxu0
      %v8559 = vadd.f32 0.0, %v8558
      %v8560 = vpop.f32.mrb[0].mxu0
      %8561 = vmatprep.mubr.bf16.mxu0 0
      %8562 = vmatmul.mubr.bf16.gmra.mrb[0].mxu0 %v8403
      %v8563 = vpop.f32.mrb[0].mxu0
      %v8564 = vadd.f32 0.0, %v8563
      %v8565 = vpop.f32.mrb[0].mxu0
      %v8566 = vpop.f32.mrb[0].mxu0
      %v8567 = vadd.f32 0.0, %v8566
      %v8568 = vpop.f32.mrb[0].mxu0
      %8569 = vmatprep.mubr.bf16.mxu0 0
      %8570 = vmatmul.mubr.bf16.gmra.mrb[0].mxu0 %v8406
      %v8571 = vpop.f32.mrb[0].mxu0
      %v8572 = vadd.f32 0.0, %v8571
      %v8573 = vpop.f32.mrb[0].mxu0
      %v8574 = vpop.f32.mrb[0].mxu0
      %v8575 = vadd.f32 0.0, %v8574
      %v8576 = vpop.f32.mrb[0].mxu0
      %8577 = vmatprep.mubr.bf16.mxu0 0
      %8578 = vmatmul.mubr.bf16.gmra.mrb[0].mxu0 %v8409
      %v8579 = vpop.f32.mrb[0].mxu0
      %v8580 = vadd.f32 0.0, %v8579
      %v8581 = vpop.f32.mrb[0].mxu0
      %v8582 = vpop.f32.mrb[0].mxu0
      %v8583 = vadd.f32 0.0, %v8582
      %v8584 = vpop.f32.mrb[0].mxu0
      %8585 = vmatprep.mubr.bf16.mxu0 0
      %8586 = vmatmul.mubr.bf16.gmra.mrb[0].mxu0 %v8412
      %v8587 = vpop.f32.mrb[0].mxu0
      %v8588 = vadd.f32 0.0, %v8587
      %v8589 = vpop.f32.mrb[0].mxu0
      %v8590 = vpop.f32.mrb[0].mxu0
      %v8591 = vadd.f32 0.0, %v8590
      %v8592 = vpop.f32.mrb[0].mxu0
      %8593 = vdwg.mxu0
      %v8594 = vadd.f32 %v8148, %v8452
      %v8595 = vadd.f32 %v8149, %v8455
      %v8596 = vadd.f32 %v8150, %v8460
      %v8597 = vadd.f32 %v8151, %v8463
      %v8598 = vadd.f32 %v8152, %v8468
      %v8599 = vadd.f32 %v8153, %v8471
      %v8600 = vadd.f32 %v8154, %v8476
      %v8601 = vadd.f32 %v8155, %v8479
      %v8602 = vadd.f32 %v8156, %v8484
      %v8603 = vadd.f32 %v8157, %v8487
      %v8604 = vadd.f32 %v8158, %v8492
      %v8605 = vadd.f32 %v8159, %v8495
      %v8606 = vadd.f32 %v8160, %v8500
      %v8607 = vadd.f32 %v8161, %v8503
      %v8608 = vadd.f32 %v8162, %v8508
      %v8609 = vadd.f32 %v8163, %v8511
      %v8610 = vadd.f32 %v8164, %v8516
      %v8611 = vadd.f32 %v8165, %v8519
      %v8612 = vadd.f32 %v8166, %v8524
      %v8613 = vadd.f32 %v8167, %v8527
      %v8614 = vadd.f32 %v8168, %v8532
      %v8615 = vadd.f32 %v8169, %v8535
      %v8616 = vadd.f32 %v8170, %v8540
      %v8617 = vadd.f32 %v8171, %v8543
      %v8618 = vadd.f32 %v8172, %v8548
      %v8619 = vadd.f32 %v8173, %v8551
      %v8620 = vadd.f32 %v8174, %v8556
      %v8621 = vadd.f32 %v8175, %v8559
      %v8622 = vadd.f32 %v8176, %v8564
      %v8623 = vadd.f32 %v8177, %v8567
      %v8624 = vadd.f32 %v8178, %v8572
      %v8625 = vadd.f32 %v8179, %v8575
      %v8626 = vadd.f32 %v8180, %v8580
      %v8627 = vadd.f32 %v8181, %v8583
      %v8628 = vadd.f32 %v8182, %v8588
      %v8629 = vadd.f32 %v8183, %v8591
      %v8630 = vld [vmem:[#allocation3 + $0x10] sm:$0x8]
      %s8631 = scalar_lea.vmem %s7, 32
      %v8632 = vld [vmem:[%s8631] sm:$0xf]
      %v8634 = vunpack.c.l.b16 %v8630
      %v8635 = vpack.c.b16 %v7822, %v8634
      %v8636 = vrot.slane %v8635, 3
      %v8637 = vrot.slane %v7859, 3
      %v8638 = vsel %vm4490, %v8636, %v8637
      %v8639 = vrot.slane %v7860, 3
      %v8640 = vsel %vm4490, %v8637, %v8639
      %v8641 = vrot.slane %v7861, 3
      %v8642 = vsel %vm4490, %v8639, %v8641
      %v8643 = vrot.slane %v7862, 3
      %v8644 = vsel %vm4490, %v8641, %v8643
      %v8645 = vrot.slane %v7863, 3
      %v8646 = vsel %vm4490, %v8643, %v8645
      %v8647 = vrot.slane %v7864, 3
      %v8648 = vsel %vm4490, %v8645, %v8647
      %v8649 = vrot.slane %v7865, 3
      %v8650 = vsel %vm4490, %v8647, %v8649
      %v8651 = vrot.slane %v7866, 3
      %v8652 = vsel %vm4490, %v8649, %v8651
      %v8653 = vrot.slane %v7867, 3
      %v8654 = vsel %vm4490, %v8651, %v8653
      %v8655 = vrot.slane %v7868, 3
      %v8656 = vsel %vm4490, %v8653, %v8655
      %v8657 = vrot.slane %v7869, 3
      %v8658 = vsel %vm4490, %v8655, %v8657
      %v8659 = vrot.slane %v7870, 3
      %v8660 = vsel %vm4490, %v8657, %v8659
      %v8661 = vrot.slane %v7871, 3
      %v8662 = vsel %vm4490, %v8659, %v8661
      %v8663 = vrot.slane %v7872, 3
      %v8664 = vsel %vm4490, %v8661, %v8663
      %v8665 = vrot.slane %v7873, 3
      %v8666 = vsel %vm4490, %v8663, %v8665
      %v8667 = vrot.slane %v7874, 3
      %v8668 = vsel %vm4490, %v8665, %v8667
      %v8669 = vrot.slane %v7875, 3
      %v8670 = vsel %vm4490, %v8667, %v8669
      %v8671 = vrot.slane %v8189, 3
      %v8672 = vsel %vm4490, %v8669, %v8671
      %v8674 = vsel %vm5782, %v8638, 0
      %v8677 = vsel %vm5782, %v8640, 0
      %v8680 = vsel %vm5782, %v8642, 0
      %v8683 = vsel %vm5782, %v8644, 0
      %v8686 = vsel %vm5782, %v8646, 0
      %v8689 = vsel %vm5782, %v8648, 0
      %v8692 = vsel %vm5782, %v8650, 0
      %v8695 = vsel %vm5782, %v8652, 0
      %v8698 = vsel %vm5782, %v8654, 0
      %v8701 = vsel %vm5782, %v8656, 0
      %v8704 = vsel %vm5782, %v8658, 0
      %v8707 = vsel %vm5782, %v8660, 0
      %v8710 = vsel %vm5782, %v8662, 0
      %v8713 = vsel %vm5782, %v8664, 0
      %v8716 = vsel %vm5782, %v8666, 0
      %v8719 = vsel %vm5782, %v8668, 0
      %v8722 = vsel %vm5782, %v8670, 0
      %v8725 = vsel %vm5782, %v8672, 0
      %v8728 = vsel %vm5837, %v8632, 0
      %8730 = vmatprep.subr.bf16.mxu0 0
      %8731 = vmatpush1.bf16.msra.mxu0 %v8728
      %8732 = vmatprep.subr.bf16.mxu0 0
      %8733 = vmatpush1.bf16.msra.mxu0 0
      %8734 = vmatprep.subr.bf16.mxu0 0
      %8735 = vmatpush1.bf16.msra.mxu0 0
      %8736 = vmatprep.subr.bf16.mxu0 0
      %8737 = vmatpush1.bf16.msra.mxu0 0
      %8738 = vmatprep.subr.bf16.mxu0 0
      %8739 = vmatpush1.bf16.msra.mxu0 0
      %8740 = vmatprep.subr.bf16.mxu0 0
      %8741 = vmatpush1.bf16.msra.mxu0 0
      %8742 = vmatprep.subr.bf16.mxu0 0
      %8743 = vmatpush1.bf16.msra.mxu0 0
      %8744 = vmatprep.subr.bf16.mxu0 0
      %8745 = vmatpush1.bf16.msra.mxu0 0
      %8746 = vmatprep.subr.bf16.mxu0 0
      %8747 = vmatpush1.bf16.msra.mxu0 0
      %8748 = vmatprep.subr.bf16.mxu0 0
      %8749 = vmatpush1.bf16.msra.mxu0 0
      %8750 = vmatprep.subr.bf16.mxu0 0
      %8751 = vmatpush1.bf16.msra.mxu0 0
      %8752 = vmatprep.subr.bf16.mxu0 0
      %8753 = vmatpush1.bf16.msra.mxu0 0
      %8754 = vmatprep.subr.bf16.mxu0 0
      %8755 = vmatpush1.bf16.msra.mxu0 0
      %8756 = vmatprep.subr.bf16.mxu0 0
      %8757 = vmatpush1.bf16.msra.mxu0 0
      %8758 = vmatprep.subr.bf16.mxu0 0
      %8759 = vmatpush1.bf16.msra.mxu0 0
      %8760 = vmatprep.subr.bf16.mxu0 0
      %8761 = vmatpush1.bf16.msra.mxu0 0
      %8762 = vmatprep.mubr.bf16.mxu0 0
      %8763 = vmatmul.mubr.bf16.gmra.mrb[0].mxu0 %v8674
      %v8764 = vpop.f32.mrb[0].mxu0
      %v8765 = vadd.f32 0.0, %v8764
      %v8766 = vpop.f32.mrb[0].mxu0
      %v8767 = vpop.f32.mrb[0].mxu0
      %v8768 = vadd.f32 0.0, %v8767
      %v8769 = vpop.f32.mrb[0].mxu0
      %8770 = vmatprep.mubr.bf16.mxu0 0
      %8771 = vmatmul.mubr.bf16.gmra.mrb[0].mxu0 %v8677
      %v8772 = vpop.f32.mrb[0].mxu0
      %v8773 = vadd.f32 0.0, %v8772
      %v8774 = vpop.f32.mrb[0].mxu0
      %v8775 = vpop.f32.mrb[0].mxu0
      %v8776 = vadd.f32 0.0, %v8775
      %v8777 = vpop.f32.mrb[0].mxu0
      %8778 = vmatprep.mubr.bf16.mxu0 0
      %8779 = vmatmul.mubr.bf16.gmra.mrb[0].mxu0 %v8680
      %v8780 = vpop.f32.mrb[0].mxu0
      %v8781 = vadd.f32 0.0, %v8780
      %v8782 = vpop.f32.mrb[0].mxu0
      %v8783 = vpop.f32.mrb[0].mxu0
      %v8784 = vadd.f32 0.0, %v8783
      %v8785 = vpop.f32.mrb[0].mxu0
      %8786 = vmatprep.mubr.bf16.mxu0 0
      %8787 = vmatmul.mubr.bf16.gmra.mrb[0].mxu0 %v8683
      %v8788 = vpop.f32.mrb[0].mxu0
      %v8789 = vadd.f32 0.0, %v8788
      %v8790 = vpop.f32.mrb[0].mxu0
      %v8791 = vpop.f32.mrb[0].mxu0
      %v8792 = vadd.f32 0.0, %v8791
      %v8793 = vpop.f32.mrb[0].mxu0
      %8794 = vmatprep.mubr.bf16.mxu0 0
      %8795 = vmatmul.mubr.bf16.gmra.mrb[0].mxu0 %v8686
      %v8796 = vpop.f32.mrb[0].mxu0
      %v8797 = vadd.f32 0.0, %v8796
      %v8798 = vpop.f32.mrb[0].mxu0
      %v8799 = vpop.f32.mrb[0].mxu0
      %v8800 = vadd.f32 0.0, %v8799
      %v8801 = vpop.f32.mrb[0].mxu0
      %8802 = vmatprep.mubr.bf16.mxu0 0
      %8803 = vmatmul.mubr.bf16.gmra.mrb[0].mxu0 %v8689
      %v8804 = vpop.f32.mrb[0].mxu0
      %v8805 = vadd.f32 0.0, %v8804
      %v8806 = vpop.f32.mrb[0].mxu0
      %v8807 = vpop.f32.mrb[0].mxu0
      %v8808 = vadd.f32 0.0, %v8807
      %v8809 = vpop.f32.mrb[0].mxu0
      %8810 = vmatprep.mubr.bf16.mxu0 0
      %8811 = vmatmul.mubr.bf16.gmra.mrb[0].mxu0 %v8692
      %v8812 = vpop.f32.mrb[0].mxu0
      %v8813 = vadd.f32 0.0, %v8812
      %v8814 = vpop.f32.mrb[0].mxu0
      %v8815 = vpop.f32.mrb[0].mxu0
      %v8816 = vadd.f32 0.0, %v8815
      %v8817 = vpop.f32.mrb[0].mxu0
      %8818 = vmatprep.mubr.bf16.mxu0 0
      %8819 = vmatmul.mubr.bf16.gmra.mrb[0].mxu0 %v8695
      %v8820 = vpop.f32.mrb[0].mxu0
      %v8821 = vadd.f32 0.0, %v8820
      %v8822 = vpop.f32.mrb[0].mxu0
      %v8823 = vpop.f32.mrb[0].mxu0
      %v8824 = vadd.f32 0.0, %v8823
      %v8825 = vpop.f32.mrb[0].mxu0
      %8826 = vmatprep.mubr.bf16.mxu0 0
      %8827 = vmatmul.mubr.bf16.gmra.mrb[0].mxu0 %v8698
      %v8828 = vpop.f32.mrb[0].mxu0
      %v8829 = vadd.f32 0.0, %v8828
      %v8830 = vpop.f32.mrb[0].mxu0
      %v8831 = vpop.f32.mrb[0].mxu0
      %v8832 = vadd.f32 0.0, %v8831
      %v8833 = vpop.f32.mrb[0].mxu0
      %8834 = vmatprep.mubr.bf16.mxu0 0
      %8835 = vmatmul.mubr.bf16.gmra.mrb[0].mxu0 %v8701
      %v8836 = vpop.f32.mrb[0].mxu0
      %v8837 = vadd.f32 0.0, %v8836
      %v8838 = vpop.f32.mrb[0].mxu0
      %v8839 = vpop.f32.mrb[0].mxu0
      %v8840 = vadd.f32 0.0, %v8839
      %v8841 = vpop.f32.mrb[0].mxu0
      %8842 = vmatprep.mubr.bf16.mxu0 0
      %8843 = vmatmul.mubr.bf16.gmra.mrb[0].mxu0 %v8704
      %v8844 = vpop.f32.mrb[0].mxu0
      %v8845 = vadd.f32 0.0, %v8844
      %v8846 = vpop.f32.mrb[0].mxu0
      %v8847 = vpop.f32.mrb[0].mxu0
      %v8848 = vadd.f32 0.0, %v8847
      %v8849 = vpop.f32.mrb[0].mxu0
      %8850 = vmatprep.mubr.bf16.mxu0 0
      %8851 = vmatmul.mubr.bf16.gmra.mrb[0].mxu0 %v8707
      %v8852 = vpop.f32.mrb[0].mxu0
      %v8853 = vadd.f32 0.0, %v8852
      %v8854 = vpop.f32.mrb[0].mxu0
      %v8855 = vpop.f32.mrb[0].mxu0
      %v8856 = vadd.f32 0.0, %v8855
      %v8857 = vpop.f32.mrb[0].mxu0
      %8858 = vmatprep.mubr.bf16.mxu0 0
      %8859 = vmatmul.mubr.bf16.gmra.mrb[0].mxu0 %v8710
      %v8860 = vpop.f32.mrb[0].mxu0
      %v8861 = vadd.f32 0.0, %v8860
      %v8862 = vpop.f32.mrb[0].mxu0
      %v8863 = vpop.f32.mrb[0].mxu0
      %v8864 = vadd.f32 0.0, %v8863
      %v8865 = vpop.f32.mrb[0].mxu0
      %8866 = vmatprep.mubr.bf16.mxu0 0
      %8867 = vmatmul.mubr.bf16.gmra.mrb[0].mxu0 %v8713
      %v8868 = vpop.f32.mrb[0].mxu0
      %v8869 = vadd.f32 0.0, %v8868
      %v8870 = vpop.f32.mrb[0].mxu0
      %v8871 = vpop.f32.mrb[0].mxu0
      %v8872 = vadd.f32 0.0, %v8871
      %v8873 = vpop.f32.mrb[0].mxu0
      %8874 = vmatprep.mubr.bf16.mxu0 0
      %8875 = vmatmul.mubr.bf16.gmra.mrb[0].mxu0 %v8716
      %v8876 = vpop.f32.mrb[0].mxu0
      %v8877 = vadd.f32 0.0, %v8876
      %v8878 = vpop.f32.mrb[0].mxu0
      %v8879 = vpop.f32.mrb[0].mxu0
      %v8880 = vadd.f32 0.0, %v8879
      %v8881 = vpop.f32.mrb[0].mxu0
      %8882 = vmatprep.mubr.bf16.mxu0 0
      %8883 = vmatmul.mubr.bf16.gmra.mrb[0].mxu0 %v8719
      %v8884 = vpop.f32.mrb[0].mxu0
      %v8885 = vadd.f32 0.0, %v8884
      %v8886 = vpop.f32.mrb[0].mxu0
      %v8887 = vpop.f32.mrb[0].mxu0
      %v8888 = vadd.f32 0.0, %v8887
      %v8889 = vpop.f32.mrb[0].mxu0
      %8890 = vmatprep.mubr.bf16.mxu0 0
      %8891 = vmatmul.mubr.bf16.gmra.mrb[0].mxu0 %v8722
      %v8892 = vpop.f32.mrb[0].mxu0
      %v8893 = vadd.f32 0.0, %v8892
      %v8894 = vpop.f32.mrb[0].mxu0
      %v8895 = vpop.f32.mrb[0].mxu0
      %v8896 = vadd.f32 0.0, %v8895
      %v8897 = vpop.f32.mrb[0].mxu0
      %8898 = vmatprep.mubr.bf16.mxu0 0
      %8899 = vmatmul.mubr.bf16.gmra.mrb[0].mxu0 %v8725
      %v8900 = vpop.f32.mrb[0].mxu0
      %v8901 = vadd.f32 0.0, %v8900
      %v8902 = vpop.f32.mrb[0].mxu0
      %v8903 = vpop.f32.mrb[0].mxu0
      %v8904 = vadd.f32 0.0, %v8903
      %v8905 = vpop.f32.mrb[0].mxu0
      %8906 = vdwg.mxu0
      %v8907 = vadd.f32 %v8594, %v8765
      %v8908 = vadd.f32 %v8595, %v8768
      %v8909 = vadd.f32 %v8596, %v8773
      %v8910 = vadd.f32 %v8597, %v8776
      %v8911 = vadd.f32 %v8598, %v8781
      %v8912 = vadd.f32 %v8599, %v8784
      %v8913 = vadd.f32 %v8600, %v8789
      %v8914 = vadd.f32 %v8601, %v8792
      %v8915 = vadd.f32 %v8602, %v8797
      %v8916 = vadd.f32 %v8603, %v8800
      %v8917 = vadd.f32 %v8604, %v8805
      %v8918 = vadd.f32 %v8605, %v8808
      %v8919 = vadd.f32 %v8606, %v8813
      %v8920 = vadd.f32 %v8607, %v8816
      %v8921 = vadd.f32 %v8608, %v8821
      %v8922 = vadd.f32 %v8609, %v8824
      %v8923 = vadd.f32 %v8610, %v8829
      %v8924 = vadd.f32 %v8611, %v8832
      %v8925 = vadd.f32 %v8612, %v8837
      %v8926 = vadd.f32 %v8613, %v8840
      %v8927 = vadd.f32 %v8614, %v8845
      %v8928 = vadd.f32 %v8615, %v8848
      %v8929 = vadd.f32 %v8616, %v8853
      %v8930 = vadd.f32 %v8617, %v8856
      %v8931 = vadd.f32 %v8618, %v8861
      %v8932 = vadd.f32 %v8619, %v8864
      %v8933 = vadd.f32 %v8620, %v8869
      %v8934 = vadd.f32 %v8621, %v8872
      %v8935 = vadd.f32 %v8622, %v8877
      %v8936 = vadd.f32 %v8623, %v8880
      %v8937 = vadd.f32 %v8624, %v8885
      %v8938 = vadd.f32 %v8625, %v8888
      %v8939 = vadd.f32 %v8626, %v8893
      %v8940 = vadd.f32 %v8627, %v8896
      %v8941 = vadd.f32 %v8628, %v8901
      %v8942 = vadd.f32 %v8629, %v8904
      %v8943 = vpack.c.bf16 %v430, %v429
      %v8944 = vpack.c.bf16 %v432, %v431
      %v8945 = vpack.c.bf16 %v434, %v433
      %v8946 = vpack.c.bf16 %v436, %v435
      %v8947 = vpack.c.bf16 %v438, %v437
      %v8948 = vpack.c.bf16 %v440, %v439
      %v8949 = vpack.c.bf16 %v442, %v441
      %v8950 = vpack.c.bf16 %v444, %v443
      %v8951 = vpack.c.bf16 %v446, %v445
      %v8952 = vpack.c.bf16 %v448, %v447
      %v8953 = vpack.c.bf16 %v450, %v449
      %v8954 = vpack.c.bf16 %v452, %v451
      %v8955 = vpack.c.bf16 %v454, %v453
      %v8956 = vpack.c.bf16 %v456, %v455
      %v8957 = vpack.c.bf16 %v458, %v457
      %v8958 = vpack.c.bf16 %v460, %v459
      %v8959 = vpack.c.bf16 %v462, %v461
      %v8960 = vpack.c.bf16 %v464, %v463
      %v8961 = vld [vmem:[%s8] sm:$0x3]
      %v8963 = vsel %vm1632, %v8943, 0
      %v8966 = vsel %vm1632, %v8944, 0
      %v8969 = vsel %vm1632, %v8945, 0
      %v8972 = vsel %vm1632, %v8946, 0
      %v8975 = vsel %vm1632, %v8947, 0
      %v8978 = vsel %vm1632, %v8948, 0
      %v8981 = vsel %vm1632, %v8949, 0
      %v8984 = vsel %vm1632, %v8950, 0
      %v8987 = vsel %vm1632, %v8951, 0
      %v8990 = vsel %vm1632, %v8952, 0
      %v8993 = vsel %vm1632, %v8953, 0
      %v8996 = vsel %vm1632, %v8954, 0
      %v8999 = vsel %vm1632, %v8955, 0
      %v9002 = vsel %vm1632, %v8956, 0
      %v9005 = vsel %vm1632, %v8957, 0
      %v9008 = vsel %vm1632, %v8958, 0
      %v9011 = vsel %vm1632, %v8959, 0
      %v9014 = vsel %vm1632, %v8960, 0
      %v9017 = vsel %vm1687, %v8961, 0
      %9019 = vmatprep.subr.bf16.mxu0 0
      %9020 = vmatpush1.bf16.msra.mxu0 %v9017
      %9021 = vmatprep.subr.bf16.mxu0 0
      %9022 = vmatpush1.bf16.msra.mxu0 0
      %9023 = vmatprep.subr.bf16.mxu0 0
      %9024 = vmatpush1.bf16.msra.mxu0 0
      %9025 = vmatprep.subr.bf16.mxu0 0
      %9026 = vmatpush1.bf16.msra.mxu0 0
      %9027 = vmatprep.subr.bf16.mxu0 0
      %9028 = vmatpush1.bf16.msra.mxu0 0
      %9029 = vmatprep.subr.bf16.mxu0 0
      %9030 = vmatpush1.bf16.msra.mxu0 0
      %9031 = vmatprep.subr.bf16.mxu0 0
      %9032 = vmatpush1.bf16.msra.mxu0 0
      %9033 = vmatprep.subr.bf16.mxu0 0
      %9034 = vmatpush1.bf16.msra.mxu0 0
      %9035 = vmatprep.subr.bf16.mxu0 0
      %9036 = vmatpush1.bf16.msra.mxu0 0
      %9037 = vmatprep.subr.bf16.mxu0 0
      %9038 = vmatpush1.bf16.msra.mxu0 0
      %9039 = vmatprep.subr.bf16.mxu0 0
      %9040 = vmatpush1.bf16.msra.mxu0 0
      %9041 = vmatprep.subr.bf16.mxu0 0
      %9042 = vmatpush1.bf16.msra.mxu0 0
      %9043 = vmatprep.subr.bf16.mxu0 0
      %9044 = vmatpush1.bf16.msra.mxu0 0
      %9045 = vmatprep.subr.bf16.mxu0 0
      %9046 = vmatpush1.bf16.msra.mxu0 0
      %9047 = vmatprep.subr.bf16.mxu0 0
      %9048 = vmatpush1.bf16.msra.mxu0 0
      %9049 = vmatprep.subr.bf16.mxu0 0
      %9050 = vmatpush1.bf16.msra.mxu0 0
      %9051 = vmatprep.mubr.bf16.mxu0 0
      %9052 = vmatmul.mubr.bf16.gmra.mrb[0].mxu0 %v8963
      %v9053 = vpop.f32.mrb[0].mxu0
      %v9054 = vadd.f32 0.0, %v9053
      %v9055 = vpop.f32.mrb[0].mxu0
      %v9056 = vpop.f32.mrb[0].mxu0
      %v9057 = vadd.f32 0.0, %v9056
      %v9058 = vpop.f32.mrb[0].mxu0
      %9059 = vmatprep.mubr.bf16.mxu0 0
      %9060 = vmatmul.mubr.bf16.gmra.mrb[0].mxu0 %v8966
      %v9061 = vpop.f32.mrb[0].mxu0
      %v9062 = vadd.f32 0.0, %v9061
      %v9063 = vpop.f32.mrb[0].mxu0
      %v9064 = vpop.f32.mrb[0].mxu0
      %v9065 = vadd.f32 0.0, %v9064
      %v9066 = vpop.f32.mrb[0].mxu0
      %9067 = vmatprep.mubr.bf16.mxu0 0
      %9068 = vmatmul.mubr.bf16.gmra.mrb[0].mxu0 %v8969
      %v9069 = vpop.f32.mrb[0].mxu0
      %v9070 = vadd.f32 0.0, %v9069
      %v9071 = vpop.f32.mrb[0].mxu0
      %v9072 = vpop.f32.mrb[0].mxu0
      %v9073 = vadd.f32 0.0, %v9072
      %v9074 = vpop.f32.mrb[0].mxu0
      %9075 = vmatprep.mubr.bf16.mxu0 0
      %9076 = vmatmul.mubr.bf16.gmra.mrb[0].mxu0 %v8972
      %v9077 = vpop.f32.mrb[0].mxu0
      %v9078 = vadd.f32 0.0, %v9077
      %v9079 = vpop.f32.mrb[0].mxu0
      %v9080 = vpop.f32.mrb[0].mxu0
      %v9081 = vadd.f32 0.0, %v9080
      %v9082 = vpop.f32.mrb[0].mxu0
      %9083 = vmatprep.mubr.bf16.mxu0 0
      %9084 = vmatmul.mubr.bf16.gmra.mrb[0].mxu0 %v8975
      %v9085 = vpop.f32.mrb[0].mxu0
      %v9086 = vadd.f32 0.0, %v9085
      %v9087 = vpop.f32.mrb[0].mxu0
      %v9088 = vpop.f32.mrb[0].mxu0
      %v9089 = vadd.f32 0.0, %v9088
      %v9090 = vpop.f32.mrb[0].mxu0
      %9091 = vmatprep.mubr.bf16.mxu0 0
      %9092 = vmatmul.mubr.bf16.gmra.mrb[0].mxu0 %v8978
      %v9093 = vpop.f32.mrb[0].mxu0
      %v9094 = vadd.f32 0.0, %v9093
      %v9095 = vpop.f32.mrb[0].mxu0
      %v9096 = vpop.f32.mrb[0].mxu0
      %v9097 = vadd.f32 0.0, %v9096
      %v9098 = vpop.f32.mrb[0].mxu0
      %9099 = vmatprep.mubr.bf16.mxu0 0
      %9100 = vmatmul.mubr.bf16.gmra.mrb[0].mxu0 %v8981
      %v9101 = vpop.f32.mrb[0].mxu0
      %v9102 = vadd.f32 0.0, %v9101
      %v9103 = vpop.f32.mrb[0].mxu0
      %v9104 = vpop.f32.mrb[0].mxu0
      %v9105 = vadd.f32 0.0, %v9104
      %v9106 = vpop.f32.mrb[0].mxu0
      %9107 = vmatprep.mubr.bf16.mxu0 0
      %9108 = vmatmul.mubr.bf16.gmra.mrb[0].mxu0 %v8984
      %v9109 = vpop.f32.mrb[0].mxu0
      %v9110 = vadd.f32 0.0, %v9109
      %v9111 = vpop.f32.mrb[0].mxu0
      %v9112 = vpop.f32.mrb[0].mxu0
      %v9113 = vadd.f32 0.0, %v9112
      %v9114 = vpop.f32.mrb[0].mxu0
      %9115 = vmatprep.mubr.bf16.mxu0 0
      %9116 = vmatmul.mubr.bf16.gmra.mrb[0].mxu0 %v8987
      %v9117 = vpop.f32.mrb[0].mxu0
      %v9118 = vadd.f32 0.0, %v9117
      %v9119 = vpop.f32.mrb[0].mxu0
      %v9120 = vpop.f32.mrb[0].mxu0
      %v9121 = vadd.f32 0.0, %v9120
      %v9122 = vpop.f32.mrb[0].mxu0
      %9123 = vmatprep.mubr.bf16.mxu0 0
      %9124 = vmatmul.mubr.bf16.gmra.mrb[0].mxu0 %v8990
      %v9125 = vpop.f32.mrb[0].mxu0
      %v9126 = vadd.f32 0.0, %v9125
      %v9127 = vpop.f32.mrb[0].mxu0
      %v9128 = vpop.f32.mrb[0].mxu0
      %v9129 = vadd.f32 0.0, %v9128
      %v9130 = vpop.f32.mrb[0].mxu0
      %9131 = vmatprep.mubr.bf16.mxu0 0
      %9132 = vmatmul.mubr.bf16.gmra.mrb[0].mxu0 %v8993
      %v9133 = vpop.f32.mrb[0].mxu0
      %v9134 = vadd.f32 0.0, %v9133
      %v9135 = vpop.f32.mrb[0].mxu0
      %v9136 = vpop.f32.mrb[0].mxu0
      %v9137 = vadd.f32 0.0, %v9136
      %v9138 = vpop.f32.mrb[0].mxu0
      %9139 = vmatprep.mubr.bf16.mxu0 0
      %9140 = vmatmul.mubr.bf16.gmra.mrb[0].mxu0 %v8996
      %v9141 = vpop.f32.mrb[0].mxu0
      %v9142 = vadd.f32 0.0, %v9141
      %v9143 = vpop.f32.mrb[0].mxu0
      %v9144 = vpop.f32.mrb[0].mxu0
      %v9145 = vadd.f32 0.0, %v9144
      %v9146 = vpop.f32.mrb[0].mxu0
      %9147 = vmatprep.mubr.bf16.mxu0 0
      %9148 = vmatmul.mubr.bf16.gmra.mrb[0].mxu0 %v8999
      %v9149 = vpop.f32.mrb[0].mxu0
      %v9150 = vadd.f32 0.0, %v9149
      %v9151 = vpop.f32.mrb[0].mxu0
      %v9152 = vpop.f32.mrb[0].mxu0
      %v9153 = vadd.f32 0.0, %v9152
      %v9154 = vpop.f32.mrb[0].mxu0
      %9155 = vmatprep.mubr.bf16.mxu0 0
      %9156 = vmatmul.mubr.bf16.gmra.mrb[0].mxu0 %v9002
      %v9157 = vpop.f32.mrb[0].mxu0
      %v9158 = vadd.f32 0.0, %v9157
      %v9159 = vpop.f32.mrb[0].mxu0
      %v9160 = vpop.f32.mrb[0].mxu0
      %v9161 = vadd.f32 0.0, %v9160
      %v9162 = vpop.f32.mrb[0].mxu0
      %9163 = vmatprep.mubr.bf16.mxu0 0
      %9164 = vmatmul.mubr.bf16.gmra.mrb[0].mxu0 %v9005
      %v9165 = vpop.f32.mrb[0].mxu0
      %v9166 = vadd.f32 0.0, %v9165
      %v9167 = vpop.f32.mrb[0].mxu0
      %v9168 = vpop.f32.mrb[0].mxu0
      %v9169 = vadd.f32 0.0, %v9168
      %v9170 = vpop.f32.mrb[0].mxu0
      %9171 = vmatprep.mubr.bf16.mxu0 0
      %9172 = vmatmul.mubr.bf16.gmra.mrb[0].mxu0 %v9008
      %v9173 = vpop.f32.mrb[0].mxu0
      %v9174 = vadd.f32 0.0, %v9173
      %v9175 = vpop.f32.mrb[0].mxu0
      %v9176 = vpop.f32.mrb[0].mxu0
      %v9177 = vadd.f32 0.0, %v9176
      %v9178 = vpop.f32.mrb[0].mxu0
      %9179 = vmatprep.mubr.bf16.mxu0 0
      %9180 = vmatmul.mubr.bf16.gmra.mrb[0].mxu0 %v9011
      %v9181 = vpop.f32.mrb[0].mxu0
      %v9182 = vadd.f32 0.0, %v9181
      %v9183 = vpop.f32.mrb[0].mxu0
      %v9184 = vpop.f32.mrb[0].mxu0
      %v9185 = vadd.f32 0.0, %v9184
      %v9186 = vpop.f32.mrb[0].mxu0
      %9187 = vmatprep.mubr.bf16.mxu0 0
      %9188 = vmatmul.mubr.bf16.gmra.mrb[0].mxu0 %v9014
      %v9189 = vpop.f32.mrb[0].mxu0
      %v9190 = vadd.f32 0.0, %v9189
      %v9191 = vpop.f32.mrb[0].mxu0
      %v9192 = vpop.f32.mrb[0].mxu0
      %v9193 = vadd.f32 0.0, %v9192
      %v9194 = vpop.f32.mrb[0].mxu0
      %9195 = vdwg.mxu0
      %v9196 = vadd.f32 %v8907, %v9054
      %v9197 = vadd.f32 %v8908, %v9057
      %v9198 = vadd.f32 %v8909, %v9062
      %v9199 = vadd.f32 %v8910, %v9065
      %v9200 = vadd.f32 %v8911, %v9070
      %v9201 = vadd.f32 %v8912, %v9073
      %v9202 = vadd.f32 %v8913, %v9078
      %v9203 = vadd.f32 %v8914, %v9081
      %v9204 = vadd.f32 %v8915, %v9086
      %v9205 = vadd.f32 %v8916, %v9089
      %v9206 = vadd.f32 %v8917, %v9094
      %v9207 = vadd.f32 %v8918, %v9097
      %v9208 = vadd.f32 %v8919, %v9102
      %v9209 = vadd.f32 %v8920, %v9105
      %v9210 = vadd.f32 %v8921, %v9110
      %v9211 = vadd.f32 %v8922, %v9113
      %v9212 = vadd.f32 %v8923, %v9118
      %v9213 = vadd.f32 %v8924, %v9121
      %v9214 = vadd.f32 %v8925, %v9126
      %v9215 = vadd.f32 %v8926, %v9129
      %v9216 = vadd.f32 %v8927, %v9134
      %v9217 = vadd.f32 %v8928, %v9137
      %v9218 = vadd.f32 %v8929, %v9142
      %v9219 = vadd.f32 %v8930, %v9145
      %v9220 = vadd.f32 %v8931, %v9150
      %v9221 = vadd.f32 %v8932, %v9153
      %v9222 = vadd.f32 %v8933, %v9158
      %v9223 = vadd.f32 %v8934, %v9161
      %v9224 = vadd.f32 %v8935, %v9166
      %v9225 = vadd.f32 %v8936, %v9169
      %v9226 = vadd.f32 %v8937, %v9174
      %v9227 = vadd.f32 %v8938, %v9177
      %v9228 = vadd.f32 %v8939, %v9182
      %v9229 = vadd.f32 %v8940, %v9185
      %v9230 = vadd.f32 %v8941, %v9190
      %v9231 = vadd.f32 %v8942, %v9193
      %v9232 = vld [vmem:[%s9] sm:$0x1]
      %v9234 = vlaneseq
      %v9235 = vshrl.u32 %v9234, 7
      %v9236 = vsub.s32 0, %v9235
      %v9237 = vrot.slane %v9232, %v9236
      %v9239 = vadd.f32 %v9196, %v9237
      %v9240 = vadd.f32 %v9197, %v9237
      %v9241 = vadd.f32 %v9198, %v9237
      %v9242 = vadd.f32 %v9199, %v9237
      %v9243 = vadd.f32 %v9200, %v9237
      %v9244 = vadd.f32 %v9201, %v9237
      %v9245 = vadd.f32 %v9202, %v9237
      %v9246 = vadd.f32 %v9203, %v9237
      %v9247 = vadd.f32 %v9204, %v9237
      %v9248 = vadd.f32 %v9205, %v9237
      %v9249 = vadd.f32 %v9206, %v9237
      %v9250 = vadd.f32 %v9207, %v9237
      %v9251 = vadd.f32 %v9208, %v9237
      %v9252 = vadd.f32 %v9209, %v9237
      %v9253 = vadd.f32 %v9210, %v9237
      %v9254 = vadd.f32 %v9211, %v9237
      %v9255 = vadd.f32 %v9212, %v9237
      %v9256 = vadd.f32 %v9213, %v9237
      %v9257 = vadd.f32 %v9214, %v9237
      %v9258 = vadd.f32 %v9215, %v9237
      %v9259 = vadd.f32 %v9216, %v9237
      %v9260 = vadd.f32 %v9217, %v9237
      %v9261 = vadd.f32 %v9218, %v9237
      %v9262 = vadd.f32 %v9219, %v9237
      %v9263 = vadd.f32 %v9220, %v9237
      %v9264 = vadd.f32 %v9221, %v9237
      %v9265 = vadd.f32 %v9222, %v9237
      %v9266 = vadd.f32 %v9223, %v9237
      %v9267 = vadd.f32 %v9224, %v9237
      %v9268 = vadd.f32 %v9225, %v9237
      %v9269 = vadd.f32 %v9226, %v9237
      %v9270 = vadd.f32 %v9227, %v9237
      %v9271 = vadd.f32 %v9228, %v9237
      %v9272 = vadd.f32 %v9229, %v9237
      %v9273 = vadd.f32 %v9230, %v9237
      %v9274 = vadd.f32 %v9231, %v9237
      %9275 = vst.msk [vmem:[%s359] sm:$0xff] %vm5782, %v9239
      %9276 = vst.msk [vmem:[%s359 + $0x8] sm:$0xff] %vm5782, %v9240
      %9277 = vst.msk [vmem:[%s359 + $0x10] sm:$0xff] %vm5782, %v9241
      %9278 = vst.msk [vmem:[%s359 + $0x18] sm:$0xff] %vm5782, %v9242
      %9279 = vst.msk [vmem:[%s359 + $0x20] sm:$0xff] %vm5782, %v9243
      %9280 = vst.msk [vmem:[%s359 + $0x28] sm:$0xff] %vm5782, %v9244
      %9281 = vst.msk [vmem:[%s359 + $0x30] sm:$0xff] %vm5782, %v9245
      %9282 = vst.msk [vmem:[%s359 + $0x38] sm:$0xff] %vm5782, %v9246
      %9283 = vst.msk [vmem:[%s359 + $0x40] sm:$0xff] %vm5782, %v9247
      %9284 = vst.msk [vmem:[%s359 + $0x48] sm:$0xff] %vm5782, %v9248
      %9285 = vst.msk [vmem:[%s359 + $0x50] sm:$0xff] %vm5782, %v9249
      %9286 = vst.msk [vmem:[%s359 + $0x58] sm:$0xff] %vm5782, %v9250
      %9287 = vst.msk [vmem:[%s359 + $0x60] sm:$0xff] %vm5782, %v9251
      %9288 = vst.msk [vmem:[%s359 + $0x68] sm:$0xff] %vm5782, %v9252
      %9289 = vst.msk [vmem:[%s359 + $0x70] sm:$0xff] %vm5782, %v9253
      %9290 = vst.msk [vmem:[%s359 + $0x78] sm:$0xff] %vm5782, %v9254
      %9291 = vst.msk [vmem:[%s359 + $0x80] sm:$0xff] %vm5782, %v9255
      %9292 = vst.msk [vmem:[%s359 + $0x88] sm:$0xff] %vm5782, %v9256
      %9293 = vst.msk [vmem:[%s359 + $0x90] sm:$0xff] %vm5782, %v9257
      %9294 = vst.msk [vmem:[%s359 + $0x98] sm:$0xff] %vm5782, %v9258
      %9295 = vst.msk [vmem:[%s359 + $0xa0] sm:$0xff] %vm5782, %v9259
      %9296 = vst.msk [vmem:[%s359 + $0xa8] sm:$0xff] %vm5782, %v9260
      %9297 = vst.msk [vmem:[%s359 + $0xb0] sm:$0xff] %vm5782, %v9261
      %9298 = vst.msk [vmem:[%s359 + $0xb8] sm:$0xff] %vm5782, %v9262
      %9299 = vst.msk [vmem:[%s359 + $0xc0] sm:$0xff] %vm5782, %v9263
      %9300 = vst.msk [vmem:[%s359 + $0xc8] sm:$0xff] %vm5782, %v9264
      %9301 = vst.msk [vmem:[%s359 + $0xd0] sm:$0xff] %vm5782, %v9265
      %9302 = vst.msk [vmem:[%s359 + $0xd8] sm:$0xff] %vm5782, %v9266
      %9303 = vst.msk [vmem:[%s359 + $0xe0] sm:$0xff] %vm5782, %v9267
      %9304 = vst.msk [vmem:[%s359 + $0xe8] sm:$0xff] %vm5782, %v9268
      %9305 = vst.msk [vmem:[%s359 + $0xf0] sm:$0xff] %vm5782, %v9269
      %9306 = vst.msk [vmem:[%s359 + $0xf8] sm:$0xff] %vm5782, %v9270
      %9307 = vst.msk [vmem:[%s359 + $0x100] sm:$0xff] %vm5782, %v9271
      %9308 = vst.msk [vmem:[%s359 + $0x108] sm:$0xff] %vm5782, %v9272
      %9309 = vst.msk [vmem:[%s359 + $0x110] sm:$0xff] %vm5782, %v9273
      %9310 = vst.msk [vmem:[%s359 + $0x118] sm:$0xff] %vm5782, %v9274
      %p9311 = scmp.lt.s32.totalorder %s21, 1
      %s9312 = scalar_select %p9311, %s21, 1
      %s9313 = smul.addr %s9312, 36
      %s9314 = smul.addr %s9313, 8
      %s9315 = scalar_lea.vmem %s10, %s9314
      // Predicated region
      $region61: #{tpu_custom_call.1} parent=59 // pred_check
        %p9316 = pneg %p254
      $region62: #{tpu_custom_call.1} parent=59 // pred_check_branch
        %9318 = sbr.rel (%p9316) target = $region64
      $region63: #{tpu_custom_call.1} parent=59 // pred_region
        _
      $region64: #{tpu_custom_call.1} parent=59 // pred_fallthru
        _
    $region60: #{tpu_custom_call.1} parent=5 // pred_fallthru
      _
    %p9319 = scmp.le.s32.totalorder 2, %s16
    // Predicated region
    $region65: #{tpu_custom_call.1} parent=5 // pred_check
      %p9320 = pneg %p9319
    $region66: #{tpu_custom_call.1} parent=5 // pred_check_branch
      %9322 = sbr.rel (%p9320) target = $region68
    $region67: #{tpu_custom_call.1} parent=5 // pred_region
      %s9323 = ssub.s32 %s16, 2
      // Predicated region
      $region69: #{tpu_custom_call.1} parent=67 // pred_check
        %p9324 = pneg %p260
      $region70: #{tpu_custom_call.1} parent=67 // pred_check_branch
        %9326 = sbr.rel (%p9324) target = $region72
      $region71: #{tpu_custom_call.1} parent=67 // pred_region
        %p9327 = scmp.lt.s32.totalorder %s22, 1
        %s9328 = scalar_select %p9327, %s22, 1
        %s9329 = smul.addr %s9328, 36
        %s9330 = smul.addr %s9329, 8
        %s9331 = scalar_lea.vmem %s10, %s9330
      $region72: #{tpu_custom_call.1} parent=67 // pred_fallthru
        _
    $region68: #{tpu_custom_call.1} parent=5 // pred_fallthru
      _
  $region6: #{tpu_custom_call.1} parent=0 // loop_footer
    %s20 = sadd.s32 1, %s16
  $region7: #{tpu_custom_call.1} parent=0 // loop_footer_branch
    %15 = sbr.rel target = $region3
  $region8: #{tpu_custom_call.1} parent=0 // loop_exit
    _

</llo_original>
